<compile_context>
chip_gen: v7x
topology: tpu7x:2x2x1
jax: 0.10.0
libtpu: 0.0.40
codegen_flags: <defaults>
</compile_context>

<pallas_src>
import functools

import jax
import jax.numpy as jnp
from jax import lax
from jax.experimental import pallas as pl
from jax.experimental.pallas import tpu as pltpu


_NEG = -1e30  # "minus infinity" sentinel for masked max / dead-node scores


def _spec(shape):
    # One grid step, full-array block (block dims == array dims satisfies the (8,128) rule).
    return pl.BlockSpec(shape, lambda i, _n=len(shape): (0,) * _n)


def _forward_kernel(x_ref, a_ref, boh_ref, boht_ref,
                    sw0_ref, sw1_ref, sw2_ref,
                    gw0_ref, gw1_ref, gw2_ref,
                    bconv_ref, pwn_ref,
                    l1w_ref, l1b_ref, l2w_ref, l2b_ref, l3w_ref, l3b_ref,
                    o_ref, cat_scr, *, num_graphs, ratio):
    f32 = jnp.float32
    x = x_ref[...]                       # (N, 2)   node features (columns [2, 3])
    A = a_ref[...]                       # (N, N)   dense adjacency, A[i, j] = edge j -> i
    boh = boh_ref[...]                   # (G, N)   one-hot batch assignment
    boht = boht_ref[...]                 # (N, G)
    N = A.shape[0]
    G = num_graphs
    C = bconv_ref.shape[1]               # conv_width

    # Constants shared by all 6 TopK poolings (built once, stay in vregs/VMEM).
    sg = jnp.dot(boht, boh, preferred_element_type=f32)        # (N, N) same-graph 0/1
    idx_r = lax.broadcasted_iota(jnp.int32, (N, N), 0)
    idx_c = lax.broadcasted_iota(jnp.int32, (N, N), 1)
    on_diag = idx_r == idx_c
    row_of_g = lax.broadcasted_iota(jnp.int32, (G, C), 0)

    def col_to_row(v):                   # exact (N,1) -> (1,N) via diagonal select + reduce
        return jnp.sum(jnp.where(on_diag, v, 0.0), axis=0, keepdims=True)

    mask = jnp.ones((N, 1), f32)         # alive-node mask (fixed-size TopK emulation)
    gmp_sum = jnp.zeros((G, C), f32)     # running sum of the per-layer readouts
    gap_sum = jnp.zeros((G, C), f32)

    sage_w = (sw0_ref, sw1_ref, sw2_ref)   # stacked [Wl; Wr] per SAGE layer
    gcn_w = (gw0_ref, gw1_ref, gw2_ref)

    for layer in range(6):
        # ----------------------------------------------------------------- conv
        if layer < 3:
            # SAGEConv(mean): relu([mean_nbr(x) | x] @ [Wl; Wr] + b) as ONE matmul;
            # the (N, 2*Cin) operand is assembled as a lane-dense slab in VMEM scratch.
            cin = x.shape[1]
            deg = jnp.dot(A, mask, preferred_element_type=f32)            # alive in-neighbors
            agg = jnp.dot(A, x, preferred_element_type=f32) / jnp.maximum(deg, 1.0)
            cat_scr[:, 0:cin] = agg
            cat_scr[:, cin:2 * cin] = x
            h = jnp.dot(cat_scr[:, 0:2 * cin], sage_w[layer][...],
                        preferred_element_type=f32)
        else:
            # GCNConv: relu(D^-1/2 (A+I) D^-1/2 (x W) + b), computed as
            #   dinv * (A @ (dinv * xW)) + xW / deg
            # so no N x N identity / normalized adjacency is ever materialized.
            xw = jnp.dot(x, gcn_w[layer - 3][...], preferred_element_type=f32)
            deg = jnp.dot(A, mask, preferred_element_type=f32) + 1.0      # alive nbrs + self loop
            dinv = lax.rsqrt(deg)
            h = dinv * jnp.dot(A, dinv * xw, preferred_element_type=f32) + xw / deg
        h = jnp.maximum(h + bconv_ref[layer:layer + 1, :], 0.0)           # (N, C)

        # ------------------------------------------------- TopKPooling(ratio)
        # score = tanh(x . w / ||w||); keep the ceil(ratio * n) best alive nodes per graph
        # (rank < ratio * n  <=>  rank < ceil(ratio * n) since rank is an integer).
        # TODO(synk): PyG compacts the graph (x[perm], filter_adj); emulated with a keep mask.
        pw_col = pwn_ref[:, layer:layer + 1]                              # (C, 1), pre-normalized
        s_col = jnp.tanh(jnp.dot(h, pw_col, preferred_element_type=f32))  # (N, 1)
        ss_col = jnp.where(mask > 0.0, s_col, _NEG)                       # dead nodes -> -inf
        ss_row = col_to_row(ss_col)                                       # exact (1, N) copy
        beats = (ss_row > ss_col) | ((ss_row == ss_col) & (idx_c < idx_r))
        rank = jnp.sum(jnp.where(beats, sg, 0.0), axis=1, keepdims=True)  # (N, 1)
        n_pg = jnp.dot(boh, mask, preferred_element_type=f32)             # (G, 1) alive per graph
        k_node = ratio * jnp.dot(boht, n_pg, preferred_element_type=f32)  # (N, 1)
        keep = jnp.where((rank < k_node) & (mask > 0.0), 1.0, 0.0)

        x = h * s_col * keep            # survivors gated by tanh(score); dropped nodes -> 0
        mask = keep
        # A stays untouched: dropped nodes have zero features and are excluded from degree
        # counts via `A @ mask`, which matches PyG's filter_adj for the surviving nodes and
        # avoids rewriting the N x N adjacency every layer.

        # --------------------------------------- readout: global max + mean pool
        sums = jnp.dot(boh, x, preferred_element_type=f32)                # (G, C)
        counts = jnp.dot(boh, keep, preferred_element_type=f32)           # (G, 1)
        gap_sum = gap_sum + sums / jnp.maximum(counts, 1.0)
        gmp = jnp.full((G, C), _NEG, f32)
        for g in range(G):              # G is tiny; assembled into one (G, C) slab
            sel = (boht[:, g:g + 1] * keep) > 0.0                         # (N, 1)
            row = jnp.max(jnp.where(sel, x, _NEG), axis=0, keepdims=True)  # (1, C)
            gmp = jnp.where(row_of_g == g, row, gmp)
        gmp_sum = gmp_sum + gmp

    # ----------------------------------------------------------------- MLP head
    # lin1 consumes cat([gmp, gap]); implemented by splitting W1 into its gmp / gap halves
    # (no lane-dim concat).  F.dropout(p=0.0) is the identity.
    h1 = (jnp.dot(gmp_sum, l1w_ref[0:C, :], preferred_element_type=f32)
          + jnp.dot(gap_sum, l1w_ref[C:2 * C, :], preferred_element_type=f32)
          + l1b_ref[...])
    h1 = jnp.maximum(h1, 0.0)
    h2 = jnp.maximum(jnp.dot(h1, l2w_ref[...], preferred_element_type=f32)
                     + l2b_ref[...], 0.0)
    o_ref[...] = jnp.dot(h2, l3w_ref[...], preferred_element_type=f32) + l3b_ref[...]


# ----------------------------------------------------------------------------
# Full forward pass = ONE pallas_call.
# ----------------------------------------------------------------------------
def forward(params, x_raw, A, batch_oh):
    N = x_raw.shape[0]
    G = batch_oh.shape[0]
    C = params['gcn3_w'].shape[0]                    # conv_width

    x2 = x_raw[:, 2:4]                               # x = x[:, [2, 3]]
    boht = batch_oh.T

    # Fold SAGE's two weight matrices into one: [agg | x] @ [Wl; Wr].
    sw = [jnp.concatenate([params[f'sage{i}_wl'], params[f'sage{i}_wr']], axis=0)
          for i in range(3)]
    gw = [params[f'gcn{i}_w'] for i in range(3, 6)]
    b_conv = jnp.stack([params[f'sage{i}_b'] for i in range(3)]
                       + [params[f'gcn{i}_b'] for i in range(3, 6)], axis=0)    # (6, C)
    pwn = jnp.stack([params[f'pool{i}_w'] for i in range(6)], axis=1)           # (C, 6)
    pwn = pwn / jnp.sqrt(jnp.sum(pwn * pwn, axis=0, keepdims=True))             # tanh(x.w/||w||)
    l1b = params['lin1_b'].reshape(1, -1)
    l2b = params['lin2_b'].reshape(1, -1)
    l3b = params['lin3_b'].reshape(1, -1)

    inputs = (x2, A, batch_oh, boht,
              sw[0], sw[1], sw[2], gw[0], gw[1], gw[2],
              b_conv, pwn,
              params['lin1_w'], l1b, params['lin2_w'], l2b, params['lin3_w'], l3b)

    kern = functools.partial(_forward_kernel, num_graphs=G, ratio=0.5)
    return pl.pallas_call(
        kern,
        grid=(1,),
        in_specs=[_spec(a.shape) for a in inputs],
        out_specs=_spec((G, 1)),
        out_shape=jax.ShapeDtypeStruct((G, 1), jnp.float32),
        scratch_shapes=[pltpu.VMEM((N, 2 * C), jnp.float32)],
        compiler_params=pltpu.CompilerParams(dimension_semantics=("arbitrary",)),
    )(*inputs)


# ----------------------------------------------------------------------------
# Deterministic parameter init (shapes from AirfoilGCNN.__init__, conv_width=64)
# ----------------------------------------------------------------------------
def init_params(key, conv_width=64):
    keys = iter(jax.random.split(key, 40))

    def dense(shape, fan_in):
        return jax.random.normal(next(keys), shape, jnp.float32) / jnp.sqrt(float(fan_in))

    p = {}
    sage_in = [2, conv_width, conv_width]
    for i, cin in enumerate(sage_in):
        p[f'sage{i}_wl'] = dense((cin, conv_width), cin)
        p[f'sage{i}_wr'] = dense((cin, conv_width), cin)
        p[f'sage{i}_b'] = dense((conv_width,), cin)
    for i in range(3, 6):
        p[f'gcn{i}_w'] = dense((conv_width, conv_width), conv_width)
        p[f'gcn{i}_b'] = dense((conv_width,), conv_width)
    for i in range(6):
        p[f'pool{i}_w'] = dense((conv_width,), conv_width)
    p['lin1_w'] = dense((2 * conv_width, 128), 2 * conv_width)
    p['lin1_b'] = dense((128,), 2 * conv_width)
    p['lin2_w'] = dense((128, 64), 128)
    p['lin2_b'] = dense((64,), 128)
    p['lin3_w'] = dense((64, 1), 64)
    p['lin3_b'] = dense((1,), 64)
    return p


# ----------------------------------------------------------------------------
if __name__ == "__main__":
    N = 32            # total nodes
    G = 2             # graphs in the batch (16 nodes each)
    NODE_FEATS = 5    # data.x columns (forward only uses columns [2, 3])

    key = jax.random.PRNGKey(0)
    k_x, k_adj, k_par = jax.random.split(key, 3)

    # Node features.
    x_raw = jax.random.normal(k_x, (N, NODE_FEATS), jnp.float32)

    # Batch assignment: first 16 nodes -> graph 0, last 16 -> graph 1.
    batch = jnp.concatenate([jnp.zeros((N // 2,), jnp.int32),
                             jnp.ones((N // 2,), jnp.int32)])
    batch_oh = jax.nn.one_hot(batch, G, dtype=jnp.float32).T       # (G, N)

    # Dense symmetric adjacency, block-diagonal per graph, no self loops.
    same_graph = (batch_oh.T @ batch_oh) > 0
    probs = jax.random.uniform(k_adj, (N, N))
    A = (probs < 0.25) & same_graph
    A = A | A.T
    A = A & (~jnp.eye(N, dtype=bool))
    A = A.astype(jnp.float32)                                      # A[i, j] = edge j -> i

    params = init_params(k_par, conv_width=64)

    fwd = jax.jit(forward)
    out = fwd(params, x_raw, A, batch_oh)
    out = jax.block_until_ready(out)

    assert out.shape == (G, 1)
    assert bool(jnp.all(jnp.isfinite(out)))
    print("KERNEL_OK")
</pallas_src>

<mosaic_0001>
module attributes {stable_mosaic.version = 11 : i64} {
  func.func @_forward_kernel(%arg0: i32, %arg1: memref<32x2xf32, #tpu.memory_space<vmem>>, %arg2: memref<32x32xf32, #tpu.memory_space<vmem>>, %arg3: memref<2x32xf32, #tpu.memory_space<vmem>>, %arg4: memref<32x2xf32, #tpu.memory_space<vmem>>, %arg5: memref<4x64xf32, #tpu.memory_space<vmem>>, %arg6: memref<128x64xf32, #tpu.memory_space<vmem>>, %arg7: memref<128x64xf32, #tpu.memory_space<vmem>>, %arg8: memref<64x64xf32, #tpu.memory_space<vmem>>, %arg9: memref<64x64xf32, #tpu.memory_space<vmem>>, %arg10: memref<64x64xf32, #tpu.memory_space<vmem>>, %arg11: memref<6x64xf32, #tpu.memory_space<vmem>>, %arg12: memref<64x6xf32, #tpu.memory_space<vmem>>, %arg13: memref<128x128xf32, #tpu.memory_space<vmem>>, %arg14: memref<1x128xf32, #tpu.memory_space<vmem>>, %arg15: memref<128x64xf32, #tpu.memory_space<vmem>>, %arg16: memref<1x64xf32, #tpu.memory_space<vmem>>, %arg17: memref<64x1xf32, #tpu.memory_space<vmem>>, %arg18: memref<1x1xf32, #tpu.memory_space<vmem>>, %arg19: memref<2x1xf32, #tpu.memory_space<vmem>>, %arg20: memref<32x128xf32, #tpu.memory_space<vmem>>) attributes {dimension_semantics = [#tpu.dimension_semantics<arbitrary>], iteration_bounds = array<i64: 1>, scalar_prefetch = 0 : i64, scratch_operands = 1 : i64, tpu.core_type = #tpu.core_type<tc>, window_params = [{pipeline_mode = #tpu.pipeline_mode<synchronous>, transform_indices = @transform_0, window_bounds = array<i64: 32, 2>}, {pipeline_mode = #tpu.pipeline_mode<synchronous>, transform_indices = @transform_1, window_bounds = array<i64: 32, 32>}, {pipeline_mode = #tpu.pipeline_mode<synchronous>, transform_indices = @transform_2, window_bounds = array<i64: 2, 32>}, {pipeline_mode = #tpu.pipeline_mode<synchronous>, transform_indices = @transform_3, window_bounds = array<i64: 32, 2>}, {pipeline_mode = #tpu.pipeline_mode<synchronous>, transform_indices = @transform_4, window_bounds = array<i64: 4, 64>}, {pipeline_mode = #tpu.pipeline_mode<synchronous>, transform_indices = @transform_5, window_bounds = array<i64: 128, 64>}, {pipeline_mode = #tpu.pipeline_mode<synchronous>, transform_indices = @transform_6, window_bounds = array<i64: 128, 64>}, {pipeline_mode = #tpu.pipeline_mode<synchronous>, transform_indices = @transform_7, window_bounds = array<i64: 64, 64>}, {pipeline_mode = #tpu.pipeline_mode<synchronous>, transform_indices = @transform_8, window_bounds = array<i64: 64, 64>}, {pipeline_mode = #tpu.pipeline_mode<synchronous>, transform_indices = @transform_9, window_bounds = array<i64: 64, 64>}, {pipeline_mode = #tpu.pipeline_mode<synchronous>, transform_indices = @transform_10, window_bounds = array<i64: 6, 64>}, {pipeline_mode = #tpu.pipeline_mode<synchronous>, transform_indices = @transform_11, window_bounds = array<i64: 64, 6>}, {pipeline_mode = #tpu.pipeline_mode<synchronous>, transform_indices = @transform_12, window_bounds = array<i64: 128, 128>}, {pipeline_mode = #tpu.pipeline_mode<synchronous>, transform_indices = @transform_13, window_bounds = array<i64: 1, 128>}, {pipeline_mode = #tpu.pipeline_mode<synchronous>, transform_indices = @transform_14, window_bounds = array<i64: 128, 64>}, {pipeline_mode = #tpu.pipeline_mode<synchronous>, transform_indices = @transform_15, window_bounds = array<i64: 1, 64>}, {pipeline_mode = #tpu.pipeline_mode<synchronous>, transform_indices = @transform_16, window_bounds = array<i64: 64, 1>}, {pipeline_mode = #tpu.pipeline_mode<synchronous>, transform_indices = @transform_17, window_bounds = array<i64: 1, 1>}, {pipeline_mode = #tpu.pipeline_mode<synchronous>, transform_indices = @transform_18, window_bounds = array<i64: 2, 1>}]} {
    %c0 = arith.constant 0 : index
    %c0_0 = arith.constant 0 : index
    %0 = vector.load %arg1[%c0, %c0_0] : memref<32x2xf32, #tpu.memory_space<vmem>>, vector<32x2xf32>
    %c0_1 = arith.constant 0 : index
    %c0_2 = arith.constant 0 : index
    %1 = vector.load %arg2[%c0_1, %c0_2] : memref<32x32xf32, #tpu.memory_space<vmem>>, vector<32x32xf32>
    %c0_3 = arith.constant 0 : index
    %c0_4 = arith.constant 0 : index
    %2 = vector.load %arg3[%c0_3, %c0_4] : memref<2x32xf32, #tpu.memory_space<vmem>>, vector<2x32xf32>
    %c0_5 = arith.constant 0 : index
    %c0_6 = arith.constant 0 : index
    %3 = vector.load %arg4[%c0_5, %c0_6] : memref<32x2xf32, #tpu.memory_space<vmem>>, vector<32x2xf32>
    %cst = arith.constant dense<0.000000e+00> : vector<32x32xf32>
    %4 = tpu.matmul %3, %2, %cst {dimension_numbers = #tpu.dot_dimension_numbers<[1], [0], [0], [1], [0, 0, 1, 1], [], []>} : vector<32x2xf32>, vector<2x32xf32>, vector<32x32xf32> -> vector<32x32xf32>
    %5 = tpu.iota {dimensions = array<i32: 0>} : vector<32x32xi32>
    %6 = tpu.iota {dimensions = array<i32: 1>} : vector<32x32xi32>
    %7 = arith.cmpi eq, %5, %6 : vector<32x32xi32>
    %8 = tpu.iota {dimensions = array<i32: 0>} : vector<2x64xi32>
    %cst_7 = arith.constant 1.000000e+00 : f32
    %9 = vector.broadcast %cst_7 : f32 to vector<32x1xf32>
    %cst_8 = arith.constant 0.000000e+00 : f32
    %10 = vector.broadcast %cst_8 : f32 to vector<2x64xf32>
    %cst_9 = arith.constant 0.000000e+00 : f32
    %11 = vector.broadcast %cst_9 : f32 to vector<2x64xf32>
    %cst_10 = arith.constant dense<0.000000e+00> : vector<32x1xf32>
    %12 = tpu.matmul %1, %9, %cst_10 {dimension_numbers = #tpu.dot_dimension_numbers<[1], [0], [0], [1], [0, 0, 1, 1], [], []>} : vector<32x32xf32>, vector<32x1xf32>, vector<32x1xf32> -> vector<32x1xf32>
    %cst_11 = arith.constant dense<0.000000e+00> : vector<32x2xf32>
    %13 = tpu.matmul %1, %0, %cst_11 {dimension_numbers = #tpu.dot_dimension_numbers<[1], [0], [0], [1], [0, 0, 1, 1], [], []>} : vector<32x32xf32>, vector<32x2xf32>, vector<32x2xf32> -> vector<32x2xf32>
    %cst_12 = arith.constant 1.000000e+00 : f32
    %14 = vector.broadcast %cst_12 : f32 to vector<32x1xf32>
    %15 = arith.maximumf %12, %14 : vector<32x1xf32>
    %16 = vector.broadcast %15 : vector<32x1xf32> to vector<32x2xf32>
    %17 = arith.divf %13, %16 : vector<32x2xf32>
    %c0_13 = arith.constant 0 : index
    %c0_14 = arith.constant 0 : index
    %18 = vector.load %arg20[%c0_13, %c0_14] : memref<32x128xf32, #tpu.memory_space<vmem>>, vector<32x2xf32>
    tpu.vector_store %arg20[%c0_13, %c0_14], %17 {strides = array<i32>} : memref<32x128xf32, #tpu.memory_space<vmem>>, vector<32x2xf32>,
    %c0_15 = arith.constant 0 : index
    %c2 = arith.constant 2 : index
    %19 = vector.load %arg20[%c0_15, %c2] : memref<32x128xf32, #tpu.memory_space<vmem>>, vector<32x2xf32>
    tpu.vector_store %arg20[%c0_15, %c2], %0 {strides = array<i32>} : memref<32x128xf32, #tpu.memory_space<vmem>>, vector<32x2xf32>,
    %c0_16 = arith.constant 0 : index
    %c0_17 = arith.constant 0 : index
    %20 = vector.load %arg20[%c0_16, %c0_17] : memref<32x128xf32, #tpu.memory_space<vmem>>, vector<32x4xf32>
    %c0_18 = arith.constant 0 : index
    %c0_19 = arith.constant 0 : index
    %21 = vector.load %arg5[%c0_18, %c0_19] : memref<4x64xf32, #tpu.memory_space<vmem>>, vector<4x64xf32>
    %cst_20 = arith.constant dense<0.000000e+00> : vector<32x64xf32>
    %22 = tpu.matmul %20, %21, %cst_20 {dimension_numbers = #tpu.dot_dimension_numbers<[1], [0], [0], [1], [0, 0, 1, 1], [], []>} : vector<32x4xf32>, vector<4x64xf32>, vector<32x64xf32> -> vector<32x64xf32>
    %c0_21 = arith.constant 0 : index
    %c0_22 = arith.constant 0 : index
    %23 = vector.load %arg11[%c0_21, %c0_22] : memref<6x64xf32, #tpu.memory_space<vmem>>, vector<1x64xf32>
    %24 = vector.broadcast %23 : vector<1x64xf32> to vector<32x64xf32>
    %25 = arith.addf %22, %24 : vector<32x64xf32>
    %cst_23 = arith.constant 0.000000e+00 : f32
    %26 = vector.broadcast %cst_23 : f32 to vector<32x64xf32>
    %27 = arith.maximumf %25, %26 : vector<32x64xf32>
    %c0_24 = arith.constant 0 : index
    %c0_25 = arith.constant 0 : index
    %28 = vector.load %arg12[%c0_24, %c0_25] : memref<64x6xf32, #tpu.memory_space<vmem>>, vector<64x1xf32>
    %cst_26 = arith.constant dense<0.000000e+00> : vector<32x1xf32>
    %29 = tpu.matmul %27, %28, %cst_26 {dimension_numbers = #tpu.dot_dimension_numbers<[1], [0], [0], [1], [0, 0, 1, 1], [], []>} : vector<32x64xf32>, vector<64x1xf32>, vector<32x1xf32> -> vector<32x1xf32>
    %30 = math.tanh %29 : vector<32x1xf32>
    %cst_27 = arith.constant 0.000000e+00 : f32
    %31 = vector.broadcast %cst_27 : f32 to vector<32x1xf32>
    %32 = arith.cmpf ogt, %9, %31 : vector<32x1xf32>
    %cst_28 = arith.constant -1.000000e+30 : f32
    %33 = vector.broadcast %cst_28 : f32 to vector<32x1xf32>
    %34 = arith.select %32, %30, %33 : vector<32x1xi1>, vector<32x1xf32>
    %cst_29 = arith.constant 0.000000e+00 : f32
    %35 = vector.shape_cast %34 : vector<32x1xf32> to vector<32x1xf32>
    %36 = vector.broadcast %35 : vector<32x1xf32> to vector<32x32xf32>
    %37 = vector.broadcast %cst_29 : f32 to vector<32x32xf32>
    %38 = arith.select %7, %36, %37 : vector<32x32xi1>, vector<32x32xf32>
    %cst_30 = arith.constant dense<0.000000e+00> : vector<32xf32>
    %39 = vector.multi_reduction <add>, %38, %cst_30 [0] : vector<32x32xf32> to vector<32xf32>
    %40 = vector.shape_cast %39 : vector<32xf32> to vector<1x32xf32>
    %41 = vector.broadcast %40 : vector<1x32xf32> to vector<32x32xf32>
    %42 = vector.broadcast %34 : vector<32x1xf32> to vector<32x32xf32>
    %43 = arith.cmpf ogt, %41, %42 : vector<32x32xf32>
    %44 = vector.broadcast %40 : vector<1x32xf32> to vector<32x32xf32>
    %45 = vector.broadcast %34 : vector<32x1xf32> to vector<32x32xf32>
    %46 = arith.cmpf oeq, %44, %45 : vector<32x32xf32>
    %47 = arith.cmpi slt, %6, %5 : vector<32x32xi32>
    %48 = arith.andi %46, %47 : vector<32x32xi1>
    %49 = arith.ori %43, %48 : vector<32x32xi1>
    %cst_31 = arith.constant 0.000000e+00 : f32
    %50 = vector.broadcast %cst_31 : f32 to vector<32x32xf32>
    %51 = arith.select %49, %4, %50 : vector<32x32xi1>, vector<32x32xf32>
    %cst_32 = arith.constant dense<0.000000e+00> : vector<32xf32>
    %52 = vector.multi_reduction <add>, %51, %cst_32 [1] : vector<32x32xf32> to vector<32xf32>
    %53 = vector.shape_cast %52 : vector<32xf32> to vector<32x1xf32>
    %cst_33 = arith.constant dense<0.000000e+00> : vector<2x1xf32>
    %54 = tpu.matmul %2, %9, %cst_33 {dimension_numbers = #tpu.dot_dimension_numbers<[1], [0], [0], [1], [0, 0, 1, 1], [], []>} : vector<2x32xf32>, vector<32x1xf32>, vector<2x1xf32> -> vector<2x1xf32>
    %cst_34 = arith.constant dense<0.000000e+00> : vector<32x1xf32>
    %55 = tpu.matmul %3, %54, %cst_34 {dimension_numbers = #tpu.dot_dimension_numbers<[1], [0], [0], [1], [0, 0, 1, 1], [], []>} : vector<32x2xf32>, vector<2x1xf32>, vector<32x1xf32> -> vector<32x1xf32>
    %cst_35 = arith.constant 5.000000e-01 : f32
    %56 = vector.broadcast %cst_35 : f32 to vector<32x1xf32>
    %57 = arith.mulf %56, %55 : vector<32x1xf32>
    %58 = arith.cmpf olt, %53, %57 : vector<32x1xf32>
    %cst_36 = arith.constant 0.000000e+00 : f32
    %59 = vector.broadcast %cst_36 : f32 to vector<32x1xf32>
    %60 = arith.cmpf ogt, %9, %59 : vector<32x1xf32>
    %61 = arith.andi %58, %60 : vector<32x1xi1>
    %cst_37 = arith.constant 1.000000e+00 : f32
    %cst_38 = arith.constant 0.000000e+00 : f32
    %62 = vector.broadcast %cst_37 : f32 to vector<32x1xf32>
    %63 = vector.broadcast %cst_38 : f32 to vector<32x1xf32>
    %64 = arith.select %61, %62, %63 : vector<32x1xi1>, vector<32x1xf32>
    %65 = vector.broadcast %30 : vector<32x1xf32> to vector<32x64xf32>
    %66 = arith.mulf %27, %65 : vector<32x64xf32>
    %67 = vector.broadcast %64 : vector<32x1xf32> to vector<32x64xf32>
    %68 = arith.mulf %66, %67 : vector<32x64xf32>
    %cst_39 = arith.constant dense<0.000000e+00> : vector<2x64xf32>
    %69 = tpu.matmul %2, %68, %cst_39 {dimension_numbers = #tpu.dot_dimension_numbers<[1], [0], [0], [1], [0, 0, 1, 1], [], []>} : vector<2x32xf32>, vector<32x64xf32>, vector<2x64xf32> -> vector<2x64xf32>
    %cst_40 = arith.constant dense<0.000000e+00> : vector<2x1xf32>
    %70 = tpu.matmul %2, %64, %cst_40 {dimension_numbers = #tpu.dot_dimension_numbers<[1], [0], [0], [1], [0, 0, 1, 1], [], []>} : vector<2x32xf32>, vector<32x1xf32>, vector<2x1xf32> -> vector<2x1xf32>
    %cst_41 = arith.constant 1.000000e+00 : f32
    %71 = vector.broadcast %cst_41 : f32 to vector<2x1xf32>
    %72 = arith.maximumf %70, %71 : vector<2x1xf32>
    %73 = vector.broadcast %72 : vector<2x1xf32> to vector<2x64xf32>
    %74 = arith.divf %69, %73 : vector<2x64xf32>
    %75 = arith.addf %11, %74 : vector<2x64xf32>
    %cst_42 = arith.constant -1.000000e+30 : f32
    %76 = vector.broadcast %cst_42 : f32 to vector<2x64xf32>
    %77 = vector.extract_strided_slice %3 {offsets = [0, 0], sizes = [32, 1], strides = [1, 1]} : vector<32x2xf32> to vector<32x1xf32>
    %78 = arith.mulf %77, %64 : vector<32x1xf32>
    %cst_43 = arith.constant 0.000000e+00 : f32
    %79 = vector.broadcast %cst_43 : f32 to vector<32x1xf32>
    %80 = arith.cmpf ogt, %78, %79 : vector<32x1xf32>
    %cst_44 = arith.constant -1.000000e+30 : f32
    %81 = vector.shape_cast %80 : vector<32x1xi1> to vector<32x1xi1>
    %82 = vector.broadcast %81 : vector<32x1xi1> to vector<32x64xi1>
    %83 = vector.broadcast %cst_44 : f32 to vector<32x64xf32>
    %84 = arith.select %82, %68, %83 : vector<32x64xi1>, vector<32x64xf32>
    %cst_45 = arith.constant dense<0xFF800000> : vector<64xf32>
    %85 = vector.multi_reduction <maximumf>, %84, %cst_45 [0] : vector<32x64xf32> to vector<64xf32>
    %86 = vector.shape_cast %85 : vector<64xf32> to vector<1x64xf32>
    %c0_i32 = arith.constant 0 : i32
    %87 = vector.broadcast %c0_i32 : i32 to vector<2x64xi32>
    %88 = arith.cmpi eq, %8, %87 : vector<2x64xi32>
    %89 = vector.shape_cast %86 : vector<1x64xf32> to vector<1x64xf32>
    %90 = vector.broadcast %89 : vector<1x64xf32> to vector<2x64xf32>
    %91 = arith.select %88, %90, %76 : vector<2x64xi1>, vector<2x64xf32>
    %92 = vector.extract_strided_slice %3 {offsets = [0, 1], sizes = [32, 1], strides = [1, 1]} : vector<32x2xf32> to vector<32x1xf32>
    %93 = arith.mulf %92, %64 : vector<32x1xf32>
    %cst_46 = arith.constant 0.000000e+00 : f32
    %94 = vector.broadcast %cst_46 : f32 to vector<32x1xf32>
    %95 = arith.cmpf ogt, %93, %94 : vector<32x1xf32>
    %cst_47 = arith.constant -1.000000e+30 : f32
    %96 = vector.shape_cast %95 : vector<32x1xi1> to vector<32x1xi1>
    %97 = vector.broadcast %96 : vector<32x1xi1> to vector<32x64xi1>
    %98 = vector.broadcast %cst_47 : f32 to vector<32x64xf32>
    %99 = arith.select %97, %68, %98 : vector<32x64xi1>, vector<32x64xf32>
    %cst_48 = arith.constant dense<0xFF800000> : vector<64xf32>
    %100 = vector.multi_reduction <maximumf>, %99, %cst_48 [0] : vector<32x64xf32> to vector<64xf32>
    %101 = vector.shape_cast %100 : vector<64xf32> to vector<1x64xf32>
    %c1_i32 = arith.constant 1 : i32
    %102 = vector.broadcast %c1_i32 : i32 to vector<2x64xi32>
    %103 = arith.cmpi eq, %8, %102 : vector<2x64xi32>
    %104 = vector.shape_cast %101 : vector<1x64xf32> to vector<1x64xf32>
    %105 = vector.broadcast %104 : vector<1x64xf32> to vector<2x64xf32>
    %106 = arith.select %103, %105, %91 : vector<2x64xi1>, vector<2x64xf32>
    %107 = arith.addf %10, %106 : vector<2x64xf32>
    %cst_49 = arith.constant dense<0.000000e+00> : vector<32x1xf32>
    %108 = tpu.matmul %1, %64, %cst_49 {dimension_numbers = #tpu.dot_dimension_numbers<[1], [0], [0], [1], [0, 0, 1, 1], [], []>} : vector<32x32xf32>, vector<32x1xf32>, vector<32x1xf32> -> vector<32x1xf32>
    %cst_50 = arith.constant dense<0.000000e+00> : vector<32x64xf32>
    %109 = tpu.matmul %1, %68, %cst_50 {dimension_numbers = #tpu.dot_dimension_numbers<[1], [0], [0], [1], [0, 0, 1, 1], [], []>} : vector<32x32xf32>, vector<32x64xf32>, vector<32x64xf32> -> vector<32x64xf32>
    %cst_51 = arith.constant 1.000000e+00 : f32
    %110 = vector.broadcast %cst_51 : f32 to vector<32x1xf32>
    %111 = arith.maximumf %108, %110 : vector<32x1xf32>
    %112 = vector.broadcast %111 : vector<32x1xf32> to vector<32x64xf32>
    %113 = arith.divf %109, %112 : vector<32x64xf32>
    %c0_52 = arith.constant 0 : index
    %c0_53 = arith.constant 0 : index
    %114 = vector.load %arg20[%c0_52, %c0_53] : memref<32x128xf32, #tpu.memory_space<vmem>>, vector<32x64xf32>
    tpu.vector_store %arg20[%c0_52, %c0_53], %113 {strides = array<i32>} : memref<32x128xf32, #tpu.memory_space<vmem>>, vector<32x64xf32>,
    %c0_54 = arith.constant 0 : index
    %c64 = arith.constant 64 : index
    %115 = vector.load %arg20[%c0_54, %c64] : memref<32x128xf32, #tpu.memory_space<vmem>>, vector<32x64xf32>
    tpu.vector_store %arg20[%c0_54, %c64], %68 {strides = array<i32>} : memref<32x128xf32, #tpu.memory_space<vmem>>, vector<32x64xf32>,
    %c0_55 = arith.constant 0 : index
    %c0_56 = arith.constant 0 : index
    %116 = vector.load %arg20[%c0_55, %c0_56] : memref<32x128xf32, #tpu.memory_space<vmem>>, vector<32x128xf32>
    %c0_57 = arith.constant 0 : index
    %c0_58 = arith.constant 0 : index
    %117 = vector.load %arg6[%c0_57, %c0_58] : memref<128x64xf32, #tpu.memory_space<vmem>>, vector<128x64xf32>
    %cst_59 = arith.constant dense<0.000000e+00> : vector<32x64xf32>
    %118 = tpu.matmul %116, %117, %cst_59 {dimension_numbers = #tpu.dot_dimension_numbers<[1], [0], [0], [1], [0, 0, 1, 1], [], []>} : vector<32x128xf32>, vector<128x64xf32>, vector<32x64xf32> -> vector<32x64xf32>
    %c1 = arith.constant 1 : index
    %c0_60 = arith.constant 0 : index
    %119 = vector.load %arg11[%c1, %c0_60] : memref<6x64xf32, #tpu.memory_space<vmem>>, vector<1x64xf32>
    %120 = vector.broadcast %119 : vector<1x64xf32> to vector<32x64xf32>
    %121 = arith.addf %118, %120 : vector<32x64xf32>
    %cst_61 = arith.constant 0.000000e+00 : f32
    %122 = vector.broadcast %cst_61 : f32 to vector<32x64xf32>
    %123 = arith.maximumf %121, %122 : vector<32x64xf32>
    %c0_62 = arith.constant 0 : index
    %c1_63 = arith.constant 1 : index
    %124 = vector.load %arg12[%c0_62, %c1_63] : memref<64x6xf32, #tpu.memory_space<vmem>>, vector<64x1xf32>
    %cst_64 = arith.constant dense<0.000000e+00> : vector<32x1xf32>
    %125 = tpu.matmul %123, %124, %cst_64 {dimension_numbers = #tpu.dot_dimension_numbers<[1], [0], [0], [1], [0, 0, 1, 1], [], []>} : vector<32x64xf32>, vector<64x1xf32>, vector<32x1xf32> -> vector<32x1xf32>
    %126 = math.tanh %125 : vector<32x1xf32>
    %cst_65 = arith.constant 0.000000e+00 : f32
    %127 = vector.broadcast %cst_65 : f32 to vector<32x1xf32>
    %128 = arith.cmpf ogt, %64, %127 : vector<32x1xf32>
    %cst_66 = arith.constant -1.000000e+30 : f32
    %129 = vector.broadcast %cst_66 : f32 to vector<32x1xf32>
    %130 = arith.select %128, %126, %129 : vector<32x1xi1>, vector<32x1xf32>
    %cst_67 = arith.constant 0.000000e+00 : f32
    %131 = vector.shape_cast %130 : vector<32x1xf32> to vector<32x1xf32>
    %132 = vector.broadcast %131 : vector<32x1xf32> to vector<32x32xf32>
    %133 = vector.broadcast %cst_67 : f32 to vector<32x32xf32>
    %134 = arith.select %7, %132, %133 : vector<32x32xi1>, vector<32x32xf32>
    %cst_68 = arith.constant dense<0.000000e+00> : vector<32xf32>
    %135 = vector.multi_reduction <add>, %134, %cst_68 [0] : vector<32x32xf32> to vector<32xf32>
    %136 = vector.shape_cast %135 : vector<32xf32> to vector<1x32xf32>
    %137 = vector.broadcast %136 : vector<1x32xf32> to vector<32x32xf32>
    %138 = vector.broadcast %130 : vector<32x1xf32> to vector<32x32xf32>
    %139 = arith.cmpf ogt, %137, %138 : vector<32x32xf32>
    %140 = vector.broadcast %136 : vector<1x32xf32> to vector<32x32xf32>
    %141 = vector.broadcast %130 : vector<32x1xf32> to vector<32x32xf32>
    %142 = arith.cmpf oeq, %140, %141 : vector<32x32xf32>
    %143 = arith.cmpi slt, %6, %5 : vector<32x32xi32>
    %144 = arith.andi %142, %143 : vector<32x32xi1>
    %145 = arith.ori %139, %144 : vector<32x32xi1>
    %cst_69 = arith.constant 0.000000e+00 : f32
    %146 = vector.broadcast %cst_69 : f32 to vector<32x32xf32>
    %147 = arith.select %145, %4, %146 : vector<32x32xi1>, vector<32x32xf32>
    %cst_70 = arith.constant dense<0.000000e+00> : vector<32xf32>
    %148 = vector.multi_reduction <add>, %147, %cst_70 [1] : vector<32x32xf32> to vector<32xf32>
    %149 = vector.shape_cast %148 : vector<32xf32> to vector<32x1xf32>
    %cst_71 = arith.constant dense<0.000000e+00> : vector<2x1xf32>
    %150 = tpu.matmul %2, %64, %cst_71 {dimension_numbers = #tpu.dot_dimension_numbers<[1], [0], [0], [1], [0, 0, 1, 1], [], []>} : vector<2x32xf32>, vector<32x1xf32>, vector<2x1xf32> -> vector<2x1xf32>
    %cst_72 = arith.constant dense<0.000000e+00> : vector<32x1xf32>
    %151 = tpu.matmul %3, %150, %cst_72 {dimension_numbers = #tpu.dot_dimension_numbers<[1], [0], [0], [1], [0, 0, 1, 1], [], []>} : vector<32x2xf32>, vector<2x1xf32>, vector<32x1xf32> -> vector<32x1xf32>
    %cst_73 = arith.constant 5.000000e-01 : f32
    %152 = vector.broadcast %cst_73 : f32 to vector<32x1xf32>
    %153 = arith.mulf %152, %151 : vector<32x1xf32>
    %154 = arith.cmpf olt, %149, %153 : vector<32x1xf32>
    %cst_74 = arith.constant 0.000000e+00 : f32
    %155 = vector.broadcast %cst_74 : f32 to vector<32x1xf32>
    %156 = arith.cmpf ogt, %64, %155 : vector<32x1xf32>
    %157 = arith.andi %154, %156 : vector<32x1xi1>
    %cst_75 = arith.constant 1.000000e+00 : f32
    %cst_76 = arith.constant 0.000000e+00 : f32
    %158 = vector.broadcast %cst_75 : f32 to vector<32x1xf32>
    %159 = vector.broadcast %cst_76 : f32 to vector<32x1xf32>
    %160 = arith.select %157, %158, %159 : vector<32x1xi1>, vector<32x1xf32>
    %161 = vector.broadcast %126 : vector<32x1xf32> to vector<32x64xf32>
    %162 = arith.mulf %123, %161 : vector<32x64xf32>
    %163 = vector.broadcast %160 : vector<32x1xf32> to vector<32x64xf32>
    %164 = arith.mulf %162, %163 : vector<32x64xf32>
    %cst_77 = arith.constant dense<0.000000e+00> : vector<2x64xf32>
    %165 = tpu.matmul %2, %164, %cst_77 {dimension_numbers = #tpu.dot_dimension_numbers<[1], [0], [0], [1], [0, 0, 1, 1], [], []>} : vector<2x32xf32>, vector<32x64xf32>, vector<2x64xf32> -> vector<2x64xf32>
    %cst_78 = arith.constant dense<0.000000e+00> : vector<2x1xf32>
    %166 = tpu.matmul %2, %160, %cst_78 {dimension_numbers = #tpu.dot_dimension_numbers<[1], [0], [0], [1], [0, 0, 1, 1], [], []>} : vector<2x32xf32>, vector<32x1xf32>, vector<2x1xf32> -> vector<2x1xf32>
    %cst_79 = arith.constant 1.000000e+00 : f32
    %167 = vector.broadcast %cst_79 : f32 to vector<2x1xf32>
    %168 = arith.maximumf %166, %167 : vector<2x1xf32>
    %169 = vector.broadcast %168 : vector<2x1xf32> to vector<2x64xf32>
    %170 = arith.divf %165, %169 : vector<2x64xf32>
    %171 = arith.addf %75, %170 : vector<2x64xf32>
    %cst_80 = arith.constant -1.000000e+30 : f32
    %172 = vector.broadcast %cst_80 : f32 to vector<2x64xf32>
    %173 = vector.extract_strided_slice %3 {offsets = [0, 0], sizes = [32, 1], strides = [1, 1]} : vector<32x2xf32> to vector<32x1xf32>
    %174 = arith.mulf %173, %160 : vector<32x1xf32>
    %cst_81 = arith.constant 0.000000e+00 : f32
    %175 = vector.broadcast %cst_81 : f32 to vector<32x1xf32>
    %176 = arith.cmpf ogt, %174, %175 : vector<32x1xf32>
    %cst_82 = arith.constant -1.000000e+30 : f32
    %177 = vector.shape_cast %176 : vector<32x1xi1> to vector<32x1xi1>
    %178 = vector.broadcast %177 : vector<32x1xi1> to vector<32x64xi1>
    %179 = vector.broadcast %cst_82 : f32 to vector<32x64xf32>
    %180 = arith.select %178, %164, %179 : vector<32x64xi1>, vector<32x64xf32>
    %cst_83 = arith.constant dense<0xFF800000> : vector<64xf32>
    %181 = vector.multi_reduction <maximumf>, %180, %cst_83 [0] : vector<32x64xf32> to vector<64xf32>
    %182 = vector.shape_cast %181 : vector<64xf32> to vector<1x64xf32>
    %c0_i32_84 = arith.constant 0 : i32
    %183 = vector.broadcast %c0_i32_84 : i32 to vector<2x64xi32>
    %184 = arith.cmpi eq, %8, %183 : vector<2x64xi32>
    %185 = vector.shape_cast %182 : vector<1x64xf32> to vector<1x64xf32>
    %186 = vector.broadcast %185 : vector<1x64xf32> to vector<2x64xf32>
    %187 = arith.select %184, %186, %172 : vector<2x64xi1>, vector<2x64xf32>
    %188 = vector.extract_strided_slice %3 {offsets = [0, 1], sizes = [32, 1], strides = [1, 1]} : vector<32x2xf32> to vector<32x1xf32>
    %189 = arith.mulf %188, %160 : vector<32x1xf32>
    %cst_85 = arith.constant 0.000000e+00 : f32
    %190 = vector.broadcast %cst_85 : f32 to vector<32x1xf32>
    %191 = arith.cmpf ogt, %189, %190 : vector<32x1xf32>
    %cst_86 = arith.constant -1.000000e+30 : f32
    %192 = vector.shape_cast %191 : vector<32x1xi1> to vector<32x1xi1>
    %193 = vector.broadcast %192 : vector<32x1xi1> to vector<32x64xi1>
    %194 = vector.broadcast %cst_86 : f32 to vector<32x64xf32>
    %195 = arith.select %193, %164, %194 : vector<32x64xi1>, vector<32x64xf32>
    %cst_87 = arith.constant dense<0xFF800000> : vector<64xf32>
    %196 = vector.multi_reduction <maximumf>, %195, %cst_87 [0] : vector<32x64xf32> to vector<64xf32>
    %197 = vector.shape_cast %196 : vector<64xf32> to vector<1x64xf32>
    %c1_i32_88 = arith.constant 1 : i32
    %198 = vector.broadcast %c1_i32_88 : i32 to vector<2x64xi32>
    %199 = arith.cmpi eq, %8, %198 : vector<2x64xi32>
    %200 = vector.shape_cast %197 : vector<1x64xf32> to vector<1x64xf32>
    %201 = vector.broadcast %200 : vector<1x64xf32> to vector<2x64xf32>
    %202 = arith.select %199, %201, %187 : vector<2x64xi1>, vector<2x64xf32>
    %203 = arith.addf %107, %202 : vector<2x64xf32>
    %cst_89 = arith.constant dense<0.000000e+00> : vector<32x1xf32>
    %204 = tpu.matmul %1, %160, %cst_89 {dimension_numbers = #tpu.dot_dimension_numbers<[1], [0], [0], [1], [0, 0, 1, 1], [], []>} : vector<32x32xf32>, vector<32x1xf32>, vector<32x1xf32> -> vector<32x1xf32>
    %cst_90 = arith.constant dense<0.000000e+00> : vector<32x64xf32>
    %205 = tpu.matmul %1, %164, %cst_90 {dimension_numbers = #tpu.dot_dimension_numbers<[1], [0], [0], [1], [0, 0, 1, 1], [], []>} : vector<32x32xf32>, vector<32x64xf32>, vector<32x64xf32> -> vector<32x64xf32>
    %cst_91 = arith.constant 1.000000e+00 : f32
    %206 = vector.broadcast %cst_91 : f32 to vector<32x1xf32>
    %207 = arith.maximumf %204, %206 : vector<32x1xf32>
    %208 = vector.broadcast %207 : vector<32x1xf32> to vector<32x64xf32>
    %209 = arith.divf %205, %208 : vector<32x64xf32>
    %c0_92 = arith.constant 0 : index
    %c0_93 = arith.constant 0 : index
    %210 = vector.load %arg20[%c0_92, %c0_93] : memref<32x128xf32, #tpu.memory_space<vmem>>, vector<32x64xf32>
    tpu.vector_store %arg20[%c0_92, %c0_93], %209 {strides = array<i32>} : memref<32x128xf32, #tpu.memory_space<vmem>>, vector<32x64xf32>,
    %c0_94 = arith.constant 0 : index
    %c64_95 = arith.constant 64 : index
    %211 = vector.load %arg20[%c0_94, %c64_95] : memref<32x128xf32, #tpu.memory_space<vmem>>, vector<32x64xf32>
    tpu.vector_store %arg20[%c0_94, %c64_95], %164 {strides = array<i32>} : memref<32x128xf32, #tpu.memory_space<vmem>>, vector<32x64xf32>,
    %c0_96 = arith.constant 0 : index
    %c0_97 = arith.constant 0 : index
    %212 = vector.load %arg20[%c0_96, %c0_97] : memref<32x128xf32, #tpu.memory_space<vmem>>, vector<32x128xf32>
    %c0_98 = arith.constant 0 : index
    %c0_99 = arith.constant 0 : index
    %213 = vector.load %arg7[%c0_98, %c0_99] : memref<128x64xf32, #tpu.memory_space<vmem>>, vector<128x64xf32>
    %cst_100 = arith.constant dense<0.000000e+00> : vector<32x64xf32>
    %214 = tpu.matmul %212, %213, %cst_100 {dimension_numbers = #tpu.dot_dimension_numbers<[1], [0], [0], [1], [0, 0, 1, 1], [], []>} : vector<32x128xf32>, vector<128x64xf32>, vector<32x64xf32> -> vector<32x64xf32>
    %c2_101 = arith.constant 2 : index
    %c0_102 = arith.constant 0 : index
    %215 = vector.load %arg11[%c2_101, %c0_102] : memref<6x64xf32, #tpu.memory_space<vmem>>, vector<1x64xf32>
    %216 = vector.broadcast %215 : vector<1x64xf32> to vector<32x64xf32>
    %217 = arith.addf %214, %216 : vector<32x64xf32>
    %cst_103 = arith.constant 0.000000e+00 : f32
    %218 = vector.broadcast %cst_103 : f32 to vector<32x64xf32>
    %219 = arith.maximumf %217, %218 : vector<32x64xf32>
    %c0_104 = arith.constant 0 : index
    %c2_105 = arith.constant 2 : index
    %220 = vector.load %arg12[%c0_104, %c2_105] : memref<64x6xf32, #tpu.memory_space<vmem>>, vector<64x1xf32>
    %cst_106 = arith.constant dense<0.000000e+00> : vector<32x1xf32>
    %221 = tpu.matmul %219, %220, %cst_106 {dimension_numbers = #tpu.dot_dimension_numbers<[1], [0], [0], [1], [0, 0, 1, 1], [], []>} : vector<32x64xf32>, vector<64x1xf32>, vector<32x1xf32> -> vector<32x1xf32>
    %222 = math.tanh %221 : vector<32x1xf32>
    %cst_107 = arith.constant 0.000000e+00 : f32
    %223 = vector.broadcast %cst_107 : f32 to vector<32x1xf32>
    %224 = arith.cmpf ogt, %160, %223 : vector<32x1xf32>
    %cst_108 = arith.constant -1.000000e+30 : f32
    %225 = vector.broadcast %cst_108 : f32 to vector<32x1xf32>
    %226 = arith.select %224, %222, %225 : vector<32x1xi1>, vector<32x1xf32>
    %cst_109 = arith.constant 0.000000e+00 : f32
    %227 = vector.shape_cast %226 : vector<32x1xf32> to vector<32x1xf32>
    %228 = vector.broadcast %227 : vector<32x1xf32> to vector<32x32xf32>
    %229 = vector.broadcast %cst_109 : f32 to vector<32x32xf32>
    %230 = arith.select %7, %228, %229 : vector<32x32xi1>, vector<32x32xf32>
    %cst_110 = arith.constant dense<0.000000e+00> : vector<32xf32>
    %231 = vector.multi_reduction <add>, %230, %cst_110 [0] : vector<32x32xf32> to vector<32xf32>
    %232 = vector.shape_cast %231 : vector<32xf32> to vector<1x32xf32>
    %233 = vector.broadcast %232 : vector<1x32xf32> to vector<32x32xf32>
    %234 = vector.broadcast %226 : vector<32x1xf32> to vector<32x32xf32>
    %235 = arith.cmpf ogt, %233, %234 : vector<32x32xf32>
    %236 = vector.broadcast %232 : vector<1x32xf32> to vector<32x32xf32>
    %237 = vector.broadcast %226 : vector<32x1xf32> to vector<32x32xf32>
    %238 = arith.cmpf oeq, %236, %237 : vector<32x32xf32>
    %239 = arith.cmpi slt, %6, %5 : vector<32x32xi32>
    %240 = arith.andi %238, %239 : vector<32x32xi1>
    %241 = arith.ori %235, %240 : vector<32x32xi1>
    %cst_111 = arith.constant 0.000000e+00 : f32
    %242 = vector.broadcast %cst_111 : f32 to vector<32x32xf32>
    %243 = arith.select %241, %4, %242 : vector<32x32xi1>, vector<32x32xf32>
    %cst_112 = arith.constant dense<0.000000e+00> : vector<32xf32>
    %244 = vector.multi_reduction <add>, %243, %cst_112 [1] : vector<32x32xf32> to vector<32xf32>
    %245 = vector.shape_cast %244 : vector<32xf32> to vector<32x1xf32>
    %cst_113 = arith.constant dense<0.000000e+00> : vector<2x1xf32>
    %246 = tpu.matmul %2, %160, %cst_113 {dimension_numbers = #tpu.dot_dimension_numbers<[1], [0], [0], [1], [0, 0, 1, 1], [], []>} : vector<2x32xf32>, vector<32x1xf32>, vector<2x1xf32> -> vector<2x1xf32>
    %cst_114 = arith.constant dense<0.000000e+00> : vector<32x1xf32>
    %247 = tpu.matmul %3, %246, %cst_114 {dimension_numbers = #tpu.dot_dimension_numbers<[1], [0], [0], [1], [0, 0, 1, 1], [], []>} : vector<32x2xf32>, vector<2x1xf32>, vector<32x1xf32> -> vector<32x1xf32>
    %cst_115 = arith.constant 5.000000e-01 : f32
    %248 = vector.broadcast %cst_115 : f32 to vector<32x1xf32>
    %249 = arith.mulf %248, %247 : vector<32x1xf32>
    %250 = arith.cmpf olt, %245, %249 : vector<32x1xf32>
    %cst_116 = arith.constant 0.000000e+00 : f32
    %251 = vector.broadcast %cst_116 : f32 to vector<32x1xf32>
    %252 = arith.cmpf ogt, %160, %251 : vector<32x1xf32>
    %253 = arith.andi %250, %252 : vector<32x1xi1>
    %cst_117 = arith.constant 1.000000e+00 : f32
    %cst_118 = arith.constant 0.000000e+00 : f32
    %254 = vector.broadcast %cst_117 : f32 to vector<32x1xf32>
    %255 = vector.broadcast %cst_118 : f32 to vector<32x1xf32>
    %256 = arith.select %253, %254, %255 : vector<32x1xi1>, vector<32x1xf32>
    %257 = vector.broadcast %222 : vector<32x1xf32> to vector<32x64xf32>
    %258 = arith.mulf %219, %257 : vector<32x64xf32>
    %259 = vector.broadcast %256 : vector<32x1xf32> to vector<32x64xf32>
    %260 = arith.mulf %258, %259 : vector<32x64xf32>
    %cst_119 = arith.constant dense<0.000000e+00> : vector<2x64xf32>
    %261 = tpu.matmul %2, %260, %cst_119 {dimension_numbers = #tpu.dot_dimension_numbers<[1], [0], [0], [1], [0, 0, 1, 1], [], []>} : vector<2x32xf32>, vector<32x64xf32>, vector<2x64xf32> -> vector<2x64xf32>
    %cst_120 = arith.constant dense<0.000000e+00> : vector<2x1xf32>
    %262 = tpu.matmul %2, %256, %cst_120 {dimension_numbers = #tpu.dot_dimension_numbers<[1], [0], [0], [1], [0, 0, 1, 1], [], []>} : vector<2x32xf32>, vector<32x1xf32>, vector<2x1xf32> -> vector<2x1xf32>
    %cst_121 = arith.constant 1.000000e+00 : f32
    %263 = vector.broadcast %cst_121 : f32 to vector<2x1xf32>
    %264 = arith.maximumf %262, %263 : vector<2x1xf32>
    %265 = vector.broadcast %264 : vector<2x1xf32> to vector<2x64xf32>
    %266 = arith.divf %261, %265 : vector<2x64xf32>
    %267 = arith.addf %171, %266 : vector<2x64xf32>
    %cst_122 = arith.constant -1.000000e+30 : f32
    %268 = vector.broadcast %cst_122 : f32 to vector<2x64xf32>
    %269 = vector.extract_strided_slice %3 {offsets = [0, 0], sizes = [32, 1], strides = [1, 1]} : vector<32x2xf32> to vector<32x1xf32>
    %270 = arith.mulf %269, %256 : vector<32x1xf32>
    %cst_123 = arith.constant 0.000000e+00 : f32
    %271 = vector.broadcast %cst_123 : f32 to vector<32x1xf32>
    %272 = arith.cmpf ogt, %270, %271 : vector<32x1xf32>
    %cst_124 = arith.constant -1.000000e+30 : f32
    %273 = vector.shape_cast %272 : vector<32x1xi1> to vector<32x1xi1>
    %274 = vector.broadcast %273 : vector<32x1xi1> to vector<32x64xi1>
    %275 = vector.broadcast %cst_124 : f32 to vector<32x64xf32>
    %276 = arith.select %274, %260, %275 : vector<32x64xi1>, vector<32x64xf32>
    %cst_125 = arith.constant dense<0xFF800000> : vector<64xf32>
    %277 = vector.multi_reduction <maximumf>, %276, %cst_125 [0] : vector<32x64xf32> to vector<64xf32>
    %278 = vector.shape_cast %277 : vector<64xf32> to vector<1x64xf32>
    %c0_i32_126 = arith.constant 0 : i32
    %279 = vector.broadcast %c0_i32_126 : i32 to vector<2x64xi32>
    %280 = arith.cmpi eq, %8, %279 : vector<2x64xi32>
    %281 = vector.shape_cast %278 : vector<1x64xf32> to vector<1x64xf32>
    %282 = vector.broadcast %281 : vector<1x64xf32> to vector<2x64xf32>
    %283 = arith.select %280, %282, %268 : vector<2x64xi1>, vector<2x64xf32>
    %284 = vector.extract_strided_slice %3 {offsets = [0, 1], sizes = [32, 1], strides = [1, 1]} : vector<32x2xf32> to vector<32x1xf32>
    %285 = arith.mulf %284, %256 : vector<32x1xf32>
    %cst_127 = arith.constant 0.000000e+00 : f32
    %286 = vector.broadcast %cst_127 : f32 to vector<32x1xf32>
    %287 = arith.cmpf ogt, %285, %286 : vector<32x1xf32>
    %cst_128 = arith.constant -1.000000e+30 : f32
    %288 = vector.shape_cast %287 : vector<32x1xi1> to vector<32x1xi1>
    %289 = vector.broadcast %288 : vector<32x1xi1> to vector<32x64xi1>
    %290 = vector.broadcast %cst_128 : f32 to vector<32x64xf32>
    %291 = arith.select %289, %260, %290 : vector<32x64xi1>, vector<32x64xf32>
    %cst_129 = arith.constant dense<0xFF800000> : vector<64xf32>
    %292 = vector.multi_reduction <maximumf>, %291, %cst_129 [0] : vector<32x64xf32> to vector<64xf32>
    %293 = vector.shape_cast %292 : vector<64xf32> to vector<1x64xf32>
    %c1_i32_130 = arith.constant 1 : i32
    %294 = vector.broadcast %c1_i32_130 : i32 to vector<2x64xi32>
    %295 = arith.cmpi eq, %8, %294 : vector<2x64xi32>
    %296 = vector.shape_cast %293 : vector<1x64xf32> to vector<1x64xf32>
    %297 = vector.broadcast %296 : vector<1x64xf32> to vector<2x64xf32>
    %298 = arith.select %295, %297, %283 : vector<2x64xi1>, vector<2x64xf32>
    %299 = arith.addf %203, %298 : vector<2x64xf32>
    %c0_131 = arith.constant 0 : index
    %c0_132 = arith.constant 0 : index
    %300 = vector.load %arg8[%c0_131, %c0_132] : memref<64x64xf32, #tpu.memory_space<vmem>>, vector<64x64xf32>
    %cst_133 = arith.constant dense<0.000000e+00> : vector<32x64xf32>
    %301 = tpu.matmul %260, %300, %cst_133 {dimension_numbers = #tpu.dot_dimension_numbers<[1], [0], [0], [1], [0, 0, 1, 1], [], []>} : vector<32x64xf32>, vector<64x64xf32>, vector<32x64xf32> -> vector<32x64xf32>
    %cst_134 = arith.constant dense<0.000000e+00> : vector<32x1xf32>
    %302 = tpu.matmul %1, %256, %cst_134 {dimension_numbers = #tpu.dot_dimension_numbers<[1], [0], [0], [1], [0, 0, 1, 1], [], []>} : vector<32x32xf32>, vector<32x1xf32>, vector<32x1xf32> -> vector<32x1xf32>
    %cst_135 = arith.constant 1.000000e+00 : f32
    %303 = vector.broadcast %cst_135 : f32 to vector<32x1xf32>
    %304 = arith.addf %302, %303 : vector<32x1xf32>
    %305 = math.rsqrt %304 : vector<32x1xf32>
    %306 = vector.broadcast %305 : vector<32x1xf32> to vector<32x64xf32>
    %307 = arith.mulf %306, %301 : vector<32x64xf32>
    %cst_136 = arith.constant dense<0.000000e+00> : vector<32x64xf32>
    %308 = tpu.matmul %1, %307, %cst_136 {dimension_numbers = #tpu.dot_dimension_numbers<[1], [0], [0], [1], [0, 0, 1, 1], [], []>} : vector<32x32xf32>, vector<32x64xf32>, vector<32x64xf32> -> vector<32x64xf32>
    %309 = vector.broadcast %305 : vector<32x1xf32> to vector<32x64xf32>
    %310 = arith.mulf %309, %308 : vector<32x64xf32>
    %311 = vector.broadcast %304 : vector<32x1xf32> to vector<32x64xf32>
    %312 = arith.divf %301, %311 : vector<32x64xf32>
    %313 = arith.addf %310, %312 : vector<32x64xf32>
    %c3 = arith.constant 3 : index
    %c0_137 = arith.constant 0 : index
    %314 = vector.load %arg11[%c3, %c0_137] : memref<6x64xf32, #tpu.memory_space<vmem>>, vector<1x64xf32>
    %315 = vector.broadcast %314 : vector<1x64xf32> to vector<32x64xf32>
    %316 = arith.addf %313, %315 : vector<32x64xf32>
    %cst_138 = arith.constant 0.000000e+00 : f32
    %317 = vector.broadcast %cst_138 : f32 to vector<32x64xf32>
    %318 = arith.maximumf %316, %317 : vector<32x64xf32>
    %c0_139 = arith.constant 0 : index
    %c3_140 = arith.constant 3 : index
    %319 = vector.load %arg12[%c0_139, %c3_140] : memref<64x6xf32, #tpu.memory_space<vmem>>, vector<64x1xf32>
    %cst_141 = arith.constant dense<0.000000e+00> : vector<32x1xf32>
    %320 = tpu.matmul %318, %319, %cst_141 {dimension_numbers = #tpu.dot_dimension_numbers<[1], [0], [0], [1], [0, 0, 1, 1], [], []>} : vector<32x64xf32>, vector<64x1xf32>, vector<32x1xf32> -> vector<32x1xf32>
    %321 = math.tanh %320 : vector<32x1xf32>
    %cst_142 = arith.constant 0.000000e+00 : f32
    %322 = vector.broadcast %cst_142 : f32 to vector<32x1xf32>
    %323 = arith.cmpf ogt, %256, %322 : vector<32x1xf32>
    %cst_143 = arith.constant -1.000000e+30 : f32
    %324 = vector.broadcast %cst_143 : f32 to vector<32x1xf32>
    %325 = arith.select %323, %321, %324 : vector<32x1xi1>, vector<32x1xf32>
    %cst_144 = arith.constant 0.000000e+00 : f32
    %326 = vector.shape_cast %325 : vector<32x1xf32> to vector<32x1xf32>
    %327 = vector.broadcast %326 : vector<32x1xf32> to vector<32x32xf32>
    %328 = vector.broadcast %cst_144 : f32 to vector<32x32xf32>
    %329 = arith.select %7, %327, %328 : vector<32x32xi1>, vector<32x32xf32>
    %cst_145 = arith.constant dense<0.000000e+00> : vector<32xf32>
    %330 = vector.multi_reduction <add>, %329, %cst_145 [0] : vector<32x32xf32> to vector<32xf32>
    %331 = vector.shape_cast %330 : vector<32xf32> to vector<1x32xf32>
    %332 = vector.broadcast %331 : vector<1x32xf32> to vector<32x32xf32>
    %333 = vector.broadcast %325 : vector<32x1xf32> to vector<32x32xf32>
    %334 = arith.cmpf ogt, %332, %333 : vector<32x32xf32>
    %335 = vector.broadcast %331 : vector<1x32xf32> to vector<32x32xf32>
    %336 = vector.broadcast %325 : vector<32x1xf32> to vector<32x32xf32>
    %337 = arith.cmpf oeq, %335, %336 : vector<32x32xf32>
    %338 = arith.cmpi slt, %6, %5 : vector<32x32xi32>
    %339 = arith.andi %337, %338 : vector<32x32xi1>
    %340 = arith.ori %334, %339 : vector<32x32xi1>
    %cst_146 = arith.constant 0.000000e+00 : f32
    %341 = vector.broadcast %cst_146 : f32 to vector<32x32xf32>
    %342 = arith.select %340, %4, %341 : vector<32x32xi1>, vector<32x32xf32>
    %cst_147 = arith.constant dense<0.000000e+00> : vector<32xf32>
    %343 = vector.multi_reduction <add>, %342, %cst_147 [1] : vector<32x32xf32> to vector<32xf32>
    %344 = vector.shape_cast %343 : vector<32xf32> to vector<32x1xf32>
    %cst_148 = arith.constant dense<0.000000e+00> : vector<2x1xf32>
    %345 = tpu.matmul %2, %256, %cst_148 {dimension_numbers = #tpu.dot_dimension_numbers<[1], [0], [0], [1], [0, 0, 1, 1], [], []>} : vector<2x32xf32>, vector<32x1xf32>, vector<2x1xf32> -> vector<2x1xf32>
    %cst_149 = arith.constant dense<0.000000e+00> : vector<32x1xf32>
    %346 = tpu.matmul %3, %345, %cst_149 {dimension_numbers = #tpu.dot_dimension_numbers<[1], [0], [0], [1], [0, 0, 1, 1], [], []>} : vector<32x2xf32>, vector<2x1xf32>, vector<32x1xf32> -> vector<32x1xf32>
    %cst_150 = arith.constant 5.000000e-01 : f32
    %347 = vector.broadcast %cst_150 : f32 to vector<32x1xf32>
    %348 = arith.mulf %347, %346 : vector<32x1xf32>
    %349 = arith.cmpf olt, %344, %348 : vector<32x1xf32>
    %cst_151 = arith.constant 0.000000e+00 : f32
    %350 = vector.broadcast %cst_151 : f32 to vector<32x1xf32>
    %351 = arith.cmpf ogt, %256, %350 : vector<32x1xf32>
    %352 = arith.andi %349, %351 : vector<32x1xi1>
    %cst_152 = arith.constant 1.000000e+00 : f32
    %cst_153 = arith.constant 0.000000e+00 : f32
    %353 = vector.broadcast %cst_152 : f32 to vector<32x1xf32>
    %354 = vector.broadcast %cst_153 : f32 to vector<32x1xf32>
    %355 = arith.select %352, %353, %354 : vector<32x1xi1>, vector<32x1xf32>
    %356 = vector.broadcast %321 : vector<32x1xf32> to vector<32x64xf32>
    %357 = arith.mulf %318, %356 : vector<32x64xf32>
    %358 = vector.broadcast %355 : vector<32x1xf32> to vector<32x64xf32>
    %359 = arith.mulf %357, %358 : vector<32x64xf32>
    %cst_154 = arith.constant dense<0.000000e+00> : vector<2x64xf32>
    %360 = tpu.matmul %2, %359, %cst_154 {dimension_numbers = #tpu.dot_dimension_numbers<[1], [0], [0], [1], [0, 0, 1, 1], [], []>} : vector<2x32xf32>, vector<32x64xf32>, vector<2x64xf32> -> vector<2x64xf32>
    %cst_155 = arith.constant dense<0.000000e+00> : vector<2x1xf32>
    %361 = tpu.matmul %2, %355, %cst_155 {dimension_numbers = #tpu.dot_dimension_numbers<[1], [0], [0], [1], [0, 0, 1, 1], [], []>} : vector<2x32xf32>, vector<32x1xf32>, vector<2x1xf32> -> vector<2x1xf32>
    %cst_156 = arith.constant 1.000000e+00 : f32
    %362 = vector.broadcast %cst_156 : f32 to vector<2x1xf32>
    %363 = arith.maximumf %361, %362 : vector<2x1xf32>
    %364 = vector.broadcast %363 : vector<2x1xf32> to vector<2x64xf32>
    %365 = arith.divf %360, %364 : vector<2x64xf32>
    %366 = arith.addf %267, %365 : vector<2x64xf32>
    %cst_157 = arith.constant -1.000000e+30 : f32
    %367 = vector.broadcast %cst_157 : f32 to vector<2x64xf32>
    %368 = vector.extract_strided_slice %3 {offsets = [0, 0], sizes = [32, 1], strides = [1, 1]} : vector<32x2xf32> to vector<32x1xf32>
    %369 = arith.mulf %368, %355 : vector<32x1xf32>
    %cst_158 = arith.constant 0.000000e+00 : f32
    %370 = vector.broadcast %cst_158 : f32 to vector<32x1xf32>
    %371 = arith.cmpf ogt, %369, %370 : vector<32x1xf32>
    %cst_159 = arith.constant -1.000000e+30 : f32
    %372 = vector.shape_cast %371 : vector<32x1xi1> to vector<32x1xi1>
    %373 = vector.broadcast %372 : vector<32x1xi1> to vector<32x64xi1>
    %374 = vector.broadcast %cst_159 : f32 to vector<32x64xf32>
    %375 = arith.select %373, %359, %374 : vector<32x64xi1>, vector<32x64xf32>
    %cst_160 = arith.constant dense<0xFF800000> : vector<64xf32>
    %376 = vector.multi_reduction <maximumf>, %375, %cst_160 [0] : vector<32x64xf32> to vector<64xf32>
    %377 = vector.shape_cast %376 : vector<64xf32> to vector<1x64xf32>
    %c0_i32_161 = arith.constant 0 : i32
    %378 = vector.broadcast %c0_i32_161 : i32 to vector<2x64xi32>
    %379 = arith.cmpi eq, %8, %378 : vector<2x64xi32>
    %380 = vector.shape_cast %377 : vector<1x64xf32> to vector<1x64xf32>
    %381 = vector.broadcast %380 : vector<1x64xf32> to vector<2x64xf32>
    %382 = arith.select %379, %381, %367 : vector<2x64xi1>, vector<2x64xf32>
    %383 = vector.extract_strided_slice %3 {offsets = [0, 1], sizes = [32, 1], strides = [1, 1]} : vector<32x2xf32> to vector<32x1xf32>
    %384 = arith.mulf %383, %355 : vector<32x1xf32>
    %cst_162 = arith.constant 0.000000e+00 : f32
    %385 = vector.broadcast %cst_162 : f32 to vector<32x1xf32>
    %386 = arith.cmpf ogt, %384, %385 : vector<32x1xf32>
    %cst_163 = arith.constant -1.000000e+30 : f32
    %387 = vector.shape_cast %386 : vector<32x1xi1> to vector<32x1xi1>
    %388 = vector.broadcast %387 : vector<32x1xi1> to vector<32x64xi1>
    %389 = vector.broadcast %cst_163 : f32 to vector<32x64xf32>
    %390 = arith.select %388, %359, %389 : vector<32x64xi1>, vector<32x64xf32>
    %cst_164 = arith.constant dense<0xFF800000> : vector<64xf32>
    %391 = vector.multi_reduction <maximumf>, %390, %cst_164 [0] : vector<32x64xf32> to vector<64xf32>
    %392 = vector.shape_cast %391 : vector<64xf32> to vector<1x64xf32>
    %c1_i32_165 = arith.constant 1 : i32
    %393 = vector.broadcast %c1_i32_165 : i32 to vector<2x64xi32>
    %394 = arith.cmpi eq, %8, %393 : vector<2x64xi32>
    %395 = vector.shape_cast %392 : vector<1x64xf32> to vector<1x64xf32>
    %396 = vector.broadcast %395 : vector<1x64xf32> to vector<2x64xf32>
    %397 = arith.select %394, %396, %382 : vector<2x64xi1>, vector<2x64xf32>
    %398 = arith.addf %299, %397 : vector<2x64xf32>
    %c0_166 = arith.constant 0 : index
    %c0_167 = arith.constant 0 : index
    %399 = vector.load %arg9[%c0_166, %c0_167] : memref<64x64xf32, #tpu.memory_space<vmem>>, vector<64x64xf32>
    %cst_168 = arith.constant dense<0.000000e+00> : vector<32x64xf32>
    %400 = tpu.matmul %359, %399, %cst_168 {dimension_numbers = #tpu.dot_dimension_numbers<[1], [0], [0], [1], [0, 0, 1, 1], [], []>} : vector<32x64xf32>, vector<64x64xf32>, vector<32x64xf32> -> vector<32x64xf32>
    %cst_169 = arith.constant dense<0.000000e+00> : vector<32x1xf32>
    %401 = tpu.matmul %1, %355, %cst_169 {dimension_numbers = #tpu.dot_dimension_numbers<[1], [0], [0], [1], [0, 0, 1, 1], [], []>} : vector<32x32xf32>, vector<32x1xf32>, vector<32x1xf32> -> vector<32x1xf32>
    %cst_170 = arith.constant 1.000000e+00 : f32
    %402 = vector.broadcast %cst_170 : f32 to vector<32x1xf32>
    %403 = arith.addf %401, %402 : vector<32x1xf32>
    %404 = math.rsqrt %403 : vector<32x1xf32>
    %405 = vector.broadcast %404 : vector<32x1xf32> to vector<32x64xf32>
    %406 = arith.mulf %405, %400 : vector<32x64xf32>
    %cst_171 = arith.constant dense<0.000000e+00> : vector<32x64xf32>
    %407 = tpu.matmul %1, %406, %cst_171 {dimension_numbers = #tpu.dot_dimension_numbers<[1], [0], [0], [1], [0, 0, 1, 1], [], []>} : vector<32x32xf32>, vector<32x64xf32>, vector<32x64xf32> -> vector<32x64xf32>
    %408 = vector.broadcast %404 : vector<32x1xf32> to vector<32x64xf32>
    %409 = arith.mulf %408, %407 : vector<32x64xf32>
    %410 = vector.broadcast %403 : vector<32x1xf32> to vector<32x64xf32>
    %411 = arith.divf %400, %410 : vector<32x64xf32>
    %412 = arith.addf %409, %411 : vector<32x64xf32>
    %c4 = arith.constant 4 : index
    %c0_172 = arith.constant 0 : index
    %413 = vector.load %arg11[%c4, %c0_172] : memref<6x64xf32, #tpu.memory_space<vmem>>, vector<1x64xf32>
    %414 = vector.broadcast %413 : vector<1x64xf32> to vector<32x64xf32>
    %415 = arith.addf %412, %414 : vector<32x64xf32>
    %cst_173 = arith.constant 0.000000e+00 : f32
    %416 = vector.broadcast %cst_173 : f32 to vector<32x64xf32>
    %417 = arith.maximumf %415, %416 : vector<32x64xf32>
    %c0_174 = arith.constant 0 : index
    %c4_175 = arith.constant 4 : index
    %418 = vector.load %arg12[%c0_174, %c4_175] : memref<64x6xf32, #tpu.memory_space<vmem>>, vector<64x1xf32>
    %cst_176 = arith.constant dense<0.000000e+00> : vector<32x1xf32>
    %419 = tpu.matmul %417, %418, %cst_176 {dimension_numbers = #tpu.dot_dimension_numbers<[1], [0], [0], [1], [0, 0, 1, 1], [], []>} : vector<32x64xf32>, vector<64x1xf32>, vector<32x1xf32> -> vector<32x1xf32>
    %420 = math.tanh %419 : vector<32x1xf32>
    %cst_177 = arith.constant 0.000000e+00 : f32
    %421 = vector.broadcast %cst_177 : f32 to vector<32x1xf32>
    %422 = arith.cmpf ogt, %355, %421 : vector<32x1xf32>
    %cst_178 = arith.constant -1.000000e+30 : f32
    %423 = vector.broadcast %cst_178 : f32 to vector<32x1xf32>
    %424 = arith.select %422, %420, %423 : vector<32x1xi1>, vector<32x1xf32>
    %cst_179 = arith.constant 0.000000e+00 : f32
    %425 = vector.shape_cast %424 : vector<32x1xf32> to vector<32x1xf32>
    %426 = vector.broadcast %425 : vector<32x1xf32> to vector<32x32xf32>
    %427 = vector.broadcast %cst_179 : f32 to vector<32x32xf32>
    %428 = arith.select %7, %426, %427 : vector<32x32xi1>, vector<32x32xf32>
    %cst_180 = arith.constant dense<0.000000e+00> : vector<32xf32>
    %429 = vector.multi_reduction <add>, %428, %cst_180 [0] : vector<32x32xf32> to vector<32xf32>
    %430 = vector.shape_cast %429 : vector<32xf32> to vector<1x32xf32>
    %431 = vector.broadcast %430 : vector<1x32xf32> to vector<32x32xf32>
    %432 = vector.broadcast %424 : vector<32x1xf32> to vector<32x32xf32>
    %433 = arith.cmpf ogt, %431, %432 : vector<32x32xf32>
    %434 = vector.broadcast %430 : vector<1x32xf32> to vector<32x32xf32>
    %435 = vector.broadcast %424 : vector<32x1xf32> to vector<32x32xf32>
    %436 = arith.cmpf oeq, %434, %435 : vector<32x32xf32>
    %437 = arith.cmpi slt, %6, %5 : vector<32x32xi32>
    %438 = arith.andi %436, %437 : vector<32x32xi1>
    %439 = arith.ori %433, %438 : vector<32x32xi1>
    %cst_181 = arith.constant 0.000000e+00 : f32
    %440 = vector.broadcast %cst_181 : f32 to vector<32x32xf32>
    %441 = arith.select %439, %4, %440 : vector<32x32xi1>, vector<32x32xf32>
    %cst_182 = arith.constant dense<0.000000e+00> : vector<32xf32>
    %442 = vector.multi_reduction <add>, %441, %cst_182 [1] : vector<32x32xf32> to vector<32xf32>
    %443 = vector.shape_cast %442 : vector<32xf32> to vector<32x1xf32>
    %cst_183 = arith.constant dense<0.000000e+00> : vector<2x1xf32>
    %444 = tpu.matmul %2, %355, %cst_183 {dimension_numbers = #tpu.dot_dimension_numbers<[1], [0], [0], [1], [0, 0, 1, 1], [], []>} : vector<2x32xf32>, vector<32x1xf32>, vector<2x1xf32> -> vector<2x1xf32>
    %cst_184 = arith.constant dense<0.000000e+00> : vector<32x1xf32>
    %445 = tpu.matmul %3, %444, %cst_184 {dimension_numbers = #tpu.dot_dimension_numbers<[1], [0], [0], [1], [0, 0, 1, 1], [], []>} : vector<32x2xf32>, vector<2x1xf32>, vector<32x1xf32> -> vector<32x1xf32>
    %cst_185 = arith.constant 5.000000e-01 : f32
    %446 = vector.broadcast %cst_185 : f32 to vector<32x1xf32>
    %447 = arith.mulf %446, %445 : vector<32x1xf32>
    %448 = arith.cmpf olt, %443, %447 : vector<32x1xf32>
    %cst_186 = arith.constant 0.000000e+00 : f32
    %449 = vector.broadcast %cst_186 : f32 to vector<32x1xf32>
    %450 = arith.cmpf ogt, %355, %449 : vector<32x1xf32>
    %451 = arith.andi %448, %450 : vector<32x1xi1>
    %cst_187 = arith.constant 1.000000e+00 : f32
    %cst_188 = arith.constant 0.000000e+00 : f32
    %452 = vector.broadcast %cst_187 : f32 to vector<32x1xf32>
    %453 = vector.broadcast %cst_188 : f32 to vector<32x1xf32>
    %454 = arith.select %451, %452, %453 : vector<32x1xi1>, vector<32x1xf32>
    %455 = vector.broadcast %420 : vector<32x1xf32> to vector<32x64xf32>
    %456 = arith.mulf %417, %455 : vector<32x64xf32>
    %457 = vector.broadcast %454 : vector<32x1xf32> to vector<32x64xf32>
    %458 = arith.mulf %456, %457 : vector<32x64xf32>
    %cst_189 = arith.constant dense<0.000000e+00> : vector<2x64xf32>
    %459 = tpu.matmul %2, %458, %cst_189 {dimension_numbers = #tpu.dot_dimension_numbers<[1], [0], [0], [1], [0, 0, 1, 1], [], []>} : vector<2x32xf32>, vector<32x64xf32>, vector<2x64xf32> -> vector<2x64xf32>
    %cst_190 = arith.constant dense<0.000000e+00> : vector<2x1xf32>
    %460 = tpu.matmul %2, %454, %cst_190 {dimension_numbers = #tpu.dot_dimension_numbers<[1], [0], [0], [1], [0, 0, 1, 1], [], []>} : vector<2x32xf32>, vector<32x1xf32>, vector<2x1xf32> -> vector<2x1xf32>
    %cst_191 = arith.constant 1.000000e+00 : f32
    %461 = vector.broadcast %cst_191 : f32 to vector<2x1xf32>
    %462 = arith.maximumf %460, %461 : vector<2x1xf32>
    %463 = vector.broadcast %462 : vector<2x1xf32> to vector<2x64xf32>
    %464 = arith.divf %459, %463 : vector<2x64xf32>
    %465 = arith.addf %366, %464 : vector<2x64xf32>
    %cst_192 = arith.constant -1.000000e+30 : f32
    %466 = vector.broadcast %cst_192 : f32 to vector<2x64xf32>
    %467 = vector.extract_strided_slice %3 {offsets = [0, 0], sizes = [32, 1], strides = [1, 1]} : vector<32x2xf32> to vector<32x1xf32>
    %468 = arith.mulf %467, %454 : vector<32x1xf32>
    %cst_193 = arith.constant 0.000000e+00 : f32
    %469 = vector.broadcast %cst_193 : f32 to vector<32x1xf32>
    %470 = arith.cmpf ogt, %468, %469 : vector<32x1xf32>
    %cst_194 = arith.constant -1.000000e+30 : f32
    %471 = vector.shape_cast %470 : vector<32x1xi1> to vector<32x1xi1>
    %472 = vector.broadcast %471 : vector<32x1xi1> to vector<32x64xi1>
    %473 = vector.broadcast %cst_194 : f32 to vector<32x64xf32>
    %474 = arith.select %472, %458, %473 : vector<32x64xi1>, vector<32x64xf32>
    %cst_195 = arith.constant dense<0xFF800000> : vector<64xf32>
    %475 = vector.multi_reduction <maximumf>, %474, %cst_195 [0] : vector<32x64xf32> to vector<64xf32>
    %476 = vector.shape_cast %475 : vector<64xf32> to vector<1x64xf32>
    %c0_i32_196 = arith.constant 0 : i32
    %477 = vector.broadcast %c0_i32_196 : i32 to vector<2x64xi32>
    %478 = arith.cmpi eq, %8, %477 : vector<2x64xi32>
    %479 = vector.shape_cast %476 : vector<1x64xf32> to vector<1x64xf32>
    %480 = vector.broadcast %479 : vector<1x64xf32> to vector<2x64xf32>
    %481 = arith.select %478, %480, %466 : vector<2x64xi1>, vector<2x64xf32>
    %482 = vector.extract_strided_slice %3 {offsets = [0, 1], sizes = [32, 1], strides = [1, 1]} : vector<32x2xf32> to vector<32x1xf32>
    %483 = arith.mulf %482, %454 : vector<32x1xf32>
    %cst_197 = arith.constant 0.000000e+00 : f32
    %484 = vector.broadcast %cst_197 : f32 to vector<32x1xf32>
    %485 = arith.cmpf ogt, %483, %484 : vector<32x1xf32>
    %cst_198 = arith.constant -1.000000e+30 : f32
    %486 = vector.shape_cast %485 : vector<32x1xi1> to vector<32x1xi1>
    %487 = vector.broadcast %486 : vector<32x1xi1> to vector<32x64xi1>
    %488 = vector.broadcast %cst_198 : f32 to vector<32x64xf32>
    %489 = arith.select %487, %458, %488 : vector<32x64xi1>, vector<32x64xf32>
    %cst_199 = arith.constant dense<0xFF800000> : vector<64xf32>
    %490 = vector.multi_reduction <maximumf>, %489, %cst_199 [0] : vector<32x64xf32> to vector<64xf32>
    %491 = vector.shape_cast %490 : vector<64xf32> to vector<1x64xf32>
    %c1_i32_200 = arith.constant 1 : i32
    %492 = vector.broadcast %c1_i32_200 : i32 to vector<2x64xi32>
    %493 = arith.cmpi eq, %8, %492 : vector<2x64xi32>
    %494 = vector.shape_cast %491 : vector<1x64xf32> to vector<1x64xf32>
    %495 = vector.broadcast %494 : vector<1x64xf32> to vector<2x64xf32>
    %496 = arith.select %493, %495, %481 : vector<2x64xi1>, vector<2x64xf32>
    %497 = arith.addf %398, %496 : vector<2x64xf32>
    %c0_201 = arith.constant 0 : index
    %c0_202 = arith.constant 0 : index
    %498 = vector.load %arg10[%c0_201, %c0_202] : memref<64x64xf32, #tpu.memory_space<vmem>>, vector<64x64xf32>
    %cst_203 = arith.constant dense<0.000000e+00> : vector<32x64xf32>
    %499 = tpu.matmul %458, %498, %cst_203 {dimension_numbers = #tpu.dot_dimension_numbers<[1], [0], [0], [1], [0, 0, 1, 1], [], []>} : vector<32x64xf32>, vector<64x64xf32>, vector<32x64xf32> -> vector<32x64xf32>
    %cst_204 = arith.constant dense<0.000000e+00> : vector<32x1xf32>
    %500 = tpu.matmul %1, %454, %cst_204 {dimension_numbers = #tpu.dot_dimension_numbers<[1], [0], [0], [1], [0, 0, 1, 1], [], []>} : vector<32x32xf32>, vector<32x1xf32>, vector<32x1xf32> -> vector<32x1xf32>
    %cst_205 = arith.constant 1.000000e+00 : f32
    %501 = vector.broadcast %cst_205 : f32 to vector<32x1xf32>
    %502 = arith.addf %500, %501 : vector<32x1xf32>
    %503 = math.rsqrt %502 : vector<32x1xf32>
    %504 = vector.broadcast %503 : vector<32x1xf32> to vector<32x64xf32>
    %505 = arith.mulf %504, %499 : vector<32x64xf32>
    %cst_206 = arith.constant dense<0.000000e+00> : vector<32x64xf32>
    %506 = tpu.matmul %1, %505, %cst_206 {dimension_numbers = #tpu.dot_dimension_numbers<[1], [0], [0], [1], [0, 0, 1, 1], [], []>} : vector<32x32xf32>, vector<32x64xf32>, vector<32x64xf32> -> vector<32x64xf32>
    %507 = vector.broadcast %503 : vector<32x1xf32> to vector<32x64xf32>
    %508 = arith.mulf %507, %506 : vector<32x64xf32>
    %509 = vector.broadcast %502 : vector<32x1xf32> to vector<32x64xf32>
    %510 = arith.divf %499, %509 : vector<32x64xf32>
    %511 = arith.addf %508, %510 : vector<32x64xf32>
    %c5 = arith.constant 5 : index
    %c0_207 = arith.constant 0 : index
    %512 = vector.load %arg11[%c5, %c0_207] : memref<6x64xf32, #tpu.memory_space<vmem>>, vector<1x64xf32>
    %513 = vector.broadcast %512 : vector<1x64xf32> to vector<32x64xf32>
    %514 = arith.addf %511, %513 : vector<32x64xf32>
    %cst_208 = arith.constant 0.000000e+00 : f32
    %515 = vector.broadcast %cst_208 : f32 to vector<32x64xf32>
    %516 = arith.maximumf %514, %515 : vector<32x64xf32>
    %c0_209 = arith.constant 0 : index
    %c5_210 = arith.constant 5 : index
    %517 = vector.load %arg12[%c0_209, %c5_210] : memref<64x6xf32, #tpu.memory_space<vmem>>, vector<64x1xf32>
    %cst_211 = arith.constant dense<0.000000e+00> : vector<32x1xf32>
    %518 = tpu.matmul %516, %517, %cst_211 {dimension_numbers = #tpu.dot_dimension_numbers<[1], [0], [0], [1], [0, 0, 1, 1], [], []>} : vector<32x64xf32>, vector<64x1xf32>, vector<32x1xf32> -> vector<32x1xf32>
    %519 = math.tanh %518 : vector<32x1xf32>
    %cst_212 = arith.constant 0.000000e+00 : f32
    %520 = vector.broadcast %cst_212 : f32 to vector<32x1xf32>
    %521 = arith.cmpf ogt, %454, %520 : vector<32x1xf32>
    %cst_213 = arith.constant -1.000000e+30 : f32
    %522 = vector.broadcast %cst_213 : f32 to vector<32x1xf32>
    %523 = arith.select %521, %519, %522 : vector<32x1xi1>, vector<32x1xf32>
    %cst_214 = arith.constant 0.000000e+00 : f32
    %524 = vector.shape_cast %523 : vector<32x1xf32> to vector<32x1xf32>
    %525 = vector.broadcast %524 : vector<32x1xf32> to vector<32x32xf32>
    %526 = vector.broadcast %cst_214 : f32 to vector<32x32xf32>
    %527 = arith.select %7, %525, %526 : vector<32x32xi1>, vector<32x32xf32>
    %cst_215 = arith.constant dense<0.000000e+00> : vector<32xf32>
    %528 = vector.multi_reduction <add>, %527, %cst_215 [0] : vector<32x32xf32> to vector<32xf32>
    %529 = vector.shape_cast %528 : vector<32xf32> to vector<1x32xf32>
    %530 = vector.broadcast %529 : vector<1x32xf32> to vector<32x32xf32>
    %531 = vector.broadcast %523 : vector<32x1xf32> to vector<32x32xf32>
    %532 = arith.cmpf ogt, %530, %531 : vector<32x32xf32>
    %533 = vector.broadcast %529 : vector<1x32xf32> to vector<32x32xf32>
    %534 = vector.broadcast %523 : vector<32x1xf32> to vector<32x32xf32>
    %535 = arith.cmpf oeq, %533, %534 : vector<32x32xf32>
    %536 = arith.cmpi slt, %6, %5 : vector<32x32xi32>
    %537 = arith.andi %535, %536 : vector<32x32xi1>
    %538 = arith.ori %532, %537 : vector<32x32xi1>
    %cst_216 = arith.constant 0.000000e+00 : f32
    %539 = vector.broadcast %cst_216 : f32 to vector<32x32xf32>
    %540 = arith.select %538, %4, %539 : vector<32x32xi1>, vector<32x32xf32>
    %cst_217 = arith.constant dense<0.000000e+00> : vector<32xf32>
    %541 = vector.multi_reduction <add>, %540, %cst_217 [1] : vector<32x32xf32> to vector<32xf32>
    %542 = vector.shape_cast %541 : vector<32xf32> to vector<32x1xf32>
    %cst_218 = arith.constant dense<0.000000e+00> : vector<2x1xf32>
    %543 = tpu.matmul %2, %454, %cst_218 {dimension_numbers = #tpu.dot_dimension_numbers<[1], [0], [0], [1], [0, 0, 1, 1], [], []>} : vector<2x32xf32>, vector<32x1xf32>, vector<2x1xf32> -> vector<2x1xf32>
    %cst_219 = arith.constant dense<0.000000e+00> : vector<32x1xf32>
    %544 = tpu.matmul %3, %543, %cst_219 {dimension_numbers = #tpu.dot_dimension_numbers<[1], [0], [0], [1], [0, 0, 1, 1], [], []>} : vector<32x2xf32>, vector<2x1xf32>, vector<32x1xf32> -> vector<32x1xf32>
    %cst_220 = arith.constant 5.000000e-01 : f32
    %545 = vector.broadcast %cst_220 : f32 to vector<32x1xf32>
    %546 = arith.mulf %545, %544 : vector<32x1xf32>
    %547 = arith.cmpf olt, %542, %546 : vector<32x1xf32>
    %cst_221 = arith.constant 0.000000e+00 : f32
    %548 = vector.broadcast %cst_221 : f32 to vector<32x1xf32>
    %549 = arith.cmpf ogt, %454, %548 : vector<32x1xf32>
    %550 = arith.andi %547, %549 : vector<32x1xi1>
    %cst_222 = arith.constant 1.000000e+00 : f32
    %cst_223 = arith.constant 0.000000e+00 : f32
    %551 = vector.broadcast %cst_222 : f32 to vector<32x1xf32>
    %552 = vector.broadcast %cst_223 : f32 to vector<32x1xf32>
    %553 = arith.select %550, %551, %552 : vector<32x1xi1>, vector<32x1xf32>
    %554 = vector.broadcast %519 : vector<32x1xf32> to vector<32x64xf32>
    %555 = arith.mulf %516, %554 : vector<32x64xf32>
    %556 = vector.broadcast %553 : vector<32x1xf32> to vector<32x64xf32>
    %557 = arith.mulf %555, %556 : vector<32x64xf32>
    %cst_224 = arith.constant dense<0.000000e+00> : vector<2x64xf32>
    %558 = tpu.matmul %2, %557, %cst_224 {dimension_numbers = #tpu.dot_dimension_numbers<[1], [0], [0], [1], [0, 0, 1, 1], [], []>} : vector<2x32xf32>, vector<32x64xf32>, vector<2x64xf32> -> vector<2x64xf32>
    %cst_225 = arith.constant dense<0.000000e+00> : vector<2x1xf32>
    %559 = tpu.matmul %2, %553, %cst_225 {dimension_numbers = #tpu.dot_dimension_numbers<[1], [0], [0], [1], [0, 0, 1, 1], [], []>} : vector<2x32xf32>, vector<32x1xf32>, vector<2x1xf32> -> vector<2x1xf32>
    %cst_226 = arith.constant 1.000000e+00 : f32
    %560 = vector.broadcast %cst_226 : f32 to vector<2x1xf32>
    %561 = arith.maximumf %559, %560 : vector<2x1xf32>
    %562 = vector.broadcast %561 : vector<2x1xf32> to vector<2x64xf32>
    %563 = arith.divf %558, %562 : vector<2x64xf32>
    %564 = arith.addf %465, %563 : vector<2x64xf32>
    %cst_227 = arith.constant -1.000000e+30 : f32
    %565 = vector.broadcast %cst_227 : f32 to vector<2x64xf32>
    %566 = vector.extract_strided_slice %3 {offsets = [0, 0], sizes = [32, 1], strides = [1, 1]} : vector<32x2xf32> to vector<32x1xf32>
    %567 = arith.mulf %566, %553 : vector<32x1xf32>
    %cst_228 = arith.constant 0.000000e+00 : f32
    %568 = vector.broadcast %cst_228 : f32 to vector<32x1xf32>
    %569 = arith.cmpf ogt, %567, %568 : vector<32x1xf32>
    %cst_229 = arith.constant -1.000000e+30 : f32
    %570 = vector.shape_cast %569 : vector<32x1xi1> to vector<32x1xi1>
    %571 = vector.broadcast %570 : vector<32x1xi1> to vector<32x64xi1>
    %572 = vector.broadcast %cst_229 : f32 to vector<32x64xf32>
    %573 = arith.select %571, %557, %572 : vector<32x64xi1>, vector<32x64xf32>
    %cst_230 = arith.constant dense<0xFF800000> : vector<64xf32>
    %574 = vector.multi_reduction <maximumf>, %573, %cst_230 [0] : vector<32x64xf32> to vector<64xf32>
    %575 = vector.shape_cast %574 : vector<64xf32> to vector<1x64xf32>
    %c0_i32_231 = arith.constant 0 : i32
    %576 = vector.broadcast %c0_i32_231 : i32 to vector<2x64xi32>
    %577 = arith.cmpi eq, %8, %576 : vector<2x64xi32>
    %578 = vector.shape_cast %575 : vector<1x64xf32> to vector<1x64xf32>
    %579 = vector.broadcast %578 : vector<1x64xf32> to vector<2x64xf32>
    %580 = arith.select %577, %579, %565 : vector<2x64xi1>, vector<2x64xf32>
    %581 = vector.extract_strided_slice %3 {offsets = [0, 1], sizes = [32, 1], strides = [1, 1]} : vector<32x2xf32> to vector<32x1xf32>
    %582 = arith.mulf %581, %553 : vector<32x1xf32>
    %cst_232 = arith.constant 0.000000e+00 : f32
    %583 = vector.broadcast %cst_232 : f32 to vector<32x1xf32>
    %584 = arith.cmpf ogt, %582, %583 : vector<32x1xf32>
    %cst_233 = arith.constant -1.000000e+30 : f32
    %585 = vector.shape_cast %584 : vector<32x1xi1> to vector<32x1xi1>
    %586 = vector.broadcast %585 : vector<32x1xi1> to vector<32x64xi1>
    %587 = vector.broadcast %cst_233 : f32 to vector<32x64xf32>
    %588 = arith.select %586, %557, %587 : vector<32x64xi1>, vector<32x64xf32>
    %cst_234 = arith.constant dense<0xFF800000> : vector<64xf32>
    %589 = vector.multi_reduction <maximumf>, %588, %cst_234 [0] : vector<32x64xf32> to vector<64xf32>
    %590 = vector.shape_cast %589 : vector<64xf32> to vector<1x64xf32>
    %c1_i32_235 = arith.constant 1 : i32
    %591 = vector.broadcast %c1_i32_235 : i32 to vector<2x64xi32>
    %592 = arith.cmpi eq, %8, %591 : vector<2x64xi32>
    %593 = vector.shape_cast %590 : vector<1x64xf32> to vector<1x64xf32>
    %594 = vector.broadcast %593 : vector<1x64xf32> to vector<2x64xf32>
    %595 = arith.select %592, %594, %580 : vector<2x64xi1>, vector<2x64xf32>
    %596 = arith.addf %497, %595 : vector<2x64xf32>
    %c0_236 = arith.constant 0 : index
    %c0_237 = arith.constant 0 : index
    %597 = vector.load %arg13[%c0_236, %c0_237] : memref<128x128xf32, #tpu.memory_space<vmem>>, vector<64x128xf32>
    %cst_238 = arith.constant dense<0.000000e+00> : vector<2x128xf32>
    %598 = tpu.matmul %596, %597, %cst_238 {dimension_numbers = #tpu.dot_dimension_numbers<[1], [0], [0], [1], [0, 0, 1, 1], [], []>} : vector<2x64xf32>, vector<64x128xf32>, vector<2x128xf32> -> vector<2x128xf32>
    %c64_239 = arith.constant 64 : index
    %c0_240 = arith.constant 0 : index
    %599 = vector.load %arg13[%c64_239, %c0_240] : memref<128x128xf32, #tpu.memory_space<vmem>>, vector<64x128xf32>
    %cst_241 = arith.constant dense<0.000000e+00> : vector<2x128xf32>
    %600 = tpu.matmul %564, %599, %cst_241 {dimension_numbers = #tpu.dot_dimension_numbers<[1], [0], [0], [1], [0, 0, 1, 1], [], []>} : vector<2x64xf32>, vector<64x128xf32>, vector<2x128xf32> -> vector<2x128xf32>
    %601 = arith.addf %598, %600 : vector<2x128xf32>
    %c0_242 = arith.constant 0 : index
    %c0_243 = arith.constant 0 : index
    %602 = vector.load %arg14[%c0_242, %c0_243] : memref<1x128xf32, #tpu.memory_space<vmem>>, vector<1x128xf32>
    %603 = vector.broadcast %602 : vector<1x128xf32> to vector<2x128xf32>
    %604 = arith.addf %601, %603 : vector<2x128xf32>
    %cst_244 = arith.constant 0.000000e+00 : f32
    %605 = vector.broadcast %cst_244 : f32 to vector<2x128xf32>
    %606 = arith.maximumf %604, %605 : vector<2x128xf32>
    %c0_245 = arith.constant 0 : index
    %c0_246 = arith.constant 0 : index
    %607 = vector.load %arg15[%c0_245, %c0_246] : memref<128x64xf32, #tpu.memory_space<vmem>>, vector<128x64xf32>
    %cst_247 = arith.constant dense<0.000000e+00> : vector<2x64xf32>
    %608 = tpu.matmul %606, %607, %cst_247 {dimension_numbers = #tpu.dot_dimension_numbers<[1], [0], [0], [1], [0, 0, 1, 1], [], []>} : vector<2x128xf32>, vector<128x64xf32>, vector<2x64xf32> -> vector<2x64xf32>
    %c0_248 = arith.constant 0 : index
    %c0_249 = arith.constant 0 : index
    %609 = vector.load %arg16[%c0_248, %c0_249] : memref<1x64xf32, #tpu.memory_space<vmem>>, vector<1x64xf32>
    %610 = vector.broadcast %609 : vector<1x64xf32> to vector<2x64xf32>
    %611 = arith.addf %608, %610 : vector<2x64xf32>
    %cst_250 = arith.constant 0.000000e+00 : f32
    %612 = vector.broadcast %cst_250 : f32 to vector<2x64xf32>
    %613 = arith.maximumf %611, %612 : vector<2x64xf32>
    %c0_251 = arith.constant 0 : index
    %c0_252 = arith.constant 0 : index
    %614 = vector.load %arg17[%c0_251, %c0_252] : memref<64x1xf32, #tpu.memory_space<vmem>>, vector<64x1xf32>
    %cst_253 = arith.constant dense<0.000000e+00> : vector<2x1xf32>
    %615 = tpu.matmul %613, %614, %cst_253 {dimension_numbers = #tpu.dot_dimension_numbers<[1], [0], [0], [1], [0, 0, 1, 1], [], []>} : vector<2x64xf32>, vector<64x1xf32>, vector<2x1xf32> -> vector<2x1xf32>
    %c0_254 = arith.constant 0 : index
    %c0_255 = arith.constant 0 : index
    %616 = vector.load %arg18[%c0_254, %c0_255] : memref<1x1xf32, #tpu.memory_space<vmem>>, vector<1x1xf32>
    %617 = vector.broadcast %616 : vector<1x1xf32> to vector<2x1xf32>
    %618 = arith.addf %615, %617 : vector<2x1xf32>
    %c0_256 = arith.constant 0 : index
    %c0_257 = arith.constant 0 : index
    %619 = vector.load %arg19[%c0_256, %c0_257] : memref<2x1xf32, #tpu.memory_space<vmem>>, vector<2x1xf32>
    tpu.vector_store %arg19[%c0_256, %c0_257], %618 {strides = array<i32>} : memref<2x1xf32, #tpu.memory_space<vmem>>, vector<2x1xf32>,
    return
  }
  func.func @transform_0(%arg0: i32) -> (i32, i32) {
    %c0_i32 = arith.constant 0 : i32
    %c0_i32_0 = arith.constant 0 : i32
    %c0_i32_1 = arith.constant 0 : i32
    return %c0_i32, %c0_i32_0 : i32, i32
  }
  func.func @transform_1(%arg0: i32) -> (i32, i32) {
    %c0_i32 = arith.constant 0 : i32
    %c0_i32_0 = arith.constant 0 : i32
    %c0_i32_1 = arith.constant 0 : i32
    return %c0_i32, %c0_i32_0 : i32, i32
  }
  func.func @transform_2(%arg0: i32) -> (i32, i32) {
    %c0_i32 = arith.constant 0 : i32
    %c0_i32_0 = arith.constant 0 : i32
    %c0_i32_1 = arith.constant 0 : i32
    return %c0_i32, %c0_i32_0 : i32, i32
  }
  func.func @transform_3(%arg0: i32) -> (i32, i32) {
    %c0_i32 = arith.constant 0 : i32
    %c0_i32_0 = arith.constant 0 : i32
    %c0_i32_1 = arith.constant 0 : i32
    return %c0_i32, %c0_i32_0 : i32, i32
  }
  func.func @transform_4(%arg0: i32) -> (i32, i32) {
    %c0_i32 = arith.constant 0 : i32
    %c0_i32_0 = arith.constant 0 : i32
    %c0_i32_1 = arith.constant 0 : i32
    return %c0_i32, %c0_i32_0 : i32, i32
  }
  func.func @transform_5(%arg0: i32) -> (i32, i32) {
    %c0_i32 = arith.constant 0 : i32
    %c0_i32_0 = arith.constant 0 : i32
    %c0_i32_1 = arith.constant 0 : i32
    return %c0_i32, %c0_i32_0 : i32, i32
  }
  func.func @transform_6(%arg0: i32) -> (i32, i32) {
    %c0_i32 = arith.constant 0 : i32
    %c0_i32_0 = arith.constant 0 : i32
    %c0_i32_1 = arith.constant 0 : i32
    return %c0_i32, %c0_i32_0 : i32, i32
  }
  func.func @transform_7(%arg0: i32) -> (i32, i32) {
    %c0_i32 = arith.constant 0 : i32
    %c0_i32_0 = arith.constant 0 : i32
    %c0_i32_1 = arith.constant 0 : i32
    return %c0_i32, %c0_i32_0 : i32, i32
  }
  func.func @transform_8(%arg0: i32) -> (i32, i32) {
    %c0_i32 = arith.constant 0 : i32
    %c0_i32_0 = arith.constant 0 : i32
    %c0_i32_1 = arith.constant 0 : i32
    return %c0_i32, %c0_i32_0 : i32, i32
  }
  func.func @transform_9(%arg0: i32) -> (i32, i32) {
    %c0_i32 = arith.constant 0 : i32
    %c0_i32_0 = arith.constant 0 : i32
    %c0_i32_1 = arith.constant 0 : i32
    return %c0_i32, %c0_i32_0 : i32, i32
  }
  func.func @transform_10(%arg0: i32) -> (i32, i32) {
    %c0_i32 = arith.constant 0 : i32
    %c0_i32_0 = arith.constant 0 : i32
    %c0_i32_1 = arith.constant 0 : i32
    return %c0_i32, %c0_i32_0 : i32, i32
  }
  func.func @transform_11(%arg0: i32) -> (i32, i32) {
    %c0_i32 = arith.constant 0 : i32
    %c0_i32_0 = arith.constant 0 : i32
    %c0_i32_1 = arith.constant 0 : i32
    return %c0_i32, %c0_i32_0 : i32, i32
  }
  func.func @transform_12(%arg0: i32) -> (i32, i32) {
    %c0_i32 = arith.constant 0 : i32
    %c0_i32_0 = arith.constant 0 : i32
    %c0_i32_1 = arith.constant 0 : i32
    return %c0_i32, %c0_i32_0 : i32, i32
  }
  func.func @transform_13(%arg0: i32) -> (i32, i32) {
    %c0_i32 = arith.constant 0 : i32
    %c0_i32_0 = arith.constant 0 : i32
    %c0_i32_1 = arith.constant 0 : i32
    return %c0_i32, %c0_i32_0 : i32, i32
  }
  func.func @transform_14(%arg0: i32) -> (i32, i32) {
    %c0_i32 = arith.constant 0 : i32
    %c0_i32_0 = arith.constant 0 : i32
    %c0_i32_1 = arith.constant 0 : i32
    return %c0_i32, %c0_i32_0 : i32, i32
  }
  func.func @transform_15(%arg0: i32) -> (i32, i32) {
    %c0_i32 = arith.constant 0 : i32
    %c0_i32_0 = arith.constant 0 : i32
    %c0_i32_1 = arith.constant 0 : i32
    return %c0_i32, %c0_i32_0 : i32, i32
  }
  func.func @transform_16(%arg0: i32) -> (i32, i32) {
    %c0_i32 = arith.constant 0 : i32
    %c0_i32_0 = arith.constant 0 : i32
    %c0_i32_1 = arith.constant 0 : i32
    return %c0_i32, %c0_i32_0 : i32, i32
  }
  func.func @transform_17(%arg0: i32) -> (i32, i32) {
    %c0_i32 = arith.constant 0 : i32
    %c0_i32_0 = arith.constant 0 : i32
    %c0_i32_1 = arith.constant 0 : i32
    return %c0_i32, %c0_i32_0 : i32, i32
  }
  func.func @transform_18(%arg0: i32) -> (i32, i32) {
    %c0_i32 = arith.constant 0 : i32
    %c0_i32_0 = arith.constant 0 : i32
    %c0_i32_1 = arith.constant 0 : i32
    return %c0_i32, %c0_i32_0 : i32, i32
  }
}

</mosaic_0001>

<llo_original>
// kernel: forward.1
$region0: #{forward.1}
  #allocation0 [shape = 'u32[]', space=smem, size = 0x4, offset = 0x4, fixed_abs, tag = 'smem constant byte address 0x4 - core index']
  #allocation1 [shape = 'u32[144,128]{1,0:T(1,128)}', space=vmem, size = 0x12000, scoped, tag = 'internal scratch']
  #allocation2 [shape = 'f32[32,128]{1,0:T(8,128)}', space=vmem, size = 0x4000, scoped, tag = 'scratch operand']
  #allocation3 [shape = 'f32[1,1]{1,0:T(1,128)S(1)}', space=vmem, size = 0x200, scoped, tag = 'scoped memory for forward.1']
  %s0 = inlined_call_operand.vmem [shape: f32[32,2], index: 0, kind: input, shape index: {}]
  %s1 = inlined_call_operand.vmem [shape: f32[32,32], index: 1, kind: input, shape index: {}]
  %s2 = inlined_call_operand.vmem [shape: f32[2,32], index: 2, kind: input, shape index: {}]
  %s3 = inlined_call_operand.vmem [shape: f32[32,2], index: 3, kind: input, shape index: {}]
  %s4 = inlined_call_operand.vmem [shape: f32[4,64], index: 4, kind: input, shape index: {}]
  %s5 = inlined_call_operand.vmem [shape: f32[128,64], index: 5, kind: input, shape index: {}]
  %s6 = inlined_call_operand.vmem [shape: f32[128,64], index: 6, kind: input, shape index: {}]
  %s7 = inlined_call_operand.vmem [shape: f32[64,64], index: 7, kind: input, shape index: {}]
  %s8 = inlined_call_operand.vmem [shape: f32[64,64], index: 8, kind: input, shape index: {}]
  %s9 = inlined_call_operand.vmem [shape: f32[64,64], index: 9, kind: input, shape index: {}]
  %s10 = inlined_call_operand.vmem [shape: f32[6,64], index: 10, kind: input, shape index: {}]
  %s11 = inlined_call_operand.vmem [shape: f32[64,6], index: 11, kind: input, shape index: {}]
  %s12 = inlined_call_operand.vmem [shape: f32[128,128], index: 12, kind: input, shape index: {}]
  %s13 = inlined_call_operand.vmem [shape: f32[1,128], index: 13, kind: input, shape index: {}]
  %s14 = inlined_call_operand.vmem [shape: f32[128,64], index: 14, kind: input, shape index: {}]
  %s15 = inlined_call_operand.vmem [shape: f32[1,64], index: 15, kind: input, shape index: {}]
  %s16 = inlined_call_operand.vmem [shape: f32[64,1], index: 16, kind: input, shape index: {}]
  %s17 = inlined_call_operand.<no memory space> [shape: f32[1,1], index: 17, kind: input, shape index: {}]
  %s18 = inlined_call_operand.vmem [shape: f32[2,1], index: 18, kind: output, shape index: {}]
  %s19 = sld [smem:[#allocation0]]
  $region82: #{forward.1} parent=0
    _
  %s21 = ssub.s32 1, %s19
  %s22 = scalar_select 0, %s21, %s19
  %v23 = vstv %s17
  %24 = vst [vmem:[#allocation3] sm:$0x1] %v23
  // Predicated region
  $region2: #{forward.1} parent=0 // pred_check
    _
  $region3: #{forward.1} parent=0 // pred_check_branch
    %26 = sbr.rel (0) target = $region5
  $region4: #{forward.1} parent=0 // pred_region
    _
  $region5: #{forward.1} parent=0 // pred_fallthru
    _
  // Predicated region
  $region6: #{forward.1} parent=0 // pred_check
    _
  $region7: #{forward.1} parent=0 // pred_check_branch
    %28 = sbr.rel (0) target = $region9
  $region8: #{forward.1} parent=0 // pred_region
    _
  $region9: #{forward.1} parent=0 // pred_fallthru
    _
  // Predicated region
  $region10: #{forward.1} parent=0 // pred_check
    _
  $region11: #{forward.1} parent=0 // pred_check_branch
    %30 = sbr.rel (0) target = $region13
  $region12: #{forward.1} parent=0 // pred_region
    _
  $region13: #{forward.1} parent=0 // pred_fallthru
    _
  // Predicated region
  $region14: #{forward.1} parent=0 // pred_check
    _
  $region15: #{forward.1} parent=0 // pred_check_branch
    %32 = sbr.rel (0) target = $region17
  $region16: #{forward.1} parent=0 // pred_region
    _
  $region17: #{forward.1} parent=0 // pred_fallthru
    _
  // Predicated region
  $region18: #{forward.1} parent=0 // pred_check
    _
  $region19: #{forward.1} parent=0 // pred_check_branch
    %34 = sbr.rel (0) target = $region21
  $region20: #{forward.1} parent=0 // pred_region
    _
  $region21: #{forward.1} parent=0 // pred_fallthru
    _
  // Predicated region
  $region22: #{forward.1} parent=0 // pred_check
    _
  $region23: #{forward.1} parent=0 // pred_check_branch
    %36 = sbr.rel (0) target = $region25
  $region24: #{forward.1} parent=0 // pred_region
    _
  $region25: #{forward.1} parent=0 // pred_fallthru
    _
  // Predicated region
  $region26: #{forward.1} parent=0 // pred_check
    _
  $region27: #{forward.1} parent=0 // pred_check_branch
    %38 = sbr.rel (0) target = $region29
  $region28: #{forward.1} parent=0 // pred_region
    _
  $region29: #{forward.1} parent=0 // pred_fallthru
    _
  // Predicated region
  $region30: #{forward.1} parent=0 // pred_check
    _
  $region31: #{forward.1} parent=0 // pred_check_branch
    %40 = sbr.rel (0) target = $region33
  $region32: #{forward.1} parent=0 // pred_region
    _
  $region33: #{forward.1} parent=0 // pred_fallthru
    _
  // Predicated region
  $region34: #{forward.1} parent=0 // pred_check
    _
  $region35: #{forward.1} parent=0 // pred_check_branch
    %42 = sbr.rel (0) target = $region37
  $region36: #{forward.1} parent=0 // pred_region
    _
  $region37: #{forward.1} parent=0 // pred_fallthru
    _
  // Predicated region
  $region38: #{forward.1} parent=0 // pred_check
    _
  $region39: #{forward.1} parent=0 // pred_check_branch
    %44 = sbr.rel (0) target = $region41
  $region40: #{forward.1} parent=0 // pred_region
    _
  $region41: #{forward.1} parent=0 // pred_fallthru
    _
  // Predicated region
  $region42: #{forward.1} parent=0 // pred_check
    _
  $region43: #{forward.1} parent=0 // pred_check_branch
    %46 = sbr.rel (0) target = $region45
  $region44: #{forward.1} parent=0 // pred_region
    _
  $region45: #{forward.1} parent=0 // pred_fallthru
    _
  // Predicated region
  $region46: #{forward.1} parent=0 // pred_check
    _
  $region47: #{forward.1} parent=0 // pred_check_branch
    %48 = sbr.rel (0) target = $region49
  $region48: #{forward.1} parent=0 // pred_region
    _
  $region49: #{forward.1} parent=0 // pred_fallthru
    _
  // Predicated region
  $region50: #{forward.1} parent=0 // pred_check
    _
  $region51: #{forward.1} parent=0 // pred_check_branch
    %50 = sbr.rel (0) target = $region53
  $region52: #{forward.1} parent=0 // pred_region
    _
  $region53: #{forward.1} parent=0 // pred_fallthru
    _
  // Predicated region
  $region54: #{forward.1} parent=0 // pred_check
    _
  $region55: #{forward.1} parent=0 // pred_check_branch
    %52 = sbr.rel (0) target = $region57
  $region56: #{forward.1} parent=0 // pred_region
    _
  $region57: #{forward.1} parent=0 // pred_fallthru
    _
  // Predicated region
  $region58: #{forward.1} parent=0 // pred_check
    _
  $region59: #{forward.1} parent=0 // pred_check_branch
    %54 = sbr.rel (0) target = $region61
  $region60: #{forward.1} parent=0 // pred_region
    _
  $region61: #{forward.1} parent=0 // pred_fallthru
    _
  // Predicated region
  $region62: #{forward.1} parent=0 // pred_check
    _
  $region63: #{forward.1} parent=0 // pred_check_branch
    %56 = sbr.rel (0) target = $region65
  $region64: #{forward.1} parent=0 // pred_region
    _
  $region65: #{forward.1} parent=0 // pred_fallthru
    _
  // Predicated region
  $region66: #{forward.1} parent=0 // pred_check
    _
  $region67: #{forward.1} parent=0 // pred_check_branch
    %58 = sbr.rel (0) target = $region69
  $region68: #{forward.1} parent=0 // pred_region
    _
  $region69: #{forward.1} parent=0 // pred_fallthru
    _
  // Predicated region
  $region70: #{forward.1} parent=0 // pred_check
    _
  $region71: #{forward.1} parent=0 // pred_check_branch
    %60 = sbr.rel (0) target = $region73
  $region72: #{forward.1} parent=0 // pred_region
    _
  $region73: #{forward.1} parent=0 // pred_fallthru
    _
  %v61 = vld [vmem:[%s0] sm:$0xff]
  %v62 = vld [vmem:[%s0 + $0x8] sm:$0xff]
  %v63 = vld [vmem:[%s0 + $0x10] sm:$0xff]
  %v64 = vld [vmem:[%s0 + $0x18] sm:$0xff]
  %v65 = vld [vmem:[%s1] sm:$0xff]
  %v66 = vld [vmem:[%s1 + $0x8] sm:$0xff]
  %v67 = vld [vmem:[%s1 + $0x10] sm:$0xff]
  %v68 = vld [vmem:[%s1 + $0x18] sm:$0xff]
  %v69 = vld [vmem:[%s2] sm:$0x3]
  %v70 = vld [vmem:[%s3] sm:$0xff]
  %v71 = vld [vmem:[%s3 + $0x8] sm:$0xff]
  %v72 = vld [vmem:[%s3 + $0x10] sm:$0xff]
  %v73 = vld [vmem:[%s3 + $0x18] sm:$0xff]
  %vm74 = vcmask 15360
  %v76 = vsel %vm74, %v70, 0
  %v79 = vsel %vm74, %v71, 0
  %v82 = vsel %vm74, %v72, 0
  %v85 = vsel %vm74, %v73, 0
  %vm87 = vcmask 1041408
  %v89 = vsel %vm87, %v69, 0
  %91 = vmatprep.subr.mxu0 0.0
  %92 = vmatpush1.msra.mxu0 %v89
  %93 = vmatprep.subr.mxu0 0.0
  %94 = vmatpush1.msra.mxu0 0.0
  %95 = vmatprep.subr.mxu0 0.0
  %96 = vmatpush1.msra.mxu0 0.0
  %97 = vmatprep.subr.mxu0 0.0
  %98 = vmatpush1.msra.mxu0 0.0
  %99 = vmatprep.subr.mxu0 0.0
  %100 = vmatpush1.msra.mxu0 0.0
  %101 = vmatprep.subr.mxu0 0.0
  %102 = vmatpush1.msra.mxu0 0.0
  %103 = vmatprep.subr.mxu0 0.0
  %104 = vmatpush1.msra.mxu0 0.0
  %105 = vmatprep.subr.mxu0 0.0
  %106 = vmatpush1.msra.mxu0 0.0
  %107 = vmatprep.subr.mxu0 0.0
  %108 = vmatpush1.msra.mxu0 0.0
  %109 = vmatprep.subr.mxu0 0.0
  %110 = vmatpush1.msra.mxu0 0.0
  %111 = vmatprep.subr.mxu0 0.0
  %112 = vmatpush1.msra.mxu0 0.0
  %113 = vmatprep.subr.mxu0 0.0
  %114 = vmatpush1.msra.mxu0 0.0
  %115 = vmatprep.subr.mxu0 0.0
  %116 = vmatpush1.msra.mxu0 0.0
  %117 = vmatprep.subr.mxu0 0.0
  %118 = vmatpush1.msra.mxu0 0.0
  %119 = vmatprep.subr.mxu0 0.0
  %120 = vmatpush1.msra.mxu0 0.0
  %121 = vmatprep.subr.mxu0 0.0
  %122 = vmatpush1.msra.mxu0 0.0
  %123 = vmatprep.subr.mxu0 0.0
  %124 = vmatpush1.msra.mxu0 0.0
  %125 = vmatprep.subr.mxu0 0.0
  %126 = vmatpush1.msra.mxu0 0.0
  %127 = vmatprep.subr.mxu0 0.0
  %128 = vmatpush1.msra.mxu0 0.0
  %129 = vmatprep.subr.mxu0 0.0
  %130 = vmatpush1.msra.mxu0 0.0
  %131 = vmatprep.subr.mxu0 0.0
  %132 = vmatpush1.msra.mxu0 0.0
  %133 = vmatprep.subr.mxu0 0.0
  %134 = vmatpush1.msra.mxu0 0.0
  %135 = vmatprep.subr.mxu0 0.0
  %136 = vmatpush1.msra.mxu0 0.0
  %137 = vmatprep.subr.mxu0 0.0
  %138 = vmatpush1.msra.mxu0 0.0
  %139 = vmatprep.subr.mxu0 0.0
  %140 = vmatpush1.msra.mxu0 0.0
  %141 = vmatprep.subr.mxu0 0.0
  %142 = vmatpush1.msra.mxu0 0.0
  %143 = vmatprep.subr.mxu0 0.0
  %144 = vmatpush1.msra.mxu0 0.0
  %145 = vmatprep.subr.mxu0 0.0
  %146 = vmatpush1.msra.mxu0 0.0
  %147 = vmatprep.subr.mxu0 0.0
  %148 = vmatpush1.msra.mxu0 0.0
  %149 = vmatprep.subr.mxu0 0.0
  %150 = vmatpush1.msra.mxu0 0.0
  %151 = vmatprep.subr.mxu0 0.0
  %152 = vmatpush1.msra.mxu0 0.0
  %153 = vmatprep.subr.mxu0 0.0
  %154 = vmatpush1.msra.mxu0 0.0
  %155 = vmatprep.mubr.f32.mxu0 0.0
  %156 = vmatmul.mubr.f32.gmra.mrb[0].mxu0 %v76
  %v157 = vpop.f32.mrb[0].mxu0
  %v158 = vadd.f32 0.0, %v157
  %v159 = vpop.f32.mrb[0].mxu0
  %160 = vmatprep.mubr.f32.mxu0 0.0
  %161 = vmatmul.mubr.f32.gmra.mrb[0].mxu0 %v79
  %v162 = vpop.f32.mrb[0].mxu0
  %v163 = vadd.f32 0.0, %v162
  %v164 = vpop.f32.mrb[0].mxu0
  %165 = vmatprep.mubr.f32.mxu0 0.0
  %166 = vmatmul.mubr.f32.gmra.mrb[0].mxu0 %v82
  %v167 = vpop.f32.mrb[0].mxu0
  %v168 = vadd.f32 0.0, %v167
  %v169 = vpop.f32.mrb[0].mxu0
  %170 = vmatprep.mubr.f32.mxu0 0.0
  %171 = vmatmul.mubr.f32.gmra.mrb[0].mxu0 %v85
  %v172 = vpop.f32.mrb[0].mxu0
  %v173 = vadd.f32 0.0, %v172
  %v174 = vpop.f32.mrb[0].mxu0
  %175 = vdwg.mxu0
  %v176 = vlaneseq
  %v177 = vshrl.u32 %v176, 7
  %v178 = vadd.s32 %v177, 8
  %v179 = vadd.s32 %v177, 16
  %v180 = vadd.s32 %v177, 24
  %v181 = vlaneseq
  %v182 = vand.u32 %v181, 127
  %vm183 = vcmp.eq.s32.totalorder %v177, %v182
  %vm184 = vcmp.eq.s32.totalorder %v178, %v182
  %vm185 = vcmp.eq.s32.totalorder %v179, %v182
  %vm186 = vcmp.eq.s32.totalorder %v180, %v182
  %vm187 = vcmask 261120
  %v189 = vsel %vm187, %v65, 0
  %v192 = vsel %vm187, %v66, 0
  %v195 = vsel %vm187, %v67, 0
  %v198 = vsel %vm187, %v68, 0
  %200 = vmatprep.subr.mxu0 0.0
  %201 = vmatpush1.msra.mxu0 1.0
  %202 = vmatprep.subr.mxu0 0.0
  %203 = vmatpush1.msra.mxu0 1.0
  %204 = vmatprep.subr.mxu0 0.0
  %205 = vmatpush1.msra.mxu0 1.0
  %206 = vmatprep.subr.mxu0 0.0
  %207 = vmatpush1.msra.mxu0 1.0
  %208 = vmatprep.subr.mxu0 0.0
  %209 = vmatpush1.msra.mxu0 0.0
  %210 = vmatprep.subr.mxu0 0.0
  %211 = vmatpush1.msra.mxu0 0.0
  %212 = vmatprep.subr.mxu0 0.0
  %213 = vmatpush1.msra.mxu0 0.0
  %214 = vmatprep.subr.mxu0 0.0
  %215 = vmatpush1.msra.mxu0 0.0
  %216 = vmatprep.subr.mxu0 0.0
  %217 = vmatpush1.msra.mxu0 0.0
  %218 = vmatprep.subr.mxu0 0.0
  %219 = vmatpush1.msra.mxu0 0.0
  %220 = vmatprep.subr.mxu0 0.0
  %221 = vmatpush1.msra.mxu0 0.0
  %222 = vmatprep.subr.mxu0 0.0
  %223 = vmatpush1.msra.mxu0 0.0
  %224 = vmatprep.subr.mxu0 0.0
  %225 = vmatpush1.msra.mxu0 0.0
  %226 = vmatprep.subr.mxu0 0.0
  %227 = vmatpush1.msra.mxu0 0.0
  %228 = vmatprep.subr.mxu0 0.0
  %229 = vmatpush1.msra.mxu0 0.0
  %230 = vmatprep.subr.mxu0 0.0
  %231 = vmatpush1.msra.mxu0 0.0
  %232 = vmatprep.subr.mxu0 0.0
  %233 = vmatpush1.msra.mxu0 0.0
  %234 = vmatprep.subr.mxu0 0.0
  %235 = vmatpush1.msra.mxu0 0.0
  %236 = vmatprep.subr.mxu0 0.0
  %237 = vmatpush1.msra.mxu0 0.0
  %238 = vmatprep.subr.mxu0 0.0
  %239 = vmatpush1.msra.mxu0 0.0
  %240 = vmatprep.subr.mxu0 0.0
  %241 = vmatpush1.msra.mxu0 0.0
  %242 = vmatprep.subr.mxu0 0.0
  %243 = vmatpush1.msra.mxu0 0.0
  %244 = vmatprep.subr.mxu0 0.0
  %245 = vmatpush1.msra.mxu0 0.0
  %246 = vmatprep.subr.mxu0 0.0
  %247 = vmatpush1.msra.mxu0 0.0
  %248 = vmatprep.subr.mxu0 0.0
  %249 = vmatpush1.msra.mxu0 0.0
  %250 = vmatprep.subr.mxu0 0.0
  %251 = vmatpush1.msra.mxu0 0.0
  %252 = vmatprep.subr.mxu0 0.0
  %253 = vmatpush1.msra.mxu0 0.0
  %254 = vmatprep.subr.mxu0 0.0
  %255 = vmatpush1.msra.mxu0 0.0
  %256 = vmatprep.subr.mxu0 0.0
  %257 = vmatpush1.msra.mxu0 0.0
  %258 = vmatprep.subr.mxu0 0.0
  %259 = vmatpush1.msra.mxu0 0.0
  %260 = vmatprep.subr.mxu0 0.0
  %261 = vmatpush1.msra.mxu0 0.0
  %262 = vmatprep.subr.mxu0 0.0
  %263 = vmatpush1.msra.mxu0 0.0
  %264 = vmatprep.mubr.f32.mxu0 0.0
  %265 = vmatmul.mubr.f32.gmra.mrb[0].mxu0 %v189
  %v266 = vpop.f32.mrb[0].mxu0
  %v267 = vadd.f32 0.0, %v266
  %v268 = vpop.f32.mrb[0].mxu0
  %269 = vmatprep.mubr.f32.mxu0 0.0
  %270 = vmatmul.mubr.f32.gmra.mrb[0].mxu0 %v192
  %v271 = vpop.f32.mrb[0].mxu0
  %v272 = vadd.f32 0.0, %v271
  %v273 = vpop.f32.mrb[0].mxu0
  %274 = vmatprep.mubr.f32.mxu0 0.0
  %275 = vmatmul.mubr.f32.gmra.mrb[0].mxu0 %v195
  %v276 = vpop.f32.mrb[0].mxu0
  %v277 = vadd.f32 0.0, %v276
  %v278 = vpop.f32.mrb[0].mxu0
  %279 = vmatprep.mubr.f32.mxu0 0.0
  %280 = vmatmul.mubr.f32.gmra.mrb[0].mxu0 %v198
  %v281 = vpop.f32.mrb[0].mxu0
  %v282 = vadd.f32 0.0, %v281
  %v283 = vpop.f32.mrb[0].mxu0
  %284 = vdwg.mxu0
  %285 = vmatprep.subr.mxu0 0.0
  %286 = vmatpush1.msra.mxu0 %v61
  %287 = vmatprep.subr.mxu0 0.0
  %288 = vmatpush1.msra.mxu0 %v62
  %289 = vmatprep.subr.mxu0 0.0
  %290 = vmatpush1.msra.mxu0 %v63
  %291 = vmatprep.subr.mxu0 0.0
  %292 = vmatpush1.msra.mxu0 %v64
  %293 = vmatprep.subr.mxu0 0.0
  %294 = vmatpush1.msra.mxu0 0.0
  %295 = vmatprep.subr.mxu0 0.0
  %296 = vmatpush1.msra.mxu0 0.0
  %297 = vmatprep.subr.mxu0 0.0
  %298 = vmatpush1.msra.mxu0 0.0
  %299 = vmatprep.subr.mxu0 0.0
  %300 = vmatpush1.msra.mxu0 0.0
  %301 = vmatprep.subr.mxu0 0.0
  %302 = vmatpush1.msra.mxu0 0.0
  %303 = vmatprep.subr.mxu0 0.0
  %304 = vmatpush1.msra.mxu0 0.0
  %305 = vmatprep.subr.mxu0 0.0
  %306 = vmatpush1.msra.mxu0 0.0
  %307 = vmatprep.subr.mxu0 0.0
  %308 = vmatpush1.msra.mxu0 0.0
  %309 = vmatprep.subr.mxu0 0.0
  %310 = vmatpush1.msra.mxu0 0.0
  %311 = vmatprep.subr.mxu0 0.0
  %312 = vmatpush1.msra.mxu0 0.0
  %313 = vmatprep.subr.mxu0 0.0
  %314 = vmatpush1.msra.mxu0 0.0
  %315 = vmatprep.subr.mxu0 0.0
  %316 = vmatpush1.msra.mxu0 0.0
  %317 = vmatprep.subr.mxu0 0.0
  %318 = vmatpush1.msra.mxu0 0.0
  %319 = vmatprep.subr.mxu0 0.0
  %320 = vmatpush1.msra.mxu0 0.0
  %321 = vmatprep.subr.mxu0 0.0
  %322 = vmatpush1.msra.mxu0 0.0
  %323 = vmatprep.subr.mxu0 0.0
  %324 = vmatpush1.msra.mxu0 0.0
  %325 = vmatprep.subr.mxu0 0.0
  %326 = vmatpush1.msra.mxu0 0.0
  %327 = vmatprep.subr.mxu0 0.0
  %328 = vmatpush1.msra.mxu0 0.0
  %329 = vmatprep.subr.mxu0 0.0
  %330 = vmatpush1.msra.mxu0 0.0
  %331 = vmatprep.subr.mxu0 0.0
  %332 = vmatpush1.msra.mxu0 0.0
  %333 = vmatprep.subr.mxu0 0.0
  %334 = vmatpush1.msra.mxu0 0.0
  %335 = vmatprep.subr.mxu0 0.0
  %336 = vmatpush1.msra.mxu0 0.0
  %337 = vmatprep.subr.mxu0 0.0
  %338 = vmatpush1.msra.mxu0 0.0
  %339 = vmatprep.subr.mxu0 0.0
  %340 = vmatpush1.msra.mxu0 0.0
  %341 = vmatprep.subr.mxu0 0.0
  %342 = vmatpush1.msra.mxu0 0.0
  %343 = vmatprep.subr.mxu0 0.0
  %344 = vmatpush1.msra.mxu0 0.0
  %345 = vmatprep.subr.mxu0 0.0
  %346 = vmatpush1.msra.mxu0 0.0
  %347 = vmatprep.subr.mxu0 0.0
  %348 = vmatpush1.msra.mxu0 0.0
  %349 = vmatprep.mubr.f32.mxu0 0.0
  %350 = vmatmul.mubr.f32.gmra.mrb[0].mxu0 %v189
  %v351 = vpop.f32.mrb[0].mxu0
  %v352 = vadd.f32 0.0, %v351
  %v353 = vpop.f32.mrb[0].mxu0
  %354 = vmatprep.mubr.f32.mxu0 0.0
  %355 = vmatmul.mubr.f32.gmra.mrb[0].mxu0 %v192
  %v356 = vpop.f32.mrb[0].mxu0
  %v357 = vadd.f32 0.0, %v356
  %v358 = vpop.f32.mrb[0].mxu0
  %359 = vmatprep.mubr.f32.mxu0 0.0
  %360 = vmatmul.mubr.f32.gmra.mrb[0].mxu0 %v195
  %v361 = vpop.f32.mrb[0].mxu0
  %v362 = vadd.f32 0.0, %v361
  %v363 = vpop.f32.mrb[0].mxu0
  %364 = vmatprep.mubr.f32.mxu0 0.0
  %365 = vmatmul.mubr.f32.gmra.mrb[0].mxu0 %v198
  %v366 = vpop.f32.mrb[0].mxu0
  %v367 = vadd.f32 0.0, %v366
  %v368 = vpop.f32.mrb[0].mxu0
  %369 = vdwg.mxu0
  %v370 = vmax.f32 %v267, 1.0
  %v371 = vmax.f32 %v272, 1.0
  %v372 = vmax.f32 %v277, 1.0
  %v373 = vmax.f32 %v282, 1.0
  %375 = vset.pattern.permute.xlu0 0
  %376 = vperm.xlu0 %375, %v370
  %v377 = vpop.permute.xlu0 %376
  %380 = vset.pattern.permute.xlu0 0
  %381 = vperm.xlu0 %380, %v371
  %v382 = vpop.permute.xlu0 %381
  %385 = vset.pattern.permute.xlu0 0
  %386 = vperm.xlu0 %385, %v372
  %v387 = vpop.permute.xlu0 %386
  %390 = vset.pattern.permute.xlu0 0
  %391 = vperm.xlu0 %390, %v373
  %v392 = vpop.permute.xlu0 %391
  %v394 = vrcp.pop %v377
  %v395 = vmul.f32 %v352, %v394
  %v396 = vrcp.pop %v382
  %v397 = vmul.f32 %v357, %v396
  %v398 = vrcp.pop %v387
  %v399 = vmul.f32 %v362, %v398
  %v400 = vrcp.pop %v392
  %v401 = vmul.f32 %v367, %v400
  %402 = vst.msk [vmem:[#allocation2] sm:$0xff] %vm74, %v395
  %403 = vst.msk [vmem:[#allocation2 + $0x8] sm:$0xff] %vm74, %v397
  %404 = vst.msk [vmem:[#allocation2 + $0x10] sm:$0xff] %vm74, %v399
  %405 = vst.msk [vmem:[#allocation2 + $0x18] sm:$0xff] %vm74, %v401
  %410 = vrot.lane.b32.xlu0 %v61, 2
  %v411 = vpop.permute.xlu0 %410
  %412 = vrot.lane.b32.xlu0 %v62, 2
  %v413 = vpop.permute.xlu0 %412
  %414 = vrot.lane.b32.xlu0 %v63, 2
  %v415 = vpop.permute.xlu0 %414
  %416 = vrot.lane.b32.xlu0 %v64, 2
  %v417 = vpop.permute.xlu0 %416
  %vm422 = vcmask 31760
  %423 = vst.msk [vmem:[#allocation2] sm:$0xff] %vm422, %v411
  %424 = vst.msk [vmem:[#allocation2 + $0x8] sm:$0xff] %vm422, %v413
  %425 = vst.msk [vmem:[#allocation2 + $0x10] sm:$0xff] %vm422, %v415
  %426 = vst.msk [vmem:[#allocation2 + $0x18] sm:$0xff] %vm422, %v417
  %v427 = vld [vmem:[#allocation2] sm:$0xff]
  %v428 = vld [vmem:[#allocation2 + $0x8] sm:$0xff]
  %v429 = vld [vmem:[#allocation2 + $0x10] sm:$0xff]
  %v430 = vld [vmem:[#allocation2 + $0x18] sm:$0xff]
  %v431 = vld [vmem:[%s4] sm:$0xf]
  %v432 = vld [vmem:[%s10] sm:$0x1]
  %v433 = vlaneseq
  %v434 = vshrl.u32 %v433, 7
  %v435 = vsub.s32 0, %v434
  %v436 = vrot.slane %v432, %v435
  %vm437 = vcmask 31744
  %v439 = vsel %vm437, %v427, 0
  %v442 = vsel %vm437, %v428, 0
  %v445 = vsel %vm437, %v429, 0
  %v448 = vsel %vm437, %v430, 0
  %vm450 = vcmask 1043456
  %v452 = vsel %vm450, %v431, 0
  %454 = vmatprep.subr.mxu0 0.0
  %455 = vmatpush1.msra.mxu0 %v452
  %456 = vmatprep.subr.mxu0 0.0
  %457 = vmatpush1.msra.mxu0 0.0
  %458 = vmatprep.subr.mxu0 0.0
  %459 = vmatpush1.msra.mxu0 0.0
  %460 = vmatprep.subr.mxu0 0.0
  %461 = vmatpush1.msra.mxu0 0.0
  %462 = vmatprep.subr.mxu0 0.0
  %463 = vmatpush1.msra.mxu0 0.0
  %464 = vmatprep.subr.mxu0 0.0
  %465 = vmatpush1.msra.mxu0 0.0
  %466 = vmatprep.subr.mxu0 0.0
  %467 = vmatpush1.msra.mxu0 0.0
  %468 = vmatprep.subr.mxu0 0.0
  %469 = vmatpush1.msra.mxu0 0.0
  %470 = vmatprep.subr.mxu0 0.0
  %471 = vmatpush1.msra.mxu0 0.0
  %472 = vmatprep.subr.mxu0 0.0
  %473 = vmatpush1.msra.mxu0 0.0
  %474 = vmatprep.subr.mxu0 0.0
  %475 = vmatpush1.msra.mxu0 0.0
  %476 = vmatprep.subr.mxu0 0.0
  %477 = vmatpush1.msra.mxu0 0.0
  %478 = vmatprep.subr.mxu0 0.0
  %479 = vmatpush1.msra.mxu0 0.0
  %480 = vmatprep.subr.mxu0 0.0
  %481 = vmatpush1.msra.mxu0 0.0
  %482 = vmatprep.subr.mxu0 0.0
  %483 = vmatpush1.msra.mxu0 0.0
  %484 = vmatprep.subr.mxu0 0.0
  %485 = vmatpush1.msra.mxu0 0.0
  %486 = vmatprep.subr.mxu0 0.0
  %487 = vmatpush1.msra.mxu0 0.0
  %488 = vmatprep.subr.mxu0 0.0
  %489 = vmatpush1.msra.mxu0 0.0
  %490 = vmatprep.subr.mxu0 0.0
  %491 = vmatpush1.msra.mxu0 0.0
  %492 = vmatprep.subr.mxu0 0.0
  %493 = vmatpush1.msra.mxu0 0.0
  %494 = vmatprep.subr.mxu0 0.0
  %495 = vmatpush1.msra.mxu0 0.0
  %496 = vmatprep.subr.mxu0 0.0
  %497 = vmatpush1.msra.mxu0 0.0
  %498 = vmatprep.subr.mxu0 0.0
  %499 = vmatpush1.msra.mxu0 0.0
  %500 = vmatprep.subr.mxu0 0.0
  %501 = vmatpush1.msra.mxu0 0.0
  %502 = vmatprep.subr.mxu0 0.0
  %503 = vmatpush1.msra.mxu0 0.0
  %504 = vmatprep.subr.mxu0 0.0
  %505 = vmatpush1.msra.mxu0 0.0
  %506 = vmatprep.subr.mxu0 0.0
  %507 = vmatpush1.msra.mxu0 0.0
  %508 = vmatprep.subr.mxu0 0.0
  %509 = vmatpush1.msra.mxu0 0.0
  %510 = vmatprep.subr.mxu0 0.0
  %511 = vmatpush1.msra.mxu0 0.0
  %512 = vmatprep.subr.mxu0 0.0
  %513 = vmatpush1.msra.mxu0 0.0
  %514 = vmatprep.subr.mxu0 0.0
  %515 = vmatpush1.msra.mxu0 0.0
  %516 = vmatprep.subr.mxu0 0.0
  %517 = vmatpush1.msra.mxu0 0.0
  %518 = vmatprep.mubr.f32.mxu0 0.0
  %519 = vmatmul.mubr.f32.gmra.mrb[0].mxu0 %v439
  %v520 = vpop.f32.mrb[0].mxu0
  %v521 = vadd.f32 %v436, %v520
  %v522 = vpop.f32.mrb[0].mxu0
  %523 = vmatprep.mubr.f32.mxu0 0.0
  %524 = vmatmul.mubr.f32.gmra.mrb[0].mxu0 %v442
  %v525 = vpop.f32.mrb[0].mxu0
  %v526 = vadd.f32 %v436, %v525
  %v527 = vpop.f32.mrb[0].mxu0
  %528 = vmatprep.mubr.f32.mxu0 0.0
  %529 = vmatmul.mubr.f32.gmra.mrb[0].mxu0 %v445
  %v530 = vpop.f32.mrb[0].mxu0
  %v531 = vadd.f32 %v436, %v530
  %v532 = vpop.f32.mrb[0].mxu0
  %533 = vmatprep.mubr.f32.mxu0 0.0
  %534 = vmatmul.mubr.f32.gmra.mrb[0].mxu0 %v448
  %v535 = vpop.f32.mrb[0].mxu0
  %v536 = vadd.f32 %v436, %v535
  %v537 = vpop.f32.mrb[0].mxu0
  %538 = vdwg.mxu0
  %v539 = vmax.f32 %v521, 0.0
  %v540 = vmax.f32 %v526, 0.0
  %v541 = vmax.f32 %v531, 0.0
  %v542 = vmax.f32 %v536, 0.0
  %v543 = vld [vmem:[%s11] sm:$0xff]
  %v544 = vld [vmem:[%s11 + $0x8] sm:$0xff]
  %v545 = vld [vmem:[%s11 + $0x10] sm:$0xff]
  %v546 = vld [vmem:[%s11 + $0x18] sm:$0xff]
  %v547 = vld [vmem:[%s11 + $0x20] sm:$0xff]
  %v548 = vld [vmem:[%s11 + $0x28] sm:$0xff]
  %v549 = vld [vmem:[%s11 + $0x30] sm:$0xff]
  %v550 = vld [vmem:[%s11 + $0x38] sm:$0xff]
  %vm551 = vcmask 523264
  %v553 = vsel %vm551, %v539, 0
  %v556 = vsel %vm551, %v540, 0
  %v559 = vsel %vm551, %v541, 0
  %v562 = vsel %vm551, %v542, 0
  %564 = vmatprep.subr.mxu0 0.0
  %565 = vmatpush1.msra.mxu0 %v543
  %566 = vmatprep.subr.mxu0 0.0
  %567 = vmatpush1.msra.mxu0 %v544
  %568 = vmatprep.subr.mxu0 0.0
  %569 = vmatpush1.msra.mxu0 %v545
  %570 = vmatprep.subr.mxu0 0.0
  %571 = vmatpush1.msra.mxu0 %v546
  %572 = vmatprep.subr.mxu0 0.0
  %573 = vmatpush1.msra.mxu0 %v547
  %574 = vmatprep.subr.mxu0 0.0
  %575 = vmatpush1.msra.mxu0 %v548
  %576 = vmatprep.subr.mxu0 0.0
  %577 = vmatpush1.msra.mxu0 %v549
  %578 = vmatprep.subr.mxu0 0.0
  %579 = vmatpush1.msra.mxu0 %v550
  %580 = vmatprep.subr.mxu0 0.0
  %581 = vmatpush1.msra.mxu0 0.0
  %582 = vmatprep.subr.mxu0 0.0
  %583 = vmatpush1.msra.mxu0 0.0
  %584 = vmatprep.subr.mxu0 0.0
  %585 = vmatpush1.msra.mxu0 0.0
  %586 = vmatprep.subr.mxu0 0.0
  %587 = vmatpush1.msra.mxu0 0.0
  %588 = vmatprep.subr.mxu0 0.0
  %589 = vmatpush1.msra.mxu0 0.0
  %590 = vmatprep.subr.mxu0 0.0
  %591 = vmatpush1.msra.mxu0 0.0
  %592 = vmatprep.subr.mxu0 0.0
  %593 = vmatpush1.msra.mxu0 0.0
  %594 = vmatprep.subr.mxu0 0.0
  %595 = vmatpush1.msra.mxu0 0.0
  %596 = vmatprep.subr.mxu0 0.0
  %597 = vmatpush1.msra.mxu0 0.0
  %598 = vmatprep.subr.mxu0 0.0
  %599 = vmatpush1.msra.mxu0 0.0
  %600 = vmatprep.subr.mxu0 0.0
  %601 = vmatpush1.msra.mxu0 0.0
  %602 = vmatprep.subr.mxu0 0.0
  %603 = vmatpush1.msra.mxu0 0.0
  %604 = vmatprep.subr.mxu0 0.0
  %605 = vmatpush1.msra.mxu0 0.0
  %606 = vmatprep.subr.mxu0 0.0
  %607 = vmatpush1.msra.mxu0 0.0
  %608 = vmatprep.subr.mxu0 0.0
  %609 = vmatpush1.msra.mxu0 0.0
  %610 = vmatprep.subr.mxu0 0.0
  %611 = vmatpush1.msra.mxu0 0.0
  %612 = vmatprep.subr.mxu0 0.0
  %613 = vmatpush1.msra.mxu0 0.0
  %614 = vmatprep.subr.mxu0 0.0
  %615 = vmatpush1.msra.mxu0 0.0
  %616 = vmatprep.subr.mxu0 0.0
  %617 = vmatpush1.msra.mxu0 0.0
  %618 = vmatprep.subr.mxu0 0.0
  %619 = vmatpush1.msra.mxu0 0.0
  %620 = vmatprep.subr.mxu0 0.0
  %621 = vmatpush1.msra.mxu0 0.0
  %622 = vmatprep.subr.mxu0 0.0
  %623 = vmatpush1.msra.mxu0 0.0
  %624 = vmatprep.subr.mxu0 0.0
  %625 = vmatpush1.msra.mxu0 0.0
  %626 = vmatprep.subr.mxu0 0.0
  %627 = vmatpush1.msra.mxu0 0.0
  %628 = vmatprep.mubr.f32.mxu0 0.0
  %629 = vmatmul.mubr.f32.gmra.mrb[0].mxu0 %v553
  %v630 = vpop.f32.mrb[0].mxu0
  %v631 = vadd.f32 0.0, %v630
  %v632 = vpop.f32.mrb[0].mxu0
  %633 = vmatprep.mubr.f32.mxu0 0.0
  %634 = vmatmul.mubr.f32.gmra.mrb[0].mxu0 %v556
  %v635 = vpop.f32.mrb[0].mxu0
  %v636 = vadd.f32 0.0, %v635
  %v637 = vpop.f32.mrb[0].mxu0
  %638 = vmatprep.mubr.f32.mxu0 0.0
  %639 = vmatmul.mubr.f32.gmra.mrb[0].mxu0 %v559
  %v640 = vpop.f32.mrb[0].mxu0
  %v641 = vadd.f32 0.0, %v640
  %v642 = vpop.f32.mrb[0].mxu0
  %643 = vmatprep.mubr.f32.mxu0 0.0
  %644 = vmatmul.mubr.f32.gmra.mrb[0].mxu0 %v562
  %v645 = vpop.f32.mrb[0].mxu0
  %v646 = vadd.f32 0.0, %v645
  %v647 = vpop.f32.mrb[0].mxu0
  %648 = vdwg.mxu0
  %v649 = vtanh.pop %v631
  %v650 = vtanh.pop %v636
  %v651 = vtanh.pop %v641
  %v652 = vtanh.pop %v646
  %vm653 = vcmp.gt.f32.partialorder 1.0, 0.0
  %v654 = vsel %vm653, %v649, -1e+30
  %v655 = vsel %vm653, %v650, -1e+30
  %v656 = vsel %vm653, %v651, -1e+30
  %v657 = vsel %vm653, %v652, -1e+30
  %659 = vset.pattern.permute.xlu0 0
  %660 = vperm.xlu0 %659, %v654
  %v661 = vpop.permute.xlu0 %660
  %664 = vset.pattern.permute.xlu0 0
  %665 = vperm.xlu0 %664, %v655
  %v666 = vpop.permute.xlu0 %665
  %669 = vset.pattern.permute.xlu0 0
  %670 = vperm.xlu0 %669, %v656
  %v671 = vpop.permute.xlu0 %670
  %674 = vset.pattern.permute.xlu0 0
  %675 = vperm.xlu0 %674, %v657
  %v676 = vpop.permute.xlu0 %675
  %v678 = vsel %vm183, %v661, 0.0
  %v679 = vsel %vm184, %v666, 0.0
  %v680 = vsel %vm185, %v671, 0.0
  %v681 = vsel %vm186, %v676, 0.0
  %v682 = vsel %vm187, %v678, 0.0
  %v683 = vsel %vm187, %v679, 0.0
  %v684 = vadd.f32 %v682, %v683
  %v685 = vsel %vm187, %v680, 0.0
  %v686 = vadd.f32 %v684, %v685
  %v687 = vsel %vm187, %v681, 0.0
  %v688 = vadd.f32 %v686, %v687
  %v689 = vrot.slane %v688, 4
  %v690 = vadd.f32 %v688, %v689
  %v691 = vrot.slane %v690, 2
  %v692 = vadd.f32 %v690, %v691
  %v693 = vrot.slane %v692, 1
  %v694 = vadd.f32 %v692, %v693
  %vm695 = vcmp.gt.f32.partialorder %v694, %v661
  %vm696 = vcmp.gt.f32.partialorder %v694, %v666
  %vm697 = vcmp.gt.f32.partialorder %v694, %v671
  %vm698 = vcmp.gt.f32.partialorder %v694, %v676
  %vm699 = vcmp.eq.f32.partialorder %v694, %v661
  %vm700 = vcmp.eq.f32.partialorder %v694, %v666
  %vm701 = vcmp.eq.f32.partialorder %v694, %v671
  %vm702 = vcmp.eq.f32.partialorder %v694, %v676
  %vm703 = vcmp.lt.s32.totalorder %v182, %v177
  %vm704 = vcmp.lt.s32.totalorder %v182, %v178
  %vm705 = vcmp.lt.s32.totalorder %v182, %v179
  %vm706 = vcmp.lt.s32.totalorder %v182, %v180
  %vm707 = vmand %vm699, %vm703
  %vm708 = vmand %vm700, %vm704
  %vm709 = vmand %vm701, %vm705
  %vm710 = vmand %vm702, %vm706
  %vm711 = vmor %vm695, %vm707
  %vm712 = vmor %vm696, %vm708
  %vm713 = vmor %vm697, %vm709
  %vm714 = vmor %vm698, %vm710
  %v715 = vsel %vm711, %v158, 0.0
  %v716 = vsel %vm712, %v163, 0.0
  %v717 = vsel %vm713, %v168, 0.0
  %v718 = vsel %vm714, %v173, 0.0
  %v719 = vsel %vm187, %v715, 0.0
  %720 = vadd.xlane.f32.xlu0 %v719
  %v721 = vpop.xlane.xlu0 %720
  %v722 = vsel %vm187, %v716, 0.0
  %723 = vadd.xlane.f32.xlu0 %v722
  %v724 = vpop.xlane.xlu0 %723
  %v725 = vsel %vm187, %v717, 0.0
  %726 = vadd.xlane.f32.xlu0 %v725
  %v727 = vpop.xlane.xlu0 %726
  %v728 = vsel %vm187, %v718, 0.0
  %729 = vadd.xlane.f32.xlu0 %v728
  %v730 = vpop.xlane.xlu0 %729
  %v731 = vsel %vm187, %v69, 0
  %733 = vmatprep.subr.mxu0 0.0
  %734 = vmatpush1.msra.mxu0 1.0
  %735 = vmatprep.subr.mxu0 0.0
  %736 = vmatpush1.msra.mxu0 1.0
  %737 = vmatprep.subr.mxu0 0.0
  %738 = vmatpush1.msra.mxu0 1.0
  %739 = vmatprep.subr.mxu0 0.0
  %740 = vmatpush1.msra.mxu0 1.0
  %741 = vmatprep.subr.mxu0 0.0
  %742 = vmatpush1.msra.mxu0 0.0
  %743 = vmatprep.subr.mxu0 0.0
  %744 = vmatpush1.msra.mxu0 0.0
  %745 = vmatprep.subr.mxu0 0.0
  %746 = vmatpush1.msra.mxu0 0.0
  %747 = vmatprep.subr.mxu0 0.0
  %748 = vmatpush1.msra.mxu0 0.0
  %749 = vmatprep.subr.mxu0 0.0
  %750 = vmatpush1.msra.mxu0 0.0
  %751 = vmatprep.subr.mxu0 0.0
  %752 = vmatpush1.msra.mxu0 0.0
  %753 = vmatprep.subr.mxu0 0.0
  %754 = vmatpush1.msra.mxu0 0.0
  %755 = vmatprep.subr.mxu0 0.0
  %756 = vmatpush1.msra.mxu0 0.0
  %757 = vmatprep.subr.mxu0 0.0
  %758 = vmatpush1.msra.mxu0 0.0
  %759 = vmatprep.subr.mxu0 0.0
  %760 = vmatpush1.msra.mxu0 0.0
  %761 = vmatprep.subr.mxu0 0.0
  %762 = vmatpush1.msra.mxu0 0.0
  %763 = vmatprep.subr.mxu0 0.0
  %764 = vmatpush1.msra.mxu0 0.0
  %765 = vmatprep.subr.mxu0 0.0
  %766 = vmatpush1.msra.mxu0 0.0
  %767 = vmatprep.subr.mxu0 0.0
  %768 = vmatpush1.msra.mxu0 0.0
  %769 = vmatprep.subr.mxu0 0.0
  %770 = vmatpush1.msra.mxu0 0.0
  %771 = vmatprep.subr.mxu0 0.0
  %772 = vmatpush1.msra.mxu0 0.0
  %773 = vmatprep.subr.mxu0 0.0
  %774 = vmatpush1.msra.mxu0 0.0
  %775 = vmatprep.subr.mxu0 0.0
  %776 = vmatpush1.msra.mxu0 0.0
  %777 = vmatprep.subr.mxu0 0.0
  %778 = vmatpush1.msra.mxu0 0.0
  %779 = vmatprep.subr.mxu0 0.0
  %780 = vmatpush1.msra.mxu0 0.0
  %781 = vmatprep.subr.mxu0 0.0
  %782 = vmatpush1.msra.mxu0 0.0
  %783 = vmatprep.subr.mxu0 0.0
  %784 = vmatpush1.msra.mxu0 0.0
  %785 = vmatprep.subr.mxu0 0.0
  %786 = vmatpush1.msra.mxu0 0.0
  %787 = vmatprep.subr.mxu0 0.0
  %788 = vmatpush1.msra.mxu0 0.0
  %789 = vmatprep.subr.mxu0 0.0
  %790 = vmatpush1.msra.mxu0 0.0
  %791 = vmatprep.subr.mxu0 0.0
  %792 = vmatpush1.msra.mxu0 0.0
  %793 = vmatprep.subr.mxu0 0.0
  %794 = vmatpush1.msra.mxu0 0.0
  %795 = vmatprep.subr.mxu0 0.0
  %796 = vmatpush1.msra.mxu0 0.0
  %797 = vmatprep.mubr.f32.mxu0 0.0
  %798 = vmatmul.mubr.f32.gmra.mrb[0].mxu0 %v731
  %v799 = vpop.f32.mrb[0].mxu0
  %v800 = vadd.f32 0.0, %v799
  %v801 = vpop.f32.mrb[0].mxu0
  %802 = vdwg.mxu0
  %v804 = vsel %vm87, %v800, 0
  %806 = vmatprep.subr.mxu0 0.0
  %807 = vmatpush1.msra.mxu0 %v804
  %808 = vmatprep.subr.mxu0 0.0
  %809 = vmatpush1.msra.mxu0 0.0
  %810 = vmatprep.subr.mxu0 0.0
  %811 = vmatpush1.msra.mxu0 0.0
  %812 = vmatprep.subr.mxu0 0.0
  %813 = vmatpush1.msra.mxu0 0.0
  %814 = vmatprep.subr.mxu0 0.0
  %815 = vmatpush1.msra.mxu0 0.0
  %816 = vmatprep.subr.mxu0 0.0
  %817 = vmatpush1.msra.mxu0 0.0
  %818 = vmatprep.subr.mxu0 0.0
  %819 = vmatpush1.msra.mxu0 0.0
  %820 = vmatprep.subr.mxu0 0.0
  %821 = vmatpush1.msra.mxu0 0.0
  %822 = vmatprep.subr.mxu0 0.0
  %823 = vmatpush1.msra.mxu0 0.0
  %824 = vmatprep.subr.mxu0 0.0
  %825 = vmatpush1.msra.mxu0 0.0
  %826 = vmatprep.subr.mxu0 0.0
  %827 = vmatpush1.msra.mxu0 0.0
  %828 = vmatprep.subr.mxu0 0.0
  %829 = vmatpush1.msra.mxu0 0.0
  %830 = vmatprep.subr.mxu0 0.0
  %831 = vmatpush1.msra.mxu0 0.0
  %832 = vmatprep.subr.mxu0 0.0
  %833 = vmatpush1.msra.mxu0 0.0
  %834 = vmatprep.subr.mxu0 0.0
  %835 = vmatpush1.msra.mxu0 0.0
  %836 = vmatprep.subr.mxu0 0.0
  %837 = vmatpush1.msra.mxu0 0.0
  %838 = vmatprep.subr.mxu0 0.0
  %839 = vmatpush1.msra.mxu0 0.0
  %840 = vmatprep.subr.mxu0 0.0
  %841 = vmatpush1.msra.mxu0 0.0
  %842 = vmatprep.subr.mxu0 0.0
  %843 = vmatpush1.msra.mxu0 0.0
  %844 = vmatprep.subr.mxu0 0.0
  %845 = vmatpush1.msra.mxu0 0.0
  %846 = vmatprep.subr.mxu0 0.0
  %847 = vmatpush1.msra.mxu0 0.0
  %848 = vmatprep.subr.mxu0 0.0
  %849 = vmatpush1.msra.mxu0 0.0
  %850 = vmatprep.subr.mxu0 0.0
  %851 = vmatpush1.msra.mxu0 0.0
  %852 = vmatprep.subr.mxu0 0.0
  %853 = vmatpush1.msra.mxu0 0.0
  %854 = vmatprep.subr.mxu0 0.0
  %855 = vmatpush1.msra.mxu0 0.0
  %856 = vmatprep.subr.mxu0 0.0
  %857 = vmatpush1.msra.mxu0 0.0
  %858 = vmatprep.subr.mxu0 0.0
  %859 = vmatpush1.msra.mxu0 0.0
  %860 = vmatprep.subr.mxu0 0.0
  %861 = vmatpush1.msra.mxu0 0.0
  %862 = vmatprep.subr.mxu0 0.0
  %863 = vmatpush1.msra.mxu0 0.0
  %864 = vmatprep.subr.mxu0 0.0
  %865 = vmatpush1.msra.mxu0 0.0
  %866 = vmatprep.subr.mxu0 0.0
  %867 = vmatpush1.msra.mxu0 0.0
  %868 = vmatprep.subr.mxu0 0.0
  %869 = vmatpush1.msra.mxu0 0.0
  %870 = vmatprep.mubr.f32.mxu0 0.0
  %871 = vmatmul.mubr.f32.gmra.mrb[0].mxu0 %v76
  %v872 = vpop.f32.mrb[0].mxu0
  %v873 = vadd.f32 0.0, %v872
  %v874 = vpop.f32.mrb[0].mxu0
  %875 = vmatprep.mubr.f32.mxu0 0.0
  %876 = vmatmul.mubr.f32.gmra.mrb[0].mxu0 %v79
  %v877 = vpop.f32.mrb[0].mxu0
  %v878 = vadd.f32 0.0, %v877
  %v879 = vpop.f32.mrb[0].mxu0
  %880 = vmatprep.mubr.f32.mxu0 0.0
  %881 = vmatmul.mubr.f32.gmra.mrb[0].mxu0 %v82
  %v882 = vpop.f32.mrb[0].mxu0
  %v883 = vadd.f32 0.0, %v882
  %v884 = vpop.f32.mrb[0].mxu0
  %885 = vmatprep.mubr.f32.mxu0 0.0
  %886 = vmatmul.mubr.f32.gmra.mrb[0].mxu0 %v85
  %v887 = vpop.f32.mrb[0].mxu0
  %v888 = vadd.f32 0.0, %v887
  %v889 = vpop.f32.mrb[0].mxu0
  %890 = vdwg.mxu0
  %v891 = vmul.f32 %v873, 0.5
  %v892 = vmul.f32 %v878, 0.5
  %v893 = vmul.f32 %v883, 0.5
  %v894 = vmul.f32 %v888, 0.5
  %vm895 = vcmp.lt.f32.partialorder %v721, %v891
  %vm896 = vcmp.lt.f32.partialorder %v724, %v892
  %vm897 = vcmp.lt.f32.partialorder %v727, %v893
  %vm898 = vcmp.lt.f32.partialorder %v730, %v894
  %vm899 = vmand %vm895, %vm653
  %vm900 = vmand %vm896, %vm653
  %vm901 = vmand %vm897, %vm653
  %vm902 = vmand %vm898, %vm653
  %v903 = vsel %vm899, 1.0, 0.0
  %v904 = vsel %vm900, 1.0, 0.0
  %v905 = vsel %vm901, 1.0, 0.0
  %v906 = vsel %vm902, 1.0, 0.0
  %908 = vset.pattern.permute.xlu0 0
  %909 = vperm.xlu0 %908, %v649
  %v910 = vpop.permute.xlu0 %909
  %913 = vset.pattern.permute.xlu0 0
  %914 = vperm.xlu0 %913, %v650
  %v915 = vpop.permute.xlu0 %914
  %918 = vset.pattern.permute.xlu0 0
  %919 = vperm.xlu0 %918, %v651
  %v920 = vpop.permute.xlu0 %919
  %923 = vset.pattern.permute.xlu0 0
  %924 = vperm.xlu0 %923, %v652
  %v925 = vpop.permute.xlu0 %924
  %v927 = vmul.f32 %v539, %v910
  %v928 = vmul.f32 %v540, %v915
  %v929 = vmul.f32 %v541, %v920
  %v930 = vmul.f32 %v542, %v925
  %932 = vset.pattern.permute.xlu0 0
  %933 = vperm.xlu0 %932, %v903
  %v934 = vpop.permute.xlu0 %933
  %937 = vset.pattern.permute.xlu0 0
  %938 = vperm.xlu0 %937, %v904
  %v939 = vpop.permute.xlu0 %938
  %942 = vset.pattern.permute.xlu0 0
  %943 = vperm.xlu0 %942, %v905
  %v944 = vpop.permute.xlu0 %943
  %947 = vset.pattern.permute.xlu0 0
  %948 = vperm.xlu0 %947, %v906
  %v949 = vpop.permute.xlu0 %948
  %v951 = vmul.f32 %v927, %v934
  %v952 = vmul.f32 %v928, %v939
  %v953 = vmul.f32 %v929, %v944
  %v954 = vmul.f32 %v930, %v949
  %955 = vmatprep.subr.mxu0 0.0
  %956 = vmatpush1.msra.mxu0 %v951
  %957 = vmatprep.subr.mxu0 0.0
  %958 = vmatpush1.msra.mxu0 %v952
  %959 = vmatprep.subr.mxu0 0.0
  %960 = vmatpush1.msra.mxu0 %v953
  %961 = vmatprep.subr.mxu0 0.0
  %962 = vmatpush1.msra.mxu0 %v954
  %963 = vmatprep.subr.mxu0 0.0
  %964 = vmatpush1.msra.mxu0 0.0
  %965 = vmatprep.subr.mxu0 0.0
  %966 = vmatpush1.msra.mxu0 0.0
  %967 = vmatprep.subr.mxu0 0.0
  %968 = vmatpush1.msra.mxu0 0.0
  %969 = vmatprep.subr.mxu0 0.0
  %970 = vmatpush1.msra.mxu0 0.0
  %971 = vmatprep.subr.mxu0 0.0
  %972 = vmatpush1.msra.mxu0 0.0
  %973 = vmatprep.subr.mxu0 0.0
  %974 = vmatpush1.msra.mxu0 0.0
  %975 = vmatprep.subr.mxu0 0.0
  %976 = vmatpush1.msra.mxu0 0.0
  %977 = vmatprep.subr.mxu0 0.0
  %978 = vmatpush1.msra.mxu0 0.0
  %979 = vmatprep.subr.mxu0 0.0
  %980 = vmatpush1.msra.mxu0 0.0
  %981 = vmatprep.subr.mxu0 0.0
  %982 = vmatpush1.msra.mxu0 0.0
  %983 = vmatprep.subr.mxu0 0.0
  %984 = vmatpush1.msra.mxu0 0.0
  %985 = vmatprep.subr.mxu0 0.0
  %986 = vmatpush1.msra.mxu0 0.0
  %987 = vmatprep.subr.mxu0 0.0
  %988 = vmatpush1.msra.mxu0 0.0
  %989 = vmatprep.subr.mxu0 0.0
  %990 = vmatpush1.msra.mxu0 0.0
  %991 = vmatprep.subr.mxu0 0.0
  %992 = vmatpush1.msra.mxu0 0.0
  %993 = vmatprep.subr.mxu0 0.0
  %994 = vmatpush1.msra.mxu0 0.0
  %995 = vmatprep.subr.mxu0 0.0
  %996 = vmatpush1.msra.mxu0 0.0
  %997 = vmatprep.subr.mxu0 0.0
  %998 = vmatpush1.msra.mxu0 0.0
  %999 = vmatprep.subr.mxu0 0.0
  %1000 = vmatpush1.msra.mxu0 0.0
  %1001 = vmatprep.subr.mxu0 0.0
  %1002 = vmatpush1.msra.mxu0 0.0
  %1003 = vmatprep.subr.mxu0 0.0
  %1004 = vmatpush1.msra.mxu0 0.0
  %1005 = vmatprep.subr.mxu0 0.0
  %1006 = vmatpush1.msra.mxu0 0.0
  %1007 = vmatprep.subr.mxu0 0.0
  %1008 = vmatpush1.msra.mxu0 0.0
  %1009 = vmatprep.subr.mxu0 0.0
  %1010 = vmatpush1.msra.mxu0 0.0
  %1011 = vmatprep.subr.mxu0 0.0
  %1012 = vmatpush1.msra.mxu0 0.0
  %1013 = vmatprep.subr.mxu0 0.0
  %1014 = vmatpush1.msra.mxu0 0.0
  %1015 = vmatprep.subr.mxu0 0.0
  %1016 = vmatpush1.msra.mxu0 0.0
  %1017 = vmatprep.subr.mxu0 0.0
  %1018 = vmatpush1.msra.mxu0 0.0
  %1019 = vmatprep.mubr.f32.mxu0 0.0
  %1020 = vmatmul.mubr.f32.gmra.mrb[0].mxu0 %v731
  %v1021 = vpop.f32.mrb[0].mxu0
  %v1022 = vadd.f32 0.0, %v1021
  %v1023 = vpop.f32.mrb[0].mxu0
  %1024 = vdwg.mxu0
  %1025 = vmatprep.subr.mxu0 0.0
  %1026 = vmatpush1.msra.mxu0 %v903
  %1027 = vmatprep.subr.mxu0 0.0
  %1028 = vmatpush1.msra.mxu0 %v904
  %1029 = vmatprep.subr.mxu0 0.0
  %1030 = vmatpush1.msra.mxu0 %v905
  %1031 = vmatprep.subr.mxu0 0.0
  %1032 = vmatpush1.msra.mxu0 %v906
  %1033 = vmatprep.subr.mxu0 0.0
  %1034 = vmatpush1.msra.mxu0 0.0
  %1035 = vmatprep.subr.mxu0 0.0
  %1036 = vmatpush1.msra.mxu0 0.0
  %1037 = vmatprep.subr.mxu0 0.0
  %1038 = vmatpush1.msra.mxu0 0.0
  %1039 = vmatprep.subr.mxu0 0.0
  %1040 = vmatpush1.msra.mxu0 0.0
  %1041 = vmatprep.subr.mxu0 0.0
  %1042 = vmatpush1.msra.mxu0 0.0
  %1043 = vmatprep.subr.mxu0 0.0
  %1044 = vmatpush1.msra.mxu0 0.0
  %1045 = vmatprep.subr.mxu0 0.0
  %1046 = vmatpush1.msra.mxu0 0.0
  %1047 = vmatprep.subr.mxu0 0.0
  %1048 = vmatpush1.msra.mxu0 0.0
  %1049 = vmatprep.subr.mxu0 0.0
  %1050 = vmatpush1.msra.mxu0 0.0
  %1051 = vmatprep.subr.mxu0 0.0
  %1052 = vmatpush1.msra.mxu0 0.0
  %1053 = vmatprep.subr.mxu0 0.0
  %1054 = vmatpush1.msra.mxu0 0.0
  %1055 = vmatprep.subr.mxu0 0.0
  %1056 = vmatpush1.msra.mxu0 0.0
  %1057 = vmatprep.subr.mxu0 0.0
  %1058 = vmatpush1.msra.mxu0 0.0
  %1059 = vmatprep.subr.mxu0 0.0
  %1060 = vmatpush1.msra.mxu0 0.0
  %1061 = vmatprep.subr.mxu0 0.0
  %1062 = vmatpush1.msra.mxu0 0.0
  %1063 = vmatprep.subr.mxu0 0.0
  %1064 = vmatpush1.msra.mxu0 0.0
  %1065 = vmatprep.subr.mxu0 0.0
  %1066 = vmatpush1.msra.mxu0 0.0
  %1067 = vmatprep.subr.mxu0 0.0
  %1068 = vmatpush1.msra.mxu0 0.0
  %1069 = vmatprep.subr.mxu0 0.0
  %1070 = vmatpush1.msra.mxu0 0.0
  %1071 = vmatprep.subr.mxu0 0.0
  %1072 = vmatpush1.msra.mxu0 0.0
  %1073 = vmatprep.subr.mxu0 0.0
  %1074 = vmatpush1.msra.mxu0 0.0
  %1075 = vmatprep.subr.mxu0 0.0
  %1076 = vmatpush1.msra.mxu0 0.0
  %1077 = vmatprep.subr.mxu0 0.0
  %1078 = vmatpush1.msra.mxu0 0.0
  %1079 = vmatprep.subr.mxu0 0.0
  %1080 = vmatpush1.msra.mxu0 0.0
  %1081 = vmatprep.subr.mxu0 0.0
  %1082 = vmatpush1.msra.mxu0 0.0
  %1083 = vmatprep.subr.mxu0 0.0
  %1084 = vmatpush1.msra.mxu0 0.0
  %1085 = vmatprep.subr.mxu0 0.0
  %1086 = vmatpush1.msra.mxu0 0.0
  %1087 = vmatprep.subr.mxu0 0.0
  %1088 = vmatpush1.msra.mxu0 0.0
  %1089 = vmatprep.mubr.f32.mxu0 0.0
  %1090 = vmatmul.mubr.f32.gmra.mrb[0].mxu0 %v731
  %v1091 = vpop.f32.mrb[0].mxu0
  %v1092 = vadd.f32 0.0, %v1091
  %v1093 = vpop.f32.mrb[0].mxu0
  %1094 = vdwg.mxu0
  %v1095 = vmax.f32 %v1092, 1.0
  %1097 = vset.pattern.permute.xlu0 0
  %1098 = vperm.xlu0 %1097, %v1095
  %v1099 = vpop.permute.xlu0 %1098
  %v1101 = vrcp.pop %v1099
  %v1102 = vmul.f32 %v1022, %v1101
  %v1103 = vadd.f32 %v1102, 0.0
  %v1104 = vmul.f32 %v70, %v903
  %v1105 = vmul.f32 %v71, %v904
  %v1106 = vmul.f32 %v72, %v905
  %v1107 = vmul.f32 %v73, %v906
  %vm1108 = vcmp.gt.f32.partialorder %v1104, 0.0
  %vm1109 = vcmp.gt.f32.partialorder %v1105, 0.0
  %vm1110 = vcmp.gt.f32.partialorder %v1106, 0.0
  %vm1111 = vcmp.gt.f32.partialorder %v1107, 0.0
  %v1112 = vsel %vm1108, 1, 0
  %v1113 = vsel %vm1109, 1, 0
  %v1114 = vsel %vm1110, 1, 0
  %v1115 = vsel %vm1111, 1, 0
  %1116 = vset.pattern.permute.xlu0 0
  %1117 = vperm.xlu0 %1116, %v1112
  %v1118 = vpop.permute.xlu0 %1117
  %1119 = vset.pattern.permute.xlu0 0
  %1120 = vperm.xlu0 %1119, %v1113
  %v1121 = vpop.permute.xlu0 %1120
  %1122 = vset.pattern.permute.xlu0 0
  %1123 = vperm.xlu0 %1122, %v1114
  %v1124 = vpop.permute.xlu0 %1123
  %1125 = vset.pattern.permute.xlu0 0
  %1126 = vperm.xlu0 %1125, %v1115
  %v1127 = vpop.permute.xlu0 %1126
  %vm1128 = vcmp.eq.s32.totalorder %v1118, 1
  %vm1129 = vcmp.eq.s32.totalorder %v1121, 1
  %vm1130 = vcmp.eq.s32.totalorder %v1124, 1
  %vm1131 = vcmp.eq.s32.totalorder %v1127, 1
  %v1132 = vsel %vm1128, %v951, -1e+30
  %v1133 = vsel %vm1129, %v952, -1e+30
  %v1134 = vsel %vm1130, %v953, -1e+30
  %v1135 = vsel %vm1131, %v954, -1e+30
  %v1136 = vsel %vm551, %v1132, -inf
  %v1137 = vsel %vm551, %v1133, -inf
  %v1138 = vsel %vm551, %v1134, -inf
  %v1139 = vsel %vm551, %v1135, -inf
  %v1140 = vmax.f32 %v1136, %v1137
  %v1141 = vmax.f32 %v1138, %v1139
  %v1142 = vmax.f32 %v1140, %v1141
  %v1143 = vrot.slane %v1142, 4
  %v1144 = vmax.f32 %v1142, %v1143
  %v1145 = vrot.slane %v1144, 2
  %v1146 = vmax.f32 %v1144, %v1145
  %v1147 = vrot.slane %v1146, 1
  %v1148 = vmax.f32 %v1146, %v1147
  %vm1149 = vcmp.eq.s32.totalorder %v177, 0
  %v1150 = vsel %vm1149, %v1148, -1e+30
  %1151 = vrot.lane.b32.xlu0 %v903, 1
  %v1152 = vpop.permute.xlu0 %1151
  %1153 = vrot.lane.b32.xlu0 %v904, 1
  %v1154 = vpop.permute.xlu0 %1153
  %1155 = vrot.lane.b32.xlu0 %v905, 1
  %v1156 = vpop.permute.xlu0 %1155
  %1157 = vrot.lane.b32.xlu0 %v906, 1
  %v1158 = vpop.permute.xlu0 %1157
  %v1163 = vmul.f32 %v70, %v1152
  %v1164 = vmul.f32 %v71, %v1154
  %v1165 = vmul.f32 %v72, %v1156
  %v1166 = vmul.f32 %v73, %v1158
  %vm1167 = vcmp.gt.f32.partialorder %v1163, 0.0
  %vm1168 = vcmp.gt.f32.partialorder %v1164, 0.0
  %vm1169 = vcmp.gt.f32.partialorder %v1165, 0.0
  %vm1170 = vcmp.gt.f32.partialorder %v1166, 0.0
  %v1171 = vsel %vm1167, 1, 0
  %v1172 = vsel %vm1168, 1, 0
  %v1173 = vsel %vm1169, 1, 0
  %v1174 = vsel %vm1170, 1, 0
  %1175 = vset.pattern.permute.xlu0 1
  %1176 = vperm.xlu0 %1175, %v1171
  %v1177 = vpop.permute.xlu0 %1176
  %1178 = vset.pattern.permute.xlu0 1
  %1179 = vperm.xlu0 %1178, %v1172
  %v1180 = vpop.permute.xlu0 %1179
  %1181 = vset.pattern.permute.xlu0 1
  %1182 = vperm.xlu0 %1181, %v1173
  %v1183 = vpop.permute.xlu0 %1182
  %1184 = vset.pattern.permute.xlu0 1
  %1185 = vperm.xlu0 %1184, %v1174
  %v1186 = vpop.permute.xlu0 %1185
  %vm1187 = vcmp.eq.s32.totalorder %v1177, 1
  %vm1188 = vcmp.eq.s32.totalorder %v1180, 1
  %vm1189 = vcmp.eq.s32.totalorder %v1183, 1
  %vm1190 = vcmp.eq.s32.totalorder %v1186, 1
  %v1191 = vsel %vm1187, %v951, -1e+30
  %v1192 = vsel %vm1188, %v952, -1e+30
  %v1193 = vsel %vm1189, %v953, -1e+30
  %v1194 = vsel %vm1190, %v954, -1e+30
  %v1195 = vsel %vm551, %v1191, -inf
  %v1196 = vsel %vm551, %v1192, -inf
  %v1197 = vsel %vm551, %v1193, -inf
  %v1198 = vsel %vm551, %v1194, -inf
  %v1199 = vmax.f32 %v1195, %v1196
  %v1200 = vmax.f32 %v1197, %v1198
  %v1201 = vmax.f32 %v1199, %v1200
  %v1202 = vrot.slane %v1201, 4
  %v1203 = vmax.f32 %v1201, %v1202
  %v1204 = vrot.slane %v1203, 2
  %v1205 = vmax.f32 %v1203, %v1204
  %v1206 = vrot.slane %v1205, 1
  %v1207 = vmax.f32 %v1205, %v1206
  %vm1208 = vcmp.eq.s32.totalorder %v177, 1
  %v1209 = vsel %vm1208, %v1207, %v1150
  %v1210 = vadd.f32 %v1209, 0.0
  %1211 = vmatprep.subr.mxu0 0.0
  %1212 = vmatpush1.msra.mxu0 %v903
  %1213 = vmatprep.subr.mxu0 0.0
  %1214 = vmatpush1.msra.mxu0 %v904
  %1215 = vmatprep.subr.mxu0 0.0
  %1216 = vmatpush1.msra.mxu0 %v905
  %1217 = vmatprep.subr.mxu0 0.0
  %1218 = vmatpush1.msra.mxu0 %v906
  %1219 = vmatprep.subr.mxu0 0.0
  %1220 = vmatpush1.msra.mxu0 0.0
  %1221 = vmatprep.subr.mxu0 0.0
  %1222 = vmatpush1.msra.mxu0 0.0
  %1223 = vmatprep.subr.mxu0 0.0
  %1224 = vmatpush1.msra.mxu0 0.0
  %1225 = vmatprep.subr.mxu0 0.0
  %1226 = vmatpush1.msra.mxu0 0.0
  %1227 = vmatprep.subr.mxu0 0.0
  %1228 = vmatpush1.msra.mxu0 0.0
  %1229 = vmatprep.subr.mxu0 0.0
  %1230 = vmatpush1.msra.mxu0 0.0
  %1231 = vmatprep.subr.mxu0 0.0
  %1232 = vmatpush1.msra.mxu0 0.0
  %1233 = vmatprep.subr.mxu0 0.0
  %1234 = vmatpush1.msra.mxu0 0.0
  %1235 = vmatprep.subr.mxu0 0.0
  %1236 = vmatpush1.msra.mxu0 0.0
  %1237 = vmatprep.subr.mxu0 0.0
  %1238 = vmatpush1.msra.mxu0 0.0
  %1239 = vmatprep.subr.mxu0 0.0
  %1240 = vmatpush1.msra.mxu0 0.0
  %1241 = vmatprep.subr.mxu0 0.0
  %1242 = vmatpush1.msra.mxu0 0.0
  %1243 = vmatprep.subr.mxu0 0.0
  %1244 = vmatpush1.msra.mxu0 0.0
  %1245 = vmatprep.subr.mxu0 0.0
  %1246 = vmatpush1.msra.mxu0 0.0
  %1247 = vmatprep.subr.mxu0 0.0
  %1248 = vmatpush1.msra.mxu0 0.0
  %1249 = vmatprep.subr.mxu0 0.0
  %1250 = vmatpush1.msra.mxu0 0.0
  %1251 = vmatprep.subr.mxu0 0.0
  %1252 = vmatpush1.msra.mxu0 0.0
  %1253 = vmatprep.subr.mxu0 0.0
  %1254 = vmatpush1.msra.mxu0 0.0
  %1255 = vmatprep.subr.mxu0 0.0
  %1256 = vmatpush1.msra.mxu0 0.0
  %1257 = vmatprep.subr.mxu0 0.0
  %1258 = vmatpush1.msra.mxu0 0.0
  %1259 = vmatprep.subr.mxu0 0.0
  %1260 = vmatpush1.msra.mxu0 0.0
  %1261 = vmatprep.subr.mxu0 0.0
  %1262 = vmatpush1.msra.mxu0 0.0
  %1263 = vmatprep.subr.mxu0 0.0
  %1264 = vmatpush1.msra.mxu0 0.0
  %1265 = vmatprep.subr.mxu0 0.0
  %1266 = vmatpush1.msra.mxu0 0.0
  %1267 = vmatprep.subr.mxu0 0.0
  %1268 = vmatpush1.msra.mxu0 0.0
  %1269 = vmatprep.subr.mxu0 0.0
  %1270 = vmatpush1.msra.mxu0 0.0
  %1271 = vmatprep.subr.mxu0 0.0
  %1272 = vmatpush1.msra.mxu0 0.0
  %1273 = vmatprep.subr.mxu0 0.0
  %1274 = vmatpush1.msra.mxu0 0.0
  %1275 = vmatprep.mubr.f32.mxu0 0.0
  %1276 = vmatmul.mubr.f32.gmra.mrb[0].mxu0 %v189
  %v1277 = vpop.f32.mrb[0].mxu0
  %v1278 = vadd.f32 0.0, %v1277
  %v1279 = vpop.f32.mrb[0].mxu0
  %1280 = vmatprep.mubr.f32.mxu0 0.0
  %1281 = vmatmul.mubr.f32.gmra.mrb[0].mxu0 %v192
  %v1282 = vpop.f32.mrb[0].mxu0
  %v1283 = vadd.f32 0.0, %v1282
  %v1284 = vpop.f32.mrb[0].mxu0
  %1285 = vmatprep.mubr.f32.mxu0 0.0
  %1286 = vmatmul.mubr.f32.gmra.mrb[0].mxu0 %v195
  %v1287 = vpop.f32.mrb[0].mxu0
  %v1288 = vadd.f32 0.0, %v1287
  %v1289 = vpop.f32.mrb[0].mxu0
  %1290 = vmatprep.mubr.f32.mxu0 0.0
  %1291 = vmatmul.mubr.f32.gmra.mrb[0].mxu0 %v198
  %v1292 = vpop.f32.mrb[0].mxu0
  %v1293 = vadd.f32 0.0, %v1292
  %v1294 = vpop.f32.mrb[0].mxu0
  %1295 = vdwg.mxu0
  %1296 = vmatprep.subr.mxu0 0.0
  %1297 = vmatpush1.msra.mxu0 %v951
  %1298 = vmatprep.subr.mxu0 0.0
  %1299 = vmatpush1.msra.mxu0 %v952
  %1300 = vmatprep.subr.mxu0 0.0
  %1301 = vmatpush1.msra.mxu0 %v953
  %1302 = vmatprep.subr.mxu0 0.0
  %1303 = vmatpush1.msra.mxu0 %v954
  %1304 = vmatprep.subr.mxu0 0.0
  %1305 = vmatpush1.msra.mxu0 0.0
  %1306 = vmatprep.subr.mxu0 0.0
  %1307 = vmatpush1.msra.mxu0 0.0
  %1308 = vmatprep.subr.mxu0 0.0
  %1309 = vmatpush1.msra.mxu0 0.0
  %1310 = vmatprep.subr.mxu0 0.0
  %1311 = vmatpush1.msra.mxu0 0.0
  %1312 = vmatprep.subr.mxu0 0.0
  %1313 = vmatpush1.msra.mxu0 0.0
  %1314 = vmatprep.subr.mxu0 0.0
  %1315 = vmatpush1.msra.mxu0 0.0
  %1316 = vmatprep.subr.mxu0 0.0
  %1317 = vmatpush1.msra.mxu0 0.0
  %1318 = vmatprep.subr.mxu0 0.0
  %1319 = vmatpush1.msra.mxu0 0.0
  %1320 = vmatprep.subr.mxu0 0.0
  %1321 = vmatpush1.msra.mxu0 0.0
  %1322 = vmatprep.subr.mxu0 0.0
  %1323 = vmatpush1.msra.mxu0 0.0
  %1324 = vmatprep.subr.mxu0 0.0
  %1325 = vmatpush1.msra.mxu0 0.0
  %1326 = vmatprep.subr.mxu0 0.0
  %1327 = vmatpush1.msra.mxu0 0.0
  %1328 = vmatprep.subr.mxu0 0.0
  %1329 = vmatpush1.msra.mxu0 0.0
  %1330 = vmatprep.subr.mxu0 0.0
  %1331 = vmatpush1.msra.mxu0 0.0
  %1332 = vmatprep.subr.mxu0 0.0
  %1333 = vmatpush1.msra.mxu0 0.0
  %1334 = vmatprep.subr.mxu0 0.0
  %1335 = vmatpush1.msra.mxu0 0.0
  %1336 = vmatprep.subr.mxu0 0.0
  %1337 = vmatpush1.msra.mxu0 0.0
  %1338 = vmatprep.subr.mxu0 0.0
  %1339 = vmatpush1.msra.mxu0 0.0
  %1340 = vmatprep.subr.mxu0 0.0
  %1341 = vmatpush1.msra.mxu0 0.0
  %1342 = vmatprep.subr.mxu0 0.0
  %1343 = vmatpush1.msra.mxu0 0.0
  %1344 = vmatprep.subr.mxu0 0.0
  %1345 = vmatpush1.msra.mxu0 0.0
  %1346 = vmatprep.subr.mxu0 0.0
  %1347 = vmatpush1.msra.mxu0 0.0
  %1348 = vmatprep.subr.mxu0 0.0
  %1349 = vmatpush1.msra.mxu0 0.0
  %1350 = vmatprep.subr.mxu0 0.0
  %1351 = vmatpush1.msra.mxu0 0.0
  %1352 = vmatprep.subr.mxu0 0.0
  %1353 = vmatpush1.msra.mxu0 0.0
  %1354 = vmatprep.subr.mxu0 0.0
  %1355 = vmatpush1.msra.mxu0 0.0
  %1356 = vmatprep.subr.mxu0 0.0
  %1357 = vmatpush1.msra.mxu0 0.0
  %1358 = vmatprep.subr.mxu0 0.0
  %1359 = vmatpush1.msra.mxu0 0.0
  %1360 = vmatprep.mubr.f32.mxu0 0.0
  %1361 = vmatmul.mubr.f32.gmra.mrb[0].mxu0 %v189
  %v1362 = vpop.f32.mrb[0].mxu0
  %v1363 = vadd.f32 0.0, %v1362
  %v1364 = vpop.f32.mrb[0].mxu0
  %1365 = vmatprep.mubr.f32.mxu0 0.0
  %1366 = vmatmul.mubr.f32.gmra.mrb[0].mxu0 %v192
  %v1367 = vpop.f32.mrb[0].mxu0
  %v1368 = vadd.f32 0.0, %v1367
  %v1369 = vpop.f32.mrb[0].mxu0
  %1370 = vmatprep.mubr.f32.mxu0 0.0
  %1371 = vmatmul.mubr.f32.gmra.mrb[0].mxu0 %v195
  %v1372 = vpop.f32.mrb[0].mxu0
  %v1373 = vadd.f32 0.0, %v1372
  %v1374 = vpop.f32.mrb[0].mxu0
  %1375 = vmatprep.mubr.f32.mxu0 0.0
  %1376 = vmatmul.mubr.f32.gmra.mrb[0].mxu0 %v198
  %v1377 = vpop.f32.mrb[0].mxu0
  %v1378 = vadd.f32 0.0, %v1377
  %v1379 = vpop.f32.mrb[0].mxu0
  %1380 = vdwg.mxu0
  %v1381 = vmax.f32 %v1278, 1.0
  %v1382 = vmax.f32 %v1283, 1.0
  %v1383 = vmax.f32 %v1288, 1.0
  %v1384 = vmax.f32 %v1293, 1.0
  %1386 = vset.pattern.permute.xlu0 0
  %1387 = vperm.xlu0 %1386, %v1381
  %v1388 = vpop.permute.xlu0 %1387
  %1391 = vset.pattern.permute.xlu0 0
  %1392 = vperm.xlu0 %1391, %v1382
  %v1393 = vpop.permute.xlu0 %1392
  %1396 = vset.pattern.permute.xlu0 0
  %1397 = vperm.xlu0 %1396, %v1383
  %v1398 = vpop.permute.xlu0 %1397
  %1401 = vset.pattern.permute.xlu0 0
  %1402 = vperm.xlu0 %1401, %v1384
  %v1403 = vpop.permute.xlu0 %1402
  %v1405 = vrcp.pop %v1388
  %v1406 = vmul.f32 %v1363, %v1405
  %v1407 = vrcp.pop %v1393
  %v1408 = vmul.f32 %v1368, %v1407
  %v1409 = vrcp.pop %v1398
  %v1410 = vmul.f32 %v1373, %v1409
  %v1411 = vrcp.pop %v1403
  %v1412 = vmul.f32 %v1378, %v1411
  %1413 = vst.msk [vmem:[#allocation2] sm:$0xff] %vm551, %v1406
  %1414 = vst.msk [vmem:[#allocation2 + $0x8] sm:$0xff] %vm551, %v1408
  %1415 = vst.msk [vmem:[#allocation2 + $0x10] sm:$0xff] %vm551, %v1410
  %1416 = vst.msk [vmem:[#allocation2 + $0x18] sm:$0xff] %vm551, %v1412
  %1421 = vrot.lane.b32.xlu0 %v951, 64
  %v1422 = vpop.permute.xlu0 %1421
  %1423 = vrot.lane.b32.xlu0 %v952, 64
  %v1424 = vpop.permute.xlu0 %1423
  %1425 = vrot.lane.b32.xlu0 %v953, 64
  %v1426 = vpop.permute.xlu0 %1425
  %1427 = vrot.lane.b32.xlu0 %v954, 64
  %v1428 = vpop.permute.xlu0 %1427
  %vm1433 = vcmask 1048064
  %1434 = vst.msk [vmem:[#allocation2] sm:$0xff] %vm1433, %v1422
  %1435 = vst.msk [vmem:[#allocation2 + $0x8] sm:$0xff] %vm1433, %v1424
  %1436 = vst.msk [vmem:[#allocation2 + $0x10] sm:$0xff] %vm1433, %v1426
  %1437 = vst.msk [vmem:[#allocation2 + $0x18] sm:$0xff] %vm1433, %v1428
  %v1438 = vld [vmem:[#allocation2] sm:$0xff]
  %v1439 = vld [vmem:[#allocation2 + $0x8] sm:$0xff]
  %v1440 = vld [vmem:[#allocation2 + $0x10] sm:$0xff]
  %v1441 = vld [vmem:[#allocation2 + $0x18] sm:$0xff]
  %v1442 = vld [vmem:[%s5] sm:$0xff]
  %v1443 = vld [vmem:[%s5 + $0x8] sm:$0xff]
  %v1444 = vld [vmem:[%s5 + $0x10] sm:$0xff]
  %v1445 = vld [vmem:[%s5 + $0x18] sm:$0xff]
  %v1446 = vld [vmem:[%s5 + $0x20] sm:$0xff]
  %v1447 = vld [vmem:[%s5 + $0x28] sm:$0xff]
  %v1448 = vld [vmem:[%s5 + $0x30] sm:$0xff]
  %v1449 = vld [vmem:[%s5 + $0x38] sm:$0xff]
  %v1450 = vld [vmem:[%s5 + $0x40] sm:$0xff]
  %v1451 = vld [vmem:[%s5 + $0x48] sm:$0xff]
  %v1452 = vld [vmem:[%s5 + $0x50] sm:$0xff]
  %v1453 = vld [vmem:[%s5 + $0x58] sm:$0xff]
  %v1454 = vld [vmem:[%s5 + $0x60] sm:$0xff]
  %v1455 = vld [vmem:[%s5 + $0x68] sm:$0xff]
  %v1456 = vld [vmem:[%s5 + $0x70] sm:$0xff]
  %v1457 = vld [vmem:[%s5 + $0x78] sm:$0xff]
  %v1458 = vld [vmem:[%s10 + $0x1] sm:$0x1]
  %v1459 = vlaneseq
  %v1460 = vshrl.u32 %v1459, 7
  %v1461 = vsub.s32 0, %v1460
  %v1462 = vrot.slane %v1458, %v1461
  %1463 = vmatprep.subr.mxu0 0.0
  %1464 = vmatpush1.msra.mxu0 %v1442
  %1465 = vmatprep.subr.mxu0 0.0
  %1466 = vmatpush1.msra.mxu0 %v1443
  %1467 = vmatprep.subr.mxu0 0.0
  %1468 = vmatpush1.msra.mxu0 %v1444
  %1469 = vmatprep.subr.mxu0 0.0
  %1470 = vmatpush1.msra.mxu0 %v1445
  %1471 = vmatprep.subr.mxu0 0.0
  %1472 = vmatpush1.msra.mxu0 %v1446
  %1473 = vmatprep.subr.mxu0 0.0
  %1474 = vmatpush1.msra.mxu0 %v1447
  %1475 = vmatprep.subr.mxu0 0.0
  %1476 = vmatpush1.msra.mxu0 %v1448
  %1477 = vmatprep.subr.mxu0 0.0
  %1478 = vmatpush1.msra.mxu0 %v1449
  %1479 = vmatprep.subr.mxu0 0.0
  %1480 = vmatpush1.msra.mxu0 %v1450
  %1481 = vmatprep.subr.mxu0 0.0
  %1482 = vmatpush1.msra.mxu0 %v1451
  %1483 = vmatprep.subr.mxu0 0.0
  %1484 = vmatpush1.msra.mxu0 %v1452
  %1485 = vmatprep.subr.mxu0 0.0
  %1486 = vmatpush1.msra.mxu0 %v1453
  %1487 = vmatprep.subr.mxu0 0.0
  %1488 = vmatpush1.msra.mxu0 %v1454
  %1489 = vmatprep.subr.mxu0 0.0
  %1490 = vmatpush1.msra.mxu0 %v1455
  %1491 = vmatprep.subr.mxu0 0.0
  %1492 = vmatpush1.msra.mxu0 %v1456
  %1493 = vmatprep.subr.mxu0 0.0
  %1494 = vmatpush1.msra.mxu0 %v1457
  %1495 = vmatprep.subr.mxu0 0.0
  %1496 = vmatpush1.msra.mxu0 0.0
  %1497 = vmatprep.subr.mxu0 0.0
  %1498 = vmatpush1.msra.mxu0 0.0
  %1499 = vmatprep.subr.mxu0 0.0
  %1500 = vmatpush1.msra.mxu0 0.0
  %1501 = vmatprep.subr.mxu0 0.0
  %1502 = vmatpush1.msra.mxu0 0.0
  %1503 = vmatprep.subr.mxu0 0.0
  %1504 = vmatpush1.msra.mxu0 0.0
  %1505 = vmatprep.subr.mxu0 0.0
  %1506 = vmatpush1.msra.mxu0 0.0
  %1507 = vmatprep.subr.mxu0 0.0
  %1508 = vmatpush1.msra.mxu0 0.0
  %1509 = vmatprep.subr.mxu0 0.0
  %1510 = vmatpush1.msra.mxu0 0.0
  %1511 = vmatprep.subr.mxu0 0.0
  %1512 = vmatpush1.msra.mxu0 0.0
  %1513 = vmatprep.subr.mxu0 0.0
  %1514 = vmatpush1.msra.mxu0 0.0
  %1515 = vmatprep.subr.mxu0 0.0
  %1516 = vmatpush1.msra.mxu0 0.0
  %1517 = vmatprep.subr.mxu0 0.0
  %1518 = vmatpush1.msra.mxu0 0.0
  %1519 = vmatprep.subr.mxu0 0.0
  %1520 = vmatpush1.msra.mxu0 0.0
  %1521 = vmatprep.subr.mxu0 0.0
  %1522 = vmatpush1.msra.mxu0 0.0
  %1523 = vmatprep.subr.mxu0 0.0
  %1524 = vmatpush1.msra.mxu0 0.0
  %1525 = vmatprep.subr.mxu0 0.0
  %1526 = vmatpush1.msra.mxu0 0.0
  %1527 = vmatprep.mubr.f32.mxu0 0.0
  %1528 = vmatmul.mubr.f32.gmra.mrb[0].mxu0 %v1438
  %v1529 = vpop.f32.mrb[0].mxu0
  %v1530 = vadd.f32 %v1462, %v1529
  %v1531 = vpop.f32.mrb[0].mxu0
  %1532 = vmatprep.mubr.f32.mxu0 0.0
  %1533 = vmatmul.mubr.f32.gmra.mrb[0].mxu0 %v1439
  %v1534 = vpop.f32.mrb[0].mxu0
  %v1535 = vadd.f32 %v1462, %v1534
  %v1536 = vpop.f32.mrb[0].mxu0
  %1537 = vmatprep.mubr.f32.mxu0 0.0
  %1538 = vmatmul.mubr.f32.gmra.mrb[0].mxu0 %v1440
  %v1539 = vpop.f32.mrb[0].mxu0
  %v1540 = vadd.f32 %v1462, %v1539
  %v1541 = vpop.f32.mrb[0].mxu0
  %1542 = vmatprep.mubr.f32.mxu0 0.0
  %1543 = vmatmul.mubr.f32.gmra.mrb[0].mxu0 %v1441
  %v1544 = vpop.f32.mrb[0].mxu0
  %v1545 = vadd.f32 %v1462, %v1544
  %v1546 = vpop.f32.mrb[0].mxu0
  %1547 = vdwg.mxu0
  %v1548 = vmax.f32 %v1530, 0.0
  %v1549 = vmax.f32 %v1535, 0.0
  %v1550 = vmax.f32 %v1540, 0.0
  %v1551 = vmax.f32 %v1545, 0.0
  %v1552 = vld [vmem:[%s11] sm:$0xff]
  %v1553 = vld [vmem:[%s11 + $0x8] sm:$0xff]
  %v1554 = vld [vmem:[%s11 + $0x10] sm:$0xff]
  %v1555 = vld [vmem:[%s11 + $0x18] sm:$0xff]
  %v1556 = vld [vmem:[%s11 + $0x20] sm:$0xff]
  %v1557 = vld [vmem:[%s11 + $0x28] sm:$0xff]
  %v1558 = vld [vmem:[%s11 + $0x30] sm:$0xff]
  %v1559 = vld [vmem:[%s11 + $0x38] sm:$0xff]
  %1568 = vrot.lane.b32.xlu0 %v1552, 127
  %v1569 = vpop.permute.xlu0 %1568
  %1570 = vrot.lane.b32.xlu0 %v1553, 127
  %v1571 = vpop.permute.xlu0 %1570
  %1572 = vrot.lane.b32.xlu0 %v1554, 127
  %v1573 = vpop.permute.xlu0 %1572
  %1574 = vrot.lane.b32.xlu0 %v1555, 127
  %v1575 = vpop.permute.xlu0 %1574
  %1576 = vrot.lane.b32.xlu0 %v1556, 127
  %v1577 = vpop.permute.xlu0 %1576
  %1578 = vrot.lane.b32.xlu0 %v1557, 127
  %v1579 = vpop.permute.xlu0 %1578
  %1580 = vrot.lane.b32.xlu0 %v1558, 127
  %v1581 = vpop.permute.xlu0 %1580
  %1582 = vrot.lane.b32.xlu0 %v1559, 127
  %v1583 = vpop.permute.xlu0 %1582
  %v1593 = vsel %vm551, %v1548, 0
  %v1596 = vsel %vm551, %v1549, 0
  %v1599 = vsel %vm551, %v1550, 0
  %v1602 = vsel %vm551, %v1551, 0
  %1604 = vmatprep.subr.mxu0 0.0
  %1605 = vmatpush1.msra.mxu0 %v1569
  %1606 = vmatprep.subr.mxu0 0.0
  %1607 = vmatpush1.msra.mxu0 %v1571
  %1608 = vmatprep.subr.mxu0 0.0
  %1609 = vmatpush1.msra.mxu0 %v1573
  %1610 = vmatprep.subr.mxu0 0.0
  %1611 = vmatpush1.msra.mxu0 %v1575
  %1612 = vmatprep.subr.mxu0 0.0
  %1613 = vmatpush1.msra.mxu0 %v1577
  %1614 = vmatprep.subr.mxu0 0.0
  %1615 = vmatpush1.msra.mxu0 %v1579
  %1616 = vmatprep.subr.mxu0 0.0
  %1617 = vmatpush1.msra.mxu0 %v1581
  %1618 = vmatprep.subr.mxu0 0.0
  %1619 = vmatpush1.msra.mxu0 %v1583
  %1620 = vmatprep.subr.mxu0 0.0
  %1621 = vmatpush1.msra.mxu0 0.0
  %1622 = vmatprep.subr.mxu0 0.0
  %1623 = vmatpush1.msra.mxu0 0.0
  %1624 = vmatprep.subr.mxu0 0.0
  %1625 = vmatpush1.msra.mxu0 0.0
  %1626 = vmatprep.subr.mxu0 0.0
  %1627 = vmatpush1.msra.mxu0 0.0
  %1628 = vmatprep.subr.mxu0 0.0
  %1629 = vmatpush1.msra.mxu0 0.0
  %1630 = vmatprep.subr.mxu0 0.0
  %1631 = vmatpush1.msra.mxu0 0.0
  %1632 = vmatprep.subr.mxu0 0.0
  %1633 = vmatpush1.msra.mxu0 0.0
  %1634 = vmatprep.subr.mxu0 0.0
  %1635 = vmatpush1.msra.mxu0 0.0
  %1636 = vmatprep.subr.mxu0 0.0
  %1637 = vmatpush1.msra.mxu0 0.0
  %1638 = vmatprep.subr.mxu0 0.0
  %1639 = vmatpush1.msra.mxu0 0.0
  %1640 = vmatprep.subr.mxu0 0.0
  %1641 = vmatpush1.msra.mxu0 0.0
  %1642 = vmatprep.subr.mxu0 0.0
  %1643 = vmatpush1.msra.mxu0 0.0
  %1644 = vmatprep.subr.mxu0 0.0
  %1645 = vmatpush1.msra.mxu0 0.0
  %1646 = vmatprep.subr.mxu0 0.0
  %1647 = vmatpush1.msra.mxu0 0.0
  %1648 = vmatprep.subr.mxu0 0.0
  %1649 = vmatpush1.msra.mxu0 0.0
  %1650 = vmatprep.subr.mxu0 0.0
  %1651 = vmatpush1.msra.mxu0 0.0
  %1652 = vmatprep.subr.mxu0 0.0
  %1653 = vmatpush1.msra.mxu0 0.0
  %1654 = vmatprep.subr.mxu0 0.0
  %1655 = vmatpush1.msra.mxu0 0.0
  %1656 = vmatprep.subr.mxu0 0.0
  %1657 = vmatpush1.msra.mxu0 0.0
  %1658 = vmatprep.subr.mxu0 0.0
  %1659 = vmatpush1.msra.mxu0 0.0
  %1660 = vmatprep.subr.mxu0 0.0
  %1661 = vmatpush1.msra.mxu0 0.0
  %1662 = vmatprep.subr.mxu0 0.0
  %1663 = vmatpush1.msra.mxu0 0.0
  %1664 = vmatprep.subr.mxu0 0.0
  %1665 = vmatpush1.msra.mxu0 0.0
  %1666 = vmatprep.subr.mxu0 0.0
  %1667 = vmatpush1.msra.mxu0 0.0
  %1668 = vmatprep.mubr.f32.mxu0 0.0
  %1669 = vmatmul.mubr.f32.gmra.mrb[0].mxu0 %v1593
  %v1670 = vpop.f32.mrb[0].mxu0
  %v1671 = vadd.f32 0.0, %v1670
  %v1672 = vpop.f32.mrb[0].mxu0
  %1673 = vmatprep.mubr.f32.mxu0 0.0
  %1674 = vmatmul.mubr.f32.gmra.mrb[0].mxu0 %v1596
  %v1675 = vpop.f32.mrb[0].mxu0
  %v1676 = vadd.f32 0.0, %v1675
  %v1677 = vpop.f32.mrb[0].mxu0
  %1678 = vmatprep.mubr.f32.mxu0 0.0
  %1679 = vmatmul.mubr.f32.gmra.mrb[0].mxu0 %v1599
  %v1680 = vpop.f32.mrb[0].mxu0
  %v1681 = vadd.f32 0.0, %v1680
  %v1682 = vpop.f32.mrb[0].mxu0
  %1683 = vmatprep.mubr.f32.mxu0 0.0
  %1684 = vmatmul.mubr.f32.gmra.mrb[0].mxu0 %v1602
  %v1685 = vpop.f32.mrb[0].mxu0
  %v1686 = vadd.f32 0.0, %v1685
  %v1687 = vpop.f32.mrb[0].mxu0
  %1688 = vdwg.mxu0
  %v1689 = vtanh.pop %v1671
  %v1690 = vtanh.pop %v1676
  %v1691 = vtanh.pop %v1681
  %v1692 = vtanh.pop %v1686
  %vm1693 = vcmp.gt.f32.partialorder %v903, 0.0
  %vm1694 = vcmp.gt.f32.partialorder %v904, 0.0
  %vm1695 = vcmp.gt.f32.partialorder %v905, 0.0
  %vm1696 = vcmp.gt.f32.partialorder %v906, 0.0
  %v1697 = vsel %vm1693, %v1689, -1e+30
  %v1698 = vsel %vm1694, %v1690, -1e+30
  %v1699 = vsel %vm1695, %v1691, -1e+30
  %v1700 = vsel %vm1696, %v1692, -1e+30
  %1702 = vset.pattern.permute.xlu0 0
  %1703 = vperm.xlu0 %1702, %v1697
  %v1704 = vpop.permute.xlu0 %1703
  %1707 = vset.pattern.permute.xlu0 0
  %1708 = vperm.xlu0 %1707, %v1698
  %v1709 = vpop.permute.xlu0 %1708
  %1712 = vset.pattern.permute.xlu0 0
  %1713 = vperm.xlu0 %1712, %v1699
  %v1714 = vpop.permute.xlu0 %1713
  %1717 = vset.pattern.permute.xlu0 0
  %1718 = vperm.xlu0 %1717, %v1700
  %v1719 = vpop.permute.xlu0 %1718
  %v1721 = vsel %vm183, %v1704, 0.0
  %v1722 = vsel %vm184, %v1709, 0.0
  %v1723 = vsel %vm185, %v1714, 0.0
  %v1724 = vsel %vm186, %v1719, 0.0
  %v1725 = vsel %vm187, %v1721, 0.0
  %v1726 = vsel %vm187, %v1722, 0.0
  %v1727 = vadd.f32 %v1725, %v1726
  %v1728 = vsel %vm187, %v1723, 0.0
  %v1729 = vadd.f32 %v1727, %v1728
  %v1730 = vsel %vm187, %v1724, 0.0
  %v1731 = vadd.f32 %v1729, %v1730
  %v1732 = vrot.slane %v1731, 4
  %v1733 = vadd.f32 %v1731, %v1732
  %v1734 = vrot.slane %v1733, 2
  %v1735 = vadd.f32 %v1733, %v1734
  %v1736 = vrot.slane %v1735, 1
  %v1737 = vadd.f32 %v1735, %v1736
  %vm1738 = vcmp.gt.f32.partialorder %v1737, %v1704
  %vm1739 = vcmp.gt.f32.partialorder %v1737, %v1709
  %vm1740 = vcmp.gt.f32.partialorder %v1737, %v1714
  %vm1741 = vcmp.gt.f32.partialorder %v1737, %v1719
  %vm1742 = vcmp.eq.f32.partialorder %v1737, %v1704
  %vm1743 = vcmp.eq.f32.partialorder %v1737, %v1709
  %vm1744 = vcmp.eq.f32.partialorder %v1737, %v1714
  %vm1745 = vcmp.eq.f32.partialorder %v1737, %v1719
  %vm1746 = vmand %vm1742, %vm703
  %vm1747 = vmand %vm1743, %vm704
  %vm1748 = vmand %vm1744, %vm705
  %vm1749 = vmand %vm1745, %vm706
  %vm1750 = vmor %vm1738, %vm1746
  %vm1751 = vmor %vm1739, %vm1747
  %vm1752 = vmor %vm1740, %vm1748
  %vm1753 = vmor %vm1741, %vm1749
  %v1754 = vsel %vm1750, %v158, 0.0
  %v1755 = vsel %vm1751, %v163, 0.0
  %v1756 = vsel %vm1752, %v168, 0.0
  %v1757 = vsel %vm1753, %v173, 0.0
  %v1758 = vsel %vm187, %v1754, 0.0
  %1759 = vadd.xlane.f32.xlu0 %v1758
  %v1760 = vpop.xlane.xlu0 %1759
  %v1761 = vsel %vm187, %v1755, 0.0
  %1762 = vadd.xlane.f32.xlu0 %v1761
  %v1763 = vpop.xlane.xlu0 %1762
  %v1764 = vsel %vm187, %v1756, 0.0
  %1765 = vadd.xlane.f32.xlu0 %v1764
  %v1766 = vpop.xlane.xlu0 %1765
  %v1767 = vsel %vm187, %v1757, 0.0
  %1768 = vadd.xlane.f32.xlu0 %v1767
  %v1769 = vpop.xlane.xlu0 %1768
  %v1771 = vsel %vm87, %v1092, 0
  %1773 = vmatprep.subr.mxu0 0.0
  %1774 = vmatpush1.msra.mxu0 %v1771
  %1775 = vmatprep.subr.mxu0 0.0
  %1776 = vmatpush1.msra.mxu0 0.0
  %1777 = vmatprep.subr.mxu0 0.0
  %1778 = vmatpush1.msra.mxu0 0.0
  %1779 = vmatprep.subr.mxu0 0.0
  %1780 = vmatpush1.msra.mxu0 0.0
  %1781 = vmatprep.subr.mxu0 0.0
  %1782 = vmatpush1.msra.mxu0 0.0
  %1783 = vmatprep.subr.mxu0 0.0
  %1784 = vmatpush1.msra.mxu0 0.0
  %1785 = vmatprep.subr.mxu0 0.0
  %1786 = vmatpush1.msra.mxu0 0.0
  %1787 = vmatprep.subr.mxu0 0.0
  %1788 = vmatpush1.msra.mxu0 0.0
  %1789 = vmatprep.subr.mxu0 0.0
  %1790 = vmatpush1.msra.mxu0 0.0
  %1791 = vmatprep.subr.mxu0 0.0
  %1792 = vmatpush1.msra.mxu0 0.0
  %1793 = vmatprep.subr.mxu0 0.0
  %1794 = vmatpush1.msra.mxu0 0.0
  %1795 = vmatprep.subr.mxu0 0.0
  %1796 = vmatpush1.msra.mxu0 0.0
  %1797 = vmatprep.subr.mxu0 0.0
  %1798 = vmatpush1.msra.mxu0 0.0
  %1799 = vmatprep.subr.mxu0 0.0
  %1800 = vmatpush1.msra.mxu0 0.0
  %1801 = vmatprep.subr.mxu0 0.0
  %1802 = vmatpush1.msra.mxu0 0.0
  %1803 = vmatprep.subr.mxu0 0.0
  %1804 = vmatpush1.msra.mxu0 0.0
  %1805 = vmatprep.subr.mxu0 0.0
  %1806 = vmatpush1.msra.mxu0 0.0
  %1807 = vmatprep.subr.mxu0 0.0
  %1808 = vmatpush1.msra.mxu0 0.0
  %1809 = vmatprep.subr.mxu0 0.0
  %1810 = vmatpush1.msra.mxu0 0.0
  %1811 = vmatprep.subr.mxu0 0.0
  %1812 = vmatpush1.msra.mxu0 0.0
  %1813 = vmatprep.subr.mxu0 0.0
  %1814 = vmatpush1.msra.mxu0 0.0
  %1815 = vmatprep.subr.mxu0 0.0
  %1816 = vmatpush1.msra.mxu0 0.0
  %1817 = vmatprep.subr.mxu0 0.0
  %1818 = vmatpush1.msra.mxu0 0.0
  %1819 = vmatprep.subr.mxu0 0.0
  %1820 = vmatpush1.msra.mxu0 0.0
  %1821 = vmatprep.subr.mxu0 0.0
  %1822 = vmatpush1.msra.mxu0 0.0
  %1823 = vmatprep.subr.mxu0 0.0
  %1824 = vmatpush1.msra.mxu0 0.0
  %1825 = vmatprep.subr.mxu0 0.0
  %1826 = vmatpush1.msra.mxu0 0.0
  %1827 = vmatprep.subr.mxu0 0.0
  %1828 = vmatpush1.msra.mxu0 0.0
  %1829 = vmatprep.subr.mxu0 0.0
  %1830 = vmatpush1.msra.mxu0 0.0
  %1831 = vmatprep.subr.mxu0 0.0
  %1832 = vmatpush1.msra.mxu0 0.0
  %1833 = vmatprep.subr.mxu0 0.0
  %1834 = vmatpush1.msra.mxu0 0.0
  %1835 = vmatprep.subr.mxu0 0.0
  %1836 = vmatpush1.msra.mxu0 0.0
  %1837 = vmatprep.mubr.f32.mxu0 0.0
  %1838 = vmatmul.mubr.f32.gmra.mrb[0].mxu0 %v76
  %v1839 = vpop.f32.mrb[0].mxu0
  %v1840 = vadd.f32 0.0, %v1839
  %v1841 = vpop.f32.mrb[0].mxu0
  %1842 = vmatprep.mubr.f32.mxu0 0.0
  %1843 = vmatmul.mubr.f32.gmra.mrb[0].mxu0 %v79
  %v1844 = vpop.f32.mrb[0].mxu0
  %v1845 = vadd.f32 0.0, %v1844
  %v1846 = vpop.f32.mrb[0].mxu0
  %1847 = vmatprep.mubr.f32.mxu0 0.0
  %1848 = vmatmul.mubr.f32.gmra.mrb[0].mxu0 %v82
  %v1849 = vpop.f32.mrb[0].mxu0
  %v1850 = vadd.f32 0.0, %v1849
  %v1851 = vpop.f32.mrb[0].mxu0
  %1852 = vmatprep.mubr.f32.mxu0 0.0
  %1853 = vmatmul.mubr.f32.gmra.mrb[0].mxu0 %v85
  %v1854 = vpop.f32.mrb[0].mxu0
  %v1855 = vadd.f32 0.0, %v1854
  %v1856 = vpop.f32.mrb[0].mxu0
  %1857 = vdwg.mxu0
  %v1858 = vmul.f32 %v1840, 0.5
  %v1859 = vmul.f32 %v1845, 0.5
  %v1860 = vmul.f32 %v1850, 0.5
  %v1861 = vmul.f32 %v1855, 0.5
  %vm1862 = vcmp.lt.f32.partialorder %v1760, %v1858
  %vm1863 = vcmp.lt.f32.partialorder %v1763, %v1859
  %vm1864 = vcmp.lt.f32.partialorder %v1766, %v1860
  %vm1865 = vcmp.lt.f32.partialorder %v1769, %v1861
  %vm1866 = vmand %vm1862, %vm1693
  %vm1867 = vmand %vm1863, %vm1694
  %vm1868 = vmand %vm1864, %vm1695
  %vm1869 = vmand %vm1865, %vm1696
  %v1870 = vsel %vm1866, 1.0, 0.0
  %v1871 = vsel %vm1867, 1.0, 0.0
  %v1872 = vsel %vm1868, 1.0, 0.0
  %v1873 = vsel %vm1869, 1.0, 0.0
  %1875 = vset.pattern.permute.xlu0 0
  %1876 = vperm.xlu0 %1875, %v1689
  %v1877 = vpop.permute.xlu0 %1876
  %1880 = vset.pattern.permute.xlu0 0
  %1881 = vperm.xlu0 %1880, %v1690
  %v1882 = vpop.permute.xlu0 %1881
  %1885 = vset.pattern.permute.xlu0 0
  %1886 = vperm.xlu0 %1885, %v1691
  %v1887 = vpop.permute.xlu0 %1886
  %1890 = vset.pattern.permute.xlu0 0
  %1891 = vperm.xlu0 %1890, %v1692
  %v1892 = vpop.permute.xlu0 %1891
  %v1894 = vmul.f32 %v1548, %v1877
  %v1895 = vmul.f32 %v1549, %v1882
  %v1896 = vmul.f32 %v1550, %v1887
  %v1897 = vmul.f32 %v1551, %v1892
  %1899 = vset.pattern.permute.xlu0 0
  %1900 = vperm.xlu0 %1899, %v1870
  %v1901 = vpop.permute.xlu0 %1900
  %1904 = vset.pattern.permute.xlu0 0
  %1905 = vperm.xlu0 %1904, %v1871
  %v1906 = vpop.permute.xlu0 %1905
  %1909 = vset.pattern.permute.xlu0 0
  %1910 = vperm.xlu0 %1909, %v1872
  %v1911 = vpop.permute.xlu0 %1910
  %1914 = vset.pattern.permute.xlu0 0
  %1915 = vperm.xlu0 %1914, %v1873
  %v1916 = vpop.permute.xlu0 %1915
  %v1918 = vmul.f32 %v1894, %v1901
  %v1919 = vmul.f32 %v1895, %v1906
  %v1920 = vmul.f32 %v1896, %v1911
  %v1921 = vmul.f32 %v1897, %v1916
  %1922 = vmatprep.subr.mxu0 0.0
  %1923 = vmatpush1.msra.mxu0 %v1918
  %1924 = vmatprep.subr.mxu0 0.0
  %1925 = vmatpush1.msra.mxu0 %v1919
  %1926 = vmatprep.subr.mxu0 0.0
  %1927 = vmatpush1.msra.mxu0 %v1920
  %1928 = vmatprep.subr.mxu0 0.0
  %1929 = vmatpush1.msra.mxu0 %v1921
  %1930 = vmatprep.subr.mxu0 0.0
  %1931 = vmatpush1.msra.mxu0 0.0
  %1932 = vmatprep.subr.mxu0 0.0
  %1933 = vmatpush1.msra.mxu0 0.0
  %1934 = vmatprep.subr.mxu0 0.0
  %1935 = vmatpush1.msra.mxu0 0.0
  %1936 = vmatprep.subr.mxu0 0.0
  %1937 = vmatpush1.msra.mxu0 0.0
  %1938 = vmatprep.subr.mxu0 0.0
  %1939 = vmatpush1.msra.mxu0 0.0
  %1940 = vmatprep.subr.mxu0 0.0
  %1941 = vmatpush1.msra.mxu0 0.0
  %1942 = vmatprep.subr.mxu0 0.0
  %1943 = vmatpush1.msra.mxu0 0.0
  %1944 = vmatprep.subr.mxu0 0.0
  %1945 = vmatpush1.msra.mxu0 0.0
  %1946 = vmatprep.subr.mxu0 0.0
  %1947 = vmatpush1.msra.mxu0 0.0
  %1948 = vmatprep.subr.mxu0 0.0
  %1949 = vmatpush1.msra.mxu0 0.0
  %1950 = vmatprep.subr.mxu0 0.0
  %1951 = vmatpush1.msra.mxu0 0.0
  %1952 = vmatprep.subr.mxu0 0.0
  %1953 = vmatpush1.msra.mxu0 0.0
  %1954 = vmatprep.subr.mxu0 0.0
  %1955 = vmatpush1.msra.mxu0 0.0
  %1956 = vmatprep.subr.mxu0 0.0
  %1957 = vmatpush1.msra.mxu0 0.0
  %1958 = vmatprep.subr.mxu0 0.0
  %1959 = vmatpush1.msra.mxu0 0.0
  %1960 = vmatprep.subr.mxu0 0.0
  %1961 = vmatpush1.msra.mxu0 0.0
  %1962 = vmatprep.subr.mxu0 0.0
  %1963 = vmatpush1.msra.mxu0 0.0
  %1964 = vmatprep.subr.mxu0 0.0
  %1965 = vmatpush1.msra.mxu0 0.0
  %1966 = vmatprep.subr.mxu0 0.0
  %1967 = vmatpush1.msra.mxu0 0.0
  %1968 = vmatprep.subr.mxu0 0.0
  %1969 = vmatpush1.msra.mxu0 0.0
  %1970 = vmatprep.subr.mxu0 0.0
  %1971 = vmatpush1.msra.mxu0 0.0
  %1972 = vmatprep.subr.mxu0 0.0
  %1973 = vmatpush1.msra.mxu0 0.0
  %1974 = vmatprep.subr.mxu0 0.0
  %1975 = vmatpush1.msra.mxu0 0.0
  %1976 = vmatprep.subr.mxu0 0.0
  %1977 = vmatpush1.msra.mxu0 0.0
  %1978 = vmatprep.subr.mxu0 0.0
  %1979 = vmatpush1.msra.mxu0 0.0
  %1980 = vmatprep.subr.mxu0 0.0
  %1981 = vmatpush1.msra.mxu0 0.0
  %1982 = vmatprep.subr.mxu0 0.0
  %1983 = vmatpush1.msra.mxu0 0.0
  %1984 = vmatprep.subr.mxu0 0.0
  %1985 = vmatpush1.msra.mxu0 0.0
  %1986 = vmatprep.mubr.f32.mxu0 0.0
  %1987 = vmatmul.mubr.f32.gmra.mrb[0].mxu0 %v731
  %v1988 = vpop.f32.mrb[0].mxu0
  %v1989 = vadd.f32 0.0, %v1988
  %v1990 = vpop.f32.mrb[0].mxu0
  %1991 = vdwg.mxu0
  %1992 = vmatprep.subr.mxu0 0.0
  %1993 = vmatpush1.msra.mxu0 %v1870
  %1994 = vmatprep.subr.mxu0 0.0
  %1995 = vmatpush1.msra.mxu0 %v1871
  %1996 = vmatprep.subr.mxu0 0.0
  %1997 = vmatpush1.msra.mxu0 %v1872
  %1998 = vmatprep.subr.mxu0 0.0
  %1999 = vmatpush1.msra.mxu0 %v1873
  %2000 = vmatprep.subr.mxu0 0.0
  %2001 = vmatpush1.msra.mxu0 0.0
  %2002 = vmatprep.subr.mxu0 0.0
  %2003 = vmatpush1.msra.mxu0 0.0
  %2004 = vmatprep.subr.mxu0 0.0
  %2005 = vmatpush1.msra.mxu0 0.0
  %2006 = vmatprep.subr.mxu0 0.0
  %2007 = vmatpush1.msra.mxu0 0.0
  %2008 = vmatprep.subr.mxu0 0.0
  %2009 = vmatpush1.msra.mxu0 0.0
  %2010 = vmatprep.subr.mxu0 0.0
  %2011 = vmatpush1.msra.mxu0 0.0
  %2012 = vmatprep.subr.mxu0 0.0
  %2013 = vmatpush1.msra.mxu0 0.0
  %2014 = vmatprep.subr.mxu0 0.0
  %2015 = vmatpush1.msra.mxu0 0.0
  %2016 = vmatprep.subr.mxu0 0.0
  %2017 = vmatpush1.msra.mxu0 0.0
  %2018 = vmatprep.subr.mxu0 0.0
  %2019 = vmatpush1.msra.mxu0 0.0
  %2020 = vmatprep.subr.mxu0 0.0
  %2021 = vmatpush1.msra.mxu0 0.0
  %2022 = vmatprep.subr.mxu0 0.0
  %2023 = vmatpush1.msra.mxu0 0.0
  %2024 = vmatprep.subr.mxu0 0.0
  %2025 = vmatpush1.msra.mxu0 0.0
  %2026 = vmatprep.subr.mxu0 0.0
  %2027 = vmatpush1.msra.mxu0 0.0
  %2028 = vmatprep.subr.mxu0 0.0
  %2029 = vmatpush1.msra.mxu0 0.0
  %2030 = vmatprep.subr.mxu0 0.0
  %2031 = vmatpush1.msra.mxu0 0.0
  %2032 = vmatprep.subr.mxu0 0.0
  %2033 = vmatpush1.msra.mxu0 0.0
  %2034 = vmatprep.subr.mxu0 0.0
  %2035 = vmatpush1.msra.mxu0 0.0
  %2036 = vmatprep.subr.mxu0 0.0
  %2037 = vmatpush1.msra.mxu0 0.0
  %2038 = vmatprep.subr.mxu0 0.0
  %2039 = vmatpush1.msra.mxu0 0.0
  %2040 = vmatprep.subr.mxu0 0.0
  %2041 = vmatpush1.msra.mxu0 0.0
  %2042 = vmatprep.subr.mxu0 0.0
  %2043 = vmatpush1.msra.mxu0 0.0
  %2044 = vmatprep.subr.mxu0 0.0
  %2045 = vmatpush1.msra.mxu0 0.0
  %2046 = vmatprep.subr.mxu0 0.0
  %2047 = vmatpush1.msra.mxu0 0.0
  %2048 = vmatprep.subr.mxu0 0.0
  %2049 = vmatpush1.msra.mxu0 0.0
  %2050 = vmatprep.subr.mxu0 0.0
  %2051 = vmatpush1.msra.mxu0 0.0
  %2052 = vmatprep.subr.mxu0 0.0
  %2053 = vmatpush1.msra.mxu0 0.0
  %2054 = vmatprep.subr.mxu0 0.0
  %2055 = vmatpush1.msra.mxu0 0.0
  %2056 = vmatprep.mubr.f32.mxu0 0.0
  %2057 = vmatmul.mubr.f32.gmra.mrb[0].mxu0 %v731
  %v2058 = vpop.f32.mrb[0].mxu0
  %v2059 = vadd.f32 0.0, %v2058
  %v2060 = vpop.f32.mrb[0].mxu0
  %2061 = vdwg.mxu0
  %v2062 = vmax.f32 %v2059, 1.0
  %2064 = vset.pattern.permute.xlu0 0
  %2065 = vperm.xlu0 %2064, %v2062
  %v2066 = vpop.permute.xlu0 %2065
  %v2068 = vrcp.pop %v2066
  %v2069 = vmul.f32 %v1989, %v2068
  %v2070 = vadd.f32 %v1103, %v2069
  %v2071 = vmul.f32 %v70, %v1870
  %v2072 = vmul.f32 %v71, %v1871
  %v2073 = vmul.f32 %v72, %v1872
  %v2074 = vmul.f32 %v73, %v1873
  %vm2075 = vcmp.gt.f32.partialorder %v2071, 0.0
  %vm2076 = vcmp.gt.f32.partialorder %v2072, 0.0
  %vm2077 = vcmp.gt.f32.partialorder %v2073, 0.0
  %vm2078 = vcmp.gt.f32.partialorder %v2074, 0.0
  %v2079 = vsel %vm2075, 1, 0
  %v2080 = vsel %vm2076, 1, 0
  %v2081 = vsel %vm2077, 1, 0
  %v2082 = vsel %vm2078, 1, 0
  %2083 = vset.pattern.permute.xlu0 0
  %2084 = vperm.xlu0 %2083, %v2079
  %v2085 = vpop.permute.xlu0 %2084
  %2086 = vset.pattern.permute.xlu0 0
  %2087 = vperm.xlu0 %2086, %v2080
  %v2088 = vpop.permute.xlu0 %2087
  %2089 = vset.pattern.permute.xlu0 0
  %2090 = vperm.xlu0 %2089, %v2081
  %v2091 = vpop.permute.xlu0 %2090
  %2092 = vset.pattern.permute.xlu0 0
  %2093 = vperm.xlu0 %2092, %v2082
  %v2094 = vpop.permute.xlu0 %2093
  %vm2095 = vcmp.eq.s32.totalorder %v2085, 1
  %vm2096 = vcmp.eq.s32.totalorder %v2088, 1
  %vm2097 = vcmp.eq.s32.totalorder %v2091, 1
  %vm2098 = vcmp.eq.s32.totalorder %v2094, 1
  %v2099 = vsel %vm2095, %v1918, -1e+30
  %v2100 = vsel %vm2096, %v1919, -1e+30
  %v2101 = vsel %vm2097, %v1920, -1e+30
  %v2102 = vsel %vm2098, %v1921, -1e+30
  %v2103 = vsel %vm551, %v2099, -inf
  %v2104 = vsel %vm551, %v2100, -inf
  %v2105 = vsel %vm551, %v2101, -inf
  %v2106 = vsel %vm551, %v2102, -inf
  %v2107 = vmax.f32 %v2103, %v2104
  %v2108 = vmax.f32 %v2105, %v2106
  %v2109 = vmax.f32 %v2107, %v2108
  %v2110 = vrot.slane %v2109, 4
  %v2111 = vmax.f32 %v2109, %v2110
  %v2112 = vrot.slane %v2111, 2
  %v2113 = vmax.f32 %v2111, %v2112
  %v2114 = vrot.slane %v2113, 1
  %v2115 = vmax.f32 %v2113, %v2114
  %v2116 = vsel %vm1149, %v2115, -1e+30
  %2117 = vrot.lane.b32.xlu0 %v1870, 1
  %v2118 = vpop.permute.xlu0 %2117
  %2119 = vrot.lane.b32.xlu0 %v1871, 1
  %v2120 = vpop.permute.xlu0 %2119
  %2121 = vrot.lane.b32.xlu0 %v1872, 1
  %v2122 = vpop.permute.xlu0 %2121
  %2123 = vrot.lane.b32.xlu0 %v1873, 1
  %v2124 = vpop.permute.xlu0 %2123
  %v2129 = vmul.f32 %v70, %v2118
  %v2130 = vmul.f32 %v71, %v2120
  %v2131 = vmul.f32 %v72, %v2122
  %v2132 = vmul.f32 %v73, %v2124
  %vm2133 = vcmp.gt.f32.partialorder %v2129, 0.0
  %vm2134 = vcmp.gt.f32.partialorder %v2130, 0.0
  %vm2135 = vcmp.gt.f32.partialorder %v2131, 0.0
  %vm2136 = vcmp.gt.f32.partialorder %v2132, 0.0
  %v2137 = vsel %vm2133, 1, 0
  %v2138 = vsel %vm2134, 1, 0
  %v2139 = vsel %vm2135, 1, 0
  %v2140 = vsel %vm2136, 1, 0
  %2141 = vset.pattern.permute.xlu0 1
  %2142 = vperm.xlu0 %2141, %v2137
  %v2143 = vpop.permute.xlu0 %2142
  %2144 = vset.pattern.permute.xlu0 1
  %2145 = vperm.xlu0 %2144, %v2138
  %v2146 = vpop.permute.xlu0 %2145
  %2147 = vset.pattern.permute.xlu0 1
  %2148 = vperm.xlu0 %2147, %v2139
  %v2149 = vpop.permute.xlu0 %2148
  %2150 = vset.pattern.permute.xlu0 1
  %2151 = vperm.xlu0 %2150, %v2140
  %v2152 = vpop.permute.xlu0 %2151
  %vm2153 = vcmp.eq.s32.totalorder %v2143, 1
  %vm2154 = vcmp.eq.s32.totalorder %v2146, 1
  %vm2155 = vcmp.eq.s32.totalorder %v2149, 1
  %vm2156 = vcmp.eq.s32.totalorder %v2152, 1
  %v2157 = vsel %vm2153, %v1918, -1e+30
  %v2158 = vsel %vm2154, %v1919, -1e+30
  %v2159 = vsel %vm2155, %v1920, -1e+30
  %v2160 = vsel %vm2156, %v1921, -1e+30
  %v2161 = vsel %vm551, %v2157, -inf
  %v2162 = vsel %vm551, %v2158, -inf
  %v2163 = vsel %vm551, %v2159, -inf
  %v2164 = vsel %vm551, %v2160, -inf
  %v2165 = vmax.f32 %v2161, %v2162
  %v2166 = vmax.f32 %v2163, %v2164
  %v2167 = vmax.f32 %v2165, %v2166
  %v2168 = vrot.slane %v2167, 4
  %v2169 = vmax.f32 %v2167, %v2168
  %v2170 = vrot.slane %v2169, 2
  %v2171 = vmax.f32 %v2169, %v2170
  %v2172 = vrot.slane %v2171, 1
  %v2173 = vmax.f32 %v2171, %v2172
  %v2174 = vsel %vm1208, %v2173, %v2116
  %v2175 = vadd.f32 %v1210, %v2174
  %2176 = vmatprep.subr.mxu0 0.0
  %2177 = vmatpush1.msra.mxu0 %v1870
  %2178 = vmatprep.subr.mxu0 0.0
  %2179 = vmatpush1.msra.mxu0 %v1871
  %2180 = vmatprep.subr.mxu0 0.0
  %2181 = vmatpush1.msra.mxu0 %v1872
  %2182 = vmatprep.subr.mxu0 0.0
  %2183 = vmatpush1.msra.mxu0 %v1873
  %2184 = vmatprep.subr.mxu0 0.0
  %2185 = vmatpush1.msra.mxu0 0.0
  %2186 = vmatprep.subr.mxu0 0.0
  %2187 = vmatpush1.msra.mxu0 0.0
  %2188 = vmatprep.subr.mxu0 0.0
  %2189 = vmatpush1.msra.mxu0 0.0
  %2190 = vmatprep.subr.mxu0 0.0
  %2191 = vmatpush1.msra.mxu0 0.0
  %2192 = vmatprep.subr.mxu0 0.0
  %2193 = vmatpush1.msra.mxu0 0.0
  %2194 = vmatprep.subr.mxu0 0.0
  %2195 = vmatpush1.msra.mxu0 0.0
  %2196 = vmatprep.subr.mxu0 0.0
  %2197 = vmatpush1.msra.mxu0 0.0
  %2198 = vmatprep.subr.mxu0 0.0
  %2199 = vmatpush1.msra.mxu0 0.0
  %2200 = vmatprep.subr.mxu0 0.0
  %2201 = vmatpush1.msra.mxu0 0.0
  %2202 = vmatprep.subr.mxu0 0.0
  %2203 = vmatpush1.msra.mxu0 0.0
  %2204 = vmatprep.subr.mxu0 0.0
  %2205 = vmatpush1.msra.mxu0 0.0
  %2206 = vmatprep.subr.mxu0 0.0
  %2207 = vmatpush1.msra.mxu0 0.0
  %2208 = vmatprep.subr.mxu0 0.0
  %2209 = vmatpush1.msra.mxu0 0.0
  %2210 = vmatprep.subr.mxu0 0.0
  %2211 = vmatpush1.msra.mxu0 0.0
  %2212 = vmatprep.subr.mxu0 0.0
  %2213 = vmatpush1.msra.mxu0 0.0
  %2214 = vmatprep.subr.mxu0 0.0
  %2215 = vmatpush1.msra.mxu0 0.0
  %2216 = vmatprep.subr.mxu0 0.0
  %2217 = vmatpush1.msra.mxu0 0.0
  %2218 = vmatprep.subr.mxu0 0.0
  %2219 = vmatpush1.msra.mxu0 0.0
  %2220 = vmatprep.subr.mxu0 0.0
  %2221 = vmatpush1.msra.mxu0 0.0
  %2222 = vmatprep.subr.mxu0 0.0
  %2223 = vmatpush1.msra.mxu0 0.0
  %2224 = vmatprep.subr.mxu0 0.0
  %2225 = vmatpush1.msra.mxu0 0.0
  %2226 = vmatprep.subr.mxu0 0.0
  %2227 = vmatpush1.msra.mxu0 0.0
  %2228 = vmatprep.subr.mxu0 0.0
  %2229 = vmatpush1.msra.mxu0 0.0
  %2230 = vmatprep.subr.mxu0 0.0
  %2231 = vmatpush1.msra.mxu0 0.0
  %2232 = vmatprep.subr.mxu0 0.0
  %2233 = vmatpush1.msra.mxu0 0.0
  %2234 = vmatprep.subr.mxu0 0.0
  %2235 = vmatpush1.msra.mxu0 0.0
  %2236 = vmatprep.subr.mxu0 0.0
  %2237 = vmatpush1.msra.mxu0 0.0
  %2238 = vmatprep.subr.mxu0 0.0
  %2239 = vmatpush1.msra.mxu0 0.0
  %2240 = vmatprep.mubr.f32.mxu0 0.0
  %2241 = vmatmul.mubr.f32.gmra.mrb[0].mxu0 %v189
  %v2242 = vpop.f32.mrb[0].mxu0
  %v2243 = vadd.f32 0.0, %v2242
  %v2244 = vpop.f32.mrb[0].mxu0
  %2245 = vmatprep.mubr.f32.mxu0 0.0
  %2246 = vmatmul.mubr.f32.gmra.mrb[0].mxu0 %v192
  %v2247 = vpop.f32.mrb[0].mxu0
  %v2248 = vadd.f32 0.0, %v2247
  %v2249 = vpop.f32.mrb[0].mxu0
  %2250 = vmatprep.mubr.f32.mxu0 0.0
  %2251 = vmatmul.mubr.f32.gmra.mrb[0].mxu0 %v195
  %v2252 = vpop.f32.mrb[0].mxu0
  %v2253 = vadd.f32 0.0, %v2252
  %v2254 = vpop.f32.mrb[0].mxu0
  %2255 = vmatprep.mubr.f32.mxu0 0.0
  %2256 = vmatmul.mubr.f32.gmra.mrb[0].mxu0 %v198
  %v2257 = vpop.f32.mrb[0].mxu0
  %v2258 = vadd.f32 0.0, %v2257
  %v2259 = vpop.f32.mrb[0].mxu0
  %2260 = vdwg.mxu0
  %2261 = vmatprep.subr.mxu0 0.0
  %2262 = vmatpush1.msra.mxu0 %v1918
  %2263 = vmatprep.subr.mxu0 0.0
  %2264 = vmatpush1.msra.mxu0 %v1919
  %2265 = vmatprep.subr.mxu0 0.0
  %2266 = vmatpush1.msra.mxu0 %v1920
  %2267 = vmatprep.subr.mxu0 0.0
  %2268 = vmatpush1.msra.mxu0 %v1921
  %2269 = vmatprep.subr.mxu0 0.0
  %2270 = vmatpush1.msra.mxu0 0.0
  %2271 = vmatprep.subr.mxu0 0.0
  %2272 = vmatpush1.msra.mxu0 0.0
  %2273 = vmatprep.subr.mxu0 0.0
  %2274 = vmatpush1.msra.mxu0 0.0
  %2275 = vmatprep.subr.mxu0 0.0
  %2276 = vmatpush1.msra.mxu0 0.0
  %2277 = vmatprep.subr.mxu0 0.0
  %2278 = vmatpush1.msra.mxu0 0.0
  %2279 = vmatprep.subr.mxu0 0.0
  %2280 = vmatpush1.msra.mxu0 0.0
  %2281 = vmatprep.subr.mxu0 0.0
  %2282 = vmatpush1.msra.mxu0 0.0
  %2283 = vmatprep.subr.mxu0 0.0
  %2284 = vmatpush1.msra.mxu0 0.0
  %2285 = vmatprep.subr.mxu0 0.0
  %2286 = vmatpush1.msra.mxu0 0.0
  %2287 = vmatprep.subr.mxu0 0.0
  %2288 = vmatpush1.msra.mxu0 0.0
  %2289 = vmatprep.subr.mxu0 0.0
  %2290 = vmatpush1.msra.mxu0 0.0
  %2291 = vmatprep.subr.mxu0 0.0
  %2292 = vmatpush1.msra.mxu0 0.0
  %2293 = vmatprep.subr.mxu0 0.0
  %2294 = vmatpush1.msra.mxu0 0.0
  %2295 = vmatprep.subr.mxu0 0.0
  %2296 = vmatpush1.msra.mxu0 0.0
  %2297 = vmatprep.subr.mxu0 0.0
  %2298 = vmatpush1.msra.mxu0 0.0
  %2299 = vmatprep.subr.mxu0 0.0
  %2300 = vmatpush1.msra.mxu0 0.0
  %2301 = vmatprep.subr.mxu0 0.0
  %2302 = vmatpush1.msra.mxu0 0.0
  %2303 = vmatprep.subr.mxu0 0.0
  %2304 = vmatpush1.msra.mxu0 0.0
  %2305 = vmatprep.subr.mxu0 0.0
  %2306 = vmatpush1.msra.mxu0 0.0
  %2307 = vmatprep.subr.mxu0 0.0
  %2308 = vmatpush1.msra.mxu0 0.0
  %2309 = vmatprep.subr.mxu0 0.0
  %2310 = vmatpush1.msra.mxu0 0.0
  %2311 = vmatprep.subr.mxu0 0.0
  %2312 = vmatpush1.msra.mxu0 0.0
  %2313 = vmatprep.subr.mxu0 0.0
  %2314 = vmatpush1.msra.mxu0 0.0
  %2315 = vmatprep.subr.mxu0 0.0
  %2316 = vmatpush1.msra.mxu0 0.0
  %2317 = vmatprep.subr.mxu0 0.0
  %2318 = vmatpush1.msra.mxu0 0.0
  %2319 = vmatprep.subr.mxu0 0.0
  %2320 = vmatpush1.msra.mxu0 0.0
  %2321 = vmatprep.subr.mxu0 0.0
  %2322 = vmatpush1.msra.mxu0 0.0
  %2323 = vmatprep.subr.mxu0 0.0
  %2324 = vmatpush1.msra.mxu0 0.0
  %2325 = vmatprep.mubr.f32.mxu0 0.0
  %2326 = vmatmul.mubr.f32.gmra.mrb[0].mxu0 %v189
  %v2327 = vpop.f32.mrb[0].mxu0
  %v2328 = vadd.f32 0.0, %v2327
  %v2329 = vpop.f32.mrb[0].mxu0
  %2330 = vmatprep.mubr.f32.mxu0 0.0
  %2331 = vmatmul.mubr.f32.gmra.mrb[0].mxu0 %v192
  %v2332 = vpop.f32.mrb[0].mxu0
  %v2333 = vadd.f32 0.0, %v2332
  %v2334 = vpop.f32.mrb[0].mxu0
  %2335 = vmatprep.mubr.f32.mxu0 0.0
  %2336 = vmatmul.mubr.f32.gmra.mrb[0].mxu0 %v195
  %v2337 = vpop.f32.mrb[0].mxu0
  %v2338 = vadd.f32 0.0, %v2337
  %v2339 = vpop.f32.mrb[0].mxu0
  %2340 = vmatprep.mubr.f32.mxu0 0.0
  %2341 = vmatmul.mubr.f32.gmra.mrb[0].mxu0 %v198
  %v2342 = vpop.f32.mrb[0].mxu0
  %v2343 = vadd.f32 0.0, %v2342
  %v2344 = vpop.f32.mrb[0].mxu0
  %2345 = vdwg.mxu0
  %v2346 = vmax.f32 %v2243, 1.0
  %v2347 = vmax.f32 %v2248, 1.0
  %v2348 = vmax.f32 %v2253, 1.0
  %v2349 = vmax.f32 %v2258, 1.0
  %2351 = vset.pattern.permute.xlu0 0
  %2352 = vperm.xlu0 %2351, %v2346
  %v2353 = vpop.permute.xlu0 %2352
  %2356 = vset.pattern.permute.xlu0 0
  %2357 = vperm.xlu0 %2356, %v2347
  %v2358 = vpop.permute.xlu0 %2357
  %2361 = vset.pattern.permute.xlu0 0
  %2362 = vperm.xlu0 %2361, %v2348
  %v2363 = vpop.permute.xlu0 %2362
  %2366 = vset.pattern.permute.xlu0 0
  %2367 = vperm.xlu0 %2366, %v2349
  %v2368 = vpop.permute.xlu0 %2367
  %v2370 = vrcp.pop %v2353
  %v2371 = vmul.f32 %v2328, %v2370
  %v2372 = vrcp.pop %v2358
  %v2373 = vmul.f32 %v2333, %v2372
  %v2374 = vrcp.pop %v2363
  %v2375 = vmul.f32 %v2338, %v2374
  %v2376 = vrcp.pop %v2368
  %v2377 = vmul.f32 %v2343, %v2376
  %2378 = vst.msk [vmem:[#allocation2] sm:$0xff] %vm551, %v2371
  %2379 = vst.msk [vmem:[#allocation2 + $0x8] sm:$0xff] %vm551, %v2373
  %2380 = vst.msk [vmem:[#allocation2 + $0x10] sm:$0xff] %vm551, %v2375
  %2381 = vst.msk [vmem:[#allocation2 + $0x18] sm:$0xff] %vm551, %v2377
  %2386 = vrot.lane.b32.xlu0 %v1918, 64
  %v2387 = vpop.permute.xlu0 %2386
  %2388 = vrot.lane.b32.xlu0 %v1919, 64
  %v2389 = vpop.permute.xlu0 %2388
  %2390 = vrot.lane.b32.xlu0 %v1920, 64
  %v2391 = vpop.permute.xlu0 %2390
  %2392 = vrot.lane.b32.xlu0 %v1921, 64
  %v2393 = vpop.permute.xlu0 %2392
  %2398 = vst.msk [vmem:[#allocation2] sm:$0xff] %vm1433, %v2387
  %2399 = vst.msk [vmem:[#allocation2 + $0x8] sm:$0xff] %vm1433, %v2389
  %2400 = vst.msk [vmem:[#allocation2 + $0x10] sm:$0xff] %vm1433, %v2391
  %2401 = vst.msk [vmem:[#allocation2 + $0x18] sm:$0xff] %vm1433, %v2393
  %v2402 = vld [vmem:[#allocation2] sm:$0xff]
  %v2403 = vld [vmem:[#allocation2 + $0x8] sm:$0xff]
  %v2404 = vld [vmem:[#allocation2 + $0x10] sm:$0xff]
  %v2405 = vld [vmem:[#allocation2 + $0x18] sm:$0xff]
  %v2406 = vld [vmem:[%s6] sm:$0xff]
  %v2407 = vld [vmem:[%s6 + $0x8] sm:$0xff]
  %v2408 = vld [vmem:[%s6 + $0x10] sm:$0xff]
  %v2409 = vld [vmem:[%s6 + $0x18] sm:$0xff]
  %v2410 = vld [vmem:[%s6 + $0x20] sm:$0xff]
  %v2411 = vld [vmem:[%s6 + $0x28] sm:$0xff]
  %v2412 = vld [vmem:[%s6 + $0x30] sm:$0xff]
  %v2413 = vld [vmem:[%s6 + $0x38] sm:$0xff]
  %v2414 = vld [vmem:[%s6 + $0x40] sm:$0xff]
  %v2415 = vld [vmem:[%s6 + $0x48] sm:$0xff]
  %v2416 = vld [vmem:[%s6 + $0x50] sm:$0xff]
  %v2417 = vld [vmem:[%s6 + $0x58] sm:$0xff]
  %v2418 = vld [vmem:[%s6 + $0x60] sm:$0xff]
  %v2419 = vld [vmem:[%s6 + $0x68] sm:$0xff]
  %v2420 = vld [vmem:[%s6 + $0x70] sm:$0xff]
  %v2421 = vld [vmem:[%s6 + $0x78] sm:$0xff]
  %v2422 = vld [vmem:[%s10 + $0x2] sm:$0x1]
  %v2423 = vlaneseq
  %v2424 = vshrl.u32 %v2423, 7
  %v2425 = vsub.s32 0, %v2424
  %v2426 = vrot.slane %v2422, %v2425
  %2427 = vmatprep.subr.mxu0 0.0
  %2428 = vmatpush1.msra.mxu0 %v2406
  %2429 = vmatprep.subr.mxu0 0.0
  %2430 = vmatpush1.msra.mxu0 %v2407
  %2431 = vmatprep.subr.mxu0 0.0
  %2432 = vmatpush1.msra.mxu0 %v2408
  %2433 = vmatprep.subr.mxu0 0.0
  %2434 = vmatpush1.msra.mxu0 %v2409
  %2435 = vmatprep.subr.mxu0 0.0
  %2436 = vmatpush1.msra.mxu0 %v2410
  %2437 = vmatprep.subr.mxu0 0.0
  %2438 = vmatpush1.msra.mxu0 %v2411
  %2439 = vmatprep.subr.mxu0 0.0
  %2440 = vmatpush1.msra.mxu0 %v2412
  %2441 = vmatprep.subr.mxu0 0.0
  %2442 = vmatpush1.msra.mxu0 %v2413
  %2443 = vmatprep.subr.mxu0 0.0
  %2444 = vmatpush1.msra.mxu0 %v2414
  %2445 = vmatprep.subr.mxu0 0.0
  %2446 = vmatpush1.msra.mxu0 %v2415
  %2447 = vmatprep.subr.mxu0 0.0
  %2448 = vmatpush1.msra.mxu0 %v2416
  %2449 = vmatprep.subr.mxu0 0.0
  %2450 = vmatpush1.msra.mxu0 %v2417
  %2451 = vmatprep.subr.mxu0 0.0
  %2452 = vmatpush1.msra.mxu0 %v2418
  %2453 = vmatprep.subr.mxu0 0.0
  %2454 = vmatpush1.msra.mxu0 %v2419
  %2455 = vmatprep.subr.mxu0 0.0
  %2456 = vmatpush1.msra.mxu0 %v2420
  %2457 = vmatprep.subr.mxu0 0.0
  %2458 = vmatpush1.msra.mxu0 %v2421
  %2459 = vmatprep.subr.mxu0 0.0
  %2460 = vmatpush1.msra.mxu0 0.0
  %2461 = vmatprep.subr.mxu0 0.0
  %2462 = vmatpush1.msra.mxu0 0.0
  %2463 = vmatprep.subr.mxu0 0.0
  %2464 = vmatpush1.msra.mxu0 0.0
  %2465 = vmatprep.subr.mxu0 0.0
  %2466 = vmatpush1.msra.mxu0 0.0
  %2467 = vmatprep.subr.mxu0 0.0
  %2468 = vmatpush1.msra.mxu0 0.0
  %2469 = vmatprep.subr.mxu0 0.0
  %2470 = vmatpush1.msra.mxu0 0.0
  %2471 = vmatprep.subr.mxu0 0.0
  %2472 = vmatpush1.msra.mxu0 0.0
  %2473 = vmatprep.subr.mxu0 0.0
  %2474 = vmatpush1.msra.mxu0 0.0
  %2475 = vmatprep.subr.mxu0 0.0
  %2476 = vmatpush1.msra.mxu0 0.0
  %2477 = vmatprep.subr.mxu0 0.0
  %2478 = vmatpush1.msra.mxu0 0.0
  %2479 = vmatprep.subr.mxu0 0.0
  %2480 = vmatpush1.msra.mxu0 0.0
  %2481 = vmatprep.subr.mxu0 0.0
  %2482 = vmatpush1.msra.mxu0 0.0
  %2483 = vmatprep.subr.mxu0 0.0
  %2484 = vmatpush1.msra.mxu0 0.0
  %2485 = vmatprep.subr.mxu0 0.0
  %2486 = vmatpush1.msra.mxu0 0.0
  %2487 = vmatprep.subr.mxu0 0.0
  %2488 = vmatpush1.msra.mxu0 0.0
  %2489 = vmatprep.subr.mxu0 0.0
  %2490 = vmatpush1.msra.mxu0 0.0
  %2491 = vmatprep.mubr.f32.mxu0 0.0
  %2492 = vmatmul.mubr.f32.gmra.mrb[0].mxu0 %v2402
  %v2493 = vpop.f32.mrb[0].mxu0
  %v2494 = vadd.f32 %v2426, %v2493
  %v2495 = vpop.f32.mrb[0].mxu0
  %2496 = vmatprep.mubr.f32.mxu0 0.0
  %2497 = vmatmul.mubr.f32.gmra.mrb[0].mxu0 %v2403
  %v2498 = vpop.f32.mrb[0].mxu0
  %v2499 = vadd.f32 %v2426, %v2498
  %v2500 = vpop.f32.mrb[0].mxu0
  %2501 = vmatprep.mubr.f32.mxu0 0.0
  %2502 = vmatmul.mubr.f32.gmra.mrb[0].mxu0 %v2404
  %v2503 = vpop.f32.mrb[0].mxu0
  %v2504 = vadd.f32 %v2426, %v2503
  %v2505 = vpop.f32.mrb[0].mxu0
  %2506 = vmatprep.mubr.f32.mxu0 0.0
  %2507 = vmatmul.mubr.f32.gmra.mrb[0].mxu0 %v2405
  %v2508 = vpop.f32.mrb[0].mxu0
  %v2509 = vadd.f32 %v2426, %v2508
  %v2510 = vpop.f32.mrb[0].mxu0
  %2511 = vdwg.mxu0
  %v2512 = vmax.f32 %v2494, 0.0
  %v2513 = vmax.f32 %v2499, 0.0
  %v2514 = vmax.f32 %v2504, 0.0
  %v2515 = vmax.f32 %v2509, 0.0
  %v2516 = vld [vmem:[%s11] sm:$0xff]
  %v2517 = vld [vmem:[%s11 + $0x8] sm:$0xff]
  %v2518 = vld [vmem:[%s11 + $0x10] sm:$0xff]
  %v2519 = vld [vmem:[%s11 + $0x18] sm:$0xff]
  %v2520 = vld [vmem:[%s11 + $0x20] sm:$0xff]
  %v2521 = vld [vmem:[%s11 + $0x28] sm:$0xff]
  %v2522 = vld [vmem:[%s11 + $0x30] sm:$0xff]
  %v2523 = vld [vmem:[%s11 + $0x38] sm:$0xff]
  %2532 = vrot.lane.b32.xlu0 %v2516, 126
  %v2533 = vpop.permute.xlu0 %2532
  %2534 = vrot.lane.b32.xlu0 %v2517, 126
  %v2535 = vpop.permute.xlu0 %2534
  %2536 = vrot.lane.b32.xlu0 %v2518, 126
  %v2537 = vpop.permute.xlu0 %2536
  %2538 = vrot.lane.b32.xlu0 %v2519, 126
  %v2539 = vpop.permute.xlu0 %2538
  %2540 = vrot.lane.b32.xlu0 %v2520, 126
  %v2541 = vpop.permute.xlu0 %2540
  %2542 = vrot.lane.b32.xlu0 %v2521, 126
  %v2543 = vpop.permute.xlu0 %2542
  %2544 = vrot.lane.b32.xlu0 %v2522, 126
  %v2545 = vpop.permute.xlu0 %2544
  %2546 = vrot.lane.b32.xlu0 %v2523, 126
  %v2547 = vpop.permute.xlu0 %2546
  %v2557 = vsel %vm551, %v2512, 0
  %v2560 = vsel %vm551, %v2513, 0
  %v2563 = vsel %vm551, %v2514, 0
  %v2566 = vsel %vm551, %v2515, 0
  %2568 = vmatprep.subr.mxu0 0.0
  %2569 = vmatpush1.msra.mxu0 %v2533
  %2570 = vmatprep.subr.mxu0 0.0
  %2571 = vmatpush1.msra.mxu0 %v2535
  %2572 = vmatprep.subr.mxu0 0.0
  %2573 = vmatpush1.msra.mxu0 %v2537
  %2574 = vmatprep.subr.mxu0 0.0
  %2575 = vmatpush1.msra.mxu0 %v2539
  %2576 = vmatprep.subr.mxu0 0.0
  %2577 = vmatpush1.msra.mxu0 %v2541
  %2578 = vmatprep.subr.mxu0 0.0
  %2579 = vmatpush1.msra.mxu0 %v2543
  %2580 = vmatprep.subr.mxu0 0.0
  %2581 = vmatpush1.msra.mxu0 %v2545
  %2582 = vmatprep.subr.mxu0 0.0
  %2583 = vmatpush1.msra.mxu0 %v2547
  %2584 = vmatprep.subr.mxu0 0.0
  %2585 = vmatpush1.msra.mxu0 0.0
  %2586 = vmatprep.subr.mxu0 0.0
  %2587 = vmatpush1.msra.mxu0 0.0
  %2588 = vmatprep.subr.mxu0 0.0
  %2589 = vmatpush1.msra.mxu0 0.0
  %2590 = vmatprep.subr.mxu0 0.0
  %2591 = vmatpush1.msra.mxu0 0.0
  %2592 = vmatprep.subr.mxu0 0.0
  %2593 = vmatpush1.msra.mxu0 0.0
  %2594 = vmatprep.subr.mxu0 0.0
  %2595 = vmatpush1.msra.mxu0 0.0
  %2596 = vmatprep.subr.mxu0 0.0
  %2597 = vmatpush1.msra.mxu0 0.0
  %2598 = vmatprep.subr.mxu0 0.0
  %2599 = vmatpush1.msra.mxu0 0.0
  %2600 = vmatprep.subr.mxu0 0.0
  %2601 = vmatpush1.msra.mxu0 0.0
  %2602 = vmatprep.subr.mxu0 0.0
  %2603 = vmatpush1.msra.mxu0 0.0
  %2604 = vmatprep.subr.mxu0 0.0
  %2605 = vmatpush1.msra.mxu0 0.0
  %2606 = vmatprep.subr.mxu0 0.0
  %2607 = vmatpush1.msra.mxu0 0.0
  %2608 = vmatprep.subr.mxu0 0.0
  %2609 = vmatpush1.msra.mxu0 0.0
  %2610 = vmatprep.subr.mxu0 0.0
  %2611 = vmatpush1.msra.mxu0 0.0
  %2612 = vmatprep.subr.mxu0 0.0
  %2613 = vmatpush1.msra.mxu0 0.0
  %2614 = vmatprep.subr.mxu0 0.0
  %2615 = vmatpush1.msra.mxu0 0.0
  %2616 = vmatprep.subr.mxu0 0.0
  %2617 = vmatpush1.msra.mxu0 0.0
  %2618 = vmatprep.subr.mxu0 0.0
  %2619 = vmatpush1.msra.mxu0 0.0
  %2620 = vmatprep.subr.mxu0 0.0
  %2621 = vmatpush1.msra.mxu0 0.0
  %2622 = vmatprep.subr.mxu0 0.0
  %2623 = vmatpush1.msra.mxu0 0.0
  %2624 = vmatprep.subr.mxu0 0.0
  %2625 = vmatpush1.msra.mxu0 0.0
  %2626 = vmatprep.subr.mxu0 0.0
  %2627 = vmatpush1.msra.mxu0 0.0
  %2628 = vmatprep.subr.mxu0 0.0
  %2629 = vmatpush1.msra.mxu0 0.0
  %2630 = vmatprep.subr.mxu0 0.0
  %2631 = vmatpush1.msra.mxu0 0.0
  %2632 = vmatprep.mubr.f32.mxu0 0.0
  %2633 = vmatmul.mubr.f32.gmra.mrb[0].mxu0 %v2557
  %v2634 = vpop.f32.mrb[0].mxu0
  %v2635 = vadd.f32 0.0, %v2634
  %v2636 = vpop.f32.mrb[0].mxu0
  %2637 = vmatprep.mubr.f32.mxu0 0.0
  %2638 = vmatmul.mubr.f32.gmra.mrb[0].mxu0 %v2560
  %v2639 = vpop.f32.mrb[0].mxu0
  %v2640 = vadd.f32 0.0, %v2639
  %v2641 = vpop.f32.mrb[0].mxu0
  %2642 = vmatprep.mubr.f32.mxu0 0.0
  %2643 = vmatmul.mubr.f32.gmra.mrb[0].mxu0 %v2563
  %v2644 = vpop.f32.mrb[0].mxu0
  %v2645 = vadd.f32 0.0, %v2644
  %v2646 = vpop.f32.mrb[0].mxu0
  %2647 = vmatprep.mubr.f32.mxu0 0.0
  %2648 = vmatmul.mubr.f32.gmra.mrb[0].mxu0 %v2566
  %v2649 = vpop.f32.mrb[0].mxu0
  %v2650 = vadd.f32 0.0, %v2649
  %v2651 = vpop.f32.mrb[0].mxu0
  %2652 = vdwg.mxu0
  %v2653 = vtanh.pop %v2635
  %v2654 = vtanh.pop %v2640
  %v2655 = vtanh.pop %v2645
  %v2656 = vtanh.pop %v2650
  %vm2657 = vcmp.gt.f32.partialorder %v1870, 0.0
  %vm2658 = vcmp.gt.f32.partialorder %v1871, 0.0
  %vm2659 = vcmp.gt.f32.partialorder %v1872, 0.0
  %vm2660 = vcmp.gt.f32.partialorder %v1873, 0.0
  %v2661 = vsel %vm2657, %v2653, -1e+30
  %v2662 = vsel %vm2658, %v2654, -1e+30
  %v2663 = vsel %vm2659, %v2655, -1e+30
  %v2664 = vsel %vm2660, %v2656, -1e+30
  %2666 = vset.pattern.permute.xlu0 0
  %2667 = vperm.xlu0 %2666, %v2661
  %v2668 = vpop.permute.xlu0 %2667
  %2671 = vset.pattern.permute.xlu0 0
  %2672 = vperm.xlu0 %2671, %v2662
  %v2673 = vpop.permute.xlu0 %2672
  %2676 = vset.pattern.permute.xlu0 0
  %2677 = vperm.xlu0 %2676, %v2663
  %v2678 = vpop.permute.xlu0 %2677
  %2681 = vset.pattern.permute.xlu0 0
  %2682 = vperm.xlu0 %2681, %v2664
  %v2683 = vpop.permute.xlu0 %2682
  %v2685 = vsel %vm183, %v2668, 0.0
  %v2686 = vsel %vm184, %v2673, 0.0
  %v2687 = vsel %vm185, %v2678, 0.0
  %v2688 = vsel %vm186, %v2683, 0.0
  %v2689 = vsel %vm187, %v2685, 0.0
  %v2690 = vsel %vm187, %v2686, 0.0
  %v2691 = vadd.f32 %v2689, %v2690
  %v2692 = vsel %vm187, %v2687, 0.0
  %v2693 = vadd.f32 %v2691, %v2692
  %v2694 = vsel %vm187, %v2688, 0.0
  %v2695 = vadd.f32 %v2693, %v2694
  %v2696 = vrot.slane %v2695, 4
  %v2697 = vadd.f32 %v2695, %v2696
  %v2698 = vrot.slane %v2697, 2
  %v2699 = vadd.f32 %v2697, %v2698
  %v2700 = vrot.slane %v2699, 1
  %v2701 = vadd.f32 %v2699, %v2700
  %vm2702 = vcmp.gt.f32.partialorder %v2701, %v2668
  %vm2703 = vcmp.gt.f32.partialorder %v2701, %v2673
  %vm2704 = vcmp.gt.f32.partialorder %v2701, %v2678
  %vm2705 = vcmp.gt.f32.partialorder %v2701, %v2683
  %vm2706 = vcmp.eq.f32.partialorder %v2701, %v2668
  %vm2707 = vcmp.eq.f32.partialorder %v2701, %v2673
  %vm2708 = vcmp.eq.f32.partialorder %v2701, %v2678
  %vm2709 = vcmp.eq.f32.partialorder %v2701, %v2683
  %vm2710 = vmand %vm2706, %vm703
  %vm2711 = vmand %vm2707, %vm704
  %vm2712 = vmand %vm2708, %vm705
  %vm2713 = vmand %vm2709, %vm706
  %vm2714 = vmor %vm2702, %vm2710
  %vm2715 = vmor %vm2703, %vm2711
  %vm2716 = vmor %vm2704, %vm2712
  %vm2717 = vmor %vm2705, %vm2713
  %v2718 = vsel %vm2714, %v158, 0.0
  %v2719 = vsel %vm2715, %v163, 0.0
  %v2720 = vsel %vm2716, %v168, 0.0
  %v2721 = vsel %vm2717, %v173, 0.0
  %v2722 = vsel %vm187, %v2718, 0.0
  %2723 = vadd.xlane.f32.xlu0 %v2722
  %v2724 = vpop.xlane.xlu0 %2723
  %v2725 = vsel %vm187, %v2719, 0.0
  %2726 = vadd.xlane.f32.xlu0 %v2725
  %v2727 = vpop.xlane.xlu0 %2726
  %v2728 = vsel %vm187, %v2720, 0.0
  %2729 = vadd.xlane.f32.xlu0 %v2728
  %v2730 = vpop.xlane.xlu0 %2729
  %v2731 = vsel %vm187, %v2721, 0.0
  %2732 = vadd.xlane.f32.xlu0 %v2731
  %v2733 = vpop.xlane.xlu0 %2732
  %v2735 = vsel %vm87, %v2059, 0
  %2737 = vmatprep.subr.mxu0 0.0
  %2738 = vmatpush1.msra.mxu0 %v2735
  %2739 = vmatprep.subr.mxu0 0.0
  %2740 = vmatpush1.msra.mxu0 0.0
  %2741 = vmatprep.subr.mxu0 0.0
  %2742 = vmatpush1.msra.mxu0 0.0
  %2743 = vmatprep.subr.mxu0 0.0
  %2744 = vmatpush1.msra.mxu0 0.0
  %2745 = vmatprep.subr.mxu0 0.0
  %2746 = vmatpush1.msra.mxu0 0.0
  %2747 = vmatprep.subr.mxu0 0.0
  %2748 = vmatpush1.msra.mxu0 0.0
  %2749 = vmatprep.subr.mxu0 0.0
  %2750 = vmatpush1.msra.mxu0 0.0
  %2751 = vmatprep.subr.mxu0 0.0
  %2752 = vmatpush1.msra.mxu0 0.0
  %2753 = vmatprep.subr.mxu0 0.0
  %2754 = vmatpush1.msra.mxu0 0.0
  %2755 = vmatprep.subr.mxu0 0.0
  %2756 = vmatpush1.msra.mxu0 0.0
  %2757 = vmatprep.subr.mxu0 0.0
  %2758 = vmatpush1.msra.mxu0 0.0
  %2759 = vmatprep.subr.mxu0 0.0
  %2760 = vmatpush1.msra.mxu0 0.0
  %2761 = vmatprep.subr.mxu0 0.0
  %2762 = vmatpush1.msra.mxu0 0.0
  %2763 = vmatprep.subr.mxu0 0.0
  %2764 = vmatpush1.msra.mxu0 0.0
  %2765 = vmatprep.subr.mxu0 0.0
  %2766 = vmatpush1.msra.mxu0 0.0
  %2767 = vmatprep.subr.mxu0 0.0
  %2768 = vmatpush1.msra.mxu0 0.0
  %2769 = vmatprep.subr.mxu0 0.0
  %2770 = vmatpush1.msra.mxu0 0.0
  %2771 = vmatprep.subr.mxu0 0.0
  %2772 = vmatpush1.msra.mxu0 0.0
  %2773 = vmatprep.subr.mxu0 0.0
  %2774 = vmatpush1.msra.mxu0 0.0
  %2775 = vmatprep.subr.mxu0 0.0
  %2776 = vmatpush1.msra.mxu0 0.0
  %2777 = vmatprep.subr.mxu0 0.0
  %2778 = vmatpush1.msra.mxu0 0.0
  %2779 = vmatprep.subr.mxu0 0.0
  %2780 = vmatpush1.msra.mxu0 0.0
  %2781 = vmatprep.subr.mxu0 0.0
  %2782 = vmatpush1.msra.mxu0 0.0
  %2783 = vmatprep.subr.mxu0 0.0
  %2784 = vmatpush1.msra.mxu0 0.0
  %2785 = vmatprep.subr.mxu0 0.0
  %2786 = vmatpush1.msra.mxu0 0.0
  %2787 = vmatprep.subr.mxu0 0.0
  %2788 = vmatpush1.msra.mxu0 0.0
  %2789 = vmatprep.subr.mxu0 0.0
  %2790 = vmatpush1.msra.mxu0 0.0
  %2791 = vmatprep.subr.mxu0 0.0
  %2792 = vmatpush1.msra.mxu0 0.0
  %2793 = vmatprep.subr.mxu0 0.0
  %2794 = vmatpush1.msra.mxu0 0.0
  %2795 = vmatprep.subr.mxu0 0.0
  %2796 = vmatpush1.msra.mxu0 0.0
  %2797 = vmatprep.subr.mxu0 0.0
  %2798 = vmatpush1.msra.mxu0 0.0
  %2799 = vmatprep.subr.mxu0 0.0
  %2800 = vmatpush1.msra.mxu0 0.0
  %2801 = vmatprep.mubr.f32.mxu0 0.0
  %2802 = vmatmul.mubr.f32.gmra.mrb[0].mxu0 %v76
  %v2803 = vpop.f32.mrb[0].mxu0
  %v2804 = vadd.f32 0.0, %v2803
  %v2805 = vpop.f32.mrb[0].mxu0
  %2806 = vmatprep.mubr.f32.mxu0 0.0
  %2807 = vmatmul.mubr.f32.gmra.mrb[0].mxu0 %v79
  %v2808 = vpop.f32.mrb[0].mxu0
  %v2809 = vadd.f32 0.0, %v2808
  %v2810 = vpop.f32.mrb[0].mxu0
  %2811 = vmatprep.mubr.f32.mxu0 0.0
  %2812 = vmatmul.mubr.f32.gmra.mrb[0].mxu0 %v82
  %v2813 = vpop.f32.mrb[0].mxu0
  %v2814 = vadd.f32 0.0, %v2813
  %v2815 = vpop.f32.mrb[0].mxu0
  %2816 = vmatprep.mubr.f32.mxu0 0.0
  %2817 = vmatmul.mubr.f32.gmra.mrb[0].mxu0 %v85
  %v2818 = vpop.f32.mrb[0].mxu0
  %v2819 = vadd.f32 0.0, %v2818
  %v2820 = vpop.f32.mrb[0].mxu0
  %2821 = vdwg.mxu0
  %v2822 = vmul.f32 %v2804, 0.5
  %v2823 = vmul.f32 %v2809, 0.5
  %v2824 = vmul.f32 %v2814, 0.5
  %v2825 = vmul.f32 %v2819, 0.5
  %vm2826 = vcmp.lt.f32.partialorder %v2724, %v2822
  %vm2827 = vcmp.lt.f32.partialorder %v2727, %v2823
  %vm2828 = vcmp.lt.f32.partialorder %v2730, %v2824
  %vm2829 = vcmp.lt.f32.partialorder %v2733, %v2825
  %vm2830 = vmand %vm2826, %vm2657
  %vm2831 = vmand %vm2827, %vm2658
  %vm2832 = vmand %vm2828, %vm2659
  %vm2833 = vmand %vm2829, %vm2660
  %v2834 = vsel %vm2830, 1.0, 0.0
  %v2835 = vsel %vm2831, 1.0, 0.0
  %v2836 = vsel %vm2832, 1.0, 0.0
  %v2837 = vsel %vm2833, 1.0, 0.0
  %2839 = vset.pattern.permute.xlu0 0
  %2840 = vperm.xlu0 %2839, %v2653
  %v2841 = vpop.permute.xlu0 %2840
  %2844 = vset.pattern.permute.xlu0 0
  %2845 = vperm.xlu0 %2844, %v2654
  %v2846 = vpop.permute.xlu0 %2845
  %2849 = vset.pattern.permute.xlu0 0
  %2850 = vperm.xlu0 %2849, %v2655
  %v2851 = vpop.permute.xlu0 %2850
  %2854 = vset.pattern.permute.xlu0 0
  %2855 = vperm.xlu0 %2854, %v2656
  %v2856 = vpop.permute.xlu0 %2855
  %v2858 = vmul.f32 %v2512, %v2841
  %v2859 = vmul.f32 %v2513, %v2846
  %v2860 = vmul.f32 %v2514, %v2851
  %v2861 = vmul.f32 %v2515, %v2856
  %2863 = vset.pattern.permute.xlu0 0
  %2864 = vperm.xlu0 %2863, %v2834
  %v2865 = vpop.permute.xlu0 %2864
  %2868 = vset.pattern.permute.xlu0 0
  %2869 = vperm.xlu0 %2868, %v2835
  %v2870 = vpop.permute.xlu0 %2869
  %2873 = vset.pattern.permute.xlu0 0
  %2874 = vperm.xlu0 %2873, %v2836
  %v2875 = vpop.permute.xlu0 %2874
  %2878 = vset.pattern.permute.xlu0 0
  %2879 = vperm.xlu0 %2878, %v2837
  %v2880 = vpop.permute.xlu0 %2879
  %v2882 = vmul.f32 %v2858, %v2865
  %v2883 = vmul.f32 %v2859, %v2870
  %v2884 = vmul.f32 %v2860, %v2875
  %v2885 = vmul.f32 %v2861, %v2880
  %2886 = vmatprep.subr.mxu0 0.0
  %2887 = vmatpush1.msra.mxu0 %v2882
  %2888 = vmatprep.subr.mxu0 0.0
  %2889 = vmatpush1.msra.mxu0 %v2883
  %2890 = vmatprep.subr.mxu0 0.0
  %2891 = vmatpush1.msra.mxu0 %v2884
  %2892 = vmatprep.subr.mxu0 0.0
  %2893 = vmatpush1.msra.mxu0 %v2885
  %2894 = vmatprep.subr.mxu0 0.0
  %2895 = vmatpush1.msra.mxu0 0.0
  %2896 = vmatprep.subr.mxu0 0.0
  %2897 = vmatpush1.msra.mxu0 0.0
  %2898 = vmatprep.subr.mxu0 0.0
  %2899 = vmatpush1.msra.mxu0 0.0
  %2900 = vmatprep.subr.mxu0 0.0
  %2901 = vmatpush1.msra.mxu0 0.0
  %2902 = vmatprep.subr.mxu0 0.0
  %2903 = vmatpush1.msra.mxu0 0.0
  %2904 = vmatprep.subr.mxu0 0.0
  %2905 = vmatpush1.msra.mxu0 0.0
  %2906 = vmatprep.subr.mxu0 0.0
  %2907 = vmatpush1.msra.mxu0 0.0
  %2908 = vmatprep.subr.mxu0 0.0
  %2909 = vmatpush1.msra.mxu0 0.0
  %2910 = vmatprep.subr.mxu0 0.0
  %2911 = vmatpush1.msra.mxu0 0.0
  %2912 = vmatprep.subr.mxu0 0.0
  %2913 = vmatpush1.msra.mxu0 0.0
  %2914 = vmatprep.subr.mxu0 0.0
  %2915 = vmatpush1.msra.mxu0 0.0
  %2916 = vmatprep.subr.mxu0 0.0
  %2917 = vmatpush1.msra.mxu0 0.0
  %2918 = vmatprep.subr.mxu0 0.0
  %2919 = vmatpush1.msra.mxu0 0.0
  %2920 = vmatprep.subr.mxu0 0.0
  %2921 = vmatpush1.msra.mxu0 0.0
  %2922 = vmatprep.subr.mxu0 0.0
  %2923 = vmatpush1.msra.mxu0 0.0
  %2924 = vmatprep.subr.mxu0 0.0
  %2925 = vmatpush1.msra.mxu0 0.0
  %2926 = vmatprep.subr.mxu0 0.0
  %2927 = vmatpush1.msra.mxu0 0.0
  %2928 = vmatprep.subr.mxu0 0.0
  %2929 = vmatpush1.msra.mxu0 0.0
  %2930 = vmatprep.subr.mxu0 0.0
  %2931 = vmatpush1.msra.mxu0 0.0
  %2932 = vmatprep.subr.mxu0 0.0
  %2933 = vmatpush1.msra.mxu0 0.0
  %2934 = vmatprep.subr.mxu0 0.0
  %2935 = vmatpush1.msra.mxu0 0.0
  %2936 = vmatprep.subr.mxu0 0.0
  %2937 = vmatpush1.msra.mxu0 0.0
  %2938 = vmatprep.subr.mxu0 0.0
  %2939 = vmatpush1.msra.mxu0 0.0
  %2940 = vmatprep.subr.mxu0 0.0
  %2941 = vmatpush1.msra.mxu0 0.0
  %2942 = vmatprep.subr.mxu0 0.0
  %2943 = vmatpush1.msra.mxu0 0.0
  %2944 = vmatprep.subr.mxu0 0.0
  %2945 = vmatpush1.msra.mxu0 0.0
  %2946 = vmatprep.subr.mxu0 0.0
  %2947 = vmatpush1.msra.mxu0 0.0
  %2948 = vmatprep.subr.mxu0 0.0
  %2949 = vmatpush1.msra.mxu0 0.0
  %2950 = vmatprep.mubr.f32.mxu0 0.0
  %2951 = vmatmul.mubr.f32.gmra.mrb[0].mxu0 %v731
  %v2952 = vpop.f32.mrb[0].mxu0
  %v2953 = vadd.f32 0.0, %v2952
  %v2954 = vpop.f32.mrb[0].mxu0
  %2955 = vdwg.mxu0
  %2956 = vmatprep.subr.mxu0 0.0
  %2957 = vmatpush1.msra.mxu0 %v2834
  %2958 = vmatprep.subr.mxu0 0.0
  %2959 = vmatpush1.msra.mxu0 %v2835
  %2960 = vmatprep.subr.mxu0 0.0
  %2961 = vmatpush1.msra.mxu0 %v2836
  %2962 = vmatprep.subr.mxu0 0.0
  %2963 = vmatpush1.msra.mxu0 %v2837
  %2964 = vmatprep.subr.mxu0 0.0
  %2965 = vmatpush1.msra.mxu0 0.0
  %2966 = vmatprep.subr.mxu0 0.0
  %2967 = vmatpush1.msra.mxu0 0.0
  %2968 = vmatprep.subr.mxu0 0.0
  %2969 = vmatpush1.msra.mxu0 0.0
  %2970 = vmatprep.subr.mxu0 0.0
  %2971 = vmatpush1.msra.mxu0 0.0
  %2972 = vmatprep.subr.mxu0 0.0
  %2973 = vmatpush1.msra.mxu0 0.0
  %2974 = vmatprep.subr.mxu0 0.0
  %2975 = vmatpush1.msra.mxu0 0.0
  %2976 = vmatprep.subr.mxu0 0.0
  %2977 = vmatpush1.msra.mxu0 0.0
  %2978 = vmatprep.subr.mxu0 0.0
  %2979 = vmatpush1.msra.mxu0 0.0
  %2980 = vmatprep.subr.mxu0 0.0
  %2981 = vmatpush1.msra.mxu0 0.0
  %2982 = vmatprep.subr.mxu0 0.0
  %2983 = vmatpush1.msra.mxu0 0.0
  %2984 = vmatprep.subr.mxu0 0.0
  %2985 = vmatpush1.msra.mxu0 0.0
  %2986 = vmatprep.subr.mxu0 0.0
  %2987 = vmatpush1.msra.mxu0 0.0
  %2988 = vmatprep.subr.mxu0 0.0
  %2989 = vmatpush1.msra.mxu0 0.0
  %2990 = vmatprep.subr.mxu0 0.0
  %2991 = vmatpush1.msra.mxu0 0.0
  %2992 = vmatprep.subr.mxu0 0.0
  %2993 = vmatpush1.msra.mxu0 0.0
  %2994 = vmatprep.subr.mxu0 0.0
  %2995 = vmatpush1.msra.mxu0 0.0
  %2996 = vmatprep.subr.mxu0 0.0
  %2997 = vmatpush1.msra.mxu0 0.0
  %2998 = vmatprep.subr.mxu0 0.0
  %2999 = vmatpush1.msra.mxu0 0.0
  %3000 = vmatprep.subr.mxu0 0.0
  %3001 = vmatpush1.msra.mxu0 0.0
  %3002 = vmatprep.subr.mxu0 0.0
  %3003 = vmatpush1.msra.mxu0 0.0
  %3004 = vmatprep.subr.mxu0 0.0
  %3005 = vmatpush1.msra.mxu0 0.0
  %3006 = vmatprep.subr.mxu0 0.0
  %3007 = vmatpush1.msra.mxu0 0.0
  %3008 = vmatprep.subr.mxu0 0.0
  %3009 = vmatpush1.msra.mxu0 0.0
  %3010 = vmatprep.subr.mxu0 0.0
  %3011 = vmatpush1.msra.mxu0 0.0
  %3012 = vmatprep.subr.mxu0 0.0
  %3013 = vmatpush1.msra.mxu0 0.0
  %3014 = vmatprep.subr.mxu0 0.0
  %3015 = vmatpush1.msra.mxu0 0.0
  %3016 = vmatprep.subr.mxu0 0.0
  %3017 = vmatpush1.msra.mxu0 0.0
  %3018 = vmatprep.subr.mxu0 0.0
  %3019 = vmatpush1.msra.mxu0 0.0
  %3020 = vmatprep.mubr.f32.mxu0 0.0
  %3021 = vmatmul.mubr.f32.gmra.mrb[0].mxu0 %v731
  %v3022 = vpop.f32.mrb[0].mxu0
  %v3023 = vadd.f32 0.0, %v3022
  %v3024 = vpop.f32.mrb[0].mxu0
  %3025 = vdwg.mxu0
  %v3026 = vmax.f32 %v3023, 1.0
  %3028 = vset.pattern.permute.xlu0 0
  %3029 = vperm.xlu0 %3028, %v3026
  %v3030 = vpop.permute.xlu0 %3029
  %v3032 = vrcp.pop %v3030
  %v3033 = vmul.f32 %v2953, %v3032
  %v3034 = vadd.f32 %v2070, %v3033
  %v3035 = vmul.f32 %v70, %v2834
  %v3036 = vmul.f32 %v71, %v2835
  %v3037 = vmul.f32 %v72, %v2836
  %v3038 = vmul.f32 %v73, %v2837
  %vm3039 = vcmp.gt.f32.partialorder %v3035, 0.0
  %vm3040 = vcmp.gt.f32.partialorder %v3036, 0.0
  %vm3041 = vcmp.gt.f32.partialorder %v3037, 0.0
  %vm3042 = vcmp.gt.f32.partialorder %v3038, 0.0
  %v3043 = vsel %vm3039, 1, 0
  %v3044 = vsel %vm3040, 1, 0
  %v3045 = vsel %vm3041, 1, 0
  %v3046 = vsel %vm3042, 1, 0
  %3047 = vset.pattern.permute.xlu0 0
  %3048 = vperm.xlu0 %3047, %v3043
  %v3049 = vpop.permute.xlu0 %3048
  %3050 = vset.pattern.permute.xlu0 0
  %3051 = vperm.xlu0 %3050, %v3044
  %v3052 = vpop.permute.xlu0 %3051
  %3053 = vset.pattern.permute.xlu0 0
  %3054 = vperm.xlu0 %3053, %v3045
  %v3055 = vpop.permute.xlu0 %3054
  %3056 = vset.pattern.permute.xlu0 0
  %3057 = vperm.xlu0 %3056, %v3046
  %v3058 = vpop.permute.xlu0 %3057
  %vm3059 = vcmp.eq.s32.totalorder %v3049, 1
  %vm3060 = vcmp.eq.s32.totalorder %v3052, 1
  %vm3061 = vcmp.eq.s32.totalorder %v3055, 1
  %vm3062 = vcmp.eq.s32.totalorder %v3058, 1
  %v3063 = vsel %vm3059, %v2882, -1e+30
  %v3064 = vsel %vm3060, %v2883, -1e+30
  %v3065 = vsel %vm3061, %v2884, -1e+30
  %v3066 = vsel %vm3062, %v2885, -1e+30
  %v3067 = vsel %vm551, %v3063, -inf
  %v3068 = vsel %vm551, %v3064, -inf
  %v3069 = vsel %vm551, %v3065, -inf
  %v3070 = vsel %vm551, %v3066, -inf
  %v3071 = vmax.f32 %v3067, %v3068
  %v3072 = vmax.f32 %v3069, %v3070
  %v3073 = vmax.f32 %v3071, %v3072
  %v3074 = vrot.slane %v3073, 4
  %v3075 = vmax.f32 %v3073, %v3074
  %v3076 = vrot.slane %v3075, 2
  %v3077 = vmax.f32 %v3075, %v3076
  %v3078 = vrot.slane %v3077, 1
  %v3079 = vmax.f32 %v3077, %v3078
  %v3080 = vsel %vm1149, %v3079, -1e+30
  %3081 = vrot.lane.b32.xlu0 %v2834, 1
  %v3082 = vpop.permute.xlu0 %3081
  %3083 = vrot.lane.b32.xlu0 %v2835, 1
  %v3084 = vpop.permute.xlu0 %3083
  %3085 = vrot.lane.b32.xlu0 %v2836, 1
  %v3086 = vpop.permute.xlu0 %3085
  %3087 = vrot.lane.b32.xlu0 %v2837, 1
  %v3088 = vpop.permute.xlu0 %3087
  %v3093 = vmul.f32 %v70, %v3082
  %v3094 = vmul.f32 %v71, %v3084
  %v3095 = vmul.f32 %v72, %v3086
  %v3096 = vmul.f32 %v73, %v3088
  %vm3097 = vcmp.gt.f32.partialorder %v3093, 0.0
  %vm3098 = vcmp.gt.f32.partialorder %v3094, 0.0
  %vm3099 = vcmp.gt.f32.partialorder %v3095, 0.0
  %vm3100 = vcmp.gt.f32.partialorder %v3096, 0.0
  %v3101 = vsel %vm3097, 1, 0
  %v3102 = vsel %vm3098, 1, 0
  %v3103 = vsel %vm3099, 1, 0
  %v3104 = vsel %vm3100, 1, 0
  %3105 = vset.pattern.permute.xlu0 1
  %3106 = vperm.xlu0 %3105, %v3101
  %v3107 = vpop.permute.xlu0 %3106
  %3108 = vset.pattern.permute.xlu0 1
  %3109 = vperm.xlu0 %3108, %v3102
  %v3110 = vpop.permute.xlu0 %3109
  %3111 = vset.pattern.permute.xlu0 1
  %3112 = vperm.xlu0 %3111, %v3103
  %v3113 = vpop.permute.xlu0 %3112
  %3114 = vset.pattern.permute.xlu0 1
  %3115 = vperm.xlu0 %3114, %v3104
  %v3116 = vpop.permute.xlu0 %3115
  %vm3117 = vcmp.eq.s32.totalorder %v3107, 1
  %vm3118 = vcmp.eq.s32.totalorder %v3110, 1
  %vm3119 = vcmp.eq.s32.totalorder %v3113, 1
  %vm3120 = vcmp.eq.s32.totalorder %v3116, 1
  %v3121 = vsel %vm3117, %v2882, -1e+30
  %v3122 = vsel %vm3118, %v2883, -1e+30
  %v3123 = vsel %vm3119, %v2884, -1e+30
  %v3124 = vsel %vm3120, %v2885, -1e+30
  %v3125 = vsel %vm551, %v3121, -inf
  %v3126 = vsel %vm551, %v3122, -inf
  %v3127 = vsel %vm551, %v3123, -inf
  %v3128 = vsel %vm551, %v3124, -inf
  %v3129 = vmax.f32 %v3125, %v3126
  %v3130 = vmax.f32 %v3127, %v3128
  %v3131 = vmax.f32 %v3129, %v3130
  %v3132 = vrot.slane %v3131, 4
  %v3133 = vmax.f32 %v3131, %v3132
  %v3134 = vrot.slane %v3133, 2
  %v3135 = vmax.f32 %v3133, %v3134
  %v3136 = vrot.slane %v3135, 1
  %v3137 = vmax.f32 %v3135, %v3136
  %v3138 = vsel %vm1208, %v3137, %v3080
  %v3139 = vadd.f32 %v2175, %v3138
  %v3140 = vld [vmem:[%s7] sm:$0xff]
  %v3141 = vld [vmem:[%s7 + $0x8] sm:$0xff]
  %v3142 = vld [vmem:[%s7 + $0x10] sm:$0xff]
  %v3143 = vld [vmem:[%s7 + $0x18] sm:$0xff]
  %v3144 = vld [vmem:[%s7 + $0x20] sm:$0xff]
  %v3145 = vld [vmem:[%s7 + $0x28] sm:$0xff]
  %v3146 = vld [vmem:[%s7 + $0x30] sm:$0xff]
  %v3147 = vld [vmem:[%s7 + $0x38] sm:$0xff]
  %v3149 = vsel %vm551, %v2882, 0
  %v3152 = vsel %vm551, %v2883, 0
  %v3155 = vsel %vm551, %v2884, 0
  %v3158 = vsel %vm551, %v2885, 0
  %3160 = vmatprep.subr.mxu0 0.0
  %3161 = vmatpush1.msra.mxu0 %v3140
  %3162 = vmatprep.subr.mxu0 0.0
  %3163 = vmatpush1.msra.mxu0 %v3141
  %3164 = vmatprep.subr.mxu0 0.0
  %3165 = vmatpush1.msra.mxu0 %v3142
  %3166 = vmatprep.subr.mxu0 0.0
  %3167 = vmatpush1.msra.mxu0 %v3143
  %3168 = vmatprep.subr.mxu0 0.0
  %3169 = vmatpush1.msra.mxu0 %v3144
  %3170 = vmatprep.subr.mxu0 0.0
  %3171 = vmatpush1.msra.mxu0 %v3145
  %3172 = vmatprep.subr.mxu0 0.0
  %3173 = vmatpush1.msra.mxu0 %v3146
  %3174 = vmatprep.subr.mxu0 0.0
  %3175 = vmatpush1.msra.mxu0 %v3147
  %3176 = vmatprep.subr.mxu0 0.0
  %3177 = vmatpush1.msra.mxu0 0.0
  %3178 = vmatprep.subr.mxu0 0.0
  %3179 = vmatpush1.msra.mxu0 0.0
  %3180 = vmatprep.subr.mxu0 0.0
  %3181 = vmatpush1.msra.mxu0 0.0
  %3182 = vmatprep.subr.mxu0 0.0
  %3183 = vmatpush1.msra.mxu0 0.0
  %3184 = vmatprep.subr.mxu0 0.0
  %3185 = vmatpush1.msra.mxu0 0.0
  %3186 = vmatprep.subr.mxu0 0.0
  %3187 = vmatpush1.msra.mxu0 0.0
  %3188 = vmatprep.subr.mxu0 0.0
  %3189 = vmatpush1.msra.mxu0 0.0
  %3190 = vmatprep.subr.mxu0 0.0
  %3191 = vmatpush1.msra.mxu0 0.0
  %3192 = vmatprep.subr.mxu0 0.0
  %3193 = vmatpush1.msra.mxu0 0.0
  %3194 = vmatprep.subr.mxu0 0.0
  %3195 = vmatpush1.msra.mxu0 0.0
  %3196 = vmatprep.subr.mxu0 0.0
  %3197 = vmatpush1.msra.mxu0 0.0
  %3198 = vmatprep.subr.mxu0 0.0
  %3199 = vmatpush1.msra.mxu0 0.0
  %3200 = vmatprep.subr.mxu0 0.0
  %3201 = vmatpush1.msra.mxu0 0.0
  %3202 = vmatprep.subr.mxu0 0.0
  %3203 = vmatpush1.msra.mxu0 0.0
  %3204 = vmatprep.subr.mxu0 0.0
  %3205 = vmatpush1.msra.mxu0 0.0
  %3206 = vmatprep.subr.mxu0 0.0
  %3207 = vmatpush1.msra.mxu0 0.0
  %3208 = vmatprep.subr.mxu0 0.0
  %3209 = vmatpush1.msra.mxu0 0.0
  %3210 = vmatprep.subr.mxu0 0.0
  %3211 = vmatpush1.msra.mxu0 0.0
  %3212 = vmatprep.subr.mxu0 0.0
  %3213 = vmatpush1.msra.mxu0 0.0
  %3214 = vmatprep.subr.mxu0 0.0
  %3215 = vmatpush1.msra.mxu0 0.0
  %3216 = vmatprep.subr.mxu0 0.0
  %3217 = vmatpush1.msra.mxu0 0.0
  %3218 = vmatprep.subr.mxu0 0.0
  %3219 = vmatpush1.msra.mxu0 0.0
  %3220 = vmatprep.subr.mxu0 0.0
  %3221 = vmatpush1.msra.mxu0 0.0
  %3222 = vmatprep.subr.mxu0 0.0
  %3223 = vmatpush1.msra.mxu0 0.0
  %3224 = vmatprep.mubr.f32.mxu0 0.0
  %3225 = vmatmul.mubr.f32.gmra.mrb[0].mxu0 %v3149
  %v3226 = vpop.f32.mrb[0].mxu0
  %v3227 = vadd.f32 0.0, %v3226
  %v3228 = vpop.f32.mrb[0].mxu0
  %3229 = vmatprep.mubr.f32.mxu0 0.0
  %3230 = vmatmul.mubr.f32.gmra.mrb[0].mxu0 %v3152
  %v3231 = vpop.f32.mrb[0].mxu0
  %v3232 = vadd.f32 0.0, %v3231
  %v3233 = vpop.f32.mrb[0].mxu0
  %3234 = vmatprep.mubr.f32.mxu0 0.0
  %3235 = vmatmul.mubr.f32.gmra.mrb[0].mxu0 %v3155
  %v3236 = vpop.f32.mrb[0].mxu0
  %v3237 = vadd.f32 0.0, %v3236
  %v3238 = vpop.f32.mrb[0].mxu0
  %3239 = vmatprep.mubr.f32.mxu0 0.0
  %3240 = vmatmul.mubr.f32.gmra.mrb[0].mxu0 %v3158
  %v3241 = vpop.f32.mrb[0].mxu0
  %v3242 = vadd.f32 0.0, %v3241
  %v3243 = vpop.f32.mrb[0].mxu0
  %3244 = vdwg.mxu0
  %3245 = vmatprep.subr.mxu0 0.0
  %3246 = vmatpush1.msra.mxu0 %v2834
  %3247 = vmatprep.subr.mxu0 0.0
  %3248 = vmatpush1.msra.mxu0 %v2835
  %3249 = vmatprep.subr.mxu0 0.0
  %3250 = vmatpush1.msra.mxu0 %v2836
  %3251 = vmatprep.subr.mxu0 0.0
  %3252 = vmatpush1.msra.mxu0 %v2837
  %3253 = vmatprep.subr.mxu0 0.0
  %3254 = vmatpush1.msra.mxu0 0.0
  %3255 = vmatprep.subr.mxu0 0.0
  %3256 = vmatpush1.msra.mxu0 0.0
  %3257 = vmatprep.subr.mxu0 0.0
  %3258 = vmatpush1.msra.mxu0 0.0
  %3259 = vmatprep.subr.mxu0 0.0
  %3260 = vmatpush1.msra.mxu0 0.0
  %3261 = vmatprep.subr.mxu0 0.0
  %3262 = vmatpush1.msra.mxu0 0.0
  %3263 = vmatprep.subr.mxu0 0.0
  %3264 = vmatpush1.msra.mxu0 0.0
  %3265 = vmatprep.subr.mxu0 0.0
  %3266 = vmatpush1.msra.mxu0 0.0
  %3267 = vmatprep.subr.mxu0 0.0
  %3268 = vmatpush1.msra.mxu0 0.0
  %3269 = vmatprep.subr.mxu0 0.0
  %3270 = vmatpush1.msra.mxu0 0.0
  %3271 = vmatprep.subr.mxu0 0.0
  %3272 = vmatpush1.msra.mxu0 0.0
  %3273 = vmatprep.subr.mxu0 0.0
  %3274 = vmatpush1.msra.mxu0 0.0
  %3275 = vmatprep.subr.mxu0 0.0
  %3276 = vmatpush1.msra.mxu0 0.0
  %3277 = vmatprep.subr.mxu0 0.0
  %3278 = vmatpush1.msra.mxu0 0.0
  %3279 = vmatprep.subr.mxu0 0.0
  %3280 = vmatpush1.msra.mxu0 0.0
  %3281 = vmatprep.subr.mxu0 0.0
  %3282 = vmatpush1.msra.mxu0 0.0
  %3283 = vmatprep.subr.mxu0 0.0
  %3284 = vmatpush1.msra.mxu0 0.0
  %3285 = vmatprep.subr.mxu0 0.0
  %3286 = vmatpush1.msra.mxu0 0.0
  %3287 = vmatprep.subr.mxu0 0.0
  %3288 = vmatpush1.msra.mxu0 0.0
  %3289 = vmatprep.subr.mxu0 0.0
  %3290 = vmatpush1.msra.mxu0 0.0
  %3291 = vmatprep.subr.mxu0 0.0
  %3292 = vmatpush1.msra.mxu0 0.0
  %3293 = vmatprep.subr.mxu0 0.0
  %3294 = vmatpush1.msra.mxu0 0.0
  %3295 = vmatprep.subr.mxu0 0.0
  %3296 = vmatpush1.msra.mxu0 0.0
  %3297 = vmatprep.subr.mxu0 0.0
  %3298 = vmatpush1.msra.mxu0 0.0
  %3299 = vmatprep.subr.mxu0 0.0
  %3300 = vmatpush1.msra.mxu0 0.0
  %3301 = vmatprep.subr.mxu0 0.0
  %3302 = vmatpush1.msra.mxu0 0.0
  %3303 = vmatprep.subr.mxu0 0.0
  %3304 = vmatpush1.msra.mxu0 0.0
  %3305 = vmatprep.subr.mxu0 0.0
  %3306 = vmatpush1.msra.mxu0 0.0
  %3307 = vmatprep.subr.mxu0 0.0
  %3308 = vmatpush1.msra.mxu0 0.0
  %3309 = vmatprep.mubr.f32.mxu0 0.0
  %3310 = vmatmul.mubr.f32.gmra.mrb[0].mxu0 %v189
  %v3311 = vpop.f32.mrb[0].mxu0
  %v3312 = vadd.f32 1.0, %v3311
  %v3313 = vpop.f32.mrb[0].mxu0
  %3314 = vmatprep.mubr.f32.mxu0 0.0
  %3315 = vmatmul.mubr.f32.gmra.mrb[0].mxu0 %v192
  %v3316 = vpop.f32.mrb[0].mxu0
  %v3317 = vadd.f32 1.0, %v3316
  %v3318 = vpop.f32.mrb[0].mxu0
  %3319 = vmatprep.mubr.f32.mxu0 0.0
  %3320 = vmatmul.mubr.f32.gmra.mrb[0].mxu0 %v195
  %v3321 = vpop.f32.mrb[0].mxu0
  %v3322 = vadd.f32 1.0, %v3321
  %v3323 = vpop.f32.mrb[0].mxu0
  %3324 = vmatprep.mubr.f32.mxu0 0.0
  %3325 = vmatmul.mubr.f32.gmra.mrb[0].mxu0 %v198
  %v3326 = vpop.f32.mrb[0].mxu0
  %v3327 = vadd.f32 1.0, %v3326
  %v3328 = vpop.f32.mrb[0].mxu0
  %3329 = vdwg.mxu0
  %v3330 = vrsqrt.pop %v3312
  %v3331 = vrsqrt.pop %v3317
  %v3332 = vrsqrt.pop %v3322
  %v3333 = vrsqrt.pop %v3327
  %3335 = vset.pattern.permute.xlu0 0
  %3336 = vperm.xlu0 %3335, %v3330
  %v3337 = vpop.permute.xlu0 %3336
  %3340 = vset.pattern.permute.xlu0 0
  %3341 = vperm.xlu0 %3340, %v3331
  %v3342 = vpop.permute.xlu0 %3341
  %3345 = vset.pattern.permute.xlu0 0
  %3346 = vperm.xlu0 %3345, %v3332
  %v3347 = vpop.permute.xlu0 %3346
  %3350 = vset.pattern.permute.xlu0 0
  %3351 = vperm.xlu0 %3350, %v3333
  %v3352 = vpop.permute.xlu0 %3351
  %v3354 = vmul.f32 %v3337, %v3227
  %v3355 = vmul.f32 %v3342, %v3232
  %v3356 = vmul.f32 %v3347, %v3237
  %v3357 = vmul.f32 %v3352, %v3242
  %3358 = vmatprep.subr.mxu0 0.0
  %3359 = vmatpush1.msra.mxu0 %v3354
  %3360 = vmatprep.subr.mxu0 0.0
  %3361 = vmatpush1.msra.mxu0 %v3355
  %3362 = vmatprep.subr.mxu0 0.0
  %3363 = vmatpush1.msra.mxu0 %v3356
  %3364 = vmatprep.subr.mxu0 0.0
  %3365 = vmatpush1.msra.mxu0 %v3357
  %3366 = vmatprep.subr.mxu0 0.0
  %3367 = vmatpush1.msra.mxu0 0.0
  %3368 = vmatprep.subr.mxu0 0.0
  %3369 = vmatpush1.msra.mxu0 0.0
  %3370 = vmatprep.subr.mxu0 0.0
  %3371 = vmatpush1.msra.mxu0 0.0
  %3372 = vmatprep.subr.mxu0 0.0
  %3373 = vmatpush1.msra.mxu0 0.0
  %3374 = vmatprep.subr.mxu0 0.0
  %3375 = vmatpush1.msra.mxu0 0.0
  %3376 = vmatprep.subr.mxu0 0.0
  %3377 = vmatpush1.msra.mxu0 0.0
  %3378 = vmatprep.subr.mxu0 0.0
  %3379 = vmatpush1.msra.mxu0 0.0
  %3380 = vmatprep.subr.mxu0 0.0
  %3381 = vmatpush1.msra.mxu0 0.0
  %3382 = vmatprep.subr.mxu0 0.0
  %3383 = vmatpush1.msra.mxu0 0.0
  %3384 = vmatprep.subr.mxu0 0.0
  %3385 = vmatpush1.msra.mxu0 0.0
  %3386 = vmatprep.subr.mxu0 0.0
  %3387 = vmatpush1.msra.mxu0 0.0
  %3388 = vmatprep.subr.mxu0 0.0
  %3389 = vmatpush1.msra.mxu0 0.0
  %3390 = vmatprep.subr.mxu0 0.0
  %3391 = vmatpush1.msra.mxu0 0.0
  %3392 = vmatprep.subr.mxu0 0.0
  %3393 = vmatpush1.msra.mxu0 0.0
  %3394 = vmatprep.subr.mxu0 0.0
  %3395 = vmatpush1.msra.mxu0 0.0
  %3396 = vmatprep.subr.mxu0 0.0
  %3397 = vmatpush1.msra.mxu0 0.0
  %3398 = vmatprep.subr.mxu0 0.0
  %3399 = vmatpush1.msra.mxu0 0.0
  %3400 = vmatprep.subr.mxu0 0.0
  %3401 = vmatpush1.msra.mxu0 0.0
  %3402 = vmatprep.subr.mxu0 0.0
  %3403 = vmatpush1.msra.mxu0 0.0
  %3404 = vmatprep.subr.mxu0 0.0
  %3405 = vmatpush1.msra.mxu0 0.0
  %3406 = vmatprep.subr.mxu0 0.0
  %3407 = vmatpush1.msra.mxu0 0.0
  %3408 = vmatprep.subr.mxu0 0.0
  %3409 = vmatpush1.msra.mxu0 0.0
  %3410 = vmatprep.subr.mxu0 0.0
  %3411 = vmatpush1.msra.mxu0 0.0
  %3412 = vmatprep.subr.mxu0 0.0
  %3413 = vmatpush1.msra.mxu0 0.0
  %3414 = vmatprep.subr.mxu0 0.0
  %3415 = vmatpush1.msra.mxu0 0.0
  %3416 = vmatprep.subr.mxu0 0.0
  %3417 = vmatpush1.msra.mxu0 0.0
  %3418 = vmatprep.subr.mxu0 0.0
  %3419 = vmatpush1.msra.mxu0 0.0
  %3420 = vmatprep.subr.mxu0 0.0
  %3421 = vmatpush1.msra.mxu0 0.0
  %3422 = vmatprep.mubr.f32.mxu0 0.0
  %3423 = vmatmul.mubr.f32.gmra.mrb[0].mxu0 %v189
  %v3424 = vpop.f32.mrb[0].mxu0
  %v3425 = vadd.f32 0.0, %v3424
  %v3426 = vpop.f32.mrb[0].mxu0
  %3427 = vmatprep.mubr.f32.mxu0 0.0
  %3428 = vmatmul.mubr.f32.gmra.mrb[0].mxu0 %v192
  %v3429 = vpop.f32.mrb[0].mxu0
  %v3430 = vadd.f32 0.0, %v3429
  %v3431 = vpop.f32.mrb[0].mxu0
  %3432 = vmatprep.mubr.f32.mxu0 0.0
  %3433 = vmatmul.mubr.f32.gmra.mrb[0].mxu0 %v195
  %v3434 = vpop.f32.mrb[0].mxu0
  %v3435 = vadd.f32 0.0, %v3434
  %v3436 = vpop.f32.mrb[0].mxu0
  %3437 = vmatprep.mubr.f32.mxu0 0.0
  %3438 = vmatmul.mubr.f32.gmra.mrb[0].mxu0 %v198
  %v3439 = vpop.f32.mrb[0].mxu0
  %v3440 = vadd.f32 0.0, %v3439
  %v3441 = vpop.f32.mrb[0].mxu0
  %3442 = vdwg.mxu0
  %v3443 = vmul.f32 %v3337, %v3425
  %v3444 = vmul.f32 %v3342, %v3430
  %v3445 = vmul.f32 %v3347, %v3435
  %v3446 = vmul.f32 %v3352, %v3440
  %3448 = vset.pattern.permute.xlu0 0
  %3449 = vperm.xlu0 %3448, %v3312
  %v3450 = vpop.permute.xlu0 %3449
  %3453 = vset.pattern.permute.xlu0 0
  %3454 = vperm.xlu0 %3453, %v3317
  %v3455 = vpop.permute.xlu0 %3454
  %3458 = vset.pattern.permute.xlu0 0
  %3459 = vperm.xlu0 %3458, %v3322
  %v3460 = vpop.permute.xlu0 %3459
  %3463 = vset.pattern.permute.xlu0 0
  %3464 = vperm.xlu0 %3463, %v3327
  %v3465 = vpop.permute.xlu0 %3464
  %v3467 = vrcp.pop %v3450
  %v3468 = vmul.f32 %v3227, %v3467
  %v3469 = vrcp.pop %v3455
  %v3470 = vmul.f32 %v3232, %v3469
  %v3471 = vrcp.pop %v3460
  %v3472 = vmul.f32 %v3237, %v3471
  %v3473 = vrcp.pop %v3465
  %v3474 = vmul.f32 %v3242, %v3473
  %v3475 = vadd.f32 %v3443, %v3468
  %v3476 = vadd.f32 %v3444, %v3470
  %v3477 = vadd.f32 %v3445, %v3472
  %v3478 = vadd.f32 %v3446, %v3474
  %v3479 = vld [vmem:[%s10 + $0x3] sm:$0x1]
  %v3480 = vlaneseq
  %v3481 = vshrl.u32 %v3480, 7
  %v3482 = vsub.s32 0, %v3481
  %v3483 = vrot.slane %v3479, %v3482
  %v3484 = vadd.f32 %v3475, %v3483
  %v3485 = vadd.f32 %v3476, %v3483
  %v3486 = vadd.f32 %v3477, %v3483
  %v3487 = vadd.f32 %v3478, %v3483
  %v3488 = vmax.f32 %v3484, 0.0
  %v3489 = vmax.f32 %v3485, 0.0
  %v3490 = vmax.f32 %v3486, 0.0
  %v3491 = vmax.f32 %v3487, 0.0
  %3492 = vrot.lane.b32.xlu0 %v2516, 125
  %v3493 = vpop.permute.xlu0 %3492
  %3494 = vrot.lane.b32.xlu0 %v2517, 125
  %v3495 = vpop.permute.xlu0 %3494
  %3496 = vrot.lane.b32.xlu0 %v2518, 125
  %v3497 = vpop.permute.xlu0 %3496
  %3498 = vrot.lane.b32.xlu0 %v2519, 125
  %v3499 = vpop.permute.xlu0 %3498
  %3500 = vrot.lane.b32.xlu0 %v2520, 125
  %v3501 = vpop.permute.xlu0 %3500
  %3502 = vrot.lane.b32.xlu0 %v2521, 125
  %v3503 = vpop.permute.xlu0 %3502
  %3504 = vrot.lane.b32.xlu0 %v2522, 125
  %v3505 = vpop.permute.xlu0 %3504
  %3506 = vrot.lane.b32.xlu0 %v2523, 125
  %v3507 = vpop.permute.xlu0 %3506
  %v3517 = vsel %vm551, %v3488, 0
  %v3520 = vsel %vm551, %v3489, 0
  %v3523 = vsel %vm551, %v3490, 0
  %v3526 = vsel %vm551, %v3491, 0
  %3528 = vmatprep.subr.mxu0 0.0
  %3529 = vmatpush1.msra.mxu0 %v3493
  %3530 = vmatprep.subr.mxu0 0.0
  %3531 = vmatpush1.msra.mxu0 %v3495
  %3532 = vmatprep.subr.mxu0 0.0
  %3533 = vmatpush1.msra.mxu0 %v3497
  %3534 = vmatprep.subr.mxu0 0.0
  %3535 = vmatpush1.msra.mxu0 %v3499
  %3536 = vmatprep.subr.mxu0 0.0
  %3537 = vmatpush1.msra.mxu0 %v3501
  %3538 = vmatprep.subr.mxu0 0.0
  %3539 = vmatpush1.msra.mxu0 %v3503
  %3540 = vmatprep.subr.mxu0 0.0
  %3541 = vmatpush1.msra.mxu0 %v3505
  %3542 = vmatprep.subr.mxu0 0.0
  %3543 = vmatpush1.msra.mxu0 %v3507
  %3544 = vmatprep.subr.mxu0 0.0
  %3545 = vmatpush1.msra.mxu0 0.0
  %3546 = vmatprep.subr.mxu0 0.0
  %3547 = vmatpush1.msra.mxu0 0.0
  %3548 = vmatprep.subr.mxu0 0.0
  %3549 = vmatpush1.msra.mxu0 0.0
  %3550 = vmatprep.subr.mxu0 0.0
  %3551 = vmatpush1.msra.mxu0 0.0
  %3552 = vmatprep.subr.mxu0 0.0
  %3553 = vmatpush1.msra.mxu0 0.0
  %3554 = vmatprep.subr.mxu0 0.0
  %3555 = vmatpush1.msra.mxu0 0.0
  %3556 = vmatprep.subr.mxu0 0.0
  %3557 = vmatpush1.msra.mxu0 0.0
  %3558 = vmatprep.subr.mxu0 0.0
  %3559 = vmatpush1.msra.mxu0 0.0
  %3560 = vmatprep.subr.mxu0 0.0
  %3561 = vmatpush1.msra.mxu0 0.0
  %3562 = vmatprep.subr.mxu0 0.0
  %3563 = vmatpush1.msra.mxu0 0.0
  %3564 = vmatprep.subr.mxu0 0.0
  %3565 = vmatpush1.msra.mxu0 0.0
  %3566 = vmatprep.subr.mxu0 0.0
  %3567 = vmatpush1.msra.mxu0 0.0
  %3568 = vmatprep.subr.mxu0 0.0
  %3569 = vmatpush1.msra.mxu0 0.0
  %3570 = vmatprep.subr.mxu0 0.0
  %3571 = vmatpush1.msra.mxu0 0.0
  %3572 = vmatprep.subr.mxu0 0.0
  %3573 = vmatpush1.msra.mxu0 0.0
  %3574 = vmatprep.subr.mxu0 0.0
  %3575 = vmatpush1.msra.mxu0 0.0
  %3576 = vmatprep.subr.mxu0 0.0
  %3577 = vmatpush1.msra.mxu0 0.0
  %3578 = vmatprep.subr.mxu0 0.0
  %3579 = vmatpush1.msra.mxu0 0.0
  %3580 = vmatprep.subr.mxu0 0.0
  %3581 = vmatpush1.msra.mxu0 0.0
  %3582 = vmatprep.subr.mxu0 0.0
  %3583 = vmatpush1.msra.mxu0 0.0
  %3584 = vmatprep.subr.mxu0 0.0
  %3585 = vmatpush1.msra.mxu0 0.0
  %3586 = vmatprep.subr.mxu0 0.0
  %3587 = vmatpush1.msra.mxu0 0.0
  %3588 = vmatprep.subr.mxu0 0.0
  %3589 = vmatpush1.msra.mxu0 0.0
  %3590 = vmatprep.subr.mxu0 0.0
  %3591 = vmatpush1.msra.mxu0 0.0
  %3592 = vmatprep.mubr.f32.mxu0 0.0
  %3593 = vmatmul.mubr.f32.gmra.mrb[0].mxu0 %v3517
  %v3594 = vpop.f32.mrb[0].mxu0
  %v3595 = vadd.f32 0.0, %v3594
  %v3596 = vpop.f32.mrb[0].mxu0
  %3597 = vmatprep.mubr.f32.mxu0 0.0
  %3598 = vmatmul.mubr.f32.gmra.mrb[0].mxu0 %v3520
  %v3599 = vpop.f32.mrb[0].mxu0
  %v3600 = vadd.f32 0.0, %v3599
  %v3601 = vpop.f32.mrb[0].mxu0
  %3602 = vmatprep.mubr.f32.mxu0 0.0
  %3603 = vmatmul.mubr.f32.gmra.mrb[0].mxu0 %v3523
  %v3604 = vpop.f32.mrb[0].mxu0
  %v3605 = vadd.f32 0.0, %v3604
  %v3606 = vpop.f32.mrb[0].mxu0
  %3607 = vmatprep.mubr.f32.mxu0 0.0
  %3608 = vmatmul.mubr.f32.gmra.mrb[0].mxu0 %v3526
  %v3609 = vpop.f32.mrb[0].mxu0
  %v3610 = vadd.f32 0.0, %v3609
  %v3611 = vpop.f32.mrb[0].mxu0
  %3612 = vdwg.mxu0
  %v3613 = vtanh.pop %v3595
  %v3614 = vtanh.pop %v3600
  %v3615 = vtanh.pop %v3605
  %v3616 = vtanh.pop %v3610
  %vm3617 = vcmp.gt.f32.partialorder %v2834, 0.0
  %vm3618 = vcmp.gt.f32.partialorder %v2835, 0.0
  %vm3619 = vcmp.gt.f32.partialorder %v2836, 0.0
  %vm3620 = vcmp.gt.f32.partialorder %v2837, 0.0
  %v3621 = vsel %vm3617, %v3613, -1e+30
  %v3622 = vsel %vm3618, %v3614, -1e+30
  %v3623 = vsel %vm3619, %v3615, -1e+30
  %v3624 = vsel %vm3620, %v3616, -1e+30
  %3626 = vset.pattern.permute.xlu0 0
  %3627 = vperm.xlu0 %3626, %v3621
  %v3628 = vpop.permute.xlu0 %3627
  %3631 = vset.pattern.permute.xlu0 0
  %3632 = vperm.xlu0 %3631, %v3622
  %v3633 = vpop.permute.xlu0 %3632
  %3636 = vset.pattern.permute.xlu0 0
  %3637 = vperm.xlu0 %3636, %v3623
  %v3638 = vpop.permute.xlu0 %3637
  %3641 = vset.pattern.permute.xlu0 0
  %3642 = vperm.xlu0 %3641, %v3624
  %v3643 = vpop.permute.xlu0 %3642
  %v3645 = vsel %vm183, %v3628, 0.0
  %v3646 = vsel %vm184, %v3633, 0.0
  %v3647 = vsel %vm185, %v3638, 0.0
  %v3648 = vsel %vm186, %v3643, 0.0
  %v3649 = vsel %vm187, %v3645, 0.0
  %v3650 = vsel %vm187, %v3646, 0.0
  %v3651 = vadd.f32 %v3649, %v3650
  %v3652 = vsel %vm187, %v3647, 0.0
  %v3653 = vadd.f32 %v3651, %v3652
  %v3654 = vsel %vm187, %v3648, 0.0
  %v3655 = vadd.f32 %v3653, %v3654
  %v3656 = vrot.slane %v3655, 4
  %v3657 = vadd.f32 %v3655, %v3656
  %v3658 = vrot.slane %v3657, 2
  %v3659 = vadd.f32 %v3657, %v3658
  %v3660 = vrot.slane %v3659, 1
  %v3661 = vadd.f32 %v3659, %v3660
  %vm3662 = vcmp.gt.f32.partialorder %v3661, %v3628
  %vm3663 = vcmp.gt.f32.partialorder %v3661, %v3633
  %vm3664 = vcmp.gt.f32.partialorder %v3661, %v3638
  %vm3665 = vcmp.gt.f32.partialorder %v3661, %v3643
  %vm3666 = vcmp.eq.f32.partialorder %v3661, %v3628
  %vm3667 = vcmp.eq.f32.partialorder %v3661, %v3633
  %vm3668 = vcmp.eq.f32.partialorder %v3661, %v3638
  %vm3669 = vcmp.eq.f32.partialorder %v3661, %v3643
  %vm3670 = vmand %vm3666, %vm703
  %vm3671 = vmand %vm3667, %vm704
  %vm3672 = vmand %vm3668, %vm705
  %vm3673 = vmand %vm3669, %vm706
  %vm3674 = vmor %vm3662, %vm3670
  %vm3675 = vmor %vm3663, %vm3671
  %vm3676 = vmor %vm3664, %vm3672
  %vm3677 = vmor %vm3665, %vm3673
  %v3678 = vsel %vm3674, %v158, 0.0
  %v3679 = vsel %vm3675, %v163, 0.0
  %v3680 = vsel %vm3676, %v168, 0.0
  %v3681 = vsel %vm3677, %v173, 0.0
  %v3682 = vsel %vm187, %v3678, 0.0
  %3683 = vadd.xlane.f32.xlu0 %v3682
  %v3684 = vpop.xlane.xlu0 %3683
  %v3685 = vsel %vm187, %v3679, 0.0
  %3686 = vadd.xlane.f32.xlu0 %v3685
  %v3687 = vpop.xlane.xlu0 %3686
  %v3688 = vsel %vm187, %v3680, 0.0
  %3689 = vadd.xlane.f32.xlu0 %v3688
  %v3690 = vpop.xlane.xlu0 %3689
  %v3691 = vsel %vm187, %v3681, 0.0
  %3692 = vadd.xlane.f32.xlu0 %v3691
  %v3693 = vpop.xlane.xlu0 %3692
  %v3695 = vsel %vm87, %v3023, 0
  %3697 = vmatprep.subr.mxu0 0.0
  %3698 = vmatpush1.msra.mxu0 %v3695
  %3699 = vmatprep.subr.mxu0 0.0
  %3700 = vmatpush1.msra.mxu0 0.0
  %3701 = vmatprep.subr.mxu0 0.0
  %3702 = vmatpush1.msra.mxu0 0.0
  %3703 = vmatprep.subr.mxu0 0.0
  %3704 = vmatpush1.msra.mxu0 0.0
  %3705 = vmatprep.subr.mxu0 0.0
  %3706 = vmatpush1.msra.mxu0 0.0
  %3707 = vmatprep.subr.mxu0 0.0
  %3708 = vmatpush1.msra.mxu0 0.0
  %3709 = vmatprep.subr.mxu0 0.0
  %3710 = vmatpush1.msra.mxu0 0.0
  %3711 = vmatprep.subr.mxu0 0.0
  %3712 = vmatpush1.msra.mxu0 0.0
  %3713 = vmatprep.subr.mxu0 0.0
  %3714 = vmatpush1.msra.mxu0 0.0
  %3715 = vmatprep.subr.mxu0 0.0
  %3716 = vmatpush1.msra.mxu0 0.0
  %3717 = vmatprep.subr.mxu0 0.0
  %3718 = vmatpush1.msra.mxu0 0.0
  %3719 = vmatprep.subr.mxu0 0.0
  %3720 = vmatpush1.msra.mxu0 0.0
  %3721 = vmatprep.subr.mxu0 0.0
  %3722 = vmatpush1.msra.mxu0 0.0
  %3723 = vmatprep.subr.mxu0 0.0
  %3724 = vmatpush1.msra.mxu0 0.0
  %3725 = vmatprep.subr.mxu0 0.0
  %3726 = vmatpush1.msra.mxu0 0.0
  %3727 = vmatprep.subr.mxu0 0.0
  %3728 = vmatpush1.msra.mxu0 0.0
  %3729 = vmatprep.subr.mxu0 0.0
  %3730 = vmatpush1.msra.mxu0 0.0
  %3731 = vmatprep.subr.mxu0 0.0
  %3732 = vmatpush1.msra.mxu0 0.0
  %3733 = vmatprep.subr.mxu0 0.0
  %3734 = vmatpush1.msra.mxu0 0.0
  %3735 = vmatprep.subr.mxu0 0.0
  %3736 = vmatpush1.msra.mxu0 0.0
  %3737 = vmatprep.subr.mxu0 0.0
  %3738 = vmatpush1.msra.mxu0 0.0
  %3739 = vmatprep.subr.mxu0 0.0
  %3740 = vmatpush1.msra.mxu0 0.0
  %3741 = vmatprep.subr.mxu0 0.0
  %3742 = vmatpush1.msra.mxu0 0.0
  %3743 = vmatprep.subr.mxu0 0.0
  %3744 = vmatpush1.msra.mxu0 0.0
  %3745 = vmatprep.subr.mxu0 0.0
  %3746 = vmatpush1.msra.mxu0 0.0
  %3747 = vmatprep.subr.mxu0 0.0
  %3748 = vmatpush1.msra.mxu0 0.0
  %3749 = vmatprep.subr.mxu0 0.0
  %3750 = vmatpush1.msra.mxu0 0.0
  %3751 = vmatprep.subr.mxu0 0.0
  %3752 = vmatpush1.msra.mxu0 0.0
  %3753 = vmatprep.subr.mxu0 0.0
  %3754 = vmatpush1.msra.mxu0 0.0
  %3755 = vmatprep.subr.mxu0 0.0
  %3756 = vmatpush1.msra.mxu0 0.0
  %3757 = vmatprep.subr.mxu0 0.0
  %3758 = vmatpush1.msra.mxu0 0.0
  %3759 = vmatprep.subr.mxu0 0.0
  %3760 = vmatpush1.msra.mxu0 0.0
  %3761 = vmatprep.mubr.f32.mxu0 0.0
  %3762 = vmatmul.mubr.f32.gmra.mrb[0].mxu0 %v76
  %v3763 = vpop.f32.mrb[0].mxu0
  %v3764 = vadd.f32 0.0, %v3763
  %v3765 = vpop.f32.mrb[0].mxu0
  %3766 = vmatprep.mubr.f32.mxu0 0.0
  %3767 = vmatmul.mubr.f32.gmra.mrb[0].mxu0 %v79
  %v3768 = vpop.f32.mrb[0].mxu0
  %v3769 = vadd.f32 0.0, %v3768
  %v3770 = vpop.f32.mrb[0].mxu0
  %3771 = vmatprep.mubr.f32.mxu0 0.0
  %3772 = vmatmul.mubr.f32.gmra.mrb[0].mxu0 %v82
  %v3773 = vpop.f32.mrb[0].mxu0
  %v3774 = vadd.f32 0.0, %v3773
  %v3775 = vpop.f32.mrb[0].mxu0
  %3776 = vmatprep.mubr.f32.mxu0 0.0
  %3777 = vmatmul.mubr.f32.gmra.mrb[0].mxu0 %v85
  %v3778 = vpop.f32.mrb[0].mxu0
  %v3779 = vadd.f32 0.0, %v3778
  %v3780 = vpop.f32.mrb[0].mxu0
  %3781 = vdwg.mxu0
  %v3782 = vmul.f32 %v3764, 0.5
  %v3783 = vmul.f32 %v3769, 0.5
  %v3784 = vmul.f32 %v3774, 0.5
  %v3785 = vmul.f32 %v3779, 0.5
  %vm3786 = vcmp.lt.f32.partialorder %v3684, %v3782
  %vm3787 = vcmp.lt.f32.partialorder %v3687, %v3783
  %vm3788 = vcmp.lt.f32.partialorder %v3690, %v3784
  %vm3789 = vcmp.lt.f32.partialorder %v3693, %v3785
  %vm3790 = vmand %vm3786, %vm3617
  %vm3791 = vmand %vm3787, %vm3618
  %vm3792 = vmand %vm3788, %vm3619
  %vm3793 = vmand %vm3789, %vm3620
  %v3794 = vsel %vm3790, 1.0, 0.0
  %v3795 = vsel %vm3791, 1.0, 0.0
  %v3796 = vsel %vm3792, 1.0, 0.0
  %v3797 = vsel %vm3793, 1.0, 0.0
  %3799 = vset.pattern.permute.xlu0 0
  %3800 = vperm.xlu0 %3799, %v3613
  %v3801 = vpop.permute.xlu0 %3800
  %3804 = vset.pattern.permute.xlu0 0
  %3805 = vperm.xlu0 %3804, %v3614
  %v3806 = vpop.permute.xlu0 %3805
  %3809 = vset.pattern.permute.xlu0 0
  %3810 = vperm.xlu0 %3809, %v3615
  %v3811 = vpop.permute.xlu0 %3810
  %3814 = vset.pattern.permute.xlu0 0
  %3815 = vperm.xlu0 %3814, %v3616
  %v3816 = vpop.permute.xlu0 %3815
  %v3818 = vmul.f32 %v3488, %v3801
  %v3819 = vmul.f32 %v3489, %v3806
  %v3820 = vmul.f32 %v3490, %v3811
  %v3821 = vmul.f32 %v3491, %v3816
  %3823 = vset.pattern.permute.xlu0 0
  %3824 = vperm.xlu0 %3823, %v3794
  %v3825 = vpop.permute.xlu0 %3824
  %3828 = vset.pattern.permute.xlu0 0
  %3829 = vperm.xlu0 %3828, %v3795
  %v3830 = vpop.permute.xlu0 %3829
  %3833 = vset.pattern.permute.xlu0 0
  %3834 = vperm.xlu0 %3833, %v3796
  %v3835 = vpop.permute.xlu0 %3834
  %3838 = vset.pattern.permute.xlu0 0
  %3839 = vperm.xlu0 %3838, %v3797
  %v3840 = vpop.permute.xlu0 %3839
  %v3842 = vmul.f32 %v3818, %v3825
  %v3843 = vmul.f32 %v3819, %v3830
  %v3844 = vmul.f32 %v3820, %v3835
  %v3845 = vmul.f32 %v3821, %v3840
  %3846 = vmatprep.subr.mxu0 0.0
  %3847 = vmatpush1.msra.mxu0 %v3842
  %3848 = vmatprep.subr.mxu0 0.0
  %3849 = vmatpush1.msra.mxu0 %v3843
  %3850 = vmatprep.subr.mxu0 0.0
  %3851 = vmatpush1.msra.mxu0 %v3844
  %3852 = vmatprep.subr.mxu0 0.0
  %3853 = vmatpush1.msra.mxu0 %v3845
  %3854 = vmatprep.subr.mxu0 0.0
  %3855 = vmatpush1.msra.mxu0 0.0
  %3856 = vmatprep.subr.mxu0 0.0
  %3857 = vmatpush1.msra.mxu0 0.0
  %3858 = vmatprep.subr.mxu0 0.0
  %3859 = vmatpush1.msra.mxu0 0.0
  %3860 = vmatprep.subr.mxu0 0.0
  %3861 = vmatpush1.msra.mxu0 0.0
  %3862 = vmatprep.subr.mxu0 0.0
  %3863 = vmatpush1.msra.mxu0 0.0
  %3864 = vmatprep.subr.mxu0 0.0
  %3865 = vmatpush1.msra.mxu0 0.0
  %3866 = vmatprep.subr.mxu0 0.0
  %3867 = vmatpush1.msra.mxu0 0.0
  %3868 = vmatprep.subr.mxu0 0.0
  %3869 = vmatpush1.msra.mxu0 0.0
  %3870 = vmatprep.subr.mxu0 0.0
  %3871 = vmatpush1.msra.mxu0 0.0
  %3872 = vmatprep.subr.mxu0 0.0
  %3873 = vmatpush1.msra.mxu0 0.0
  %3874 = vmatprep.subr.mxu0 0.0
  %3875 = vmatpush1.msra.mxu0 0.0
  %3876 = vmatprep.subr.mxu0 0.0
  %3877 = vmatpush1.msra.mxu0 0.0
  %3878 = vmatprep.subr.mxu0 0.0
  %3879 = vmatpush1.msra.mxu0 0.0
  %3880 = vmatprep.subr.mxu0 0.0
  %3881 = vmatpush1.msra.mxu0 0.0
  %3882 = vmatprep.subr.mxu0 0.0
  %3883 = vmatpush1.msra.mxu0 0.0
  %3884 = vmatprep.subr.mxu0 0.0
  %3885 = vmatpush1.msra.mxu0 0.0
  %3886 = vmatprep.subr.mxu0 0.0
  %3887 = vmatpush1.msra.mxu0 0.0
  %3888 = vmatprep.subr.mxu0 0.0
  %3889 = vmatpush1.msra.mxu0 0.0
  %3890 = vmatprep.subr.mxu0 0.0
  %3891 = vmatpush1.msra.mxu0 0.0
  %3892 = vmatprep.subr.mxu0 0.0
  %3893 = vmatpush1.msra.mxu0 0.0
  %3894 = vmatprep.subr.mxu0 0.0
  %3895 = vmatpush1.msra.mxu0 0.0
  %3896 = vmatprep.subr.mxu0 0.0
  %3897 = vmatpush1.msra.mxu0 0.0
  %3898 = vmatprep.subr.mxu0 0.0
  %3899 = vmatpush1.msra.mxu0 0.0
  %3900 = vmatprep.subr.mxu0 0.0
  %3901 = vmatpush1.msra.mxu0 0.0
  %3902 = vmatprep.subr.mxu0 0.0
  %3903 = vmatpush1.msra.mxu0 0.0
  %3904 = vmatprep.subr.mxu0 0.0
  %3905 = vmatpush1.msra.mxu0 0.0
  %3906 = vmatprep.subr.mxu0 0.0
  %3907 = vmatpush1.msra.mxu0 0.0
  %3908 = vmatprep.subr.mxu0 0.0
  %3909 = vmatpush1.msra.mxu0 0.0
  %3910 = vmatprep.mubr.f32.mxu0 0.0
  %3911 = vmatmul.mubr.f32.gmra.mrb[0].mxu0 %v731
  %v3912 = vpop.f32.mrb[0].mxu0
  %v3913 = vadd.f32 0.0, %v3912
  %v3914 = vpop.f32.mrb[0].mxu0
  %3915 = vdwg.mxu0
  %3916 = vmatprep.subr.mxu0 0.0
  %3917 = vmatpush1.msra.mxu0 %v3794
  %3918 = vmatprep.subr.mxu0 0.0
  %3919 = vmatpush1.msra.mxu0 %v3795
  %3920 = vmatprep.subr.mxu0 0.0
  %3921 = vmatpush1.msra.mxu0 %v3796
  %3922 = vmatprep.subr.mxu0 0.0
  %3923 = vmatpush1.msra.mxu0 %v3797
  %3924 = vmatprep.subr.mxu0 0.0
  %3925 = vmatpush1.msra.mxu0 0.0
  %3926 = vmatprep.subr.mxu0 0.0
  %3927 = vmatpush1.msra.mxu0 0.0
  %3928 = vmatprep.subr.mxu0 0.0
  %3929 = vmatpush1.msra.mxu0 0.0
  %3930 = vmatprep.subr.mxu0 0.0
  %3931 = vmatpush1.msra.mxu0 0.0
  %3932 = vmatprep.subr.mxu0 0.0
  %3933 = vmatpush1.msra.mxu0 0.0
  %3934 = vmatprep.subr.mxu0 0.0
  %3935 = vmatpush1.msra.mxu0 0.0
  %3936 = vmatprep.subr.mxu0 0.0
  %3937 = vmatpush1.msra.mxu0 0.0
  %3938 = vmatprep.subr.mxu0 0.0
  %3939 = vmatpush1.msra.mxu0 0.0
  %3940 = vmatprep.subr.mxu0 0.0
  %3941 = vmatpush1.msra.mxu0 0.0
  %3942 = vmatprep.subr.mxu0 0.0
  %3943 = vmatpush1.msra.mxu0 0.0
  %3944 = vmatprep.subr.mxu0 0.0
  %3945 = vmatpush1.msra.mxu0 0.0
  %3946 = vmatprep.subr.mxu0 0.0
  %3947 = vmatpush1.msra.mxu0 0.0
  %3948 = vmatprep.subr.mxu0 0.0
  %3949 = vmatpush1.msra.mxu0 0.0
  %3950 = vmatprep.subr.mxu0 0.0
  %3951 = vmatpush1.msra.mxu0 0.0
  %3952 = vmatprep.subr.mxu0 0.0
  %3953 = vmatpush1.msra.mxu0 0.0
  %3954 = vmatprep.subr.mxu0 0.0
  %3955 = vmatpush1.msra.mxu0 0.0
  %3956 = vmatprep.subr.mxu0 0.0
  %3957 = vmatpush1.msra.mxu0 0.0
  %3958 = vmatprep.subr.mxu0 0.0
  %3959 = vmatpush1.msra.mxu0 0.0
  %3960 = vmatprep.subr.mxu0 0.0
  %3961 = vmatpush1.msra.mxu0 0.0
  %3962 = vmatprep.subr.mxu0 0.0
  %3963 = vmatpush1.msra.mxu0 0.0
  %3964 = vmatprep.subr.mxu0 0.0
  %3965 = vmatpush1.msra.mxu0 0.0
  %3966 = vmatprep.subr.mxu0 0.0
  %3967 = vmatpush1.msra.mxu0 0.0
  %3968 = vmatprep.subr.mxu0 0.0
  %3969 = vmatpush1.msra.mxu0 0.0
  %3970 = vmatprep.subr.mxu0 0.0
  %3971 = vmatpush1.msra.mxu0 0.0
  %3972 = vmatprep.subr.mxu0 0.0
  %3973 = vmatpush1.msra.mxu0 0.0
  %3974 = vmatprep.subr.mxu0 0.0
  %3975 = vmatpush1.msra.mxu0 0.0
  %3976 = vmatprep.subr.mxu0 0.0
  %3977 = vmatpush1.msra.mxu0 0.0
  %3978 = vmatprep.subr.mxu0 0.0
  %3979 = vmatpush1.msra.mxu0 0.0
  %3980 = vmatprep.mubr.f32.mxu0 0.0
  %3981 = vmatmul.mubr.f32.gmra.mrb[0].mxu0 %v731
  %v3982 = vpop.f32.mrb[0].mxu0
  %v3983 = vadd.f32 0.0, %v3982
  %v3984 = vpop.f32.mrb[0].mxu0
  %3985 = vdwg.mxu0
  %v3986 = vmax.f32 %v3983, 1.0
  %3988 = vset.pattern.permute.xlu0 0
  %3989 = vperm.xlu0 %3988, %v3986
  %v3990 = vpop.permute.xlu0 %3989
  %v3992 = vrcp.pop %v3990
  %v3993 = vmul.f32 %v3913, %v3992
  %v3994 = vadd.f32 %v3034, %v3993
  %v3995 = vmul.f32 %v70, %v3794
  %v3996 = vmul.f32 %v71, %v3795
  %v3997 = vmul.f32 %v72, %v3796
  %v3998 = vmul.f32 %v73, %v3797
  %vm3999 = vcmp.gt.f32.partialorder %v3995, 0.0
  %vm4000 = vcmp.gt.f32.partialorder %v3996, 0.0
  %vm4001 = vcmp.gt.f32.partialorder %v3997, 0.0
  %vm4002 = vcmp.gt.f32.partialorder %v3998, 0.0
  %v4003 = vsel %vm3999, 1, 0
  %v4004 = vsel %vm4000, 1, 0
  %v4005 = vsel %vm4001, 1, 0
  %v4006 = vsel %vm4002, 1, 0
  %4007 = vset.pattern.permute.xlu0 0
  %4008 = vperm.xlu0 %4007, %v4003
  %v4009 = vpop.permute.xlu0 %4008
  %4010 = vset.pattern.permute.xlu0 0
  %4011 = vperm.xlu0 %4010, %v4004
  %v4012 = vpop.permute.xlu0 %4011
  %4013 = vset.pattern.permute.xlu0 0
  %4014 = vperm.xlu0 %4013, %v4005
  %v4015 = vpop.permute.xlu0 %4014
  %4016 = vset.pattern.permute.xlu0 0
  %4017 = vperm.xlu0 %4016, %v4006
  %v4018 = vpop.permute.xlu0 %4017
  %vm4019 = vcmp.eq.s32.totalorder %v4009, 1
  %vm4020 = vcmp.eq.s32.totalorder %v4012, 1
  %vm4021 = vcmp.eq.s32.totalorder %v4015, 1
  %vm4022 = vcmp.eq.s32.totalorder %v4018, 1
  %v4023 = vsel %vm4019, %v3842, -1e+30
  %v4024 = vsel %vm4020, %v3843, -1e+30
  %v4025 = vsel %vm4021, %v3844, -1e+30
  %v4026 = vsel %vm4022, %v3845, -1e+30
  %v4027 = vsel %vm551, %v4023, -inf
  %v4028 = vsel %vm551, %v4024, -inf
  %v4029 = vsel %vm551, %v4025, -inf
  %v4030 = vsel %vm551, %v4026, -inf
  %v4031 = vmax.f32 %v4027, %v4028
  %v4032 = vmax.f32 %v4029, %v4030
  %v4033 = vmax.f32 %v4031, %v4032
  %v4034 = vrot.slane %v4033, 4
  %v4035 = vmax.f32 %v4033, %v4034
  %v4036 = vrot.slane %v4035, 2
  %v4037 = vmax.f32 %v4035, %v4036
  %v4038 = vrot.slane %v4037, 1
  %v4039 = vmax.f32 %v4037, %v4038
  %v4040 = vsel %vm1149, %v4039, -1e+30
  %4041 = vrot.lane.b32.xlu0 %v3794, 1
  %v4042 = vpop.permute.xlu0 %4041
  %4043 = vrot.lane.b32.xlu0 %v3795, 1
  %v4044 = vpop.permute.xlu0 %4043
  %4045 = vrot.lane.b32.xlu0 %v3796, 1
  %v4046 = vpop.permute.xlu0 %4045
  %4047 = vrot.lane.b32.xlu0 %v3797, 1
  %v4048 = vpop.permute.xlu0 %4047
  %v4053 = vmul.f32 %v70, %v4042
  %v4054 = vmul.f32 %v71, %v4044
  %v4055 = vmul.f32 %v72, %v4046
  %v4056 = vmul.f32 %v73, %v4048
  %vm4057 = vcmp.gt.f32.partialorder %v4053, 0.0
  %vm4058 = vcmp.gt.f32.partialorder %v4054, 0.0
  %vm4059 = vcmp.gt.f32.partialorder %v4055, 0.0
  %vm4060 = vcmp.gt.f32.partialorder %v4056, 0.0
  %v4061 = vsel %vm4057, 1, 0
  %v4062 = vsel %vm4058, 1, 0
  %v4063 = vsel %vm4059, 1, 0
  %v4064 = vsel %vm4060, 1, 0
  %4065 = vset.pattern.permute.xlu0 1
  %4066 = vperm.xlu0 %4065, %v4061
  %v4067 = vpop.permute.xlu0 %4066
  %4068 = vset.pattern.permute.xlu0 1
  %4069 = vperm.xlu0 %4068, %v4062
  %v4070 = vpop.permute.xlu0 %4069
  %4071 = vset.pattern.permute.xlu0 1
  %4072 = vperm.xlu0 %4071, %v4063
  %v4073 = vpop.permute.xlu0 %4072
  %4074 = vset.pattern.permute.xlu0 1
  %4075 = vperm.xlu0 %4074, %v4064
  %v4076 = vpop.permute.xlu0 %4075
  %vm4077 = vcmp.eq.s32.totalorder %v4067, 1
  %vm4078 = vcmp.eq.s32.totalorder %v4070, 1
  %vm4079 = vcmp.eq.s32.totalorder %v4073, 1
  %vm4080 = vcmp.eq.s32.totalorder %v4076, 1
  %v4081 = vsel %vm4077, %v3842, -1e+30
  %v4082 = vsel %vm4078, %v3843, -1e+30
  %v4083 = vsel %vm4079, %v3844, -1e+30
  %v4084 = vsel %vm4080, %v3845, -1e+30
  %v4085 = vsel %vm551, %v4081, -inf
  %v4086 = vsel %vm551, %v4082, -inf
  %v4087 = vsel %vm551, %v4083, -inf
  %v4088 = vsel %vm551, %v4084, -inf
  %v4089 = vmax.f32 %v4085, %v4086
  %v4090 = vmax.f32 %v4087, %v4088
  %v4091 = vmax.f32 %v4089, %v4090
  %v4092 = vrot.slane %v4091, 4
  %v4093 = vmax.f32 %v4091, %v4092
  %v4094 = vrot.slane %v4093, 2
  %v4095 = vmax.f32 %v4093, %v4094
  %v4096 = vrot.slane %v4095, 1
  %v4097 = vmax.f32 %v4095, %v4096
  %v4098 = vsel %vm1208, %v4097, %v4040
  %v4099 = vadd.f32 %v3139, %v4098
  %v4100 = vld [vmem:[%s8] sm:$0xff]
  %v4101 = vld [vmem:[%s8 + $0x8] sm:$0xff]
  %v4102 = vld [vmem:[%s8 + $0x10] sm:$0xff]
  %v4103 = vld [vmem:[%s8 + $0x18] sm:$0xff]
  %v4104 = vld [vmem:[%s8 + $0x20] sm:$0xff]
  %v4105 = vld [vmem:[%s8 + $0x28] sm:$0xff]
  %v4106 = vld [vmem:[%s8 + $0x30] sm:$0xff]
  %v4107 = vld [vmem:[%s8 + $0x38] sm:$0xff]
  %v4109 = vsel %vm551, %v3842, 0
  %v4112 = vsel %vm551, %v3843, 0
  %v4115 = vsel %vm551, %v3844, 0
  %v4118 = vsel %vm551, %v3845, 0
  %4120 = vmatprep.subr.mxu0 0.0
  %4121 = vmatpush1.msra.mxu0 %v4100
  %4122 = vmatprep.subr.mxu0 0.0
  %4123 = vmatpush1.msra.mxu0 %v4101
  %4124 = vmatprep.subr.mxu0 0.0
  %4125 = vmatpush1.msra.mxu0 %v4102
  %4126 = vmatprep.subr.mxu0 0.0
  %4127 = vmatpush1.msra.mxu0 %v4103
  %4128 = vmatprep.subr.mxu0 0.0
  %4129 = vmatpush1.msra.mxu0 %v4104
  %4130 = vmatprep.subr.mxu0 0.0
  %4131 = vmatpush1.msra.mxu0 %v4105
  %4132 = vmatprep.subr.mxu0 0.0
  %4133 = vmatpush1.msra.mxu0 %v4106
  %4134 = vmatprep.subr.mxu0 0.0
  %4135 = vmatpush1.msra.mxu0 %v4107
  %4136 = vmatprep.subr.mxu0 0.0
  %4137 = vmatpush1.msra.mxu0 0.0
  %4138 = vmatprep.subr.mxu0 0.0
  %4139 = vmatpush1.msra.mxu0 0.0
  %4140 = vmatprep.subr.mxu0 0.0
  %4141 = vmatpush1.msra.mxu0 0.0
  %4142 = vmatprep.subr.mxu0 0.0
  %4143 = vmatpush1.msra.mxu0 0.0
  %4144 = vmatprep.subr.mxu0 0.0
  %4145 = vmatpush1.msra.mxu0 0.0
  %4146 = vmatprep.subr.mxu0 0.0
  %4147 = vmatpush1.msra.mxu0 0.0
  %4148 = vmatprep.subr.mxu0 0.0
  %4149 = vmatpush1.msra.mxu0 0.0
  %4150 = vmatprep.subr.mxu0 0.0
  %4151 = vmatpush1.msra.mxu0 0.0
  %4152 = vmatprep.subr.mxu0 0.0
  %4153 = vmatpush1.msra.mxu0 0.0
  %4154 = vmatprep.subr.mxu0 0.0
  %4155 = vmatpush1.msra.mxu0 0.0
  %4156 = vmatprep.subr.mxu0 0.0
  %4157 = vmatpush1.msra.mxu0 0.0
  %4158 = vmatprep.subr.mxu0 0.0
  %4159 = vmatpush1.msra.mxu0 0.0
  %4160 = vmatprep.subr.mxu0 0.0
  %4161 = vmatpush1.msra.mxu0 0.0
  %4162 = vmatprep.subr.mxu0 0.0
  %4163 = vmatpush1.msra.mxu0 0.0
  %4164 = vmatprep.subr.mxu0 0.0
  %4165 = vmatpush1.msra.mxu0 0.0
  %4166 = vmatprep.subr.mxu0 0.0
  %4167 = vmatpush1.msra.mxu0 0.0
  %4168 = vmatprep.subr.mxu0 0.0
  %4169 = vmatpush1.msra.mxu0 0.0
  %4170 = vmatprep.subr.mxu0 0.0
  %4171 = vmatpush1.msra.mxu0 0.0
  %4172 = vmatprep.subr.mxu0 0.0
  %4173 = vmatpush1.msra.mxu0 0.0
  %4174 = vmatprep.subr.mxu0 0.0
  %4175 = vmatpush1.msra.mxu0 0.0
  %4176 = vmatprep.subr.mxu0 0.0
  %4177 = vmatpush1.msra.mxu0 0.0
  %4178 = vmatprep.subr.mxu0 0.0
  %4179 = vmatpush1.msra.mxu0 0.0
  %4180 = vmatprep.subr.mxu0 0.0
  %4181 = vmatpush1.msra.mxu0 0.0
  %4182 = vmatprep.subr.mxu0 0.0
  %4183 = vmatpush1.msra.mxu0 0.0
  %4184 = vmatprep.mubr.f32.mxu0 0.0
  %4185 = vmatmul.mubr.f32.gmra.mrb[0].mxu0 %v4109
  %v4186 = vpop.f32.mrb[0].mxu0
  %v4187 = vadd.f32 0.0, %v4186
  %v4188 = vpop.f32.mrb[0].mxu0
  %4189 = vmatprep.mubr.f32.mxu0 0.0
  %4190 = vmatmul.mubr.f32.gmra.mrb[0].mxu0 %v4112
  %v4191 = vpop.f32.mrb[0].mxu0
  %v4192 = vadd.f32 0.0, %v4191
  %v4193 = vpop.f32.mrb[0].mxu0
  %4194 = vmatprep.mubr.f32.mxu0 0.0
  %4195 = vmatmul.mubr.f32.gmra.mrb[0].mxu0 %v4115
  %v4196 = vpop.f32.mrb[0].mxu0
  %v4197 = vadd.f32 0.0, %v4196
  %v4198 = vpop.f32.mrb[0].mxu0
  %4199 = vmatprep.mubr.f32.mxu0 0.0
  %4200 = vmatmul.mubr.f32.gmra.mrb[0].mxu0 %v4118
  %v4201 = vpop.f32.mrb[0].mxu0
  %v4202 = vadd.f32 0.0, %v4201
  %v4203 = vpop.f32.mrb[0].mxu0
  %4204 = vdwg.mxu0
  %4205 = vmatprep.subr.mxu0 0.0
  %4206 = vmatpush1.msra.mxu0 %v3794
  %4207 = vmatprep.subr.mxu0 0.0
  %4208 = vmatpush1.msra.mxu0 %v3795
  %4209 = vmatprep.subr.mxu0 0.0
  %4210 = vmatpush1.msra.mxu0 %v3796
  %4211 = vmatprep.subr.mxu0 0.0
  %4212 = vmatpush1.msra.mxu0 %v3797
  %4213 = vmatprep.subr.mxu0 0.0
  %4214 = vmatpush1.msra.mxu0 0.0
  %4215 = vmatprep.subr.mxu0 0.0
  %4216 = vmatpush1.msra.mxu0 0.0
  %4217 = vmatprep.subr.mxu0 0.0
  %4218 = vmatpush1.msra.mxu0 0.0
  %4219 = vmatprep.subr.mxu0 0.0
  %4220 = vmatpush1.msra.mxu0 0.0
  %4221 = vmatprep.subr.mxu0 0.0
  %4222 = vmatpush1.msra.mxu0 0.0
  %4223 = vmatprep.subr.mxu0 0.0
  %4224 = vmatpush1.msra.mxu0 0.0
  %4225 = vmatprep.subr.mxu0 0.0
  %4226 = vmatpush1.msra.mxu0 0.0
  %4227 = vmatprep.subr.mxu0 0.0
  %4228 = vmatpush1.msra.mxu0 0.0
  %4229 = vmatprep.subr.mxu0 0.0
  %4230 = vmatpush1.msra.mxu0 0.0
  %4231 = vmatprep.subr.mxu0 0.0
  %4232 = vmatpush1.msra.mxu0 0.0
  %4233 = vmatprep.subr.mxu0 0.0
  %4234 = vmatpush1.msra.mxu0 0.0
  %4235 = vmatprep.subr.mxu0 0.0
  %4236 = vmatpush1.msra.mxu0 0.0
  %4237 = vmatprep.subr.mxu0 0.0
  %4238 = vmatpush1.msra.mxu0 0.0
  %4239 = vmatprep.subr.mxu0 0.0
  %4240 = vmatpush1.msra.mxu0 0.0
  %4241 = vmatprep.subr.mxu0 0.0
  %4242 = vmatpush1.msra.mxu0 0.0
  %4243 = vmatprep.subr.mxu0 0.0
  %4244 = vmatpush1.msra.mxu0 0.0
  %4245 = vmatprep.subr.mxu0 0.0
  %4246 = vmatpush1.msra.mxu0 0.0
  %4247 = vmatprep.subr.mxu0 0.0
  %4248 = vmatpush1.msra.mxu0 0.0
  %4249 = vmatprep.subr.mxu0 0.0
  %4250 = vmatpush1.msra.mxu0 0.0
  %4251 = vmatprep.subr.mxu0 0.0
  %4252 = vmatpush1.msra.mxu0 0.0
  %4253 = vmatprep.subr.mxu0 0.0
  %4254 = vmatpush1.msra.mxu0 0.0
  %4255 = vmatprep.subr.mxu0 0.0
  %4256 = vmatpush1.msra.mxu0 0.0
  %4257 = vmatprep.subr.mxu0 0.0
  %4258 = vmatpush1.msra.mxu0 0.0
  %4259 = vmatprep.subr.mxu0 0.0
  %4260 = vmatpush1.msra.mxu0 0.0
  %4261 = vmatprep.subr.mxu0 0.0
  %4262 = vmatpush1.msra.mxu0 0.0
  %4263 = vmatprep.subr.mxu0 0.0
  %4264 = vmatpush1.msra.mxu0 0.0
  %4265 = vmatprep.subr.mxu0 0.0
  %4266 = vmatpush1.msra.mxu0 0.0
  %4267 = vmatprep.subr.mxu0 0.0
  %4268 = vmatpush1.msra.mxu0 0.0
  %4269 = vmatprep.mubr.f32.mxu0 0.0
  %4270 = vmatmul.mubr.f32.gmra.mrb[0].mxu0 %v189
  %v4271 = vpop.f32.mrb[0].mxu0
  %v4272 = vadd.f32 1.0, %v4271
  %v4273 = vpop.f32.mrb[0].mxu0
  %4274 = vmatprep.mubr.f32.mxu0 0.0
  %4275 = vmatmul.mubr.f32.gmra.mrb[0].mxu0 %v192
  %v4276 = vpop.f32.mrb[0].mxu0
  %v4277 = vadd.f32 1.0, %v4276
  %v4278 = vpop.f32.mrb[0].mxu0
  %4279 = vmatprep.mubr.f32.mxu0 0.0
  %4280 = vmatmul.mubr.f32.gmra.mrb[0].mxu0 %v195
  %v4281 = vpop.f32.mrb[0].mxu0
  %v4282 = vadd.f32 1.0, %v4281
  %v4283 = vpop.f32.mrb[0].mxu0
  %4284 = vmatprep.mubr.f32.mxu0 0.0
  %4285 = vmatmul.mubr.f32.gmra.mrb[0].mxu0 %v198
  %v4286 = vpop.f32.mrb[0].mxu0
  %v4287 = vadd.f32 1.0, %v4286
  %v4288 = vpop.f32.mrb[0].mxu0
  %4289 = vdwg.mxu0
  %v4290 = vrsqrt.pop %v4272
  %v4291 = vrsqrt.pop %v4277
  %v4292 = vrsqrt.pop %v4282
  %v4293 = vrsqrt.pop %v4287
  %4295 = vset.pattern.permute.xlu0 0
  %4296 = vperm.xlu0 %4295, %v4290
  %v4297 = vpop.permute.xlu0 %4296
  %4300 = vset.pattern.permute.xlu0 0
  %4301 = vperm.xlu0 %4300, %v4291
  %v4302 = vpop.permute.xlu0 %4301
  %4305 = vset.pattern.permute.xlu0 0
  %4306 = vperm.xlu0 %4305, %v4292
  %v4307 = vpop.permute.xlu0 %4306
  %4310 = vset.pattern.permute.xlu0 0
  %4311 = vperm.xlu0 %4310, %v4293
  %v4312 = vpop.permute.xlu0 %4311
  %v4314 = vmul.f32 %v4297, %v4187
  %v4315 = vmul.f32 %v4302, %v4192
  %v4316 = vmul.f32 %v4307, %v4197
  %v4317 = vmul.f32 %v4312, %v4202
  %4318 = vmatprep.subr.mxu0 0.0
  %4319 = vmatpush1.msra.mxu0 %v4314
  %4320 = vmatprep.subr.mxu0 0.0
  %4321 = vmatpush1.msra.mxu0 %v4315
  %4322 = vmatprep.subr.mxu0 0.0
  %4323 = vmatpush1.msra.mxu0 %v4316
  %4324 = vmatprep.subr.mxu0 0.0
  %4325 = vmatpush1.msra.mxu0 %v4317
  %4326 = vmatprep.subr.mxu0 0.0
  %4327 = vmatpush1.msra.mxu0 0.0
  %4328 = vmatprep.subr.mxu0 0.0
  %4329 = vmatpush1.msra.mxu0 0.0
  %4330 = vmatprep.subr.mxu0 0.0
  %4331 = vmatpush1.msra.mxu0 0.0
  %4332 = vmatprep.subr.mxu0 0.0
  %4333 = vmatpush1.msra.mxu0 0.0
  %4334 = vmatprep.subr.mxu0 0.0
  %4335 = vmatpush1.msra.mxu0 0.0
  %4336 = vmatprep.subr.mxu0 0.0
  %4337 = vmatpush1.msra.mxu0 0.0
  %4338 = vmatprep.subr.mxu0 0.0
  %4339 = vmatpush1.msra.mxu0 0.0
  %4340 = vmatprep.subr.mxu0 0.0
  %4341 = vmatpush1.msra.mxu0 0.0
  %4342 = vmatprep.subr.mxu0 0.0
  %4343 = vmatpush1.msra.mxu0 0.0
  %4344 = vmatprep.subr.mxu0 0.0
  %4345 = vmatpush1.msra.mxu0 0.0
  %4346 = vmatprep.subr.mxu0 0.0
  %4347 = vmatpush1.msra.mxu0 0.0
  %4348 = vmatprep.subr.mxu0 0.0
  %4349 = vmatpush1.msra.mxu0 0.0
  %4350 = vmatprep.subr.mxu0 0.0
  %4351 = vmatpush1.msra.mxu0 0.0
  %4352 = vmatprep.subr.mxu0 0.0
  %4353 = vmatpush1.msra.mxu0 0.0
  %4354 = vmatprep.subr.mxu0 0.0
  %4355 = vmatpush1.msra.mxu0 0.0
  %4356 = vmatprep.subr.mxu0 0.0
  %4357 = vmatpush1.msra.mxu0 0.0
  %4358 = vmatprep.subr.mxu0 0.0
  %4359 = vmatpush1.msra.mxu0 0.0
  %4360 = vmatprep.subr.mxu0 0.0
  %4361 = vmatpush1.msra.mxu0 0.0
  %4362 = vmatprep.subr.mxu0 0.0
  %4363 = vmatpush1.msra.mxu0 0.0
  %4364 = vmatprep.subr.mxu0 0.0
  %4365 = vmatpush1.msra.mxu0 0.0
  %4366 = vmatprep.subr.mxu0 0.0
  %4367 = vmatpush1.msra.mxu0 0.0
  %4368 = vmatprep.subr.mxu0 0.0
  %4369 = vmatpush1.msra.mxu0 0.0
  %4370 = vmatprep.subr.mxu0 0.0
  %4371 = vmatpush1.msra.mxu0 0.0
  %4372 = vmatprep.subr.mxu0 0.0
  %4373 = vmatpush1.msra.mxu0 0.0
  %4374 = vmatprep.subr.mxu0 0.0
  %4375 = vmatpush1.msra.mxu0 0.0
  %4376 = vmatprep.subr.mxu0 0.0
  %4377 = vmatpush1.msra.mxu0 0.0
  %4378 = vmatprep.subr.mxu0 0.0
  %4379 = vmatpush1.msra.mxu0 0.0
  %4380 = vmatprep.subr.mxu0 0.0
  %4381 = vmatpush1.msra.mxu0 0.0
  %4382 = vmatprep.mubr.f32.mxu0 0.0
  %4383 = vmatmul.mubr.f32.gmra.mrb[0].mxu0 %v189
  %v4384 = vpop.f32.mrb[0].mxu0
  %v4385 = vadd.f32 0.0, %v4384
  %v4386 = vpop.f32.mrb[0].mxu0
  %4387 = vmatprep.mubr.f32.mxu0 0.0
  %4388 = vmatmul.mubr.f32.gmra.mrb[0].mxu0 %v192
  %v4389 = vpop.f32.mrb[0].mxu0
  %v4390 = vadd.f32 0.0, %v4389
  %v4391 = vpop.f32.mrb[0].mxu0
  %4392 = vmatprep.mubr.f32.mxu0 0.0
  %4393 = vmatmul.mubr.f32.gmra.mrb[0].mxu0 %v195
  %v4394 = vpop.f32.mrb[0].mxu0
  %v4395 = vadd.f32 0.0, %v4394
  %v4396 = vpop.f32.mrb[0].mxu0
  %4397 = vmatprep.mubr.f32.mxu0 0.0
  %4398 = vmatmul.mubr.f32.gmra.mrb[0].mxu0 %v198
  %v4399 = vpop.f32.mrb[0].mxu0
  %v4400 = vadd.f32 0.0, %v4399
  %v4401 = vpop.f32.mrb[0].mxu0
  %4402 = vdwg.mxu0
  %v4403 = vmul.f32 %v4297, %v4385
  %v4404 = vmul.f32 %v4302, %v4390
  %v4405 = vmul.f32 %v4307, %v4395
  %v4406 = vmul.f32 %v4312, %v4400
  %4408 = vset.pattern.permute.xlu0 0
  %4409 = vperm.xlu0 %4408, %v4272
  %v4410 = vpop.permute.xlu0 %4409
  %4413 = vset.pattern.permute.xlu0 0
  %4414 = vperm.xlu0 %4413, %v4277
  %v4415 = vpop.permute.xlu0 %4414
  %4418 = vset.pattern.permute.xlu0 0
  %4419 = vperm.xlu0 %4418, %v4282
  %v4420 = vpop.permute.xlu0 %4419
  %4423 = vset.pattern.permute.xlu0 0
  %4424 = vperm.xlu0 %4423, %v4287
  %v4425 = vpop.permute.xlu0 %4424
  %v4427 = vrcp.pop %v4410
  %v4428 = vmul.f32 %v4187, %v4427
  %v4429 = vrcp.pop %v4415
  %v4430 = vmul.f32 %v4192, %v4429
  %v4431 = vrcp.pop %v4420
  %v4432 = vmul.f32 %v4197, %v4431
  %v4433 = vrcp.pop %v4425
  %v4434 = vmul.f32 %v4202, %v4433
  %v4435 = vadd.f32 %v4403, %v4428
  %v4436 = vadd.f32 %v4404, %v4430
  %v4437 = vadd.f32 %v4405, %v4432
  %v4438 = vadd.f32 %v4406, %v4434
  %v4439 = vld [vmem:[%s10 + $0x4] sm:$0x1]
  %v4440 = vlaneseq
  %v4441 = vshrl.u32 %v4440, 7
  %v4442 = vsub.s32 0, %v4441
  %v4443 = vrot.slane %v4439, %v4442
  %v4444 = vadd.f32 %v4435, %v4443
  %v4445 = vadd.f32 %v4436, %v4443
  %v4446 = vadd.f32 %v4437, %v4443
  %v4447 = vadd.f32 %v4438, %v4443
  %v4448 = vmax.f32 %v4444, 0.0
  %v4449 = vmax.f32 %v4445, 0.0
  %v4450 = vmax.f32 %v4446, 0.0
  %v4451 = vmax.f32 %v4447, 0.0
  %4452 = vrot.lane.b32.xlu0 %v2516, 124
  %v4453 = vpop.permute.xlu0 %4452
  %4454 = vrot.lane.b32.xlu0 %v2517, 124
  %v4455 = vpop.permute.xlu0 %4454
  %4456 = vrot.lane.b32.xlu0 %v2518, 124
  %v4457 = vpop.permute.xlu0 %4456
  %4458 = vrot.lane.b32.xlu0 %v2519, 124
  %v4459 = vpop.permute.xlu0 %4458
  %4460 = vrot.lane.b32.xlu0 %v2520, 124
  %v4461 = vpop.permute.xlu0 %4460
  %4462 = vrot.lane.b32.xlu0 %v2521, 124
  %v4463 = vpop.permute.xlu0 %4462
  %4464 = vrot.lane.b32.xlu0 %v2522, 124
  %v4465 = vpop.permute.xlu0 %4464
  %4466 = vrot.lane.b32.xlu0 %v2523, 124
  %v4467 = vpop.permute.xlu0 %4466
  %v4477 = vsel %vm551, %v4448, 0
  %v4480 = vsel %vm551, %v4449, 0
  %v4483 = vsel %vm551, %v4450, 0
  %v4486 = vsel %vm551, %v4451, 0
  %4488 = vmatprep.subr.mxu0 0.0
  %4489 = vmatpush1.msra.mxu0 %v4453
  %4490 = vmatprep.subr.mxu0 0.0
  %4491 = vmatpush1.msra.mxu0 %v4455
  %4492 = vmatprep.subr.mxu0 0.0
  %4493 = vmatpush1.msra.mxu0 %v4457
  %4494 = vmatprep.subr.mxu0 0.0
  %4495 = vmatpush1.msra.mxu0 %v4459
  %4496 = vmatprep.subr.mxu0 0.0
  %4497 = vmatpush1.msra.mxu0 %v4461
  %4498 = vmatprep.subr.mxu0 0.0
  %4499 = vmatpush1.msra.mxu0 %v4463
  %4500 = vmatprep.subr.mxu0 0.0
  %4501 = vmatpush1.msra.mxu0 %v4465
  %4502 = vmatprep.subr.mxu0 0.0
  %4503 = vmatpush1.msra.mxu0 %v4467
  %4504 = vmatprep.subr.mxu0 0.0
  %4505 = vmatpush1.msra.mxu0 0.0
  %4506 = vmatprep.subr.mxu0 0.0
  %4507 = vmatpush1.msra.mxu0 0.0
  %4508 = vmatprep.subr.mxu0 0.0
  %4509 = vmatpush1.msra.mxu0 0.0
  %4510 = vmatprep.subr.mxu0 0.0
  %4511 = vmatpush1.msra.mxu0 0.0
  %4512 = vmatprep.subr.mxu0 0.0
  %4513 = vmatpush1.msra.mxu0 0.0
  %4514 = vmatprep.subr.mxu0 0.0
  %4515 = vmatpush1.msra.mxu0 0.0
  %4516 = vmatprep.subr.mxu0 0.0
  %4517 = vmatpush1.msra.mxu0 0.0
  %4518 = vmatprep.subr.mxu0 0.0
  %4519 = vmatpush1.msra.mxu0 0.0
  %4520 = vmatprep.subr.mxu0 0.0
  %4521 = vmatpush1.msra.mxu0 0.0
  %4522 = vmatprep.subr.mxu0 0.0
  %4523 = vmatpush1.msra.mxu0 0.0
  %4524 = vmatprep.subr.mxu0 0.0
  %4525 = vmatpush1.msra.mxu0 0.0
  %4526 = vmatprep.subr.mxu0 0.0
  %4527 = vmatpush1.msra.mxu0 0.0
  %4528 = vmatprep.subr.mxu0 0.0
  %4529 = vmatpush1.msra.mxu0 0.0
  %4530 = vmatprep.subr.mxu0 0.0
  %4531 = vmatpush1.msra.mxu0 0.0
  %4532 = vmatprep.subr.mxu0 0.0
  %4533 = vmatpush1.msra.mxu0 0.0
  %4534 = vmatprep.subr.mxu0 0.0
  %4535 = vmatpush1.msra.mxu0 0.0
  %4536 = vmatprep.subr.mxu0 0.0
  %4537 = vmatpush1.msra.mxu0 0.0
  %4538 = vmatprep.subr.mxu0 0.0
  %4539 = vmatpush1.msra.mxu0 0.0
  %4540 = vmatprep.subr.mxu0 0.0
  %4541 = vmatpush1.msra.mxu0 0.0
  %4542 = vmatprep.subr.mxu0 0.0
  %4543 = vmatpush1.msra.mxu0 0.0
  %4544 = vmatprep.subr.mxu0 0.0
  %4545 = vmatpush1.msra.mxu0 0.0
  %4546 = vmatprep.subr.mxu0 0.0
  %4547 = vmatpush1.msra.mxu0 0.0
  %4548 = vmatprep.subr.mxu0 0.0
  %4549 = vmatpush1.msra.mxu0 0.0
  %4550 = vmatprep.subr.mxu0 0.0
  %4551 = vmatpush1.msra.mxu0 0.0
  %4552 = vmatprep.mubr.f32.mxu0 0.0
  %4553 = vmatmul.mubr.f32.gmra.mrb[0].mxu0 %v4477
  %v4554 = vpop.f32.mrb[0].mxu0
  %v4555 = vadd.f32 0.0, %v4554
  %v4556 = vpop.f32.mrb[0].mxu0
  %4557 = vmatprep.mubr.f32.mxu0 0.0
  %4558 = vmatmul.mubr.f32.gmra.mrb[0].mxu0 %v4480
  %v4559 = vpop.f32.mrb[0].mxu0
  %v4560 = vadd.f32 0.0, %v4559
  %v4561 = vpop.f32.mrb[0].mxu0
  %4562 = vmatprep.mubr.f32.mxu0 0.0
  %4563 = vmatmul.mubr.f32.gmra.mrb[0].mxu0 %v4483
  %v4564 = vpop.f32.mrb[0].mxu0
  %v4565 = vadd.f32 0.0, %v4564
  %v4566 = vpop.f32.mrb[0].mxu0
  %4567 = vmatprep.mubr.f32.mxu0 0.0
  %4568 = vmatmul.mubr.f32.gmra.mrb[0].mxu0 %v4486
  %v4569 = vpop.f32.mrb[0].mxu0
  %v4570 = vadd.f32 0.0, %v4569
  %v4571 = vpop.f32.mrb[0].mxu0
  %4572 = vdwg.mxu0
  %v4573 = vtanh.pop %v4555
  %v4574 = vtanh.pop %v4560
  %v4575 = vtanh.pop %v4565
  %v4576 = vtanh.pop %v4570
  %vm4577 = vcmp.gt.f32.partialorder %v3794, 0.0
  %vm4578 = vcmp.gt.f32.partialorder %v3795, 0.0
  %vm4579 = vcmp.gt.f32.partialorder %v3796, 0.0
  %vm4580 = vcmp.gt.f32.partialorder %v3797, 0.0
  %v4581 = vsel %vm4577, %v4573, -1e+30
  %v4582 = vsel %vm4578, %v4574, -1e+30
  %v4583 = vsel %vm4579, %v4575, -1e+30
  %v4584 = vsel %vm4580, %v4576, -1e+30
  %4586 = vset.pattern.permute.xlu0 0
  %4587 = vperm.xlu0 %4586, %v4581
  %v4588 = vpop.permute.xlu0 %4587
  %4591 = vset.pattern.permute.xlu0 0
  %4592 = vperm.xlu0 %4591, %v4582
  %v4593 = vpop.permute.xlu0 %4592
  %4596 = vset.pattern.permute.xlu0 0
  %4597 = vperm.xlu0 %4596, %v4583
  %v4598 = vpop.permute.xlu0 %4597
  %4601 = vset.pattern.permute.xlu0 0
  %4602 = vperm.xlu0 %4601, %v4584
  %v4603 = vpop.permute.xlu0 %4602
  %v4605 = vsel %vm183, %v4588, 0.0
  %v4606 = vsel %vm184, %v4593, 0.0
  %v4607 = vsel %vm185, %v4598, 0.0
  %v4608 = vsel %vm186, %v4603, 0.0
  %v4609 = vsel %vm187, %v4605, 0.0
  %v4610 = vsel %vm187, %v4606, 0.0
  %v4611 = vadd.f32 %v4609, %v4610
  %v4612 = vsel %vm187, %v4607, 0.0
  %v4613 = vadd.f32 %v4611, %v4612
  %v4614 = vsel %vm187, %v4608, 0.0
  %v4615 = vadd.f32 %v4613, %v4614
  %v4616 = vrot.slane %v4615, 4
  %v4617 = vadd.f32 %v4615, %v4616
  %v4618 = vrot.slane %v4617, 2
  %v4619 = vadd.f32 %v4617, %v4618
  %v4620 = vrot.slane %v4619, 1
  %v4621 = vadd.f32 %v4619, %v4620
  %vm4622 = vcmp.gt.f32.partialorder %v4621, %v4588
  %vm4623 = vcmp.gt.f32.partialorder %v4621, %v4593
  %vm4624 = vcmp.gt.f32.partialorder %v4621, %v4598
  %vm4625 = vcmp.gt.f32.partialorder %v4621, %v4603
  %vm4626 = vcmp.eq.f32.partialorder %v4621, %v4588
  %vm4627 = vcmp.eq.f32.partialorder %v4621, %v4593
  %vm4628 = vcmp.eq.f32.partialorder %v4621, %v4598
  %vm4629 = vcmp.eq.f32.partialorder %v4621, %v4603
  %vm4630 = vmand %vm4626, %vm703
  %vm4631 = vmand %vm4627, %vm704
  %vm4632 = vmand %vm4628, %vm705
  %vm4633 = vmand %vm4629, %vm706
  %vm4634 = vmor %vm4622, %vm4630
  %vm4635 = vmor %vm4623, %vm4631
  %vm4636 = vmor %vm4624, %vm4632
  %vm4637 = vmor %vm4625, %vm4633
  %v4638 = vsel %vm4634, %v158, 0.0
  %v4639 = vsel %vm4635, %v163, 0.0
  %v4640 = vsel %vm4636, %v168, 0.0
  %v4641 = vsel %vm4637, %v173, 0.0
  %v4642 = vsel %vm187, %v4638, 0.0
  %4643 = vadd.xlane.f32.xlu0 %v4642
  %v4644 = vpop.xlane.xlu0 %4643
  %v4645 = vsel %vm187, %v4639, 0.0
  %4646 = vadd.xlane.f32.xlu0 %v4645
  %v4647 = vpop.xlane.xlu0 %4646
  %v4648 = vsel %vm187, %v4640, 0.0
  %4649 = vadd.xlane.f32.xlu0 %v4648
  %v4650 = vpop.xlane.xlu0 %4649
  %v4651 = vsel %vm187, %v4641, 0.0
  %4652 = vadd.xlane.f32.xlu0 %v4651
  %v4653 = vpop.xlane.xlu0 %4652
  %v4655 = vsel %vm87, %v3983, 0
  %4657 = vmatprep.subr.mxu0 0.0
  %4658 = vmatpush1.msra.mxu0 %v4655
  %4659 = vmatprep.subr.mxu0 0.0
  %4660 = vmatpush1.msra.mxu0 0.0
  %4661 = vmatprep.subr.mxu0 0.0
  %4662 = vmatpush1.msra.mxu0 0.0
  %4663 = vmatprep.subr.mxu0 0.0
  %4664 = vmatpush1.msra.mxu0 0.0
  %4665 = vmatprep.subr.mxu0 0.0
  %4666 = vmatpush1.msra.mxu0 0.0
  %4667 = vmatprep.subr.mxu0 0.0
  %4668 = vmatpush1.msra.mxu0 0.0
  %4669 = vmatprep.subr.mxu0 0.0
  %4670 = vmatpush1.msra.mxu0 0.0
  %4671 = vmatprep.subr.mxu0 0.0
  %4672 = vmatpush1.msra.mxu0 0.0
  %4673 = vmatprep.subr.mxu0 0.0
  %4674 = vmatpush1.msra.mxu0 0.0
  %4675 = vmatprep.subr.mxu0 0.0
  %4676 = vmatpush1.msra.mxu0 0.0
  %4677 = vmatprep.subr.mxu0 0.0
  %4678 = vmatpush1.msra.mxu0 0.0
  %4679 = vmatprep.subr.mxu0 0.0
  %4680 = vmatpush1.msra.mxu0 0.0
  %4681 = vmatprep.subr.mxu0 0.0
  %4682 = vmatpush1.msra.mxu0 0.0
  %4683 = vmatprep.subr.mxu0 0.0
  %4684 = vmatpush1.msra.mxu0 0.0
  %4685 = vmatprep.subr.mxu0 0.0
  %4686 = vmatpush1.msra.mxu0 0.0
  %4687 = vmatprep.subr.mxu0 0.0
  %4688 = vmatpush1.msra.mxu0 0.0
  %4689 = vmatprep.subr.mxu0 0.0
  %4690 = vmatpush1.msra.mxu0 0.0
  %4691 = vmatprep.subr.mxu0 0.0
  %4692 = vmatpush1.msra.mxu0 0.0
  %4693 = vmatprep.subr.mxu0 0.0
  %4694 = vmatpush1.msra.mxu0 0.0
  %4695 = vmatprep.subr.mxu0 0.0
  %4696 = vmatpush1.msra.mxu0 0.0
  %4697 = vmatprep.subr.mxu0 0.0
  %4698 = vmatpush1.msra.mxu0 0.0
  %4699 = vmatprep.subr.mxu0 0.0
  %4700 = vmatpush1.msra.mxu0 0.0
  %4701 = vmatprep.subr.mxu0 0.0
  %4702 = vmatpush1.msra.mxu0 0.0
  %4703 = vmatprep.subr.mxu0 0.0
  %4704 = vmatpush1.msra.mxu0 0.0
  %4705 = vmatprep.subr.mxu0 0.0
  %4706 = vmatpush1.msra.mxu0 0.0
  %4707 = vmatprep.subr.mxu0 0.0
  %4708 = vmatpush1.msra.mxu0 0.0
  %4709 = vmatprep.subr.mxu0 0.0
  %4710 = vmatpush1.msra.mxu0 0.0
  %4711 = vmatprep.subr.mxu0 0.0
  %4712 = vmatpush1.msra.mxu0 0.0
  %4713 = vmatprep.subr.mxu0 0.0
  %4714 = vmatpush1.msra.mxu0 0.0
  %4715 = vmatprep.subr.mxu0 0.0
  %4716 = vmatpush1.msra.mxu0 0.0
  %4717 = vmatprep.subr.mxu0 0.0
  %4718 = vmatpush1.msra.mxu0 0.0
  %4719 = vmatprep.subr.mxu0 0.0
  %4720 = vmatpush1.msra.mxu0 0.0
  %4721 = vmatprep.mubr.f32.mxu0 0.0
  %4722 = vmatmul.mubr.f32.gmra.mrb[0].mxu0 %v76
  %v4723 = vpop.f32.mrb[0].mxu0
  %v4724 = vadd.f32 0.0, %v4723
  %v4725 = vpop.f32.mrb[0].mxu0
  %4726 = vmatprep.mubr.f32.mxu0 0.0
  %4727 = vmatmul.mubr.f32.gmra.mrb[0].mxu0 %v79
  %v4728 = vpop.f32.mrb[0].mxu0
  %v4729 = vadd.f32 0.0, %v4728
  %v4730 = vpop.f32.mrb[0].mxu0
  %4731 = vmatprep.mubr.f32.mxu0 0.0
  %4732 = vmatmul.mubr.f32.gmra.mrb[0].mxu0 %v82
  %v4733 = vpop.f32.mrb[0].mxu0
  %v4734 = vadd.f32 0.0, %v4733
  %v4735 = vpop.f32.mrb[0].mxu0
  %4736 = vmatprep.mubr.f32.mxu0 0.0
  %4737 = vmatmul.mubr.f32.gmra.mrb[0].mxu0 %v85
  %v4738 = vpop.f32.mrb[0].mxu0
  %v4739 = vadd.f32 0.0, %v4738
  %v4740 = vpop.f32.mrb[0].mxu0
  %4741 = vdwg.mxu0
  %v4742 = vmul.f32 %v4724, 0.5
  %v4743 = vmul.f32 %v4729, 0.5
  %v4744 = vmul.f32 %v4734, 0.5
  %v4745 = vmul.f32 %v4739, 0.5
  %vm4746 = vcmp.lt.f32.partialorder %v4644, %v4742
  %vm4747 = vcmp.lt.f32.partialorder %v4647, %v4743
  %vm4748 = vcmp.lt.f32.partialorder %v4650, %v4744
  %vm4749 = vcmp.lt.f32.partialorder %v4653, %v4745
  %vm4750 = vmand %vm4746, %vm4577
  %vm4751 = vmand %vm4747, %vm4578
  %vm4752 = vmand %vm4748, %vm4579
  %vm4753 = vmand %vm4749, %vm4580
  %v4754 = vsel %vm4750, 1.0, 0.0
  %v4755 = vsel %vm4751, 1.0, 0.0
  %v4756 = vsel %vm4752, 1.0, 0.0
  %v4757 = vsel %vm4753, 1.0, 0.0
  %4759 = vset.pattern.permute.xlu0 0
  %4760 = vperm.xlu0 %4759, %v4573
  %v4761 = vpop.permute.xlu0 %4760
  %4764 = vset.pattern.permute.xlu0 0
  %4765 = vperm.xlu0 %4764, %v4574
  %v4766 = vpop.permute.xlu0 %4765
  %4769 = vset.pattern.permute.xlu0 0
  %4770 = vperm.xlu0 %4769, %v4575
  %v4771 = vpop.permute.xlu0 %4770
  %4774 = vset.pattern.permute.xlu0 0
  %4775 = vperm.xlu0 %4774, %v4576
  %v4776 = vpop.permute.xlu0 %4775
  %v4778 = vmul.f32 %v4448, %v4761
  %v4779 = vmul.f32 %v4449, %v4766
  %v4780 = vmul.f32 %v4450, %v4771
  %v4781 = vmul.f32 %v4451, %v4776
  %4783 = vset.pattern.permute.xlu0 0
  %4784 = vperm.xlu0 %4783, %v4754
  %v4785 = vpop.permute.xlu0 %4784
  %4788 = vset.pattern.permute.xlu0 0
  %4789 = vperm.xlu0 %4788, %v4755
  %v4790 = vpop.permute.xlu0 %4789
  %4793 = vset.pattern.permute.xlu0 0
  %4794 = vperm.xlu0 %4793, %v4756
  %v4795 = vpop.permute.xlu0 %4794
  %4798 = vset.pattern.permute.xlu0 0
  %4799 = vperm.xlu0 %4798, %v4757
  %v4800 = vpop.permute.xlu0 %4799
  %v4802 = vmul.f32 %v4778, %v4785
  %v4803 = vmul.f32 %v4779, %v4790
  %v4804 = vmul.f32 %v4780, %v4795
  %v4805 = vmul.f32 %v4781, %v4800
  %4806 = vmatprep.subr.mxu0 0.0
  %4807 = vmatpush1.msra.mxu0 %v4802
  %4808 = vmatprep.subr.mxu0 0.0
  %4809 = vmatpush1.msra.mxu0 %v4803
  %4810 = vmatprep.subr.mxu0 0.0
  %4811 = vmatpush1.msra.mxu0 %v4804
  %4812 = vmatprep.subr.mxu0 0.0
  %4813 = vmatpush1.msra.mxu0 %v4805
  %4814 = vmatprep.subr.mxu0 0.0
  %4815 = vmatpush1.msra.mxu0 0.0
  %4816 = vmatprep.subr.mxu0 0.0
  %4817 = vmatpush1.msra.mxu0 0.0
  %4818 = vmatprep.subr.mxu0 0.0
  %4819 = vmatpush1.msra.mxu0 0.0
  %4820 = vmatprep.subr.mxu0 0.0
  %4821 = vmatpush1.msra.mxu0 0.0
  %4822 = vmatprep.subr.mxu0 0.0
  %4823 = vmatpush1.msra.mxu0 0.0
  %4824 = vmatprep.subr.mxu0 0.0
  %4825 = vmatpush1.msra.mxu0 0.0
  %4826 = vmatprep.subr.mxu0 0.0
  %4827 = vmatpush1.msra.mxu0 0.0
  %4828 = vmatprep.subr.mxu0 0.0
  %4829 = vmatpush1.msra.mxu0 0.0
  %4830 = vmatprep.subr.mxu0 0.0
  %4831 = vmatpush1.msra.mxu0 0.0
  %4832 = vmatprep.subr.mxu0 0.0
  %4833 = vmatpush1.msra.mxu0 0.0
  %4834 = vmatprep.subr.mxu0 0.0
  %4835 = vmatpush1.msra.mxu0 0.0
  %4836 = vmatprep.subr.mxu0 0.0
  %4837 = vmatpush1.msra.mxu0 0.0
  %4838 = vmatprep.subr.mxu0 0.0
  %4839 = vmatpush1.msra.mxu0 0.0
  %4840 = vmatprep.subr.mxu0 0.0
  %4841 = vmatpush1.msra.mxu0 0.0
  %4842 = vmatprep.subr.mxu0 0.0
  %4843 = vmatpush1.msra.mxu0 0.0
  %4844 = vmatprep.subr.mxu0 0.0
  %4845 = vmatpush1.msra.mxu0 0.0
  %4846 = vmatprep.subr.mxu0 0.0
  %4847 = vmatpush1.msra.mxu0 0.0
  %4848 = vmatprep.subr.mxu0 0.0
  %4849 = vmatpush1.msra.mxu0 0.0
  %4850 = vmatprep.subr.mxu0 0.0
  %4851 = vmatpush1.msra.mxu0 0.0
  %4852 = vmatprep.subr.mxu0 0.0
  %4853 = vmatpush1.msra.mxu0 0.0
  %4854 = vmatprep.subr.mxu0 0.0
  %4855 = vmatpush1.msra.mxu0 0.0
  %4856 = vmatprep.subr.mxu0 0.0
  %4857 = vmatpush1.msra.mxu0 0.0
  %4858 = vmatprep.subr.mxu0 0.0
  %4859 = vmatpush1.msra.mxu0 0.0
  %4860 = vmatprep.subr.mxu0 0.0
  %4861 = vmatpush1.msra.mxu0 0.0
  %4862 = vmatprep.subr.mxu0 0.0
  %4863 = vmatpush1.msra.mxu0 0.0
  %4864 = vmatprep.subr.mxu0 0.0
  %4865 = vmatpush1.msra.mxu0 0.0
  %4866 = vmatprep.subr.mxu0 0.0
  %4867 = vmatpush1.msra.mxu0 0.0
  %4868 = vmatprep.subr.mxu0 0.0
  %4869 = vmatpush1.msra.mxu0 0.0
  %4870 = vmatprep.mubr.f32.mxu0 0.0
  %4871 = vmatmul.mubr.f32.gmra.mrb[0].mxu0 %v731
  %v4872 = vpop.f32.mrb[0].mxu0
  %v4873 = vadd.f32 0.0, %v4872
  %v4874 = vpop.f32.mrb[0].mxu0
  %4875 = vdwg.mxu0
  %4876 = vmatprep.subr.mxu0 0.0
  %4877 = vmatpush1.msra.mxu0 %v4754
  %4878 = vmatprep.subr.mxu0 0.0
  %4879 = vmatpush1.msra.mxu0 %v4755
  %4880 = vmatprep.subr.mxu0 0.0
  %4881 = vmatpush1.msra.mxu0 %v4756
  %4882 = vmatprep.subr.mxu0 0.0
  %4883 = vmatpush1.msra.mxu0 %v4757
  %4884 = vmatprep.subr.mxu0 0.0
  %4885 = vmatpush1.msra.mxu0 0.0
  %4886 = vmatprep.subr.mxu0 0.0
  %4887 = vmatpush1.msra.mxu0 0.0
  %4888 = vmatprep.subr.mxu0 0.0
  %4889 = vmatpush1.msra.mxu0 0.0
  %4890 = vmatprep.subr.mxu0 0.0
  %4891 = vmatpush1.msra.mxu0 0.0
  %4892 = vmatprep.subr.mxu0 0.0
  %4893 = vmatpush1.msra.mxu0 0.0
  %4894 = vmatprep.subr.mxu0 0.0
  %4895 = vmatpush1.msra.mxu0 0.0
  %4896 = vmatprep.subr.mxu0 0.0
  %4897 = vmatpush1.msra.mxu0 0.0
  %4898 = vmatprep.subr.mxu0 0.0
  %4899 = vmatpush1.msra.mxu0 0.0
  %4900 = vmatprep.subr.mxu0 0.0
  %4901 = vmatpush1.msra.mxu0 0.0
  %4902 = vmatprep.subr.mxu0 0.0
  %4903 = vmatpush1.msra.mxu0 0.0
  %4904 = vmatprep.subr.mxu0 0.0
  %4905 = vmatpush1.msra.mxu0 0.0
  %4906 = vmatprep.subr.mxu0 0.0
  %4907 = vmatpush1.msra.mxu0 0.0
  %4908 = vmatprep.subr.mxu0 0.0
  %4909 = vmatpush1.msra.mxu0 0.0
  %4910 = vmatprep.subr.mxu0 0.0
  %4911 = vmatpush1.msra.mxu0 0.0
  %4912 = vmatprep.subr.mxu0 0.0
  %4913 = vmatpush1.msra.mxu0 0.0
  %4914 = vmatprep.subr.mxu0 0.0
  %4915 = vmatpush1.msra.mxu0 0.0
  %4916 = vmatprep.subr.mxu0 0.0
  %4917 = vmatpush1.msra.mxu0 0.0
  %4918 = vmatprep.subr.mxu0 0.0
  %4919 = vmatpush1.msra.mxu0 0.0
  %4920 = vmatprep.subr.mxu0 0.0
  %4921 = vmatpush1.msra.mxu0 0.0
  %4922 = vmatprep.subr.mxu0 0.0
  %4923 = vmatpush1.msra.mxu0 0.0
  %4924 = vmatprep.subr.mxu0 0.0
  %4925 = vmatpush1.msra.mxu0 0.0
  %4926 = vmatprep.subr.mxu0 0.0
  %4927 = vmatpush1.msra.mxu0 0.0
  %4928 = vmatprep.subr.mxu0 0.0
  %4929 = vmatpush1.msra.mxu0 0.0
  %4930 = vmatprep.subr.mxu0 0.0
  %4931 = vmatpush1.msra.mxu0 0.0
  %4932 = vmatprep.subr.mxu0 0.0
  %4933 = vmatpush1.msra.mxu0 0.0
  %4934 = vmatprep.subr.mxu0 0.0
  %4935 = vmatpush1.msra.mxu0 0.0
  %4936 = vmatprep.subr.mxu0 0.0
  %4937 = vmatpush1.msra.mxu0 0.0
  %4938 = vmatprep.subr.mxu0 0.0
  %4939 = vmatpush1.msra.mxu0 0.0
  %4940 = vmatprep.mubr.f32.mxu0 0.0
  %4941 = vmatmul.mubr.f32.gmra.mrb[0].mxu0 %v731
  %v4942 = vpop.f32.mrb[0].mxu0
  %v4943 = vadd.f32 0.0, %v4942
  %v4944 = vpop.f32.mrb[0].mxu0
  %4945 = vdwg.mxu0
  %v4946 = vmax.f32 %v4943, 1.0
  %4948 = vset.pattern.permute.xlu0 0
  %4949 = vperm.xlu0 %4948, %v4946
  %v4950 = vpop.permute.xlu0 %4949
  %v4952 = vrcp.pop %v4950
  %v4953 = vmul.f32 %v4873, %v4952
  %v4954 = vadd.f32 %v3994, %v4953
  %v4955 = vmul.f32 %v70, %v4754
  %v4956 = vmul.f32 %v71, %v4755
  %v4957 = vmul.f32 %v72, %v4756
  %v4958 = vmul.f32 %v73, %v4757
  %vm4959 = vcmp.gt.f32.partialorder %v4955, 0.0
  %vm4960 = vcmp.gt.f32.partialorder %v4956, 0.0
  %vm4961 = vcmp.gt.f32.partialorder %v4957, 0.0
  %vm4962 = vcmp.gt.f32.partialorder %v4958, 0.0
  %v4963 = vsel %vm4959, 1, 0
  %v4964 = vsel %vm4960, 1, 0
  %v4965 = vsel %vm4961, 1, 0
  %v4966 = vsel %vm4962, 1, 0
  %4967 = vset.pattern.permute.xlu0 0
  %4968 = vperm.xlu0 %4967, %v4963
  %v4969 = vpop.permute.xlu0 %4968
  %4970 = vset.pattern.permute.xlu0 0
  %4971 = vperm.xlu0 %4970, %v4964
  %v4972 = vpop.permute.xlu0 %4971
  %4973 = vset.pattern.permute.xlu0 0
  %4974 = vperm.xlu0 %4973, %v4965
  %v4975 = vpop.permute.xlu0 %4974
  %4976 = vset.pattern.permute.xlu0 0
  %4977 = vperm.xlu0 %4976, %v4966
  %v4978 = vpop.permute.xlu0 %4977
  %vm4979 = vcmp.eq.s32.totalorder %v4969, 1
  %vm4980 = vcmp.eq.s32.totalorder %v4972, 1
  %vm4981 = vcmp.eq.s32.totalorder %v4975, 1
  %vm4982 = vcmp.eq.s32.totalorder %v4978, 1
  %v4983 = vsel %vm4979, %v4802, -1e+30
  %v4984 = vsel %vm4980, %v4803, -1e+30
  %v4985 = vsel %vm4981, %v4804, -1e+30
  %v4986 = vsel %vm4982, %v4805, -1e+30
  %v4987 = vsel %vm551, %v4983, -inf
  %v4988 = vsel %vm551, %v4984, -inf
  %v4989 = vsel %vm551, %v4985, -inf
  %v4990 = vsel %vm551, %v4986, -inf
  %v4991 = vmax.f32 %v4987, %v4988
  %v4992 = vmax.f32 %v4989, %v4990
  %v4993 = vmax.f32 %v4991, %v4992
  %v4994 = vrot.slane %v4993, 4
  %v4995 = vmax.f32 %v4993, %v4994
  %v4996 = vrot.slane %v4995, 2
  %v4997 = vmax.f32 %v4995, %v4996
  %v4998 = vrot.slane %v4997, 1
  %v4999 = vmax.f32 %v4997, %v4998
  %v5000 = vsel %vm1149, %v4999, -1e+30
  %5001 = vrot.lane.b32.xlu0 %v4754, 1
  %v5002 = vpop.permute.xlu0 %5001
  %5003 = vrot.lane.b32.xlu0 %v4755, 1
  %v5004 = vpop.permute.xlu0 %5003
  %5005 = vrot.lane.b32.xlu0 %v4756, 1
  %v5006 = vpop.permute.xlu0 %5005
  %5007 = vrot.lane.b32.xlu0 %v4757, 1
  %v5008 = vpop.permute.xlu0 %5007
  %v5013 = vmul.f32 %v70, %v5002
  %v5014 = vmul.f32 %v71, %v5004
  %v5015 = vmul.f32 %v72, %v5006
  %v5016 = vmul.f32 %v73, %v5008
  %vm5017 = vcmp.gt.f32.partialorder %v5013, 0.0
  %vm5018 = vcmp.gt.f32.partialorder %v5014, 0.0
  %vm5019 = vcmp.gt.f32.partialorder %v5015, 0.0
  %vm5020 = vcmp.gt.f32.partialorder %v5016, 0.0
  %v5021 = vsel %vm5017, 1, 0
  %v5022 = vsel %vm5018, 1, 0
  %v5023 = vsel %vm5019, 1, 0
  %v5024 = vsel %vm5020, 1, 0
  %5025 = vset.pattern.permute.xlu0 1
  %5026 = vperm.xlu0 %5025, %v5021
  %v5027 = vpop.permute.xlu0 %5026
  %5028 = vset.pattern.permute.xlu0 1
  %5029 = vperm.xlu0 %5028, %v5022
  %v5030 = vpop.permute.xlu0 %5029
  %5031 = vset.pattern.permute.xlu0 1
  %5032 = vperm.xlu0 %5031, %v5023
  %v5033 = vpop.permute.xlu0 %5032
  %5034 = vset.pattern.permute.xlu0 1
  %5035 = vperm.xlu0 %5034, %v5024
  %v5036 = vpop.permute.xlu0 %5035
  %vm5037 = vcmp.eq.s32.totalorder %v5027, 1
  %vm5038 = vcmp.eq.s32.totalorder %v5030, 1
  %vm5039 = vcmp.eq.s32.totalorder %v5033, 1
  %vm5040 = vcmp.eq.s32.totalorder %v5036, 1
  %v5041 = vsel %vm5037, %v4802, -1e+30
  %v5042 = vsel %vm5038, %v4803, -1e+30
  %v5043 = vsel %vm5039, %v4804, -1e+30
  %v5044 = vsel %vm5040, %v4805, -1e+30
  %v5045 = vsel %vm551, %v5041, -inf
  %v5046 = vsel %vm551, %v5042, -inf
  %v5047 = vsel %vm551, %v5043, -inf
  %v5048 = vsel %vm551, %v5044, -inf
  %v5049 = vmax.f32 %v5045, %v5046
  %v5050 = vmax.f32 %v5047, %v5048
  %v5051 = vmax.f32 %v5049, %v5050
  %v5052 = vrot.slane %v5051, 4
  %v5053 = vmax.f32 %v5051, %v5052
  %v5054 = vrot.slane %v5053, 2
  %v5055 = vmax.f32 %v5053, %v5054
  %v5056 = vrot.slane %v5055, 1
  %v5057 = vmax.f32 %v5055, %v5056
  %v5058 = vsel %vm1208, %v5057, %v5000
  %v5059 = vadd.f32 %v4099, %v5058
  %v5060 = vld [vmem:[%s9] sm:$0xff]
  %v5061 = vld [vmem:[%s9 + $0x8] sm:$0xff]
  %v5062 = vld [vmem:[%s9 + $0x10] sm:$0xff]
  %v5063 = vld [vmem:[%s9 + $0x18] sm:$0xff]
  %v5064 = vld [vmem:[%s9 + $0x20] sm:$0xff]
  %v5065 = vld [vmem:[%s9 + $0x28] sm:$0xff]
  %v5066 = vld [vmem:[%s9 + $0x30] sm:$0xff]
  %v5067 = vld [vmem:[%s9 + $0x38] sm:$0xff]
  %v5069 = vsel %vm551, %v4802, 0
  %v5072 = vsel %vm551, %v4803, 0
  %v5075 = vsel %vm551, %v4804, 0
  %v5078 = vsel %vm551, %v4805, 0
  %5080 = vmatprep.subr.mxu0 0.0
  %5081 = vmatpush1.msra.mxu0 %v5060
  %5082 = vmatprep.subr.mxu0 0.0
  %5083 = vmatpush1.msra.mxu0 %v5061
  %5084 = vmatprep.subr.mxu0 0.0
  %5085 = vmatpush1.msra.mxu0 %v5062
  %5086 = vmatprep.subr.mxu0 0.0
  %5087 = vmatpush1.msra.mxu0 %v5063
  %5088 = vmatprep.subr.mxu0 0.0
  %5089 = vmatpush1.msra.mxu0 %v5064
  %5090 = vmatprep.subr.mxu0 0.0
  %5091 = vmatpush1.msra.mxu0 %v5065
  %5092 = vmatprep.subr.mxu0 0.0
  %5093 = vmatpush1.msra.mxu0 %v5066
  %5094 = vmatprep.subr.mxu0 0.0
  %5095 = vmatpush1.msra.mxu0 %v5067
  %5096 = vmatprep.subr.mxu0 0.0
  %5097 = vmatpush1.msra.mxu0 0.0
  %5098 = vmatprep.subr.mxu0 0.0
  %5099 = vmatpush1.msra.mxu0 0.0
  %5100 = vmatprep.subr.mxu0 0.0
  %5101 = vmatpush1.msra.mxu0 0.0
  %5102 = vmatprep.subr.mxu0 0.0
  %5103 = vmatpush1.msra.mxu0 0.0
  %5104 = vmatprep.subr.mxu0 0.0
  %5105 = vmatpush1.msra.mxu0 0.0
  %5106 = vmatprep.subr.mxu0 0.0
  %5107 = vmatpush1.msra.mxu0 0.0
  %5108 = vmatprep.subr.mxu0 0.0
  %5109 = vmatpush1.msra.mxu0 0.0
  %5110 = vmatprep.subr.mxu0 0.0
  %5111 = vmatpush1.msra.mxu0 0.0
  %5112 = vmatprep.subr.mxu0 0.0
  %5113 = vmatpush1.msra.mxu0 0.0
  %5114 = vmatprep.subr.mxu0 0.0
  %5115 = vmatpush1.msra.mxu0 0.0
  %5116 = vmatprep.subr.mxu0 0.0
  %5117 = vmatpush1.msra.mxu0 0.0
  %5118 = vmatprep.subr.mxu0 0.0
  %5119 = vmatpush1.msra.mxu0 0.0
  %5120 = vmatprep.subr.mxu0 0.0
  %5121 = vmatpush1.msra.mxu0 0.0
  %5122 = vmatprep.subr.mxu0 0.0
  %5123 = vmatpush1.msra.mxu0 0.0
  %5124 = vmatprep.subr.mxu0 0.0
  %5125 = vmatpush1.msra.mxu0 0.0
  %5126 = vmatprep.subr.mxu0 0.0
  %5127 = vmatpush1.msra.mxu0 0.0
  %5128 = vmatprep.subr.mxu0 0.0
  %5129 = vmatpush1.msra.mxu0 0.0
  %5130 = vmatprep.subr.mxu0 0.0
  %5131 = vmatpush1.msra.mxu0 0.0
  %5132 = vmatprep.subr.mxu0 0.0
  %5133 = vmatpush1.msra.mxu0 0.0
  %5134 = vmatprep.subr.mxu0 0.0
  %5135 = vmatpush1.msra.mxu0 0.0
  %5136 = vmatprep.subr.mxu0 0.0
  %5137 = vmatpush1.msra.mxu0 0.0
  %5138 = vmatprep.subr.mxu0 0.0
  %5139 = vmatpush1.msra.mxu0 0.0
  %5140 = vmatprep.subr.mxu0 0.0
  %5141 = vmatpush1.msra.mxu0 0.0
  %5142 = vmatprep.subr.mxu0 0.0
  %5143 = vmatpush1.msra.mxu0 0.0
  %5144 = vmatprep.mubr.f32.mxu0 0.0
  %5145 = vmatmul.mubr.f32.gmra.mrb[0].mxu0 %v5069
  %v5146 = vpop.f32.mrb[0].mxu0
  %v5147 = vadd.f32 0.0, %v5146
  %v5148 = vpop.f32.mrb[0].mxu0
  %5149 = vmatprep.mubr.f32.mxu0 0.0
  %5150 = vmatmul.mubr.f32.gmra.mrb[0].mxu0 %v5072
  %v5151 = vpop.f32.mrb[0].mxu0
  %v5152 = vadd.f32 0.0, %v5151
  %v5153 = vpop.f32.mrb[0].mxu0
  %5154 = vmatprep.mubr.f32.mxu0 0.0
  %5155 = vmatmul.mubr.f32.gmra.mrb[0].mxu0 %v5075
  %v5156 = vpop.f32.mrb[0].mxu0
  %v5157 = vadd.f32 0.0, %v5156
  %v5158 = vpop.f32.mrb[0].mxu0
  %5159 = vmatprep.mubr.f32.mxu0 0.0
  %5160 = vmatmul.mubr.f32.gmra.mrb[0].mxu0 %v5078
  %v5161 = vpop.f32.mrb[0].mxu0
  %v5162 = vadd.f32 0.0, %v5161
  %v5163 = vpop.f32.mrb[0].mxu0
  %5164 = vdwg.mxu0
  %5165 = vmatprep.subr.mxu0 0.0
  %5166 = vmatpush1.msra.mxu0 %v4754
  %5167 = vmatprep.subr.mxu0 0.0
  %5168 = vmatpush1.msra.mxu0 %v4755
  %5169 = vmatprep.subr.mxu0 0.0
  %5170 = vmatpush1.msra.mxu0 %v4756
  %5171 = vmatprep.subr.mxu0 0.0
  %5172 = vmatpush1.msra.mxu0 %v4757
  %5173 = vmatprep.subr.mxu0 0.0
  %5174 = vmatpush1.msra.mxu0 0.0
  %5175 = vmatprep.subr.mxu0 0.0
  %5176 = vmatpush1.msra.mxu0 0.0
  %5177 = vmatprep.subr.mxu0 0.0
  %5178 = vmatpush1.msra.mxu0 0.0
  %5179 = vmatprep.subr.mxu0 0.0
  %5180 = vmatpush1.msra.mxu0 0.0
  %5181 = vmatprep.subr.mxu0 0.0
  %5182 = vmatpush1.msra.mxu0 0.0
  %5183 = vmatprep.subr.mxu0 0.0
  %5184 = vmatpush1.msra.mxu0 0.0
  %5185 = vmatprep.subr.mxu0 0.0
  %5186 = vmatpush1.msra.mxu0 0.0
  %5187 = vmatprep.subr.mxu0 0.0
  %5188 = vmatpush1.msra.mxu0 0.0
  %5189 = vmatprep.subr.mxu0 0.0
  %5190 = vmatpush1.msra.mxu0 0.0
  %5191 = vmatprep.subr.mxu0 0.0
  %5192 = vmatpush1.msra.mxu0 0.0
  %5193 = vmatprep.subr.mxu0 0.0
  %5194 = vmatpush1.msra.mxu0 0.0
  %5195 = vmatprep.subr.mxu0 0.0
  %5196 = vmatpush1.msra.mxu0 0.0
  %5197 = vmatprep.subr.mxu0 0.0
  %5198 = vmatpush1.msra.mxu0 0.0
  %5199 = vmatprep.subr.mxu0 0.0
  %5200 = vmatpush1.msra.mxu0 0.0
  %5201 = vmatprep.subr.mxu0 0.0
  %5202 = vmatpush1.msra.mxu0 0.0
  %5203 = vmatprep.subr.mxu0 0.0
  %5204 = vmatpush1.msra.mxu0 0.0
  %5205 = vmatprep.subr.mxu0 0.0
  %5206 = vmatpush1.msra.mxu0 0.0
  %5207 = vmatprep.subr.mxu0 0.0
  %5208 = vmatpush1.msra.mxu0 0.0
  %5209 = vmatprep.subr.mxu0 0.0
  %5210 = vmatpush1.msra.mxu0 0.0
  %5211 = vmatprep.subr.mxu0 0.0
  %5212 = vmatpush1.msra.mxu0 0.0
  %5213 = vmatprep.subr.mxu0 0.0
  %5214 = vmatpush1.msra.mxu0 0.0
  %5215 = vmatprep.subr.mxu0 0.0
  %5216 = vmatpush1.msra.mxu0 0.0
  %5217 = vmatprep.subr.mxu0 0.0
  %5218 = vmatpush1.msra.mxu0 0.0
  %5219 = vmatprep.subr.mxu0 0.0
  %5220 = vmatpush1.msra.mxu0 0.0
  %5221 = vmatprep.subr.mxu0 0.0
  %5222 = vmatpush1.msra.mxu0 0.0
  %5223 = vmatprep.subr.mxu0 0.0
  %5224 = vmatpush1.msra.mxu0 0.0
  %5225 = vmatprep.subr.mxu0 0.0
  %5226 = vmatpush1.msra.mxu0 0.0
  %5227 = vmatprep.subr.mxu0 0.0
  %5228 = vmatpush1.msra.mxu0 0.0
  %5229 = vmatprep.mubr.f32.mxu0 0.0
  %5230 = vmatmul.mubr.f32.gmra.mrb[0].mxu0 %v189
  %v5231 = vpop.f32.mrb[0].mxu0
  %v5232 = vadd.f32 1.0, %v5231
  %v5233 = vpop.f32.mrb[0].mxu0
  %5234 = vmatprep.mubr.f32.mxu0 0.0
  %5235 = vmatmul.mubr.f32.gmra.mrb[0].mxu0 %v192
  %v5236 = vpop.f32.mrb[0].mxu0
  %v5237 = vadd.f32 1.0, %v5236
  %v5238 = vpop.f32.mrb[0].mxu0
  %5239 = vmatprep.mubr.f32.mxu0 0.0
  %5240 = vmatmul.mubr.f32.gmra.mrb[0].mxu0 %v195
  %v5241 = vpop.f32.mrb[0].mxu0
  %v5242 = vadd.f32 1.0, %v5241
  %v5243 = vpop.f32.mrb[0].mxu0
  %5244 = vmatprep.mubr.f32.mxu0 0.0
  %5245 = vmatmul.mubr.f32.gmra.mrb[0].mxu0 %v198
  %v5246 = vpop.f32.mrb[0].mxu0
  %v5247 = vadd.f32 1.0, %v5246
  %v5248 = vpop.f32.mrb[0].mxu0
  %5249 = vdwg.mxu0
  %v5250 = vrsqrt.pop %v5232
  %v5251 = vrsqrt.pop %v5237
  %v5252 = vrsqrt.pop %v5242
  %v5253 = vrsqrt.pop %v5247
  %5255 = vset.pattern.permute.xlu0 0
  %5256 = vperm.xlu0 %5255, %v5250
  %v5257 = vpop.permute.xlu0 %5256
  %5260 = vset.pattern.permute.xlu0 0
  %5261 = vperm.xlu0 %5260, %v5251
  %v5262 = vpop.permute.xlu0 %5261
  %5265 = vset.pattern.permute.xlu0 0
  %5266 = vperm.xlu0 %5265, %v5252
  %v5267 = vpop.permute.xlu0 %5266
  %5270 = vset.pattern.permute.xlu0 0
  %5271 = vperm.xlu0 %5270, %v5253
  %v5272 = vpop.permute.xlu0 %5271
  %v5274 = vmul.f32 %v5257, %v5147
  %v5275 = vmul.f32 %v5262, %v5152
  %v5276 = vmul.f32 %v5267, %v5157
  %v5277 = vmul.f32 %v5272, %v5162
  %5278 = vmatprep.subr.mxu0 0.0
  %5279 = vmatpush1.msra.mxu0 %v5274
  %5280 = vmatprep.subr.mxu0 0.0
  %5281 = vmatpush1.msra.mxu0 %v5275
  %5282 = vmatprep.subr.mxu0 0.0
  %5283 = vmatpush1.msra.mxu0 %v5276
  %5284 = vmatprep.subr.mxu0 0.0
  %5285 = vmatpush1.msra.mxu0 %v5277
  %5286 = vmatprep.subr.mxu0 0.0
  %5287 = vmatpush1.msra.mxu0 0.0
  %5288 = vmatprep.subr.mxu0 0.0
  %5289 = vmatpush1.msra.mxu0 0.0
  %5290 = vmatprep.subr.mxu0 0.0
  %5291 = vmatpush1.msra.mxu0 0.0
  %5292 = vmatprep.subr.mxu0 0.0
  %5293 = vmatpush1.msra.mxu0 0.0
  %5294 = vmatprep.subr.mxu0 0.0
  %5295 = vmatpush1.msra.mxu0 0.0
  %5296 = vmatprep.subr.mxu0 0.0
  %5297 = vmatpush1.msra.mxu0 0.0
  %5298 = vmatprep.subr.mxu0 0.0
  %5299 = vmatpush1.msra.mxu0 0.0
  %5300 = vmatprep.subr.mxu0 0.0
  %5301 = vmatpush1.msra.mxu0 0.0
  %5302 = vmatprep.subr.mxu0 0.0
  %5303 = vmatpush1.msra.mxu0 0.0
  %5304 = vmatprep.subr.mxu0 0.0
  %5305 = vmatpush1.msra.mxu0 0.0
  %5306 = vmatprep.subr.mxu0 0.0
  %5307 = vmatpush1.msra.mxu0 0.0
  %5308 = vmatprep.subr.mxu0 0.0
  %5309 = vmatpush1.msra.mxu0 0.0
  %5310 = vmatprep.subr.mxu0 0.0
  %5311 = vmatpush1.msra.mxu0 0.0
  %5312 = vmatprep.subr.mxu0 0.0
  %5313 = vmatpush1.msra.mxu0 0.0
  %5314 = vmatprep.subr.mxu0 0.0
  %5315 = vmatpush1.msra.mxu0 0.0
  %5316 = vmatprep.subr.mxu0 0.0
  %5317 = vmatpush1.msra.mxu0 0.0
  %5318 = vmatprep.subr.mxu0 0.0
  %5319 = vmatpush1.msra.mxu0 0.0
  %5320 = vmatprep.subr.mxu0 0.0
  %5321 = vmatpush1.msra.mxu0 0.0
  %5322 = vmatprep.subr.mxu0 0.0
  %5323 = vmatpush1.msra.mxu0 0.0
  %5324 = vmatprep.subr.mxu0 0.0
  %5325 = vmatpush1.msra.mxu0 0.0
  %5326 = vmatprep.subr.mxu0 0.0
  %5327 = vmatpush1.msra.mxu0 0.0
  %5328 = vmatprep.subr.mxu0 0.0
  %5329 = vmatpush1.msra.mxu0 0.0
  %5330 = vmatprep.subr.mxu0 0.0
  %5331 = vmatpush1.msra.mxu0 0.0
  %5332 = vmatprep.subr.mxu0 0.0
  %5333 = vmatpush1.msra.mxu0 0.0
  %5334 = vmatprep.subr.mxu0 0.0
  %5335 = vmatpush1.msra.mxu0 0.0
  %5336 = vmatprep.subr.mxu0 0.0
  %5337 = vmatpush1.msra.mxu0 0.0
  %5338 = vmatprep.subr.mxu0 0.0
  %5339 = vmatpush1.msra.mxu0 0.0
  %5340 = vmatprep.subr.mxu0 0.0
  %5341 = vmatpush1.msra.mxu0 0.0
  %5342 = vmatprep.mubr.f32.mxu0 0.0
  %5343 = vmatmul.mubr.f32.gmra.mrb[0].mxu0 %v189
  %v5344 = vpop.f32.mrb[0].mxu0
  %v5345 = vadd.f32 0.0, %v5344
  %v5346 = vpop.f32.mrb[0].mxu0
  %5347 = vmatprep.mubr.f32.mxu0 0.0
  %5348 = vmatmul.mubr.f32.gmra.mrb[0].mxu0 %v192
  %v5349 = vpop.f32.mrb[0].mxu0
  %v5350 = vadd.f32 0.0, %v5349
  %v5351 = vpop.f32.mrb[0].mxu0
  %5352 = vmatprep.mubr.f32.mxu0 0.0
  %5353 = vmatmul.mubr.f32.gmra.mrb[0].mxu0 %v195
  %v5354 = vpop.f32.mrb[0].mxu0
  %v5355 = vadd.f32 0.0, %v5354
  %v5356 = vpop.f32.mrb[0].mxu0
  %5357 = vmatprep.mubr.f32.mxu0 0.0
  %5358 = vmatmul.mubr.f32.gmra.mrb[0].mxu0 %v198
  %v5359 = vpop.f32.mrb[0].mxu0
  %v5360 = vadd.f32 0.0, %v5359
  %v5361 = vpop.f32.mrb[0].mxu0
  %5362 = vdwg.mxu0
  %v5363 = vmul.f32 %v5257, %v5345
  %v5364 = vmul.f32 %v5262, %v5350
  %v5365 = vmul.f32 %v5267, %v5355
  %v5366 = vmul.f32 %v5272, %v5360
  %5368 = vset.pattern.permute.xlu0 0
  %5369 = vperm.xlu0 %5368, %v5232
  %v5370 = vpop.permute.xlu0 %5369
  %5373 = vset.pattern.permute.xlu0 0
  %5374 = vperm.xlu0 %5373, %v5237
  %v5375 = vpop.permute.xlu0 %5374
  %5378 = vset.pattern.permute.xlu0 0
  %5379 = vperm.xlu0 %5378, %v5242
  %v5380 = vpop.permute.xlu0 %5379
  %5383 = vset.pattern.permute.xlu0 0
  %5384 = vperm.xlu0 %5383, %v5247
  %v5385 = vpop.permute.xlu0 %5384
  %v5387 = vrcp.pop %v5370
  %v5388 = vmul.f32 %v5147, %v5387
  %v5389 = vrcp.pop %v5375
  %v5390 = vmul.f32 %v5152, %v5389
  %v5391 = vrcp.pop %v5380
  %v5392 = vmul.f32 %v5157, %v5391
  %v5393 = vrcp.pop %v5385
  %v5394 = vmul.f32 %v5162, %v5393
  %v5395 = vadd.f32 %v5363, %v5388
  %v5396 = vadd.f32 %v5364, %v5390
  %v5397 = vadd.f32 %v5365, %v5392
  %v5398 = vadd.f32 %v5366, %v5394
  %v5399 = vld [vmem:[%s10 + $0x5] sm:$0x1]
  %v5400 = vlaneseq
  %v5401 = vshrl.u32 %v5400, 7
  %v5402 = vsub.s32 0, %v5401
  %v5403 = vrot.slane %v5399, %v5402
  %v5404 = vadd.f32 %v5395, %v5403
  %v5405 = vadd.f32 %v5396, %v5403
  %v5406 = vadd.f32 %v5397, %v5403
  %v5407 = vadd.f32 %v5398, %v5403
  %v5408 = vmax.f32 %v5404, 0.0
  %v5409 = vmax.f32 %v5405, 0.0
  %v5410 = vmax.f32 %v5406, 0.0
  %v5411 = vmax.f32 %v5407, 0.0
  %5412 = vrot.lane.b32.xlu0 %v2516, 123
  %v5413 = vpop.permute.xlu0 %5412
  %5414 = vrot.lane.b32.xlu0 %v2517, 123
  %v5415 = vpop.permute.xlu0 %5414
  %5416 = vrot.lane.b32.xlu0 %v2518, 123
  %v5417 = vpop.permute.xlu0 %5416
  %5418 = vrot.lane.b32.xlu0 %v2519, 123
  %v5419 = vpop.permute.xlu0 %5418
  %5420 = vrot.lane.b32.xlu0 %v2520, 123
  %v5421 = vpop.permute.xlu0 %5420
  %5422 = vrot.lane.b32.xlu0 %v2521, 123
  %v5423 = vpop.permute.xlu0 %5422
  %5424 = vrot.lane.b32.xlu0 %v2522, 123
  %v5425 = vpop.permute.xlu0 %5424
  %5426 = vrot.lane.b32.xlu0 %v2523, 123
  %v5427 = vpop.permute.xlu0 %5426
  %v5437 = vsel %vm551, %v5408, 0
  %v5440 = vsel %vm551, %v5409, 0
  %v5443 = vsel %vm551, %v5410, 0
  %v5446 = vsel %vm551, %v5411, 0
  %5448 = vmatprep.subr.mxu0 0.0
  %5449 = vmatpush1.msra.mxu0 %v5413
  %5450 = vmatprep.subr.mxu0 0.0
  %5451 = vmatpush1.msra.mxu0 %v5415
  %5452 = vmatprep.subr.mxu0 0.0
  %5453 = vmatpush1.msra.mxu0 %v5417
  %5454 = vmatprep.subr.mxu0 0.0
  %5455 = vmatpush1.msra.mxu0 %v5419
  %5456 = vmatprep.subr.mxu0 0.0
  %5457 = vmatpush1.msra.mxu0 %v5421
  %5458 = vmatprep.subr.mxu0 0.0
  %5459 = vmatpush1.msra.mxu0 %v5423
  %5460 = vmatprep.subr.mxu0 0.0
  %5461 = vmatpush1.msra.mxu0 %v5425
  %5462 = vmatprep.subr.mxu0 0.0
  %5463 = vmatpush1.msra.mxu0 %v5427
  %5464 = vmatprep.subr.mxu0 0.0
  %5465 = vmatpush1.msra.mxu0 0.0
  %5466 = vmatprep.subr.mxu0 0.0
  %5467 = vmatpush1.msra.mxu0 0.0
  %5468 = vmatprep.subr.mxu0 0.0
  %5469 = vmatpush1.msra.mxu0 0.0
  %5470 = vmatprep.subr.mxu0 0.0
  %5471 = vmatpush1.msra.mxu0 0.0
  %5472 = vmatprep.subr.mxu0 0.0
  %5473 = vmatpush1.msra.mxu0 0.0
  %5474 = vmatprep.subr.mxu0 0.0
  %5475 = vmatpush1.msra.mxu0 0.0
  %5476 = vmatprep.subr.mxu0 0.0
  %5477 = vmatpush1.msra.mxu0 0.0
  %5478 = vmatprep.subr.mxu0 0.0
  %5479 = vmatpush1.msra.mxu0 0.0
  %5480 = vmatprep.subr.mxu0 0.0
  %5481 = vmatpush1.msra.mxu0 0.0
  %5482 = vmatprep.subr.mxu0 0.0
  %5483 = vmatpush1.msra.mxu0 0.0
  %5484 = vmatprep.subr.mxu0 0.0
  %5485 = vmatpush1.msra.mxu0 0.0
  %5486 = vmatprep.subr.mxu0 0.0
  %5487 = vmatpush1.msra.mxu0 0.0
  %5488 = vmatprep.subr.mxu0 0.0
  %5489 = vmatpush1.msra.mxu0 0.0
  %5490 = vmatprep.subr.mxu0 0.0
  %5491 = vmatpush1.msra.mxu0 0.0
  %5492 = vmatprep.subr.mxu0 0.0
  %5493 = vmatpush1.msra.mxu0 0.0
  %5494 = vmatprep.subr.mxu0 0.0
  %5495 = vmatpush1.msra.mxu0 0.0
  %5496 = vmatprep.subr.mxu0 0.0
  %5497 = vmatpush1.msra.mxu0 0.0
  %5498 = vmatprep.subr.mxu0 0.0
  %5499 = vmatpush1.msra.mxu0 0.0
  %5500 = vmatprep.subr.mxu0 0.0
  %5501 = vmatpush1.msra.mxu0 0.0
  %5502 = vmatprep.subr.mxu0 0.0
  %5503 = vmatpush1.msra.mxu0 0.0
  %5504 = vmatprep.subr.mxu0 0.0
  %5505 = vmatpush1.msra.mxu0 0.0
  %5506 = vmatprep.subr.mxu0 0.0
  %5507 = vmatpush1.msra.mxu0 0.0
  %5508 = vmatprep.subr.mxu0 0.0
  %5509 = vmatpush1.msra.mxu0 0.0
  %5510 = vmatprep.subr.mxu0 0.0
  %5511 = vmatpush1.msra.mxu0 0.0
  %5512 = vmatprep.mubr.f32.mxu0 0.0
  %5513 = vmatmul.mubr.f32.gmra.mrb[0].mxu0 %v5437
  %v5514 = vpop.f32.mrb[0].mxu0
  %v5515 = vadd.f32 0.0, %v5514
  %v5516 = vpop.f32.mrb[0].mxu0
  %5517 = vmatprep.mubr.f32.mxu0 0.0
  %5518 = vmatmul.mubr.f32.gmra.mrb[0].mxu0 %v5440
  %v5519 = vpop.f32.mrb[0].mxu0
  %v5520 = vadd.f32 0.0, %v5519
  %v5521 = vpop.f32.mrb[0].mxu0
  %5522 = vmatprep.mubr.f32.mxu0 0.0
  %5523 = vmatmul.mubr.f32.gmra.mrb[0].mxu0 %v5443
  %v5524 = vpop.f32.mrb[0].mxu0
  %v5525 = vadd.f32 0.0, %v5524
  %v5526 = vpop.f32.mrb[0].mxu0
  %5527 = vmatprep.mubr.f32.mxu0 0.0
  %5528 = vmatmul.mubr.f32.gmra.mrb[0].mxu0 %v5446
  %v5529 = vpop.f32.mrb[0].mxu0
  %v5530 = vadd.f32 0.0, %v5529
  %v5531 = vpop.f32.mrb[0].mxu0
  %5532 = vdwg.mxu0
  %v5533 = vtanh.pop %v5515
  %v5534 = vtanh.pop %v5520
  %v5535 = vtanh.pop %v5525
  %v5536 = vtanh.pop %v5530
  %vm5537 = vcmp.gt.f32.partialorder %v4754, 0.0
  %vm5538 = vcmp.gt.f32.partialorder %v4755, 0.0
  %vm5539 = vcmp.gt.f32.partialorder %v4756, 0.0
  %vm5540 = vcmp.gt.f32.partialorder %v4757, 0.0
  %v5541 = vsel %vm5537, %v5533, -1e+30
  %v5542 = vsel %vm5538, %v5534, -1e+30
  %v5543 = vsel %vm5539, %v5535, -1e+30
  %v5544 = vsel %vm5540, %v5536, -1e+30
  %5546 = vset.pattern.permute.xlu0 0
  %5547 = vperm.xlu0 %5546, %v5541
  %v5548 = vpop.permute.xlu0 %5547
  %5551 = vset.pattern.permute.xlu0 0
  %5552 = vperm.xlu0 %5551, %v5542
  %v5553 = vpop.permute.xlu0 %5552
  %5556 = vset.pattern.permute.xlu0 0
  %5557 = vperm.xlu0 %5556, %v5543
  %v5558 = vpop.permute.xlu0 %5557
  %5561 = vset.pattern.permute.xlu0 0
  %5562 = vperm.xlu0 %5561, %v5544
  %v5563 = vpop.permute.xlu0 %5562
  %v5565 = vsel %vm183, %v5548, 0.0
  %v5566 = vsel %vm184, %v5553, 0.0
  %v5567 = vsel %vm185, %v5558, 0.0
  %v5568 = vsel %vm186, %v5563, 0.0
  %v5569 = vsel %vm187, %v5565, 0.0
  %v5570 = vsel %vm187, %v5566, 0.0
  %v5571 = vadd.f32 %v5569, %v5570
  %v5572 = vsel %vm187, %v5567, 0.0
  %v5573 = vadd.f32 %v5571, %v5572
  %v5574 = vsel %vm187, %v5568, 0.0
  %v5575 = vadd.f32 %v5573, %v5574
  %v5576 = vrot.slane %v5575, 4
  %v5577 = vadd.f32 %v5575, %v5576
  %v5578 = vrot.slane %v5577, 2
  %v5579 = vadd.f32 %v5577, %v5578
  %v5580 = vrot.slane %v5579, 1
  %v5581 = vadd.f32 %v5579, %v5580
  %vm5582 = vcmp.gt.f32.partialorder %v5581, %v5548
  %vm5583 = vcmp.gt.f32.partialorder %v5581, %v5553
  %vm5584 = vcmp.gt.f32.partialorder %v5581, %v5558
  %vm5585 = vcmp.gt.f32.partialorder %v5581, %v5563
  %vm5586 = vcmp.eq.f32.partialorder %v5581, %v5548
  %vm5587 = vcmp.eq.f32.partialorder %v5581, %v5553
  %vm5588 = vcmp.eq.f32.partialorder %v5581, %v5558
  %vm5589 = vcmp.eq.f32.partialorder %v5581, %v5563
  %vm5590 = vmand %vm5586, %vm703
  %vm5591 = vmand %vm5587, %vm704
  %vm5592 = vmand %vm5588, %vm705
  %vm5593 = vmand %vm5589, %vm706
  %vm5594 = vmor %vm5582, %vm5590
  %vm5595 = vmor %vm5583, %vm5591
  %vm5596 = vmor %vm5584, %vm5592
  %vm5597 = vmor %vm5585, %vm5593
  %v5598 = vsel %vm5594, %v158, 0.0
  %v5599 = vsel %vm5595, %v163, 0.0
  %v5600 = vsel %vm5596, %v168, 0.0
  %v5601 = vsel %vm5597, %v173, 0.0
  %v5602 = vsel %vm187, %v5598, 0.0
  %5603 = vadd.xlane.f32.xlu0 %v5602
  %v5604 = vpop.xlane.xlu0 %5603
  %v5605 = vsel %vm187, %v5599, 0.0
  %5606 = vadd.xlane.f32.xlu0 %v5605
  %v5607 = vpop.xlane.xlu0 %5606
  %v5608 = vsel %vm187, %v5600, 0.0
  %5609 = vadd.xlane.f32.xlu0 %v5608
  %v5610 = vpop.xlane.xlu0 %5609
  %v5611 = vsel %vm187, %v5601, 0.0
  %5612 = vadd.xlane.f32.xlu0 %v5611
  %v5613 = vpop.xlane.xlu0 %5612
  %v5615 = vsel %vm87, %v4943, 0
  %5617 = vmatprep.subr.mxu0 0.0
  %5618 = vmatpush1.msra.mxu0 %v5615
  %5619 = vmatprep.subr.mxu0 0.0
  %5620 = vmatpush1.msra.mxu0 0.0
  %5621 = vmatprep.subr.mxu0 0.0
  %5622 = vmatpush1.msra.mxu0 0.0
  %5623 = vmatprep.subr.mxu0 0.0
  %5624 = vmatpush1.msra.mxu0 0.0
  %5625 = vmatprep.subr.mxu0 0.0
  %5626 = vmatpush1.msra.mxu0 0.0
  %5627 = vmatprep.subr.mxu0 0.0
  %5628 = vmatpush1.msra.mxu0 0.0
  %5629 = vmatprep.subr.mxu0 0.0
  %5630 = vmatpush1.msra.mxu0 0.0
  %5631 = vmatprep.subr.mxu0 0.0
  %5632 = vmatpush1.msra.mxu0 0.0
  %5633 = vmatprep.subr.mxu0 0.0
  %5634 = vmatpush1.msra.mxu0 0.0
  %5635 = vmatprep.subr.mxu0 0.0
  %5636 = vmatpush1.msra.mxu0 0.0
  %5637 = vmatprep.subr.mxu0 0.0
  %5638 = vmatpush1.msra.mxu0 0.0
  %5639 = vmatprep.subr.mxu0 0.0
  %5640 = vmatpush1.msra.mxu0 0.0
  %5641 = vmatprep.subr.mxu0 0.0
  %5642 = vmatpush1.msra.mxu0 0.0
  %5643 = vmatprep.subr.mxu0 0.0
  %5644 = vmatpush1.msra.mxu0 0.0
  %5645 = vmatprep.subr.mxu0 0.0
  %5646 = vmatpush1.msra.mxu0 0.0
  %5647 = vmatprep.subr.mxu0 0.0
  %5648 = vmatpush1.msra.mxu0 0.0
  %5649 = vmatprep.subr.mxu0 0.0
  %5650 = vmatpush1.msra.mxu0 0.0
  %5651 = vmatprep.subr.mxu0 0.0
  %5652 = vmatpush1.msra.mxu0 0.0
  %5653 = vmatprep.subr.mxu0 0.0
  %5654 = vmatpush1.msra.mxu0 0.0
  %5655 = vmatprep.subr.mxu0 0.0
  %5656 = vmatpush1.msra.mxu0 0.0
  %5657 = vmatprep.subr.mxu0 0.0
  %5658 = vmatpush1.msra.mxu0 0.0
  %5659 = vmatprep.subr.mxu0 0.0
  %5660 = vmatpush1.msra.mxu0 0.0
  %5661 = vmatprep.subr.mxu0 0.0
  %5662 = vmatpush1.msra.mxu0 0.0
  %5663 = vmatprep.subr.mxu0 0.0
  %5664 = vmatpush1.msra.mxu0 0.0
  %5665 = vmatprep.subr.mxu0 0.0
  %5666 = vmatpush1.msra.mxu0 0.0
  %5667 = vmatprep.subr.mxu0 0.0
  %5668 = vmatpush1.msra.mxu0 0.0
  %5669 = vmatprep.subr.mxu0 0.0
  %5670 = vmatpush1.msra.mxu0 0.0
  %5671 = vmatprep.subr.mxu0 0.0
  %5672 = vmatpush1.msra.mxu0 0.0
  %5673 = vmatprep.subr.mxu0 0.0
  %5674 = vmatpush1.msra.mxu0 0.0
  %5675 = vmatprep.subr.mxu0 0.0
  %5676 = vmatpush1.msra.mxu0 0.0
  %5677 = vmatprep.subr.mxu0 0.0
  %5678 = vmatpush1.msra.mxu0 0.0
  %5679 = vmatprep.subr.mxu0 0.0
  %5680 = vmatpush1.msra.mxu0 0.0
  %5681 = vmatprep.mubr.f32.mxu0 0.0
  %5682 = vmatmul.mubr.f32.gmra.mrb[0].mxu0 %v76
  %v5683 = vpop.f32.mrb[0].mxu0
  %v5684 = vadd.f32 0.0, %v5683
  %v5685 = vpop.f32.mrb[0].mxu0
  %5686 = vmatprep.mubr.f32.mxu0 0.0
  %5687 = vmatmul.mubr.f32.gmra.mrb[0].mxu0 %v79
  %v5688 = vpop.f32.mrb[0].mxu0
  %v5689 = vadd.f32 0.0, %v5688
  %v5690 = vpop.f32.mrb[0].mxu0
  %5691 = vmatprep.mubr.f32.mxu0 0.0
  %5692 = vmatmul.mubr.f32.gmra.mrb[0].mxu0 %v82
  %v5693 = vpop.f32.mrb[0].mxu0
  %v5694 = vadd.f32 0.0, %v5693
  %v5695 = vpop.f32.mrb[0].mxu0
  %5696 = vmatprep.mubr.f32.mxu0 0.0
  %5697 = vmatmul.mubr.f32.gmra.mrb[0].mxu0 %v85
  %v5698 = vpop.f32.mrb[0].mxu0
  %v5699 = vadd.f32 0.0, %v5698
  %v5700 = vpop.f32.mrb[0].mxu0
  %5701 = vdwg.mxu0
  %v5702 = vmul.f32 %v5684, 0.5
  %v5703 = vmul.f32 %v5689, 0.5
  %v5704 = vmul.f32 %v5694, 0.5
  %v5705 = vmul.f32 %v5699, 0.5
  %vm5706 = vcmp.lt.f32.partialorder %v5604, %v5702
  %vm5707 = vcmp.lt.f32.partialorder %v5607, %v5703
  %vm5708 = vcmp.lt.f32.partialorder %v5610, %v5704
  %vm5709 = vcmp.lt.f32.partialorder %v5613, %v5705
  %vm5710 = vmand %vm5706, %vm5537
  %vm5711 = vmand %vm5707, %vm5538
  %vm5712 = vmand %vm5708, %vm5539
  %vm5713 = vmand %vm5709, %vm5540
  %v5714 = vsel %vm5710, 1.0, 0.0
  %v5715 = vsel %vm5711, 1.0, 0.0
  %v5716 = vsel %vm5712, 1.0, 0.0
  %v5717 = vsel %vm5713, 1.0, 0.0
  %5719 = vset.pattern.permute.xlu0 0
  %5720 = vperm.xlu0 %5719, %v5533
  %v5721 = vpop.permute.xlu0 %5720
  %5724 = vset.pattern.permute.xlu0 0
  %5725 = vperm.xlu0 %5724, %v5534
  %v5726 = vpop.permute.xlu0 %5725
  %5729 = vset.pattern.permute.xlu0 0
  %5730 = vperm.xlu0 %5729, %v5535
  %v5731 = vpop.permute.xlu0 %5730
  %5734 = vset.pattern.permute.xlu0 0
  %5735 = vperm.xlu0 %5734, %v5536
  %v5736 = vpop.permute.xlu0 %5735
  %v5738 = vmul.f32 %v5408, %v5721
  %v5739 = vmul.f32 %v5409, %v5726
  %v5740 = vmul.f32 %v5410, %v5731
  %v5741 = vmul.f32 %v5411, %v5736
  %5743 = vset.pattern.permute.xlu0 0
  %5744 = vperm.xlu0 %5743, %v5714
  %v5745 = vpop.permute.xlu0 %5744
  %5748 = vset.pattern.permute.xlu0 0
  %5749 = vperm.xlu0 %5748, %v5715
  %v5750 = vpop.permute.xlu0 %5749
  %5753 = vset.pattern.permute.xlu0 0
  %5754 = vperm.xlu0 %5753, %v5716
  %v5755 = vpop.permute.xlu0 %5754
  %5758 = vset.pattern.permute.xlu0 0
  %5759 = vperm.xlu0 %5758, %v5717
  %v5760 = vpop.permute.xlu0 %5759
  %v5762 = vmul.f32 %v5738, %v5745
  %v5763 = vmul.f32 %v5739, %v5750
  %v5764 = vmul.f32 %v5740, %v5755
  %v5765 = vmul.f32 %v5741, %v5760
  %5766 = vmatprep.subr.mxu0 0.0
  %5767 = vmatpush1.msra.mxu0 %v5762
  %5768 = vmatprep.subr.mxu0 0.0
  %5769 = vmatpush1.msra.mxu0 %v5763
  %5770 = vmatprep.subr.mxu0 0.0
  %5771 = vmatpush1.msra.mxu0 %v5764
  %5772 = vmatprep.subr.mxu0 0.0
  %5773 = vmatpush1.msra.mxu0 %v5765
  %5774 = vmatprep.subr.mxu0 0.0
  %5775 = vmatpush1.msra.mxu0 0.0
  %5776 = vmatprep.subr.mxu0 0.0
  %5777 = vmatpush1.msra.mxu0 0.0
  %5778 = vmatprep.subr.mxu0 0.0
  %5779 = vmatpush1.msra.mxu0 0.0
  %5780 = vmatprep.subr.mxu0 0.0
  %5781 = vmatpush1.msra.mxu0 0.0
  %5782 = vmatprep.subr.mxu0 0.0
  %5783 = vmatpush1.msra.mxu0 0.0
  %5784 = vmatprep.subr.mxu0 0.0
  %5785 = vmatpush1.msra.mxu0 0.0
  %5786 = vmatprep.subr.mxu0 0.0
  %5787 = vmatpush1.msra.mxu0 0.0
  %5788 = vmatprep.subr.mxu0 0.0
  %5789 = vmatpush1.msra.mxu0 0.0
  %5790 = vmatprep.subr.mxu0 0.0
  %5791 = vmatpush1.msra.mxu0 0.0
  %5792 = vmatprep.subr.mxu0 0.0
  %5793 = vmatpush1.msra.mxu0 0.0
  %5794 = vmatprep.subr.mxu0 0.0
  %5795 = vmatpush1.msra.mxu0 0.0
  %5796 = vmatprep.subr.mxu0 0.0
  %5797 = vmatpush1.msra.mxu0 0.0
  %5798 = vmatprep.subr.mxu0 0.0
  %5799 = vmatpush1.msra.mxu0 0.0
  %5800 = vmatprep.subr.mxu0 0.0
  %5801 = vmatpush1.msra.mxu0 0.0
  %5802 = vmatprep.subr.mxu0 0.0
  %5803 = vmatpush1.msra.mxu0 0.0
  %5804 = vmatprep.subr.mxu0 0.0
  %5805 = vmatpush1.msra.mxu0 0.0
  %5806 = vmatprep.subr.mxu0 0.0
  %5807 = vmatpush1.msra.mxu0 0.0
  %5808 = vmatprep.subr.mxu0 0.0
  %5809 = vmatpush1.msra.mxu0 0.0
  %5810 = vmatprep.subr.mxu0 0.0
  %5811 = vmatpush1.msra.mxu0 0.0
  %5812 = vmatprep.subr.mxu0 0.0
  %5813 = vmatpush1.msra.mxu0 0.0
  %5814 = vmatprep.subr.mxu0 0.0
  %5815 = vmatpush1.msra.mxu0 0.0
  %5816 = vmatprep.subr.mxu0 0.0
  %5817 = vmatpush1.msra.mxu0 0.0
  %5818 = vmatprep.subr.mxu0 0.0
  %5819 = vmatpush1.msra.mxu0 0.0
  %5820 = vmatprep.subr.mxu0 0.0
  %5821 = vmatpush1.msra.mxu0 0.0
  %5822 = vmatprep.subr.mxu0 0.0
  %5823 = vmatpush1.msra.mxu0 0.0
  %5824 = vmatprep.subr.mxu0 0.0
  %5825 = vmatpush1.msra.mxu0 0.0
  %5826 = vmatprep.subr.mxu0 0.0
  %5827 = vmatpush1.msra.mxu0 0.0
  %5828 = vmatprep.subr.mxu0 0.0
  %5829 = vmatpush1.msra.mxu0 0.0
  %5830 = vmatprep.mubr.f32.mxu0 0.0
  %5831 = vmatmul.mubr.f32.gmra.mrb[0].mxu0 %v731
  %v5832 = vpop.f32.mrb[0].mxu0
  %v5833 = vadd.f32 0.0, %v5832
  %v5834 = vpop.f32.mrb[0].mxu0
  %5835 = vdwg.mxu0
  %5836 = vmatprep.subr.mxu0 0.0
  %5837 = vmatpush1.msra.mxu0 %v5714
  %5838 = vmatprep.subr.mxu0 0.0
  %5839 = vmatpush1.msra.mxu0 %v5715
  %5840 = vmatprep.subr.mxu0 0.0
  %5841 = vmatpush1.msra.mxu0 %v5716
  %5842 = vmatprep.subr.mxu0 0.0
  %5843 = vmatpush1.msra.mxu0 %v5717
  %5844 = vmatprep.subr.mxu0 0.0
  %5845 = vmatpush1.msra.mxu0 0.0
  %5846 = vmatprep.subr.mxu0 0.0
  %5847 = vmatpush1.msra.mxu0 0.0
  %5848 = vmatprep.subr.mxu0 0.0
  %5849 = vmatpush1.msra.mxu0 0.0
  %5850 = vmatprep.subr.mxu0 0.0
  %5851 = vmatpush1.msra.mxu0 0.0
  %5852 = vmatprep.subr.mxu0 0.0
  %5853 = vmatpush1.msra.mxu0 0.0
  %5854 = vmatprep.subr.mxu0 0.0
  %5855 = vmatpush1.msra.mxu0 0.0
  %5856 = vmatprep.subr.mxu0 0.0
  %5857 = vmatpush1.msra.mxu0 0.0
  %5858 = vmatprep.subr.mxu0 0.0
  %5859 = vmatpush1.msra.mxu0 0.0
  %5860 = vmatprep.subr.mxu0 0.0
  %5861 = vmatpush1.msra.mxu0 0.0
  %5862 = vmatprep.subr.mxu0 0.0
  %5863 = vmatpush1.msra.mxu0 0.0
  %5864 = vmatprep.subr.mxu0 0.0
  %5865 = vmatpush1.msra.mxu0 0.0
  %5866 = vmatprep.subr.mxu0 0.0
  %5867 = vmatpush1.msra.mxu0 0.0
  %5868 = vmatprep.subr.mxu0 0.0
  %5869 = vmatpush1.msra.mxu0 0.0
  %5870 = vmatprep.subr.mxu0 0.0
  %5871 = vmatpush1.msra.mxu0 0.0
  %5872 = vmatprep.subr.mxu0 0.0
  %5873 = vmatpush1.msra.mxu0 0.0
  %5874 = vmatprep.subr.mxu0 0.0
  %5875 = vmatpush1.msra.mxu0 0.0
  %5876 = vmatprep.subr.mxu0 0.0
  %5877 = vmatpush1.msra.mxu0 0.0
  %5878 = vmatprep.subr.mxu0 0.0
  %5879 = vmatpush1.msra.mxu0 0.0
  %5880 = vmatprep.subr.mxu0 0.0
  %5881 = vmatpush1.msra.mxu0 0.0
  %5882 = vmatprep.subr.mxu0 0.0
  %5883 = vmatpush1.msra.mxu0 0.0
  %5884 = vmatprep.subr.mxu0 0.0
  %5885 = vmatpush1.msra.mxu0 0.0
  %5886 = vmatprep.subr.mxu0 0.0
  %5887 = vmatpush1.msra.mxu0 0.0
  %5888 = vmatprep.subr.mxu0 0.0
  %5889 = vmatpush1.msra.mxu0 0.0
  %5890 = vmatprep.subr.mxu0 0.0
  %5891 = vmatpush1.msra.mxu0 0.0
  %5892 = vmatprep.subr.mxu0 0.0
  %5893 = vmatpush1.msra.mxu0 0.0
  %5894 = vmatprep.subr.mxu0 0.0
  %5895 = vmatpush1.msra.mxu0 0.0
  %5896 = vmatprep.subr.mxu0 0.0
  %5897 = vmatpush1.msra.mxu0 0.0
  %5898 = vmatprep.subr.mxu0 0.0
  %5899 = vmatpush1.msra.mxu0 0.0
  %5900 = vmatprep.mubr.f32.mxu0 0.0
  %5901 = vmatmul.mubr.f32.gmra.mrb[0].mxu0 %v731
  %v5902 = vpop.f32.mrb[0].mxu0
  %v5903 = vadd.f32 0.0, %v5902
  %v5904 = vpop.f32.mrb[0].mxu0
  %5905 = vdwg.mxu0
  %v5906 = vmax.f32 %v5903, 1.0
  %5908 = vset.pattern.permute.xlu0 0
  %5909 = vperm.xlu0 %5908, %v5906
  %v5910 = vpop.permute.xlu0 %5909
  %v5912 = vrcp.pop %v5910
  %v5913 = vmul.f32 %v5833, %v5912
  %v5914 = vadd.f32 %v4954, %v5913
  %v5915 = vmul.f32 %v70, %v5714
  %v5916 = vmul.f32 %v71, %v5715
  %v5917 = vmul.f32 %v72, %v5716
  %v5918 = vmul.f32 %v73, %v5717
  %vm5919 = vcmp.gt.f32.partialorder %v5915, 0.0
  %vm5920 = vcmp.gt.f32.partialorder %v5916, 0.0
  %vm5921 = vcmp.gt.f32.partialorder %v5917, 0.0
  %vm5922 = vcmp.gt.f32.partialorder %v5918, 0.0
  %v5923 = vsel %vm5919, 1, 0
  %v5924 = vsel %vm5920, 1, 0
  %v5925 = vsel %vm5921, 1, 0
  %v5926 = vsel %vm5922, 1, 0
  %5927 = vset.pattern.permute.xlu0 0
  %5928 = vperm.xlu0 %5927, %v5923
  %v5929 = vpop.permute.xlu0 %5928
  %5930 = vset.pattern.permute.xlu0 0
  %5931 = vperm.xlu0 %5930, %v5924
  %v5932 = vpop.permute.xlu0 %5931
  %5933 = vset.pattern.permute.xlu0 0
  %5934 = vperm.xlu0 %5933, %v5925
  %v5935 = vpop.permute.xlu0 %5934
  %5936 = vset.pattern.permute.xlu0 0
  %5937 = vperm.xlu0 %5936, %v5926
  %v5938 = vpop.permute.xlu0 %5937
  %vm5939 = vcmp.eq.s32.totalorder %v5929, 1
  %vm5940 = vcmp.eq.s32.totalorder %v5932, 1
  %vm5941 = vcmp.eq.s32.totalorder %v5935, 1
  %vm5942 = vcmp.eq.s32.totalorder %v5938, 1
  %v5943 = vsel %vm5939, %v5762, -1e+30
  %v5944 = vsel %vm5940, %v5763, -1e+30
  %v5945 = vsel %vm5941, %v5764, -1e+30
  %v5946 = vsel %vm5942, %v5765, -1e+30
  %v5947 = vsel %vm551, %v5943, -inf
  %v5948 = vsel %vm551, %v5944, -inf
  %v5949 = vsel %vm551, %v5945, -inf
  %v5950 = vsel %vm551, %v5946, -inf
  %v5951 = vmax.f32 %v5947, %v5948
  %v5952 = vmax.f32 %v5949, %v5950
  %v5953 = vmax.f32 %v5951, %v5952
  %v5954 = vrot.slane %v5953, 4
  %v5955 = vmax.f32 %v5953, %v5954
  %v5956 = vrot.slane %v5955, 2
  %v5957 = vmax.f32 %v5955, %v5956
  %v5958 = vrot.slane %v5957, 1
  %v5959 = vmax.f32 %v5957, %v5958
  %v5960 = vsel %vm1149, %v5959, -1e+30
  %5961 = vrot.lane.b32.xlu0 %v5714, 1
  %v5962 = vpop.permute.xlu0 %5961
  %5963 = vrot.lane.b32.xlu0 %v5715, 1
  %v5964 = vpop.permute.xlu0 %5963
  %5965 = vrot.lane.b32.xlu0 %v5716, 1
  %v5966 = vpop.permute.xlu0 %5965
  %5967 = vrot.lane.b32.xlu0 %v5717, 1
  %v5968 = vpop.permute.xlu0 %5967
  %v5973 = vmul.f32 %v70, %v5962
  %v5974 = vmul.f32 %v71, %v5964
  %v5975 = vmul.f32 %v72, %v5966
  %v5976 = vmul.f32 %v73, %v5968
  %vm5977 = vcmp.gt.f32.partialorder %v5973, 0.0
  %vm5978 = vcmp.gt.f32.partialorder %v5974, 0.0
  %vm5979 = vcmp.gt.f32.partialorder %v5975, 0.0
  %vm5980 = vcmp.gt.f32.partialorder %v5976, 0.0
  %v5981 = vsel %vm5977, 1, 0
  %v5982 = vsel %vm5978, 1, 0
  %v5983 = vsel %vm5979, 1, 0
  %v5984 = vsel %vm5980, 1, 0
  %5985 = vset.pattern.permute.xlu0 1
  %5986 = vperm.xlu0 %5985, %v5981
  %v5987 = vpop.permute.xlu0 %5986
  %5988 = vset.pattern.permute.xlu0 1
  %5989 = vperm.xlu0 %5988, %v5982
  %v5990 = vpop.permute.xlu0 %5989
  %5991 = vset.pattern.permute.xlu0 1
  %5992 = vperm.xlu0 %5991, %v5983
  %v5993 = vpop.permute.xlu0 %5992
  %5994 = vset.pattern.permute.xlu0 1
  %5995 = vperm.xlu0 %5994, %v5984
  %v5996 = vpop.permute.xlu0 %5995
  %vm5997 = vcmp.eq.s32.totalorder %v5987, 1
  %vm5998 = vcmp.eq.s32.totalorder %v5990, 1
  %vm5999 = vcmp.eq.s32.totalorder %v5993, 1
  %vm6000 = vcmp.eq.s32.totalorder %v5996, 1
  %v6001 = vsel %vm5997, %v5762, -1e+30
  %v6002 = vsel %vm5998, %v5763, -1e+30
  %v6003 = vsel %vm5999, %v5764, -1e+30
  %v6004 = vsel %vm6000, %v5765, -1e+30
  %v6005 = vsel %vm551, %v6001, -inf
  %v6006 = vsel %vm551, %v6002, -inf
  %v6007 = vsel %vm551, %v6003, -inf
  %v6008 = vsel %vm551, %v6004, -inf
  %v6009 = vmax.f32 %v6005, %v6006
  %v6010 = vmax.f32 %v6007, %v6008
  %v6011 = vmax.f32 %v6009, %v6010
  %v6012 = vrot.slane %v6011, 4
  %v6013 = vmax.f32 %v6011, %v6012
  %v6014 = vrot.slane %v6013, 2
  %v6015 = vmax.f32 %v6013, %v6014
  %v6016 = vrot.slane %v6015, 1
  %v6017 = vmax.f32 %v6015, %v6016
  %v6018 = vsel %vm1208, %v6017, %v5960
  %v6019 = vadd.f32 %v5059, %v6018
  %v6020 = vld [vmem:[%s12] sm:$0xff]
  %v6021 = vld [vmem:[%s12 + $0x8] sm:$0xff]
  %v6022 = vld [vmem:[%s12 + $0x10] sm:$0xff]
  %v6023 = vld [vmem:[%s12 + $0x18] sm:$0xff]
  %v6024 = vld [vmem:[%s12 + $0x20] sm:$0xff]
  %v6025 = vld [vmem:[%s12 + $0x28] sm:$0xff]
  %v6026 = vld [vmem:[%s12 + $0x30] sm:$0xff]
  %v6027 = vld [vmem:[%s12 + $0x38] sm:$0xff]
  %v6028 = vld [vmem:[%s12 + $0x40] sm:$0xff]
  %v6029 = vld [vmem:[%s12 + $0x48] sm:$0xff]
  %v6030 = vld [vmem:[%s12 + $0x50] sm:$0xff]
  %v6031 = vld [vmem:[%s12 + $0x58] sm:$0xff]
  %v6032 = vld [vmem:[%s12 + $0x60] sm:$0xff]
  %v6033 = vld [vmem:[%s12 + $0x68] sm:$0xff]
  %v6034 = vld [vmem:[%s12 + $0x70] sm:$0xff]
  %v6035 = vld [vmem:[%s12 + $0x78] sm:$0xff]
  %v6037 = vsel %vm551, %v5914, 0
  %6039 = vmatprep.subr.mxu0 0.0
  %6040 = vmatpush1.msra.mxu0 %v6028
  %6041 = vmatprep.subr.mxu0 0.0
  %6042 = vmatpush1.msra.mxu0 %v6029
  %6043 = vmatprep.subr.mxu0 0.0
  %6044 = vmatpush1.msra.mxu0 %v6030
  %6045 = vmatprep.subr.mxu0 0.0
  %6046 = vmatpush1.msra.mxu0 %v6031
  %6047 = vmatprep.subr.mxu0 0.0
  %6048 = vmatpush1.msra.mxu0 %v6032
  %6049 = vmatprep.subr.mxu0 0.0
  %6050 = vmatpush1.msra.mxu0 %v6033
  %6051 = vmatprep.subr.mxu0 0.0
  %6052 = vmatpush1.msra.mxu0 %v6034
  %6053 = vmatprep.subr.mxu0 0.0
  %6054 = vmatpush1.msra.mxu0 %v6035
  %6055 = vmatprep.subr.mxu0 0.0
  %6056 = vmatpush1.msra.mxu0 0.0
  %6057 = vmatprep.subr.mxu0 0.0
  %6058 = vmatpush1.msra.mxu0 0.0
  %6059 = vmatprep.subr.mxu0 0.0
  %6060 = vmatpush1.msra.mxu0 0.0
  %6061 = vmatprep.subr.mxu0 0.0
  %6062 = vmatpush1.msra.mxu0 0.0
  %6063 = vmatprep.subr.mxu0 0.0
  %6064 = vmatpush1.msra.mxu0 0.0
  %6065 = vmatprep.subr.mxu0 0.0
  %6066 = vmatpush1.msra.mxu0 0.0
  %6067 = vmatprep.subr.mxu0 0.0
  %6068 = vmatpush1.msra.mxu0 0.0
  %6069 = vmatprep.subr.mxu0 0.0
  %6070 = vmatpush1.msra.mxu0 0.0
  %6071 = vmatprep.subr.mxu0 0.0
  %6072 = vmatpush1.msra.mxu0 0.0
  %6073 = vmatprep.subr.mxu0 0.0
  %6074 = vmatpush1.msra.mxu0 0.0
  %6075 = vmatprep.subr.mxu0 0.0
  %6076 = vmatpush1.msra.mxu0 0.0
  %6077 = vmatprep.subr.mxu0 0.0
  %6078 = vmatpush1.msra.mxu0 0.0
  %6079 = vmatprep.subr.mxu0 0.0
  %6080 = vmatpush1.msra.mxu0 0.0
  %6081 = vmatprep.subr.mxu0 0.0
  %6082 = vmatpush1.msra.mxu0 0.0
  %6083 = vmatprep.subr.mxu0 0.0
  %6084 = vmatpush1.msra.mxu0 0.0
  %6085 = vmatprep.subr.mxu0 0.0
  %6086 = vmatpush1.msra.mxu0 0.0
  %6087 = vmatprep.subr.mxu0 0.0
  %6088 = vmatpush1.msra.mxu0 0.0
  %6089 = vmatprep.subr.mxu0 0.0
  %6090 = vmatpush1.msra.mxu0 0.0
  %6091 = vmatprep.subr.mxu0 0.0
  %6092 = vmatpush1.msra.mxu0 0.0
  %6093 = vmatprep.subr.mxu0 0.0
  %6094 = vmatpush1.msra.mxu0 0.0
  %6095 = vmatprep.subr.mxu0 0.0
  %6096 = vmatpush1.msra.mxu0 0.0
  %6097 = vmatprep.subr.mxu0 0.0
  %6098 = vmatpush1.msra.mxu0 0.0
  %6099 = vmatprep.subr.mxu0 0.0
  %6100 = vmatpush1.msra.mxu0 0.0
  %6101 = vmatprep.subr.mxu0 0.0
  %6102 = vmatpush1.msra.mxu0 0.0
  %6103 = vmatprep.mubr.f32.mxu0 0.0
  %6104 = vmatmul.mubr.f32.gmra.mrb[0].mxu0 %v6037
  %v6105 = vpop.f32.mrb[0].mxu0
  %v6106 = vadd.f32 0.0, %v6105
  %v6107 = vpop.f32.mrb[0].mxu0
  %6108 = vdwg.mxu0
  %v6110 = vsel %vm551, %v6019, 0
  %6112 = vmatprep.subr.mxu0 0.0
  %6113 = vmatpush1.msra.mxu0 %v6020
  %6114 = vmatprep.subr.mxu0 0.0
  %6115 = vmatpush1.msra.mxu0 %v6021
  %6116 = vmatprep.subr.mxu0 0.0
  %6117 = vmatpush1.msra.mxu0 %v6022
  %6118 = vmatprep.subr.mxu0 0.0
  %6119 = vmatpush1.msra.mxu0 %v6023
  %6120 = vmatprep.subr.mxu0 0.0
  %6121 = vmatpush1.msra.mxu0 %v6024
  %6122 = vmatprep.subr.mxu0 0.0
  %6123 = vmatpush1.msra.mxu0 %v6025
  %6124 = vmatprep.subr.mxu0 0.0
  %6125 = vmatpush1.msra.mxu0 %v6026
  %6126 = vmatprep.subr.mxu0 0.0
  %6127 = vmatpush1.msra.mxu0 %v6027
  %6128 = vmatprep.subr.mxu0 0.0
  %6129 = vmatpush1.msra.mxu0 0.0
  %6130 = vmatprep.subr.mxu0 0.0
  %6131 = vmatpush1.msra.mxu0 0.0
  %6132 = vmatprep.subr.mxu0 0.0
  %6133 = vmatpush1.msra.mxu0 0.0
  %6134 = vmatprep.subr.mxu0 0.0
  %6135 = vmatpush1.msra.mxu0 0.0
  %6136 = vmatprep.subr.mxu0 0.0
  %6137 = vmatpush1.msra.mxu0 0.0
  %6138 = vmatprep.subr.mxu0 0.0
  %6139 = vmatpush1.msra.mxu0 0.0
  %6140 = vmatprep.subr.mxu0 0.0
  %6141 = vmatpush1.msra.mxu0 0.0
  %6142 = vmatprep.subr.mxu0 0.0
  %6143 = vmatpush1.msra.mxu0 0.0
  %6144 = vmatprep.subr.mxu0 0.0
  %6145 = vmatpush1.msra.mxu0 0.0
  %6146 = vmatprep.subr.mxu0 0.0
  %6147 = vmatpush1.msra.mxu0 0.0
  %6148 = vmatprep.subr.mxu0 0.0
  %6149 = vmatpush1.msra.mxu0 0.0
  %6150 = vmatprep.subr.mxu0 0.0
  %6151 = vmatpush1.msra.mxu0 0.0
  %6152 = vmatprep.subr.mxu0 0.0
  %6153 = vmatpush1.msra.mxu0 0.0
  %6154 = vmatprep.subr.mxu0 0.0
  %6155 = vmatpush1.msra.mxu0 0.0
  %6156 = vmatprep.subr.mxu0 0.0
  %6157 = vmatpush1.msra.mxu0 0.0
  %6158 = vmatprep.subr.mxu0 0.0
  %6159 = vmatpush1.msra.mxu0 0.0
  %6160 = vmatprep.subr.mxu0 0.0
  %6161 = vmatpush1.msra.mxu0 0.0
  %6162 = vmatprep.subr.mxu0 0.0
  %6163 = vmatpush1.msra.mxu0 0.0
  %6164 = vmatprep.subr.mxu0 0.0
  %6165 = vmatpush1.msra.mxu0 0.0
  %6166 = vmatprep.subr.mxu0 0.0
  %6167 = vmatpush1.msra.mxu0 0.0
  %6168 = vmatprep.subr.mxu0 0.0
  %6169 = vmatpush1.msra.mxu0 0.0
  %6170 = vmatprep.subr.mxu0 0.0
  %6171 = vmatpush1.msra.mxu0 0.0
  %6172 = vmatprep.subr.mxu0 0.0
  %6173 = vmatpush1.msra.mxu0 0.0
  %6174 = vmatprep.subr.mxu0 0.0
  %6175 = vmatpush1.msra.mxu0 0.0
  %6176 = vmatprep.mubr.f32.mxu0 0.0
  %6177 = vmatmul.mubr.f32.gmra.mrb[0].mxu0 %v6110
  %v6178 = vpop.f32.mrb[0].mxu0
  %v6179 = vadd.f32 %v6106, %v6178
  %v6180 = vpop.f32.mrb[0].mxu0
  %6181 = vdwg.mxu0
  %v6182 = vld [vmem:[%s13] sm:$0x1]
  %v6184 = vlaneseq
  %v6185 = vshrl.u32 %v6184, 7
  %v6186 = vsub.s32 0, %v6185
  %v6187 = vrot.slane %v6182, %v6186
  %v6189 = vadd.f32 %v6179, %v6187
  %v6190 = vmax.f32 %v6189, 0.0
  %v6191 = vld [vmem:[%s14] sm:$0xff]
  %v6192 = vld [vmem:[%s14 + $0x8] sm:$0xff]
  %v6193 = vld [vmem:[%s14 + $0x10] sm:$0xff]
  %v6194 = vld [vmem:[%s14 + $0x18] sm:$0xff]
  %v6195 = vld [vmem:[%s14 + $0x20] sm:$0xff]
  %v6196 = vld [vmem:[%s14 + $0x28] sm:$0xff]
  %v6197 = vld [vmem:[%s14 + $0x30] sm:$0xff]
  %v6198 = vld [vmem:[%s14 + $0x38] sm:$0xff]
  %v6199 = vld [vmem:[%s14 + $0x40] sm:$0xff]
  %v6200 = vld [vmem:[%s14 + $0x48] sm:$0xff]
  %v6201 = vld [vmem:[%s14 + $0x50] sm:$0xff]
  %v6202 = vld [vmem:[%s14 + $0x58] sm:$0xff]
  %v6203 = vld [vmem:[%s14 + $0x60] sm:$0xff]
  %v6204 = vld [vmem:[%s14 + $0x68] sm:$0xff]
  %v6205 = vld [vmem:[%s14 + $0x70] sm:$0xff]
  %v6206 = vld [vmem:[%s14 + $0x78] sm:$0xff]
  %v6207 = vld [vmem:[%s15] sm:$0x1]
  %v6209 = vlaneseq
  %v6210 = vshrl.u32 %v6209, 7
  %v6211 = vsub.s32 0, %v6210
  %v6212 = vrot.slane %v6207, %v6211
  %6214 = vmatprep.subr.mxu0 0.0
  %6215 = vmatpush1.msra.mxu0 %v6191
  %6216 = vmatprep.subr.mxu0 0.0
  %6217 = vmatpush1.msra.mxu0 %v6192
  %6218 = vmatprep.subr.mxu0 0.0
  %6219 = vmatpush1.msra.mxu0 %v6193
  %6220 = vmatprep.subr.mxu0 0.0
  %6221 = vmatpush1.msra.mxu0 %v6194
  %6222 = vmatprep.subr.mxu0 0.0
  %6223 = vmatpush1.msra.mxu0 %v6195
  %6224 = vmatprep.subr.mxu0 0.0
  %6225 = vmatpush1.msra.mxu0 %v6196
  %6226 = vmatprep.subr.mxu0 0.0
  %6227 = vmatpush1.msra.mxu0 %v6197
  %6228 = vmatprep.subr.mxu0 0.0
  %6229 = vmatpush1.msra.mxu0 %v6198
  %6230 = vmatprep.subr.mxu0 0.0
  %6231 = vmatpush1.msra.mxu0 %v6199
  %6232 = vmatprep.subr.mxu0 0.0
  %6233 = vmatpush1.msra.mxu0 %v6200
  %6234 = vmatprep.subr.mxu0 0.0
  %6235 = vmatpush1.msra.mxu0 %v6201
  %6236 = vmatprep.subr.mxu0 0.0
  %6237 = vmatpush1.msra.mxu0 %v6202
  %6238 = vmatprep.subr.mxu0 0.0
  %6239 = vmatpush1.msra.mxu0 %v6203
  %6240 = vmatprep.subr.mxu0 0.0
  %6241 = vmatpush1.msra.mxu0 %v6204
  %6242 = vmatprep.subr.mxu0 0.0
  %6243 = vmatpush1.msra.mxu0 %v6205
  %6244 = vmatprep.subr.mxu0 0.0
  %6245 = vmatpush1.msra.mxu0 %v6206
  %6246 = vmatprep.subr.mxu0 0.0
  %6247 = vmatpush1.msra.mxu0 0.0
  %6248 = vmatprep.subr.mxu0 0.0
  %6249 = vmatpush1.msra.mxu0 0.0
  %6250 = vmatprep.subr.mxu0 0.0
  %6251 = vmatpush1.msra.mxu0 0.0
  %6252 = vmatprep.subr.mxu0 0.0
  %6253 = vmatpush1.msra.mxu0 0.0
  %6254 = vmatprep.subr.mxu0 0.0
  %6255 = vmatpush1.msra.mxu0 0.0
  %6256 = vmatprep.subr.mxu0 0.0
  %6257 = vmatpush1.msra.mxu0 0.0
  %6258 = vmatprep.subr.mxu0 0.0
  %6259 = vmatpush1.msra.mxu0 0.0
  %6260 = vmatprep.subr.mxu0 0.0
  %6261 = vmatpush1.msra.mxu0 0.0
  %6262 = vmatprep.subr.mxu0 0.0
  %6263 = vmatpush1.msra.mxu0 0.0
  %6264 = vmatprep.subr.mxu0 0.0
  %6265 = vmatpush1.msra.mxu0 0.0
  %6266 = vmatprep.subr.mxu0 0.0
  %6267 = vmatpush1.msra.mxu0 0.0
  %6268 = vmatprep.subr.mxu0 0.0
  %6269 = vmatpush1.msra.mxu0 0.0
  %6270 = vmatprep.subr.mxu0 0.0
  %6271 = vmatpush1.msra.mxu0 0.0
  %6272 = vmatprep.subr.mxu0 0.0
  %6273 = vmatpush1.msra.mxu0 0.0
  %6274 = vmatprep.subr.mxu0 0.0
  %6275 = vmatpush1.msra.mxu0 0.0
  %6276 = vmatprep.subr.mxu0 0.0
  %6277 = vmatpush1.msra.mxu0 0.0
  %6278 = vmatprep.mubr.f32.mxu0 0.0
  %6279 = vmatmul.mubr.f32.gmra.mrb[0].mxu0 %v6190
  %v6280 = vpop.f32.mrb[0].mxu0
  %v6281 = vadd.f32 %v6212, %v6280
  %v6282 = vpop.f32.mrb[0].mxu0
  %6283 = vdwg.mxu0
  %v6284 = vmax.f32 %v6281, 0.0
  %v6285 = vld [vmem:[%s16] sm:$0xff]
  %v6286 = vld [vmem:[%s16 + $0x8] sm:$0xff]
  %v6287 = vld [vmem:[%s16 + $0x10] sm:$0xff]
  %v6288 = vld [vmem:[%s16 + $0x18] sm:$0xff]
  %v6289 = vld [vmem:[%s16 + $0x20] sm:$0xff]
  %v6290 = vld [vmem:[%s16 + $0x28] sm:$0xff]
  %v6291 = vld [vmem:[%s16 + $0x30] sm:$0xff]
  %v6292 = vld [vmem:[%s16 + $0x38] sm:$0xff]
  %v6293 = vld [vmem:[#allocation3] sm:$0x1]
  %v6295 = vlaneseq
  %v6296 = vshrl.u32 %v6295, 7
  %v6297 = vsub.s32 0, %v6296
  %v6298 = vrot.slane %v6293, %v6297
  %v6301 = vsel %vm551, %v6284, 0
  %6303 = vmatprep.subr.mxu0 0.0
  %6304 = vmatpush1.msra.mxu0 %v6285
  %6305 = vmatprep.subr.mxu0 0.0
  %6306 = vmatpush1.msra.mxu0 %v6286
  %6307 = vmatprep.subr.mxu0 0.0
  %6308 = vmatpush1.msra.mxu0 %v6287
  %6309 = vmatprep.subr.mxu0 0.0
  %6310 = vmatpush1.msra.mxu0 %v6288
  %6311 = vmatprep.subr.mxu0 0.0
  %6312 = vmatpush1.msra.mxu0 %v6289
  %6313 = vmatprep.subr.mxu0 0.0
  %6314 = vmatpush1.msra.mxu0 %v6290
  %6315 = vmatprep.subr.mxu0 0.0
  %6316 = vmatpush1.msra.mxu0 %v6291
  %6317 = vmatprep.subr.mxu0 0.0
  %6318 = vmatpush1.msra.mxu0 %v6292
  %6319 = vmatprep.subr.mxu0 0.0
  %6320 = vmatpush1.msra.mxu0 0.0
  %6321 = vmatprep.subr.mxu0 0.0
  %6322 = vmatpush1.msra.mxu0 0.0
  %6323 = vmatprep.subr.mxu0 0.0
  %6324 = vmatpush1.msra.mxu0 0.0
  %6325 = vmatprep.subr.mxu0 0.0
  %6326 = vmatpush1.msra.mxu0 0.0
  %6327 = vmatprep.subr.mxu0 0.0
  %6328 = vmatpush1.msra.mxu0 0.0
  %6329 = vmatprep.subr.mxu0 0.0
  %6330 = vmatpush1.msra.mxu0 0.0
  %6331 = vmatprep.subr.mxu0 0.0
  %6332 = vmatpush1.msra.mxu0 0.0
  %6333 = vmatprep.subr.mxu0 0.0
  %6334 = vmatpush1.msra.mxu0 0.0
  %6335 = vmatprep.subr.mxu0 0.0
  %6336 = vmatpush1.msra.mxu0 0.0
  %6337 = vmatprep.subr.mxu0 0.0
  %6338 = vmatpush1.msra.mxu0 0.0
  %6339 = vmatprep.subr.mxu0 0.0
  %6340 = vmatpush1.msra.mxu0 0.0
  %6341 = vmatprep.subr.mxu0 0.0
  %6342 = vmatpush1.msra.mxu0 0.0
  %6343 = vmatprep.subr.mxu0 0.0
  %6344 = vmatpush1.msra.mxu0 0.0
  %6345 = vmatprep.subr.mxu0 0.0
  %6346 = vmatpush1.msra.mxu0 0.0
  %6347 = vmatprep.subr.mxu0 0.0
  %6348 = vmatpush1.msra.mxu0 0.0
  %6349 = vmatprep.subr.mxu0 0.0
  %6350 = vmatpush1.msra.mxu0 0.0
  %6351 = vmatprep.subr.mxu0 0.0
  %6352 = vmatpush1.msra.mxu0 0.0
  %6353 = vmatprep.subr.mxu0 0.0
  %6354 = vmatpush1.msra.mxu0 0.0
  %6355 = vmatprep.subr.mxu0 0.0
  %6356 = vmatpush1.msra.mxu0 0.0
  %6357 = vmatprep.subr.mxu0 0.0
  %6358 = vmatpush1.msra.mxu0 0.0
  %6359 = vmatprep.subr.mxu0 0.0
  %6360 = vmatpush1.msra.mxu0 0.0
  %6361 = vmatprep.subr.mxu0 0.0
  %6362 = vmatpush1.msra.mxu0 0.0
  %6363 = vmatprep.subr.mxu0 0.0
  %6364 = vmatpush1.msra.mxu0 0.0
  %6365 = vmatprep.subr.mxu0 0.0
  %6366 = vmatpush1.msra.mxu0 0.0
  %6367 = vmatprep.mubr.f32.mxu0 0.0
  %6368 = vmatmul.mubr.f32.gmra.mrb[0].mxu0 %v6301
  %v6369 = vpop.f32.mrb[0].mxu0
  %v6370 = vadd.f32 %v6298, %v6369
  %v6371 = vpop.f32.mrb[0].mxu0
  %6372 = vdwg.mxu0
  %vm6373 = vcmask 1024
  %6374 = vst.msk [vmem:[%s18] sm:$0x3] %vm6373, %v6370
  // Predicated region
  $region74: #{forward.1} parent=0 // pred_check
    _
  $region75: #{forward.1} parent=0 // pred_check_branch
    %6376 = sbr.rel (0) target = $region77
  $region76: #{forward.1} parent=0 // pred_region
    _
  $region77: #{forward.1} parent=0 // pred_fallthru
    _
  // Predicated region
  $region78: #{forward.1} parent=0 // pred_check
    _
  $region79: #{forward.1} parent=0 // pred_check_branch
    %6378 = sbr.rel (0) target = $region81
  $region80: #{forward.1} parent=0 // pred_region
    _
  $region81: #{forward.1} parent=0 // pred_fallthru
    _

</llo_original>
